<compile_context>
chip_gen: v7x
topology: tpu7x:2x2x1
jax: 0.10.0
libtpu: 0.0.40
codegen_flags: <defaults>
</compile_context>

<pallas_src>
import functools
import math

import jax
import jax.numpy as jnp
from jax import lax
from jax.experimental import pallas as pl
from jax.experimental.pallas import tpu as pltpu

D = 128       # d_model
H = 8         # n_heads
DK = D // H   # head dim
FF = 256      # ffn hidden
EPS = 1e-5    # nn.LayerNorm default


def _layer_norm(v, g, b):
    mu = jnp.mean(v, axis=-1, keepdims=True)
    var = jnp.mean((v - mu) ** 2, axis=-1, keepdims=True)
    return (v - mu) * lax.rsqrt(var + EPS) * g + b


def _gelu_exact(x):
    # PyTorch nn.GELU default == exact erf-based GELU.
    return 0.5 * x * (1.0 + lax.erf(x * (1.0 / math.sqrt(2.0))))


def encoder_layer_kernel(x_ref,
                         ln1_g_ref, ln1_b_ref, wqkv_ref, wproj_ref, bproj_ref,
                         ln2_g_ref, ln2_b_ref, w1_ref, b1_ref, w2_ref, b2_ref,
                         o_ref,
                         qkv_scr, attn_scr,
                         *, block_seqs, seq_len):
    f32 = jnp.float32
    bf16 = jnp.bfloat16

    x = x_ref[...].astype(f32)                                  # (rows, D)

    # ---- sub-block 1: x + attn(ln1(x)) ----
    xn = _layer_norm(x, ln1_g_ref[...], ln1_b_ref[...])
    # QKV projection for the whole row slab: bf16 operands, f32 MXU accumulation,
    # result staged once into VMEM so per-head slices come from a ref, not live vregs.
    qkv_scr[...] = jnp.dot(xn.astype(bf16), wqkv_ref[...],
                           preferred_element_type=f32).astype(bf16)

    scale = f32(1.0 / math.sqrt(DK))
    for s in range(block_seqs):                                 # static unroll: sequences
        r0 = s * seq_len
        for h in range(H):                                      # static unroll: heads
            c = h * DK
            qh = qkv_scr[r0:r0 + seq_len, c:c + DK]             # (L, DK) bf16
            kh = qkv_scr[r0:r0 + seq_len, D + c:D + c + DK]
            vh = qkv_scr[r0:r0 + seq_len, 2 * D + c:2 * D + c + DK]
            sc = lax.dot_general(qh, kh, (((1,), (1,)), ((), ())),
                                 preferred_element_type=f32) * scale   # (L, L) f32
            sc = sc - jnp.max(sc, axis=-1, keepdims=True)
            p = jnp.exp(sc)
            denom = jnp.sum(p, axis=-1, keepdims=True)                  # (L, 1)
            pv = jnp.dot(p.astype(bf16), vh,
                         preferred_element_type=f32)                    # (L, DK)
            # Normalize after P@V (L*DK elems instead of L*L); reciprocal -> EUP.
            attn_scr[r0:r0 + seq_len, c:c + DK] = (
                pv * pl.reciprocal(denom, approx=True))

    attn = jnp.dot(attn_scr[...].astype(bf16), wproj_ref[...],
                   preferred_element_type=f32) + bproj_ref[...]
    x = x + attn                                                # dropout = identity

    # ---- sub-block 2: x + ffn(ln2(x)) ----
    xn2 = _layer_norm(x, ln2_g_ref[...], ln2_b_ref[...])
    hid = jnp.dot(xn2.astype(bf16), w1_ref[...],
                  preferred_element_type=f32) + b1_ref[...]     # (rows, FF)
    hid = _gelu_exact(hid)
    ffn = jnp.dot(hid.astype(bf16), w2_ref[...],
                  preferred_element_type=f32) + b2_ref[...]     # (rows, D)
    o_ref[...] = (x + ffn).astype(o_ref.dtype)


def _pick_block_seqs(batch, seq_len, target_rows=256, min_rows=128):
    """Number of sequences per grid step: as many rows as fit target_rows.

    Prefers >= 2 grid steps (v7x has 2 TensorCores) when splitting still leaves
    at least `min_rows` rows per step.
    """
    divisors = [d for d in range(1, batch + 1) if batch % d == 0]
    cands = [d for d in divisors if d * seq_len <= target_rows]
    if not cands:
        return 1
    bs = max(cands)
    if bs == batch and batch > 1:
        smaller = [d for d in cands if d < batch and d * seq_len >= min_rows]
        if smaller:
            bs = max(smaller)
    return bs


def encoder_layer(x, params, *, target_rows=256):
    B, L, d = x.shape
    assert d == D
    assert L % 8 == 0
    block_seqs = _pick_block_seqs(B, L, target_rows)
    rows = block_seqs * L
    grid = (B // block_seqs,)
    xr = x.reshape(B * L, D)

    def full_spec(shape):
        return pl.BlockSpec(shape, lambda i, _s=shape: (0,) * len(_s))

    in_specs = [
        pl.BlockSpec((rows, D), lambda i: (i, 0)),      # activation row slab
        full_spec((1, D)), full_spec((1, D)),           # ln1 gamma/beta
        full_spec((D, 3 * D)),                          # Wqkv (bf16, pre-transposed)
        full_spec((D, D)), full_spec((1, D)),           # Wproj (bf16), bproj
        full_spec((1, D)), full_spec((1, D)),           # ln2 gamma/beta
        full_spec((D, FF)), full_spec((1, FF)),         # W1 (bf16), b1
        full_spec((FF, D)), full_spec((1, D)),          # W2 (bf16), b2
    ]
    out_spec = pl.BlockSpec((rows, D), lambda i: (i, 0))

    kernel = functools.partial(encoder_layer_kernel,
                               block_seqs=block_seqs, seq_len=L)

    out = pl.pallas_call(
        kernel,
        out_shape=jax.ShapeDtypeStruct((B * L, D), x.dtype),
        grid_spec=pltpu.PrefetchScalarGridSpec(
            num_scalar_prefetch=0,
            grid=grid,
            in_specs=in_specs,
            out_specs=out_spec,
            scratch_shapes=[
                pltpu.VMEM((rows, 3 * D), jnp.bfloat16),   # staged Q|K|V
                pltpu.VMEM((rows, D), jnp.float32),        # merged head outputs
            ],
        ),
        compiler_params=pltpu.CompilerParams(
            dimension_semantics=("parallel",)),
    )(xr, *params)
    return out.reshape(B, L, D)


def reference(x, params):
    """Pure-JAX reference with the same bf16-operand / f32-accumulate matmuls."""
    (ln1_g, ln1_b, wqkv, wproj, bproj,
     ln2_g, ln2_b, w1, b1, w2, b2) = params
    B, L, d = x.shape
    f32, bf16 = jnp.float32, jnp.bfloat16

    xn = _layer_norm(x, ln1_g, ln1_b)
    qkv = jnp.dot(xn.astype(bf16), wqkv, preferred_element_type=f32).astype(bf16)
    q, k, v = jnp.split(qkv, 3, axis=-1)

    def split_heads(t):
        return t.reshape(B, L, H, DK).transpose(0, 2, 1, 3)

    q, k, v = map(split_heads, (q, k, v))
    s = jnp.einsum("bhld,bhmd->bhlm", q, k,
                   preferred_element_type=f32) * (1.0 / math.sqrt(DK))
    p = jax.nn.softmax(s, axis=-1)
    o = jnp.einsum("bhlm,bhmd->bhld", p.astype(bf16), v,
                   preferred_element_type=f32)
    o = o.transpose(0, 2, 1, 3).reshape(B, L, d)
    x = x + (jnp.dot(o.astype(bf16), wproj, preferred_element_type=f32) + bproj)

    xn2 = _layer_norm(x, ln2_g, ln2_b)
    hid = _gelu_exact(jnp.dot(xn2.astype(bf16), w1,
                              preferred_element_type=f32) + b1)
    x = x + (jnp.dot(hid.astype(bf16), w2, preferred_element_type=f32) + b2)
    return x


def init_params(key):
    ks = jax.random.split(key, 4)
    scale = 0.02
    bf16 = jnp.bfloat16
    ln1_g = jnp.ones((1, D), jnp.float32)
    ln1_b = jnp.zeros((1, D), jnp.float32)
    wqkv = (scale * jax.random.normal(ks[0], (D, 3 * D), jnp.float32)).astype(bf16)
    wproj = (scale * jax.random.normal(ks[1], (D, D), jnp.float32)).astype(bf16)
    bproj = jnp.zeros((1, D), jnp.float32)
    ln2_g = jnp.ones((1, D), jnp.float32)
    ln2_b = jnp.zeros((1, D), jnp.float32)
    w1 = (scale * jax.random.normal(ks[2], (D, FF), jnp.float32)).astype(bf16)
    b1 = jnp.zeros((1, FF), jnp.float32)
    w2 = (scale * jax.random.normal(ks[3], (FF, D), jnp.float32)).astype(bf16)
    b2 = jnp.zeros((1, D), jnp.float32)
    return (ln1_g, ln1_b, wqkv, wproj, bproj,
            ln2_g, ln2_b, w1, b1, w2, b2)


if __name__ == "__main__":
    key = jax.random.PRNGKey(0)
    kx, kp = jax.random.split(key)

    B, L = 4, 16
    x = jax.random.normal(kx, (B, L, D), jnp.float32)
    params = init_params(kp)

    ref = reference(x, params)

    # Single-slab path: all sequences batched into one (B*L, D) grid step.
    out = jax.block_until_ready(encoder_layer(x, params))
    assert out.shape == (B, L, D)
    assert jnp.allclose(out, ref, atol=5e-3, rtol=5e-3), (
        f"max abs err = {jnp.max(jnp.abs(out - ref))}")

    # Multi-step grid path (2 sequences / 32 rows per step) exercises row tiling.
    out2 = jax.block_until_ready(encoder_layer(x, params, target_rows=2 * L))
    assert jnp.allclose(out2, ref, atol=5e-3, rtol=5e-3), (
        f"max abs err = {jnp.max(jnp.abs(out2 - ref))}")

    print("KERNEL_OK")
</pallas_src>

<mosaic_0001>
module attributes {stable_mosaic.version = 11 : i64} {
  func.func @encoder_layer_kernel(%arg0: i32, %arg1: memref<64x128xf32, #tpu.memory_space<vmem>>, %arg2: memref<1x128xf32, #tpu.memory_space<vmem>>, %arg3: memref<1x128xf32, #tpu.memory_space<vmem>>, %arg4: memref<128x384xbf16, #tpu.memory_space<vmem>>, %arg5: memref<128x128xbf16, #tpu.memory_space<vmem>>, %arg6: memref<1x128xf32, #tpu.memory_space<vmem>>, %arg7: memref<1x128xf32, #tpu.memory_space<vmem>>, %arg8: memref<1x128xf32, #tpu.memory_space<vmem>>, %arg9: memref<128x256xbf16, #tpu.memory_space<vmem>>, %arg10: memref<1x256xf32, #tpu.memory_space<vmem>>, %arg11: memref<256x128xbf16, #tpu.memory_space<vmem>>, %arg12: memref<1x128xf32, #tpu.memory_space<vmem>>, %arg13: memref<64x128xf32, #tpu.memory_space<vmem>>, %arg14: memref<64x384xbf16, #tpu.memory_space<vmem>>, %arg15: memref<64x128xf32, #tpu.memory_space<vmem>>) attributes {dimension_semantics = [#tpu.dimension_semantics<parallel>], iteration_bounds = array<i64: 1>, scalar_prefetch = 0 : i64, scratch_operands = 2 : i64, tpu.core_type = #tpu.core_type<tc>, window_params = [{transform_indices = @transform_0, window_bounds = array<i64: 64, 128>}, {pipeline_mode = #tpu.pipeline_mode<synchronous>, transform_indices = @transform_1, window_bounds = array<i64: 1, 128>}, {pipeline_mode = #tpu.pipeline_mode<synchronous>, transform_indices = @transform_2, window_bounds = array<i64: 1, 128>}, {pipeline_mode = #tpu.pipeline_mode<synchronous>, transform_indices = @transform_3, window_bounds = array<i64: 128, 384>}, {pipeline_mode = #tpu.pipeline_mode<synchronous>, transform_indices = @transform_4, window_bounds = array<i64: 128, 128>}, {pipeline_mode = #tpu.pipeline_mode<synchronous>, transform_indices = @transform_5, window_bounds = array<i64: 1, 128>}, {pipeline_mode = #tpu.pipeline_mode<synchronous>, transform_indices = @transform_6, window_bounds = array<i64: 1, 128>}, {pipeline_mode = #tpu.pipeline_mode<synchronous>, transform_indices = @transform_7, window_bounds = array<i64: 1, 128>}, {pipeline_mode = #tpu.pipeline_mode<synchronous>, transform_indices = @transform_8, window_bounds = array<i64: 128, 256>}, {pipeline_mode = #tpu.pipeline_mode<synchronous>, transform_indices = @transform_9, window_bounds = array<i64: 1, 256>}, {pipeline_mode = #tpu.pipeline_mode<synchronous>, transform_indices = @transform_10, window_bounds = array<i64: 256, 128>}, {pipeline_mode = #tpu.pipeline_mode<synchronous>, transform_indices = @transform_11, window_bounds = array<i64: 1, 128>}, {transform_indices = @transform_12, window_bounds = array<i64: 64, 128>}]} {
    %c0 = arith.constant 0 : index
    %c0_0 = arith.constant 0 : index
    %0 = vector.load %arg1[%c0, %c0_0] : memref<64x128xf32, #tpu.memory_space<vmem>>, vector<64x128xf32>
    %c0_1 = arith.constant 0 : index
    %c0_2 = arith.constant 0 : index
    %1 = vector.load %arg2[%c0_1, %c0_2] : memref<1x128xf32, #tpu.memory_space<vmem>>, vector<1x128xf32>
    %c0_3 = arith.constant 0 : index
    %c0_4 = arith.constant 0 : index
    %2 = vector.load %arg3[%c0_3, %c0_4] : memref<1x128xf32, #tpu.memory_space<vmem>>, vector<1x128xf32>
    %cst = arith.constant dense<0.000000e+00> : vector<64xf32>
    %3 = vector.multi_reduction <add>, %0, %cst [1] : vector<64x128xf32> to vector<64xf32>
    %4 = vector.shape_cast %3 : vector<64xf32> to vector<64x1xf32>
    %cst_5 = arith.constant 1.280000e+02 : f32
    %5 = vector.broadcast %cst_5 : f32 to vector<64x1xf32>
    %6 = arith.divf %4, %5 : vector<64x1xf32>
    %7 = vector.broadcast %6 : vector<64x1xf32> to vector<64x128xf32>
    %8 = arith.subf %0, %7 : vector<64x128xf32>
    %9 = arith.mulf %8, %8 : vector<64x128xf32>
    %cst_6 = arith.constant dense<0.000000e+00> : vector<64xf32>
    %10 = vector.multi_reduction <add>, %9, %cst_6 [1] : vector<64x128xf32> to vector<64xf32>
    %11 = vector.shape_cast %10 : vector<64xf32> to vector<64x1xf32>
    %cst_7 = arith.constant 1.280000e+02 : f32
    %12 = vector.broadcast %cst_7 : f32 to vector<64x1xf32>
    %13 = arith.divf %11, %12 : vector<64x1xf32>
    %14 = vector.broadcast %6 : vector<64x1xf32> to vector<64x128xf32>
    %15 = arith.subf %0, %14 : vector<64x128xf32>
    %cst_8 = arith.constant 9.99999974E-6 : f32
    %16 = vector.broadcast %cst_8 : f32 to vector<64x1xf32>
    %17 = arith.addf %13, %16 : vector<64x1xf32>
    %18 = math.rsqrt %17 : vector<64x1xf32>
    %19 = vector.broadcast %18 : vector<64x1xf32> to vector<64x128xf32>
    %20 = arith.mulf %15, %19 : vector<64x128xf32>
    %21 = vector.broadcast %1 : vector<1x128xf32> to vector<64x128xf32>
    %22 = arith.mulf %20, %21 : vector<64x128xf32>
    %23 = vector.broadcast %2 : vector<1x128xf32> to vector<64x128xf32>
    %24 = arith.addf %22, %23 : vector<64x128xf32>
    %25 = arith.truncf %24 : vector<64x128xf32> to vector<64x128xbf16>
    %c0_9 = arith.constant 0 : index
    %c0_10 = arith.constant 0 : index
    %26 = vector.load %arg4[%c0_9, %c0_10] : memref<128x384xbf16, #tpu.memory_space<vmem>>, vector<128x384xbf16>
    %cst_11 = arith.constant dense<0.000000e+00> : vector<64x384xf32>
    %27 = tpu.matmul %25, %26, %cst_11 {dimension_numbers = #tpu.dot_dimension_numbers<[1], [0], [0], [1], [0, 0, 1, 1], [], []>} : vector<64x128xbf16>, vector<128x384xbf16>, vector<64x384xf32> -> vector<64x384xf32>
    %28 = arith.truncf %27 : vector<64x384xf32> to vector<64x384xbf16>
    %c0_12 = arith.constant 0 : index
    %c0_13 = arith.constant 0 : index
    %29 = vector.load %arg14[%c0_12, %c0_13] : memref<64x384xbf16, #tpu.memory_space<vmem>>, vector<64x384xbf16>
    tpu.vector_store %arg14[%c0_12, %c0_13], %28 {strides = array<i32>} : memref<64x384xbf16, #tpu.memory_space<vmem>>, vector<64x384xbf16>,
    %c0_14 = arith.constant 0 : index
    %c0_15 = arith.constant 0 : index
    %30 = vector.load %arg14[%c0_14, %c0_15] : memref<64x384xbf16, #tpu.memory_space<vmem>>, vector<16x16xbf16>
    %c0_16 = arith.constant 0 : index
    %c128 = arith.constant 128 : index
    %31 = vector.load %arg14[%c0_16, %c128] : memref<64x384xbf16, #tpu.memory_space<vmem>>, vector<16x16xbf16>
    %c0_17 = arith.constant 0 : index
    %c256 = arith.constant 256 : index
    %32 = vector.load %arg14[%c0_17, %c256] : memref<64x384xbf16, #tpu.memory_space<vmem>>, vector<16x16xbf16>
    %cst_18 = arith.constant dense<0.000000e+00> : vector<16x16xf32>
    %33 = tpu.matmul %30, %31, %cst_18 {dimension_numbers = #tpu.dot_dimension_numbers<[1], [1], [0], [0], [0, 0, 1, 0], [], []>} : vector<16x16xbf16>, vector<16x16xbf16>, vector<16x16xf32> -> vector<16x16xf32>
    %cst_19 = arith.constant 2.500000e-01 : f32
    %34 = vector.broadcast %cst_19 : f32 to vector<16x16xf32>
    %35 = arith.mulf %33, %34 : vector<16x16xf32>
    %cst_20 = arith.constant dense<0xFF800000> : vector<16xf32>
    %36 = vector.multi_reduction <maximumf>, %35, %cst_20 [1] : vector<16x16xf32> to vector<16xf32>
    %37 = vector.shape_cast %36 : vector<16xf32> to vector<16x1xf32>
    %38 = vector.broadcast %37 : vector<16x1xf32> to vector<16x16xf32>
    %39 = arith.subf %35, %38 : vector<16x16xf32>
    %40 = math.exp %39 : vector<16x16xf32>
    %cst_21 = arith.constant dense<0.000000e+00> : vector<16xf32>
    %41 = vector.multi_reduction <add>, %40, %cst_21 [1] : vector<16x16xf32> to vector<16xf32>
    %42 = vector.shape_cast %41 : vector<16xf32> to vector<16x1xf32>
    %43 = arith.truncf %40 : vector<16x16xf32> to vector<16x16xbf16>
    %cst_22 = arith.constant dense<0.000000e+00> : vector<16x16xf32>
    %44 = tpu.matmul %43, %32, %cst_22 {dimension_numbers = #tpu.dot_dimension_numbers<[1], [0], [0], [1], [0, 0, 1, 1], [], []>} : vector<16x16xbf16>, vector<16x16xbf16>, vector<16x16xf32> -> vector<16x16xf32>
    %45 = tpu.reciprocal %42 {approx = true} : vector<16x1xf32> -> vector<16x1xf32>
    %46 = vector.broadcast %45 : vector<16x1xf32> to vector<16x16xf32>
    %47 = arith.mulf %44, %46 : vector<16x16xf32>
    %c0_23 = arith.constant 0 : index
    %c0_24 = arith.constant 0 : index
    %48 = vector.load %arg15[%c0_23, %c0_24] : memref<64x128xf32, #tpu.memory_space<vmem>>, vector<16x16xf32>
    tpu.vector_store %arg15[%c0_23, %c0_24], %47 {strides = array<i32>} : memref<64x128xf32, #tpu.memory_space<vmem>>, vector<16x16xf32>,
    %c0_25 = arith.constant 0 : index
    %c16 = arith.constant 16 : index
    %49 = vector.load %arg14[%c0_25, %c16] : memref<64x384xbf16, #tpu.memory_space<vmem>>, vector<16x16xbf16>
    %c0_26 = arith.constant 0 : index
    %c144 = arith.constant 144 : index
    %50 = vector.load %arg14[%c0_26, %c144] : memref<64x384xbf16, #tpu.memory_space<vmem>>, vector<16x16xbf16>
    %c0_27 = arith.constant 0 : index
    %c272 = arith.constant 272 : index
    %51 = vector.load %arg14[%c0_27, %c272] : memref<64x384xbf16, #tpu.memory_space<vmem>>, vector<16x16xbf16>
    %cst_28 = arith.constant dense<0.000000e+00> : vector<16x16xf32>
    %52 = tpu.matmul %49, %50, %cst_28 {dimension_numbers = #tpu.dot_dimension_numbers<[1], [1], [0], [0], [0, 0, 1, 0], [], []>} : vector<16x16xbf16>, vector<16x16xbf16>, vector<16x16xf32> -> vector<16x16xf32>
    %cst_29 = arith.constant 2.500000e-01 : f32
    %53 = vector.broadcast %cst_29 : f32 to vector<16x16xf32>
    %54 = arith.mulf %52, %53 : vector<16x16xf32>
    %cst_30 = arith.constant dense<0xFF800000> : vector<16xf32>
    %55 = vector.multi_reduction <maximumf>, %54, %cst_30 [1] : vector<16x16xf32> to vector<16xf32>
    %56 = vector.shape_cast %55 : vector<16xf32> to vector<16x1xf32>
    %57 = vector.broadcast %56 : vector<16x1xf32> to vector<16x16xf32>
    %58 = arith.subf %54, %57 : vector<16x16xf32>
    %59 = math.exp %58 : vector<16x16xf32>
    %cst_31 = arith.constant dense<0.000000e+00> : vector<16xf32>
    %60 = vector.multi_reduction <add>, %59, %cst_31 [1] : vector<16x16xf32> to vector<16xf32>
    %61 = vector.shape_cast %60 : vector<16xf32> to vector<16x1xf32>
    %62 = arith.truncf %59 : vector<16x16xf32> to vector<16x16xbf16>
    %cst_32 = arith.constant dense<0.000000e+00> : vector<16x16xf32>
    %63 = tpu.matmul %62, %51, %cst_32 {dimension_numbers = #tpu.dot_dimension_numbers<[1], [0], [0], [1], [0, 0, 1, 1], [], []>} : vector<16x16xbf16>, vector<16x16xbf16>, vector<16x16xf32> -> vector<16x16xf32>
    %64 = tpu.reciprocal %61 {approx = true} : vector<16x1xf32> -> vector<16x1xf32>
    %65 = vector.broadcast %64 : vector<16x1xf32> to vector<16x16xf32>
    %66 = arith.mulf %63, %65 : vector<16x16xf32>
    %c0_33 = arith.constant 0 : index
    %c16_34 = arith.constant 16 : index
    %67 = vector.load %arg15[%c0_33, %c16_34] : memref<64x128xf32, #tpu.memory_space<vmem>>, vector<16x16xf32>
    tpu.vector_store %arg15[%c0_33, %c16_34], %66 {strides = array<i32>} : memref<64x128xf32, #tpu.memory_space<vmem>>, vector<16x16xf32>,
    %c0_35 = arith.constant 0 : index
    %c32 = arith.constant 32 : index
    %68 = vector.load %arg14[%c0_35, %c32] : memref<64x384xbf16, #tpu.memory_space<vmem>>, vector<16x16xbf16>
    %c0_36 = arith.constant 0 : index
    %c160 = arith.constant 160 : index
    %69 = vector.load %arg14[%c0_36, %c160] : memref<64x384xbf16, #tpu.memory_space<vmem>>, vector<16x16xbf16>
    %c0_37 = arith.constant 0 : index
    %c288 = arith.constant 288 : index
    %70 = vector.load %arg14[%c0_37, %c288] : memref<64x384xbf16, #tpu.memory_space<vmem>>, vector<16x16xbf16>
    %cst_38 = arith.constant dense<0.000000e+00> : vector<16x16xf32>
    %71 = tpu.matmul %68, %69, %cst_38 {dimension_numbers = #tpu.dot_dimension_numbers<[1], [1], [0], [0], [0, 0, 1, 0], [], []>} : vector<16x16xbf16>, vector<16x16xbf16>, vector<16x16xf32> -> vector<16x16xf32>
    %cst_39 = arith.constant 2.500000e-01 : f32
    %72 = vector.broadcast %cst_39 : f32 to vector<16x16xf32>
    %73 = arith.mulf %71, %72 : vector<16x16xf32>
    %cst_40 = arith.constant dense<0xFF800000> : vector<16xf32>
    %74 = vector.multi_reduction <maximumf>, %73, %cst_40 [1] : vector<16x16xf32> to vector<16xf32>
    %75 = vector.shape_cast %74 : vector<16xf32> to vector<16x1xf32>
    %76 = vector.broadcast %75 : vector<16x1xf32> to vector<16x16xf32>
    %77 = arith.subf %73, %76 : vector<16x16xf32>
    %78 = math.exp %77 : vector<16x16xf32>
    %cst_41 = arith.constant dense<0.000000e+00> : vector<16xf32>
    %79 = vector.multi_reduction <add>, %78, %cst_41 [1] : vector<16x16xf32> to vector<16xf32>
    %80 = vector.shape_cast %79 : vector<16xf32> to vector<16x1xf32>
    %81 = arith.truncf %78 : vector<16x16xf32> to vector<16x16xbf16>
    %cst_42 = arith.constant dense<0.000000e+00> : vector<16x16xf32>
    %82 = tpu.matmul %81, %70, %cst_42 {dimension_numbers = #tpu.dot_dimension_numbers<[1], [0], [0], [1], [0, 0, 1, 1], [], []>} : vector<16x16xbf16>, vector<16x16xbf16>, vector<16x16xf32> -> vector<16x16xf32>
    %83 = tpu.reciprocal %80 {approx = true} : vector<16x1xf32> -> vector<16x1xf32>
    %84 = vector.broadcast %83 : vector<16x1xf32> to vector<16x16xf32>
    %85 = arith.mulf %82, %84 : vector<16x16xf32>
    %c0_43 = arith.constant 0 : index
    %c32_44 = arith.constant 32 : index
    %86 = vector.load %arg15[%c0_43, %c32_44] : memref<64x128xf32, #tpu.memory_space<vmem>>, vector<16x16xf32>
    tpu.vector_store %arg15[%c0_43, %c32_44], %85 {strides = array<i32>} : memref<64x128xf32, #tpu.memory_space<vmem>>, vector<16x16xf32>,
    %c0_45 = arith.constant 0 : index
    %c48 = arith.constant 48 : index
    %87 = vector.load %arg14[%c0_45, %c48] : memref<64x384xbf16, #tpu.memory_space<vmem>>, vector<16x16xbf16>
    %c0_46 = arith.constant 0 : index
    %c176 = arith.constant 176 : index
    %88 = vector.load %arg14[%c0_46, %c176] : memref<64x384xbf16, #tpu.memory_space<vmem>>, vector<16x16xbf16>
    %c0_47 = arith.constant 0 : index
    %c304 = arith.constant 304 : index
    %89 = vector.load %arg14[%c0_47, %c304] : memref<64x384xbf16, #tpu.memory_space<vmem>>, vector<16x16xbf16>
    %cst_48 = arith.constant dense<0.000000e+00> : vector<16x16xf32>
    %90 = tpu.matmul %87, %88, %cst_48 {dimension_numbers = #tpu.dot_dimension_numbers<[1], [1], [0], [0], [0, 0, 1, 0], [], []>} : vector<16x16xbf16>, vector<16x16xbf16>, vector<16x16xf32> -> vector<16x16xf32>
    %cst_49 = arith.constant 2.500000e-01 : f32
    %91 = vector.broadcast %cst_49 : f32 to vector<16x16xf32>
    %92 = arith.mulf %90, %91 : vector<16x16xf32>
    %cst_50 = arith.constant dense<0xFF800000> : vector<16xf32>
    %93 = vector.multi_reduction <maximumf>, %92, %cst_50 [1] : vector<16x16xf32> to vector<16xf32>
    %94 = vector.shape_cast %93 : vector<16xf32> to vector<16x1xf32>
    %95 = vector.broadcast %94 : vector<16x1xf32> to vector<16x16xf32>
    %96 = arith.subf %92, %95 : vector<16x16xf32>
    %97 = math.exp %96 : vector<16x16xf32>
    %cst_51 = arith.constant dense<0.000000e+00> : vector<16xf32>
    %98 = vector.multi_reduction <add>, %97, %cst_51 [1] : vector<16x16xf32> to vector<16xf32>
    %99 = vector.shape_cast %98 : vector<16xf32> to vector<16x1xf32>
    %100 = arith.truncf %97 : vector<16x16xf32> to vector<16x16xbf16>
    %cst_52 = arith.constant dense<0.000000e+00> : vector<16x16xf32>
    %101 = tpu.matmul %100, %89, %cst_52 {dimension_numbers = #tpu.dot_dimension_numbers<[1], [0], [0], [1], [0, 0, 1, 1], [], []>} : vector<16x16xbf16>, vector<16x16xbf16>, vector<16x16xf32> -> vector<16x16xf32>
    %102 = tpu.reciprocal %99 {approx = true} : vector<16x1xf32> -> vector<16x1xf32>
    %103 = vector.broadcast %102 : vector<16x1xf32> to vector<16x16xf32>
    %104 = arith.mulf %101, %103 : vector<16x16xf32>
    %c0_53 = arith.constant 0 : index
    %c48_54 = arith.constant 48 : index
    %105 = vector.load %arg15[%c0_53, %c48_54] : memref<64x128xf32, #tpu.memory_space<vmem>>, vector<16x16xf32>
    tpu.vector_store %arg15[%c0_53, %c48_54], %104 {strides = array<i32>} : memref<64x128xf32, #tpu.memory_space<vmem>>, vector<16x16xf32>,
    %c0_55 = arith.constant 0 : index
    %c64 = arith.constant 64 : index
    %106 = vector.load %arg14[%c0_55, %c64] : memref<64x384xbf16, #tpu.memory_space<vmem>>, vector<16x16xbf16>
    %c0_56 = arith.constant 0 : index
    %c192 = arith.constant 192 : index
    %107 = vector.load %arg14[%c0_56, %c192] : memref<64x384xbf16, #tpu.memory_space<vmem>>, vector<16x16xbf16>
    %c0_57 = arith.constant 0 : index
    %c320 = arith.constant 320 : index
    %108 = vector.load %arg14[%c0_57, %c320] : memref<64x384xbf16, #tpu.memory_space<vmem>>, vector<16x16xbf16>
    %cst_58 = arith.constant dense<0.000000e+00> : vector<16x16xf32>
    %109 = tpu.matmul %106, %107, %cst_58 {dimension_numbers = #tpu.dot_dimension_numbers<[1], [1], [0], [0], [0, 0, 1, 0], [], []>} : vector<16x16xbf16>, vector<16x16xbf16>, vector<16x16xf32> -> vector<16x16xf32>
    %cst_59 = arith.constant 2.500000e-01 : f32
    %110 = vector.broadcast %cst_59 : f32 to vector<16x16xf32>
    %111 = arith.mulf %109, %110 : vector<16x16xf32>
    %cst_60 = arith.constant dense<0xFF800000> : vector<16xf32>
    %112 = vector.multi_reduction <maximumf>, %111, %cst_60 [1] : vector<16x16xf32> to vector<16xf32>
    %113 = vector.shape_cast %112 : vector<16xf32> to vector<16x1xf32>
    %114 = vector.broadcast %113 : vector<16x1xf32> to vector<16x16xf32>
    %115 = arith.subf %111, %114 : vector<16x16xf32>
    %116 = math.exp %115 : vector<16x16xf32>
    %cst_61 = arith.constant dense<0.000000e+00> : vector<16xf32>
    %117 = vector.multi_reduction <add>, %116, %cst_61 [1] : vector<16x16xf32> to vector<16xf32>
    %118 = vector.shape_cast %117 : vector<16xf32> to vector<16x1xf32>
    %119 = arith.truncf %116 : vector<16x16xf32> to vector<16x16xbf16>
    %cst_62 = arith.constant dense<0.000000e+00> : vector<16x16xf32>
    %120 = tpu.matmul %119, %108, %cst_62 {dimension_numbers = #tpu.dot_dimension_numbers<[1], [0], [0], [1], [0, 0, 1, 1], [], []>} : vector<16x16xbf16>, vector<16x16xbf16>, vector<16x16xf32> -> vector<16x16xf32>
    %121 = tpu.reciprocal %118 {approx = true} : vector<16x1xf32> -> vector<16x1xf32>
    %122 = vector.broadcast %121 : vector<16x1xf32> to vector<16x16xf32>
    %123 = arith.mulf %120, %122 : vector<16x16xf32>
    %c0_63 = arith.constant 0 : index
    %c64_64 = arith.constant 64 : index
    %124 = vector.load %arg15[%c0_63, %c64_64] : memref<64x128xf32, #tpu.memory_space<vmem>>, vector<16x16xf32>
    tpu.vector_store %arg15[%c0_63, %c64_64], %123 {strides = array<i32>} : memref<64x128xf32, #tpu.memory_space<vmem>>, vector<16x16xf32>,
    %c0_65 = arith.constant 0 : index
    %c80 = arith.constant 80 : index
    %125 = vector.load %arg14[%c0_65, %c80] : memref<64x384xbf16, #tpu.memory_space<vmem>>, vector<16x16xbf16>
    %c0_66 = arith.constant 0 : index
    %c208 = arith.constant 208 : index
    %126 = vector.load %arg14[%c0_66, %c208] : memref<64x384xbf16, #tpu.memory_space<vmem>>, vector<16x16xbf16>
    %c0_67 = arith.constant 0 : index
    %c336 = arith.constant 336 : index
    %127 = vector.load %arg14[%c0_67, %c336] : memref<64x384xbf16, #tpu.memory_space<vmem>>, vector<16x16xbf16>
    %cst_68 = arith.constant dense<0.000000e+00> : vector<16x16xf32>
    %128 = tpu.matmul %125, %126, %cst_68 {dimension_numbers = #tpu.dot_dimension_numbers<[1], [1], [0], [0], [0, 0, 1, 0], [], []>} : vector<16x16xbf16>, vector<16x16xbf16>, vector<16x16xf32> -> vector<16x16xf32>
    %cst_69 = arith.constant 2.500000e-01 : f32
    %129 = vector.broadcast %cst_69 : f32 to vector<16x16xf32>
    %130 = arith.mulf %128, %129 : vector<16x16xf32>
    %cst_70 = arith.constant dense<0xFF800000> : vector<16xf32>
    %131 = vector.multi_reduction <maximumf>, %130, %cst_70 [1] : vector<16x16xf32> to vector<16xf32>
    %132 = vector.shape_cast %131 : vector<16xf32> to vector<16x1xf32>
    %133 = vector.broadcast %132 : vector<16x1xf32> to vector<16x16xf32>
    %134 = arith.subf %130, %133 : vector<16x16xf32>
    %135 = math.exp %134 : vector<16x16xf32>
    %cst_71 = arith.constant dense<0.000000e+00> : vector<16xf32>
    %136 = vector.multi_reduction <add>, %135, %cst_71 [1] : vector<16x16xf32> to vector<16xf32>
    %137 = vector.shape_cast %136 : vector<16xf32> to vector<16x1xf32>
    %138 = arith.truncf %135 : vector<16x16xf32> to vector<16x16xbf16>
    %cst_72 = arith.constant dense<0.000000e+00> : vector<16x16xf32>
    %139 = tpu.matmul %138, %127, %cst_72 {dimension_numbers = #tpu.dot_dimension_numbers<[1], [0], [0], [1], [0, 0, 1, 1], [], []>} : vector<16x16xbf16>, vector<16x16xbf16>, vector<16x16xf32> -> vector<16x16xf32>
    %140 = tpu.reciprocal %137 {approx = true} : vector<16x1xf32> -> vector<16x1xf32>
    %141 = vector.broadcast %140 : vector<16x1xf32> to vector<16x16xf32>
    %142 = arith.mulf %139, %141 : vector<16x16xf32>
    %c0_73 = arith.constant 0 : index
    %c80_74 = arith.constant 80 : index
    %143 = vector.load %arg15[%c0_73, %c80_74] : memref<64x128xf32, #tpu.memory_space<vmem>>, vector<16x16xf32>
    tpu.vector_store %arg15[%c0_73, %c80_74], %142 {strides = array<i32>} : memref<64x128xf32, #tpu.memory_space<vmem>>, vector<16x16xf32>,
    %c0_75 = arith.constant 0 : index
    %c96 = arith.constant 96 : index
    %144 = vector.load %arg14[%c0_75, %c96] : memref<64x384xbf16, #tpu.memory_space<vmem>>, vector<16x16xbf16>
    %c0_76 = arith.constant 0 : index
    %c224 = arith.constant 224 : index
    %145 = vector.load %arg14[%c0_76, %c224] : memref<64x384xbf16, #tpu.memory_space<vmem>>, vector<16x16xbf16>
    %c0_77 = arith.constant 0 : index
    %c352 = arith.constant 352 : index
    %146 = vector.load %arg14[%c0_77, %c352] : memref<64x384xbf16, #tpu.memory_space<vmem>>, vector<16x16xbf16>
    %cst_78 = arith.constant dense<0.000000e+00> : vector<16x16xf32>
    %147 = tpu.matmul %144, %145, %cst_78 {dimension_numbers = #tpu.dot_dimension_numbers<[1], [1], [0], [0], [0, 0, 1, 0], [], []>} : vector<16x16xbf16>, vector<16x16xbf16>, vector<16x16xf32> -> vector<16x16xf32>
    %cst_79 = arith.constant 2.500000e-01 : f32
    %148 = vector.broadcast %cst_79 : f32 to vector<16x16xf32>
    %149 = arith.mulf %147, %148 : vector<16x16xf32>
    %cst_80 = arith.constant dense<0xFF800000> : vector<16xf32>
    %150 = vector.multi_reduction <maximumf>, %149, %cst_80 [1] : vector<16x16xf32> to vector<16xf32>
    %151 = vector.shape_cast %150 : vector<16xf32> to vector<16x1xf32>
    %152 = vector.broadcast %151 : vector<16x1xf32> to vector<16x16xf32>
    %153 = arith.subf %149, %152 : vector<16x16xf32>
    %154 = math.exp %153 : vector<16x16xf32>
    %cst_81 = arith.constant dense<0.000000e+00> : vector<16xf32>
    %155 = vector.multi_reduction <add>, %154, %cst_81 [1] : vector<16x16xf32> to vector<16xf32>
    %156 = vector.shape_cast %155 : vector<16xf32> to vector<16x1xf32>
    %157 = arith.truncf %154 : vector<16x16xf32> to vector<16x16xbf16>
    %cst_82 = arith.constant dense<0.000000e+00> : vector<16x16xf32>
    %158 = tpu.matmul %157, %146, %cst_82 {dimension_numbers = #tpu.dot_dimension_numbers<[1], [0], [0], [1], [0, 0, 1, 1], [], []>} : vector<16x16xbf16>, vector<16x16xbf16>, vector<16x16xf32> -> vector<16x16xf32>
    %159 = tpu.reciprocal %156 {approx = true} : vector<16x1xf32> -> vector<16x1xf32>
    %160 = vector.broadcast %159 : vector<16x1xf32> to vector<16x16xf32>
    %161 = arith.mulf %158, %160 : vector<16x16xf32>
    %c0_83 = arith.constant 0 : index
    %c96_84 = arith.constant 96 : index
    %162 = vector.load %arg15[%c0_83, %c96_84] : memref<64x128xf32, #tpu.memory_space<vmem>>, vector<16x16xf32>
    tpu.vector_store %arg15[%c0_83, %c96_84], %161 {strides = array<i32>} : memref<64x128xf32, #tpu.memory_space<vmem>>, vector<16x16xf32>,
    %c0_85 = arith.constant 0 : index
    %c112 = arith.constant 112 : index
    %163 = vector.load %arg14[%c0_85, %c112] : memref<64x384xbf16, #tpu.memory_space<vmem>>, vector<16x16xbf16>
    %c0_86 = arith.constant 0 : index
    %c240 = arith.constant 240 : index
    %164 = vector.load %arg14[%c0_86, %c240] : memref<64x384xbf16, #tpu.memory_space<vmem>>, vector<16x16xbf16>
    %c0_87 = arith.constant 0 : index
    %c368 = arith.constant 368 : index
    %165 = vector.load %arg14[%c0_87, %c368] : memref<64x384xbf16, #tpu.memory_space<vmem>>, vector<16x16xbf16>
    %cst_88 = arith.constant dense<0.000000e+00> : vector<16x16xf32>
    %166 = tpu.matmul %163, %164, %cst_88 {dimension_numbers = #tpu.dot_dimension_numbers<[1], [1], [0], [0], [0, 0, 1, 0], [], []>} : vector<16x16xbf16>, vector<16x16xbf16>, vector<16x16xf32> -> vector<16x16xf32>
    %cst_89 = arith.constant 2.500000e-01 : f32
    %167 = vector.broadcast %cst_89 : f32 to vector<16x16xf32>
    %168 = arith.mulf %166, %167 : vector<16x16xf32>
    %cst_90 = arith.constant dense<0xFF800000> : vector<16xf32>
    %169 = vector.multi_reduction <maximumf>, %168, %cst_90 [1] : vector<16x16xf32> to vector<16xf32>
    %170 = vector.shape_cast %169 : vector<16xf32> to vector<16x1xf32>
    %171 = vector.broadcast %170 : vector<16x1xf32> to vector<16x16xf32>
    %172 = arith.subf %168, %171 : vector<16x16xf32>
    %173 = math.exp %172 : vector<16x16xf32>
    %cst_91 = arith.constant dense<0.000000e+00> : vector<16xf32>
    %174 = vector.multi_reduction <add>, %173, %cst_91 [1] : vector<16x16xf32> to vector<16xf32>
    %175 = vector.shape_cast %174 : vector<16xf32> to vector<16x1xf32>
    %176 = arith.truncf %173 : vector<16x16xf32> to vector<16x16xbf16>
    %cst_92 = arith.constant dense<0.000000e+00> : vector<16x16xf32>
    %177 = tpu.matmul %176, %165, %cst_92 {dimension_numbers = #tpu.dot_dimension_numbers<[1], [0], [0], [1], [0, 0, 1, 1], [], []>} : vector<16x16xbf16>, vector<16x16xbf16>, vector<16x16xf32> -> vector<16x16xf32>
    %178 = tpu.reciprocal %175 {approx = true} : vector<16x1xf32> -> vector<16x1xf32>
    %179 = vector.broadcast %178 : vector<16x1xf32> to vector<16x16xf32>
    %180 = arith.mulf %177, %179 : vector<16x16xf32>
    %c0_93 = arith.constant 0 : index
    %c112_94 = arith.constant 112 : index
    %181 = vector.load %arg15[%c0_93, %c112_94] : memref<64x128xf32, #tpu.memory_space<vmem>>, vector<16x16xf32>
    tpu.vector_store %arg15[%c0_93, %c112_94], %180 {strides = array<i32>} : memref<64x128xf32, #tpu.memory_space<vmem>>, vector<16x16xf32>,
    %c16_95 = arith.constant 16 : index
    %c0_96 = arith.constant 0 : index
    %182 = vector.load %arg14[%c16_95, %c0_96] : memref<64x384xbf16, #tpu.memory_space<vmem>>, vector<16x16xbf16>
    %c16_97 = arith.constant 16 : index
    %c128_98 = arith.constant 128 : index
    %183 = vector.load %arg14[%c16_97, %c128_98] : memref<64x384xbf16, #tpu.memory_space<vmem>>, vector<16x16xbf16>
    %c16_99 = arith.constant 16 : index
    %c256_100 = arith.constant 256 : index
    %184 = vector.load %arg14[%c16_99, %c256_100] : memref<64x384xbf16, #tpu.memory_space<vmem>>, vector<16x16xbf16>
    %cst_101 = arith.constant dense<0.000000e+00> : vector<16x16xf32>
    %185 = tpu.matmul %182, %183, %cst_101 {dimension_numbers = #tpu.dot_dimension_numbers<[1], [1], [0], [0], [0, 0, 1, 0], [], []>} : vector<16x16xbf16>, vector<16x16xbf16>, vector<16x16xf32> -> vector<16x16xf32>
    %cst_102 = arith.constant 2.500000e-01 : f32
    %186 = vector.broadcast %cst_102 : f32 to vector<16x16xf32>
    %187 = arith.mulf %185, %186 : vector<16x16xf32>
    %cst_103 = arith.constant dense<0xFF800000> : vector<16xf32>
    %188 = vector.multi_reduction <maximumf>, %187, %cst_103 [1] : vector<16x16xf32> to vector<16xf32>
    %189 = vector.shape_cast %188 : vector<16xf32> to vector<16x1xf32>
    %190 = vector.broadcast %189 : vector<16x1xf32> to vector<16x16xf32>
    %191 = arith.subf %187, %190 : vector<16x16xf32>
    %192 = math.exp %191 : vector<16x16xf32>
    %cst_104 = arith.constant dense<0.000000e+00> : vector<16xf32>
    %193 = vector.multi_reduction <add>, %192, %cst_104 [1] : vector<16x16xf32> to vector<16xf32>
    %194 = vector.shape_cast %193 : vector<16xf32> to vector<16x1xf32>
    %195 = arith.truncf %192 : vector<16x16xf32> to vector<16x16xbf16>
    %cst_105 = arith.constant dense<0.000000e+00> : vector<16x16xf32>
    %196 = tpu.matmul %195, %184, %cst_105 {dimension_numbers = #tpu.dot_dimension_numbers<[1], [0], [0], [1], [0, 0, 1, 1], [], []>} : vector<16x16xbf16>, vector<16x16xbf16>, vector<16x16xf32> -> vector<16x16xf32>
    %197 = tpu.reciprocal %194 {approx = true} : vector<16x1xf32> -> vector<16x1xf32>
    %198 = vector.broadcast %197 : vector<16x1xf32> to vector<16x16xf32>
    %199 = arith.mulf %196, %198 : vector<16x16xf32>
    %c16_106 = arith.constant 16 : index
    %c0_107 = arith.constant 0 : index
    %200 = vector.load %arg15[%c16_106, %c0_107] : memref<64x128xf32, #tpu.memory_space<vmem>>, vector<16x16xf32>
    tpu.vector_store %arg15[%c16_106, %c0_107], %199 {strides = array<i32>} : memref<64x128xf32, #tpu.memory_space<vmem>>, vector<16x16xf32>,
    %c16_108 = arith.constant 16 : index
    %c16_109 = arith.constant 16 : index
    %201 = vector.load %arg14[%c16_108, %c16_109] : memref<64x384xbf16, #tpu.memory_space<vmem>>, vector<16x16xbf16>
    %c16_110 = arith.constant 16 : index
    %c144_111 = arith.constant 144 : index
    %202 = vector.load %arg14[%c16_110, %c144_111] : memref<64x384xbf16, #tpu.memory_space<vmem>>, vector<16x16xbf16>
    %c16_112 = arith.constant 16 : index
    %c272_113 = arith.constant 272 : index
    %203 = vector.load %arg14[%c16_112, %c272_113] : memref<64x384xbf16, #tpu.memory_space<vmem>>, vector<16x16xbf16>
    %cst_114 = arith.constant dense<0.000000e+00> : vector<16x16xf32>
    %204 = tpu.matmul %201, %202, %cst_114 {dimension_numbers = #tpu.dot_dimension_numbers<[1], [1], [0], [0], [0, 0, 1, 0], [], []>} : vector<16x16xbf16>, vector<16x16xbf16>, vector<16x16xf32> -> vector<16x16xf32>
    %cst_115 = arith.constant 2.500000e-01 : f32
    %205 = vector.broadcast %cst_115 : f32 to vector<16x16xf32>
    %206 = arith.mulf %204, %205 : vector<16x16xf32>
    %cst_116 = arith.constant dense<0xFF800000> : vector<16xf32>
    %207 = vector.multi_reduction <maximumf>, %206, %cst_116 [1] : vector<16x16xf32> to vector<16xf32>
    %208 = vector.shape_cast %207 : vector<16xf32> to vector<16x1xf32>
    %209 = vector.broadcast %208 : vector<16x1xf32> to vector<16x16xf32>
    %210 = arith.subf %206, %209 : vector<16x16xf32>
    %211 = math.exp %210 : vector<16x16xf32>
    %cst_117 = arith.constant dense<0.000000e+00> : vector<16xf32>
    %212 = vector.multi_reduction <add>, %211, %cst_117 [1] : vector<16x16xf32> to vector<16xf32>
    %213 = vector.shape_cast %212 : vector<16xf32> to vector<16x1xf32>
    %214 = arith.truncf %211 : vector<16x16xf32> to vector<16x16xbf16>
    %cst_118 = arith.constant dense<0.000000e+00> : vector<16x16xf32>
    %215 = tpu.matmul %214, %203, %cst_118 {dimension_numbers = #tpu.dot_dimension_numbers<[1], [0], [0], [1], [0, 0, 1, 1], [], []>} : vector<16x16xbf16>, vector<16x16xbf16>, vector<16x16xf32> -> vector<16x16xf32>
    %216 = tpu.reciprocal %213 {approx = true} : vector<16x1xf32> -> vector<16x1xf32>
    %217 = vector.broadcast %216 : vector<16x1xf32> to vector<16x16xf32>
    %218 = arith.mulf %215, %217 : vector<16x16xf32>
    %c16_119 = arith.constant 16 : index
    %c16_120 = arith.constant 16 : index
    %219 = vector.load %arg15[%c16_119, %c16_120] : memref<64x128xf32, #tpu.memory_space<vmem>>, vector<16x16xf32>
    tpu.vector_store %arg15[%c16_119, %c16_120], %218 {strides = array<i32>} : memref<64x128xf32, #tpu.memory_space<vmem>>, vector<16x16xf32>,
    %c16_121 = arith.constant 16 : index
    %c32_122 = arith.constant 32 : index
    %220 = vector.load %arg14[%c16_121, %c32_122] : memref<64x384xbf16, #tpu.memory_space<vmem>>, vector<16x16xbf16>
    %c16_123 = arith.constant 16 : index
    %c160_124 = arith.constant 160 : index
    %221 = vector.load %arg14[%c16_123, %c160_124] : memref<64x384xbf16, #tpu.memory_space<vmem>>, vector<16x16xbf16>
    %c16_125 = arith.constant 16 : index
    %c288_126 = arith.constant 288 : index
    %222 = vector.load %arg14[%c16_125, %c288_126] : memref<64x384xbf16, #tpu.memory_space<vmem>>, vector<16x16xbf16>
    %cst_127 = arith.constant dense<0.000000e+00> : vector<16x16xf32>
    %223 = tpu.matmul %220, %221, %cst_127 {dimension_numbers = #tpu.dot_dimension_numbers<[1], [1], [0], [0], [0, 0, 1, 0], [], []>} : vector<16x16xbf16>, vector<16x16xbf16>, vector<16x16xf32> -> vector<16x16xf32>
    %cst_128 = arith.constant 2.500000e-01 : f32
    %224 = vector.broadcast %cst_128 : f32 to vector<16x16xf32>
    %225 = arith.mulf %223, %224 : vector<16x16xf32>
    %cst_129 = arith.constant dense<0xFF800000> : vector<16xf32>
    %226 = vector.multi_reduction <maximumf>, %225, %cst_129 [1] : vector<16x16xf32> to vector<16xf32>
    %227 = vector.shape_cast %226 : vector<16xf32> to vector<16x1xf32>
    %228 = vector.broadcast %227 : vector<16x1xf32> to vector<16x16xf32>
    %229 = arith.subf %225, %228 : vector<16x16xf32>
    %230 = math.exp %229 : vector<16x16xf32>
    %cst_130 = arith.constant dense<0.000000e+00> : vector<16xf32>
    %231 = vector.multi_reduction <add>, %230, %cst_130 [1] : vector<16x16xf32> to vector<16xf32>
    %232 = vector.shape_cast %231 : vector<16xf32> to vector<16x1xf32>
    %233 = arith.truncf %230 : vector<16x16xf32> to vector<16x16xbf16>
    %cst_131 = arith.constant dense<0.000000e+00> : vector<16x16xf32>
    %234 = tpu.matmul %233, %222, %cst_131 {dimension_numbers = #tpu.dot_dimension_numbers<[1], [0], [0], [1], [0, 0, 1, 1], [], []>} : vector<16x16xbf16>, vector<16x16xbf16>, vector<16x16xf32> -> vector<16x16xf32>
    %235 = tpu.reciprocal %232 {approx = true} : vector<16x1xf32> -> vector<16x1xf32>
    %236 = vector.broadcast %235 : vector<16x1xf32> to vector<16x16xf32>
    %237 = arith.mulf %234, %236 : vector<16x16xf32>
    %c16_132 = arith.constant 16 : index
    %c32_133 = arith.constant 32 : index
    %238 = vector.load %arg15[%c16_132, %c32_133] : memref<64x128xf32, #tpu.memory_space<vmem>>, vector<16x16xf32>
    tpu.vector_store %arg15[%c16_132, %c32_133], %237 {strides = array<i32>} : memref<64x128xf32, #tpu.memory_space<vmem>>, vector<16x16xf32>,
    %c16_134 = arith.constant 16 : index
    %c48_135 = arith.constant 48 : index
    %239 = vector.load %arg14[%c16_134, %c48_135] : memref<64x384xbf16, #tpu.memory_space<vmem>>, vector<16x16xbf16>
    %c16_136 = arith.constant 16 : index
    %c176_137 = arith.constant 176 : index
    %240 = vector.load %arg14[%c16_136, %c176_137] : memref<64x384xbf16, #tpu.memory_space<vmem>>, vector<16x16xbf16>
    %c16_138 = arith.constant 16 : index
    %c304_139 = arith.constant 304 : index
    %241 = vector.load %arg14[%c16_138, %c304_139] : memref<64x384xbf16, #tpu.memory_space<vmem>>, vector<16x16xbf16>
    %cst_140 = arith.constant dense<0.000000e+00> : vector<16x16xf32>
    %242 = tpu.matmul %239, %240, %cst_140 {dimension_numbers = #tpu.dot_dimension_numbers<[1], [1], [0], [0], [0, 0, 1, 0], [], []>} : vector<16x16xbf16>, vector<16x16xbf16>, vector<16x16xf32> -> vector<16x16xf32>
    %cst_141 = arith.constant 2.500000e-01 : f32
    %243 = vector.broadcast %cst_141 : f32 to vector<16x16xf32>
    %244 = arith.mulf %242, %243 : vector<16x16xf32>
    %cst_142 = arith.constant dense<0xFF800000> : vector<16xf32>
    %245 = vector.multi_reduction <maximumf>, %244, %cst_142 [1] : vector<16x16xf32> to vector<16xf32>
    %246 = vector.shape_cast %245 : vector<16xf32> to vector<16x1xf32>
    %247 = vector.broadcast %246 : vector<16x1xf32> to vector<16x16xf32>
    %248 = arith.subf %244, %247 : vector<16x16xf32>
    %249 = math.exp %248 : vector<16x16xf32>
    %cst_143 = arith.constant dense<0.000000e+00> : vector<16xf32>
    %250 = vector.multi_reduction <add>, %249, %cst_143 [1] : vector<16x16xf32> to vector<16xf32>
    %251 = vector.shape_cast %250 : vector<16xf32> to vector<16x1xf32>
    %252 = arith.truncf %249 : vector<16x16xf32> to vector<16x16xbf16>
    %cst_144 = arith.constant dense<0.000000e+00> : vector<16x16xf32>
    %253 = tpu.matmul %252, %241, %cst_144 {dimension_numbers = #tpu.dot_dimension_numbers<[1], [0], [0], [1], [0, 0, 1, 1], [], []>} : vector<16x16xbf16>, vector<16x16xbf16>, vector<16x16xf32> -> vector<16x16xf32>
    %254 = tpu.reciprocal %251 {approx = true} : vector<16x1xf32> -> vector<16x1xf32>
    %255 = vector.broadcast %254 : vector<16x1xf32> to vector<16x16xf32>
    %256 = arith.mulf %253, %255 : vector<16x16xf32>
    %c16_145 = arith.constant 16 : index
    %c48_146 = arith.constant 48 : index
    %257 = vector.load %arg15[%c16_145, %c48_146] : memref<64x128xf32, #tpu.memory_space<vmem>>, vector<16x16xf32>
    tpu.vector_store %arg15[%c16_145, %c48_146], %256 {strides = array<i32>} : memref<64x128xf32, #tpu.memory_space<vmem>>, vector<16x16xf32>,
    %c16_147 = arith.constant 16 : index
    %c64_148 = arith.constant 64 : index
    %258 = vector.load %arg14[%c16_147, %c64_148] : memref<64x384xbf16, #tpu.memory_space<vmem>>, vector<16x16xbf16>
    %c16_149 = arith.constant 16 : index
    %c192_150 = arith.constant 192 : index
    %259 = vector.load %arg14[%c16_149, %c192_150] : memref<64x384xbf16, #tpu.memory_space<vmem>>, vector<16x16xbf16>
    %c16_151 = arith.constant 16 : index
    %c320_152 = arith.constant 320 : index
    %260 = vector.load %arg14[%c16_151, %c320_152] : memref<64x384xbf16, #tpu.memory_space<vmem>>, vector<16x16xbf16>
    %cst_153 = arith.constant dense<0.000000e+00> : vector<16x16xf32>
    %261 = tpu.matmul %258, %259, %cst_153 {dimension_numbers = #tpu.dot_dimension_numbers<[1], [1], [0], [0], [0, 0, 1, 0], [], []>} : vector<16x16xbf16>, vector<16x16xbf16>, vector<16x16xf32> -> vector<16x16xf32>
    %cst_154 = arith.constant 2.500000e-01 : f32
    %262 = vector.broadcast %cst_154 : f32 to vector<16x16xf32>
    %263 = arith.mulf %261, %262 : vector<16x16xf32>
    %cst_155 = arith.constant dense<0xFF800000> : vector<16xf32>
    %264 = vector.multi_reduction <maximumf>, %263, %cst_155 [1] : vector<16x16xf32> to vector<16xf32>
    %265 = vector.shape_cast %264 : vector<16xf32> to vector<16x1xf32>
    %266 = vector.broadcast %265 : vector<16x1xf32> to vector<16x16xf32>
    %267 = arith.subf %263, %266 : vector<16x16xf32>
    %268 = math.exp %267 : vector<16x16xf32>
    %cst_156 = arith.constant dense<0.000000e+00> : vector<16xf32>
    %269 = vector.multi_reduction <add>, %268, %cst_156 [1] : vector<16x16xf32> to vector<16xf32>
    %270 = vector.shape_cast %269 : vector<16xf32> to vector<16x1xf32>
    %271 = arith.truncf %268 : vector<16x16xf32> to vector<16x16xbf16>
    %cst_157 = arith.constant dense<0.000000e+00> : vector<16x16xf32>
    %272 = tpu.matmul %271, %260, %cst_157 {dimension_numbers = #tpu.dot_dimension_numbers<[1], [0], [0], [1], [0, 0, 1, 1], [], []>} : vector<16x16xbf16>, vector<16x16xbf16>, vector<16x16xf32> -> vector<16x16xf32>
    %273 = tpu.reciprocal %270 {approx = true} : vector<16x1xf32> -> vector<16x1xf32>
    %274 = vector.broadcast %273 : vector<16x1xf32> to vector<16x16xf32>
    %275 = arith.mulf %272, %274 : vector<16x16xf32>
    %c16_158 = arith.constant 16 : index
    %c64_159 = arith.constant 64 : index
    %276 = vector.load %arg15[%c16_158, %c64_159] : memref<64x128xf32, #tpu.memory_space<vmem>>, vector<16x16xf32>
    tpu.vector_store %arg15[%c16_158, %c64_159], %275 {strides = array<i32>} : memref<64x128xf32, #tpu.memory_space<vmem>>, vector<16x16xf32>,
    %c16_160 = arith.constant 16 : index
    %c80_161 = arith.constant 80 : index
    %277 = vector.load %arg14[%c16_160, %c80_161] : memref<64x384xbf16, #tpu.memory_space<vmem>>, vector<16x16xbf16>
    %c16_162 = arith.constant 16 : index
    %c208_163 = arith.constant 208 : index
    %278 = vector.load %arg14[%c16_162, %c208_163] : memref<64x384xbf16, #tpu.memory_space<vmem>>, vector<16x16xbf16>
    %c16_164 = arith.constant 16 : index
    %c336_165 = arith.constant 336 : index
    %279 = vector.load %arg14[%c16_164, %c336_165] : memref<64x384xbf16, #tpu.memory_space<vmem>>, vector<16x16xbf16>
    %cst_166 = arith.constant dense<0.000000e+00> : vector<16x16xf32>
    %280 = tpu.matmul %277, %278, %cst_166 {dimension_numbers = #tpu.dot_dimension_numbers<[1], [1], [0], [0], [0, 0, 1, 0], [], []>} : vector<16x16xbf16>, vector<16x16xbf16>, vector<16x16xf32> -> vector<16x16xf32>
    %cst_167 = arith.constant 2.500000e-01 : f32
    %281 = vector.broadcast %cst_167 : f32 to vector<16x16xf32>
    %282 = arith.mulf %280, %281 : vector<16x16xf32>
    %cst_168 = arith.constant dense<0xFF800000> : vector<16xf32>
    %283 = vector.multi_reduction <maximumf>, %282, %cst_168 [1] : vector<16x16xf32> to vector<16xf32>
    %284 = vector.shape_cast %283 : vector<16xf32> to vector<16x1xf32>
    %285 = vector.broadcast %284 : vector<16x1xf32> to vector<16x16xf32>
    %286 = arith.subf %282, %285 : vector<16x16xf32>
    %287 = math.exp %286 : vector<16x16xf32>
    %cst_169 = arith.constant dense<0.000000e+00> : vector<16xf32>
    %288 = vector.multi_reduction <add>, %287, %cst_169 [1] : vector<16x16xf32> to vector<16xf32>
    %289 = vector.shape_cast %288 : vector<16xf32> to vector<16x1xf32>
    %290 = arith.truncf %287 : vector<16x16xf32> to vector<16x16xbf16>
    %cst_170 = arith.constant dense<0.000000e+00> : vector<16x16xf32>
    %291 = tpu.matmul %290, %279, %cst_170 {dimension_numbers = #tpu.dot_dimension_numbers<[1], [0], [0], [1], [0, 0, 1, 1], [], []>} : vector<16x16xbf16>, vector<16x16xbf16>, vector<16x16xf32> -> vector<16x16xf32>
    %292 = tpu.reciprocal %289 {approx = true} : vector<16x1xf32> -> vector<16x1xf32>
    %293 = vector.broadcast %292 : vector<16x1xf32> to vector<16x16xf32>
    %294 = arith.mulf %291, %293 : vector<16x16xf32>
    %c16_171 = arith.constant 16 : index
    %c80_172 = arith.constant 80 : index
    %295 = vector.load %arg15[%c16_171, %c80_172] : memref<64x128xf32, #tpu.memory_space<vmem>>, vector<16x16xf32>
    tpu.vector_store %arg15[%c16_171, %c80_172], %294 {strides = array<i32>} : memref<64x128xf32, #tpu.memory_space<vmem>>, vector<16x16xf32>,
    %c16_173 = arith.constant 16 : index
    %c96_174 = arith.constant 96 : index
    %296 = vector.load %arg14[%c16_173, %c96_174] : memref<64x384xbf16, #tpu.memory_space<vmem>>, vector<16x16xbf16>
    %c16_175 = arith.constant 16 : index
    %c224_176 = arith.constant 224 : index
    %297 = vector.load %arg14[%c16_175, %c224_176] : memref<64x384xbf16, #tpu.memory_space<vmem>>, vector<16x16xbf16>
    %c16_177 = arith.constant 16 : index
    %c352_178 = arith.constant 352 : index
    %298 = vector.load %arg14[%c16_177, %c352_178] : memref<64x384xbf16, #tpu.memory_space<vmem>>, vector<16x16xbf16>
    %cst_179 = arith.constant dense<0.000000e+00> : vector<16x16xf32>
    %299 = tpu.matmul %296, %297, %cst_179 {dimension_numbers = #tpu.dot_dimension_numbers<[1], [1], [0], [0], [0, 0, 1, 0], [], []>} : vector<16x16xbf16>, vector<16x16xbf16>, vector<16x16xf32> -> vector<16x16xf32>
    %cst_180 = arith.constant 2.500000e-01 : f32
    %300 = vector.broadcast %cst_180 : f32 to vector<16x16xf32>
    %301 = arith.mulf %299, %300 : vector<16x16xf32>
    %cst_181 = arith.constant dense<0xFF800000> : vector<16xf32>
    %302 = vector.multi_reduction <maximumf>, %301, %cst_181 [1] : vector<16x16xf32> to vector<16xf32>
    %303 = vector.shape_cast %302 : vector<16xf32> to vector<16x1xf32>
    %304 = vector.broadcast %303 : vector<16x1xf32> to vector<16x16xf32>
    %305 = arith.subf %301, %304 : vector<16x16xf32>
    %306 = math.exp %305 : vector<16x16xf32>
    %cst_182 = arith.constant dense<0.000000e+00> : vector<16xf32>
    %307 = vector.multi_reduction <add>, %306, %cst_182 [1] : vector<16x16xf32> to vector<16xf32>
    %308 = vector.shape_cast %307 : vector<16xf32> to vector<16x1xf32>
    %309 = arith.truncf %306 : vector<16x16xf32> to vector<16x16xbf16>
    %cst_183 = arith.constant dense<0.000000e+00> : vector<16x16xf32>
    %310 = tpu.matmul %309, %298, %cst_183 {dimension_numbers = #tpu.dot_dimension_numbers<[1], [0], [0], [1], [0, 0, 1, 1], [], []>} : vector<16x16xbf16>, vector<16x16xbf16>, vector<16x16xf32> -> vector<16x16xf32>
    %311 = tpu.reciprocal %308 {approx = true} : vector<16x1xf32> -> vector<16x1xf32>
    %312 = vector.broadcast %311 : vector<16x1xf32> to vector<16x16xf32>
    %313 = arith.mulf %310, %312 : vector<16x16xf32>
    %c16_184 = arith.constant 16 : index
    %c96_185 = arith.constant 96 : index
    %314 = vector.load %arg15[%c16_184, %c96_185] : memref<64x128xf32, #tpu.memory_space<vmem>>, vector<16x16xf32>
    tpu.vector_store %arg15[%c16_184, %c96_185], %313 {strides = array<i32>} : memref<64x128xf32, #tpu.memory_space<vmem>>, vector<16x16xf32>,
    %c16_186 = arith.constant 16 : index
    %c112_187 = arith.constant 112 : index
    %315 = vector.load %arg14[%c16_186, %c112_187] : memref<64x384xbf16, #tpu.memory_space<vmem>>, vector<16x16xbf16>
    %c16_188 = arith.constant 16 : index
    %c240_189 = arith.constant 240 : index
    %316 = vector.load %arg14[%c16_188, %c240_189] : memref<64x384xbf16, #tpu.memory_space<vmem>>, vector<16x16xbf16>
    %c16_190 = arith.constant 16 : index
    %c368_191 = arith.constant 368 : index
    %317 = vector.load %arg14[%c16_190, %c368_191] : memref<64x384xbf16, #tpu.memory_space<vmem>>, vector<16x16xbf16>
    %cst_192 = arith.constant dense<0.000000e+00> : vector<16x16xf32>
    %318 = tpu.matmul %315, %316, %cst_192 {dimension_numbers = #tpu.dot_dimension_numbers<[1], [1], [0], [0], [0, 0, 1, 0], [], []>} : vector<16x16xbf16>, vector<16x16xbf16>, vector<16x16xf32> -> vector<16x16xf32>
    %cst_193 = arith.constant 2.500000e-01 : f32
    %319 = vector.broadcast %cst_193 : f32 to vector<16x16xf32>
    %320 = arith.mulf %318, %319 : vector<16x16xf32>
    %cst_194 = arith.constant dense<0xFF800000> : vector<16xf32>
    %321 = vector.multi_reduction <maximumf>, %320, %cst_194 [1] : vector<16x16xf32> to vector<16xf32>
    %322 = vector.shape_cast %321 : vector<16xf32> to vector<16x1xf32>
    %323 = vector.broadcast %322 : vector<16x1xf32> to vector<16x16xf32>
    %324 = arith.subf %320, %323 : vector<16x16xf32>
    %325 = math.exp %324 : vector<16x16xf32>
    %cst_195 = arith.constant dense<0.000000e+00> : vector<16xf32>
    %326 = vector.multi_reduction <add>, %325, %cst_195 [1] : vector<16x16xf32> to vector<16xf32>
    %327 = vector.shape_cast %326 : vector<16xf32> to vector<16x1xf32>
    %328 = arith.truncf %325 : vector<16x16xf32> to vector<16x16xbf16>
    %cst_196 = arith.constant dense<0.000000e+00> : vector<16x16xf32>
    %329 = tpu.matmul %328, %317, %cst_196 {dimension_numbers = #tpu.dot_dimension_numbers<[1], [0], [0], [1], [0, 0, 1, 1], [], []>} : vector<16x16xbf16>, vector<16x16xbf16>, vector<16x16xf32> -> vector<16x16xf32>
    %330 = tpu.reciprocal %327 {approx = true} : vector<16x1xf32> -> vector<16x1xf32>
    %331 = vector.broadcast %330 : vector<16x1xf32> to vector<16x16xf32>
    %332 = arith.mulf %329, %331 : vector<16x16xf32>
    %c16_197 = arith.constant 16 : index
    %c112_198 = arith.constant 112 : index
    %333 = vector.load %arg15[%c16_197, %c112_198] : memref<64x128xf32, #tpu.memory_space<vmem>>, vector<16x16xf32>
    tpu.vector_store %arg15[%c16_197, %c112_198], %332 {strides = array<i32>} : memref<64x128xf32, #tpu.memory_space<vmem>>, vector<16x16xf32>,
    %c32_199 = arith.constant 32 : index
    %c0_200 = arith.constant 0 : index
    %334 = vector.load %arg14[%c32_199, %c0_200] : memref<64x384xbf16, #tpu.memory_space<vmem>>, vector<16x16xbf16>
    %c32_201 = arith.constant 32 : index
    %c128_202 = arith.constant 128 : index
    %335 = vector.load %arg14[%c32_201, %c128_202] : memref<64x384xbf16, #tpu.memory_space<vmem>>, vector<16x16xbf16>
    %c32_203 = arith.constant 32 : index
    %c256_204 = arith.constant 256 : index
    %336 = vector.load %arg14[%c32_203, %c256_204] : memref<64x384xbf16, #tpu.memory_space<vmem>>, vector<16x16xbf16>
    %cst_205 = arith.constant dense<0.000000e+00> : vector<16x16xf32>
    %337 = tpu.matmul %334, %335, %cst_205 {dimension_numbers = #tpu.dot_dimension_numbers<[1], [1], [0], [0], [0, 0, 1, 0], [], []>} : vector<16x16xbf16>, vector<16x16xbf16>, vector<16x16xf32> -> vector<16x16xf32>
    %cst_206 = arith.constant 2.500000e-01 : f32
    %338 = vector.broadcast %cst_206 : f32 to vector<16x16xf32>
    %339 = arith.mulf %337, %338 : vector<16x16xf32>
    %cst_207 = arith.constant dense<0xFF800000> : vector<16xf32>
    %340 = vector.multi_reduction <maximumf>, %339, %cst_207 [1] : vector<16x16xf32> to vector<16xf32>
    %341 = vector.shape_cast %340 : vector<16xf32> to vector<16x1xf32>
    %342 = vector.broadcast %341 : vector<16x1xf32> to vector<16x16xf32>
    %343 = arith.subf %339, %342 : vector<16x16xf32>
    %344 = math.exp %343 : vector<16x16xf32>
    %cst_208 = arith.constant dense<0.000000e+00> : vector<16xf32>
    %345 = vector.multi_reduction <add>, %344, %cst_208 [1] : vector<16x16xf32> to vector<16xf32>
    %346 = vector.shape_cast %345 : vector<16xf32> to vector<16x1xf32>
    %347 = arith.truncf %344 : vector<16x16xf32> to vector<16x16xbf16>
    %cst_209 = arith.constant dense<0.000000e+00> : vector<16x16xf32>
    %348 = tpu.matmul %347, %336, %cst_209 {dimension_numbers = #tpu.dot_dimension_numbers<[1], [0], [0], [1], [0, 0, 1, 1], [], []>} : vector<16x16xbf16>, vector<16x16xbf16>, vector<16x16xf32> -> vector<16x16xf32>
    %349 = tpu.reciprocal %346 {approx = true} : vector<16x1xf32> -> vector<16x1xf32>
    %350 = vector.broadcast %349 : vector<16x1xf32> to vector<16x16xf32>
    %351 = arith.mulf %348, %350 : vector<16x16xf32>
    %c32_210 = arith.constant 32 : index
    %c0_211 = arith.constant 0 : index
    %352 = vector.load %arg15[%c32_210, %c0_211] : memref<64x128xf32, #tpu.memory_space<vmem>>, vector<16x16xf32>
    tpu.vector_store %arg15[%c32_210, %c0_211], %351 {strides = array<i32>} : memref<64x128xf32, #tpu.memory_space<vmem>>, vector<16x16xf32>,
    %c32_212 = arith.constant 32 : index
    %c16_213 = arith.constant 16 : index
    %353 = vector.load %arg14[%c32_212, %c16_213] : memref<64x384xbf16, #tpu.memory_space<vmem>>, vector<16x16xbf16>
    %c32_214 = arith.constant 32 : index
    %c144_215 = arith.constant 144 : index
    %354 = vector.load %arg14[%c32_214, %c144_215] : memref<64x384xbf16, #tpu.memory_space<vmem>>, vector<16x16xbf16>
    %c32_216 = arith.constant 32 : index
    %c272_217 = arith.constant 272 : index
    %355 = vector.load %arg14[%c32_216, %c272_217] : memref<64x384xbf16, #tpu.memory_space<vmem>>, vector<16x16xbf16>
    %cst_218 = arith.constant dense<0.000000e+00> : vector<16x16xf32>
    %356 = tpu.matmul %353, %354, %cst_218 {dimension_numbers = #tpu.dot_dimension_numbers<[1], [1], [0], [0], [0, 0, 1, 0], [], []>} : vector<16x16xbf16>, vector<16x16xbf16>, vector<16x16xf32> -> vector<16x16xf32>
    %cst_219 = arith.constant 2.500000e-01 : f32
    %357 = vector.broadcast %cst_219 : f32 to vector<16x16xf32>
    %358 = arith.mulf %356, %357 : vector<16x16xf32>
    %cst_220 = arith.constant dense<0xFF800000> : vector<16xf32>
    %359 = vector.multi_reduction <maximumf>, %358, %cst_220 [1] : vector<16x16xf32> to vector<16xf32>
    %360 = vector.shape_cast %359 : vector<16xf32> to vector<16x1xf32>
    %361 = vector.broadcast %360 : vector<16x1xf32> to vector<16x16xf32>
    %362 = arith.subf %358, %361 : vector<16x16xf32>
    %363 = math.exp %362 : vector<16x16xf32>
    %cst_221 = arith.constant dense<0.000000e+00> : vector<16xf32>
    %364 = vector.multi_reduction <add>, %363, %cst_221 [1] : vector<16x16xf32> to vector<16xf32>
    %365 = vector.shape_cast %364 : vector<16xf32> to vector<16x1xf32>
    %366 = arith.truncf %363 : vector<16x16xf32> to vector<16x16xbf16>
    %cst_222 = arith.constant dense<0.000000e+00> : vector<16x16xf32>
    %367 = tpu.matmul %366, %355, %cst_222 {dimension_numbers = #tpu.dot_dimension_numbers<[1], [0], [0], [1], [0, 0, 1, 1], [], []>} : vector<16x16xbf16>, vector<16x16xbf16>, vector<16x16xf32> -> vector<16x16xf32>
    %368 = tpu.reciprocal %365 {approx = true} : vector<16x1xf32> -> vector<16x1xf32>
    %369 = vector.broadcast %368 : vector<16x1xf32> to vector<16x16xf32>
    %370 = arith.mulf %367, %369 : vector<16x16xf32>
    %c32_223 = arith.constant 32 : index
    %c16_224 = arith.constant 16 : index
    %371 = vector.load %arg15[%c32_223, %c16_224] : memref<64x128xf32, #tpu.memory_space<vmem>>, vector<16x16xf32>
    tpu.vector_store %arg15[%c32_223, %c16_224], %370 {strides = array<i32>} : memref<64x128xf32, #tpu.memory_space<vmem>>, vector<16x16xf32>,
    %c32_225 = arith.constant 32 : index
    %c32_226 = arith.constant 32 : index
    %372 = vector.load %arg14[%c32_225, %c32_226] : memref<64x384xbf16, #tpu.memory_space<vmem>>, vector<16x16xbf16>
    %c32_227 = arith.constant 32 : index
    %c160_228 = arith.constant 160 : index
    %373 = vector.load %arg14[%c32_227, %c160_228] : memref<64x384xbf16, #tpu.memory_space<vmem>>, vector<16x16xbf16>
    %c32_229 = arith.constant 32 : index
    %c288_230 = arith.constant 288 : index
    %374 = vector.load %arg14[%c32_229, %c288_230] : memref<64x384xbf16, #tpu.memory_space<vmem>>, vector<16x16xbf16>
    %cst_231 = arith.constant dense<0.000000e+00> : vector<16x16xf32>
    %375 = tpu.matmul %372, %373, %cst_231 {dimension_numbers = #tpu.dot_dimension_numbers<[1], [1], [0], [0], [0, 0, 1, 0], [], []>} : vector<16x16xbf16>, vector<16x16xbf16>, vector<16x16xf32> -> vector<16x16xf32>
    %cst_232 = arith.constant 2.500000e-01 : f32
    %376 = vector.broadcast %cst_232 : f32 to vector<16x16xf32>
    %377 = arith.mulf %375, %376 : vector<16x16xf32>
    %cst_233 = arith.constant dense<0xFF800000> : vector<16xf32>
    %378 = vector.multi_reduction <maximumf>, %377, %cst_233 [1] : vector<16x16xf32> to vector<16xf32>
    %379 = vector.shape_cast %378 : vector<16xf32> to vector<16x1xf32>
    %380 = vector.broadcast %379 : vector<16x1xf32> to vector<16x16xf32>
    %381 = arith.subf %377, %380 : vector<16x16xf32>
    %382 = math.exp %381 : vector<16x16xf32>
    %cst_234 = arith.constant dense<0.000000e+00> : vector<16xf32>
    %383 = vector.multi_reduction <add>, %382, %cst_234 [1] : vector<16x16xf32> to vector<16xf32>
    %384 = vector.shape_cast %383 : vector<16xf32> to vector<16x1xf32>
    %385 = arith.truncf %382 : vector<16x16xf32> to vector<16x16xbf16>
    %cst_235 = arith.constant dense<0.000000e+00> : vector<16x16xf32>
    %386 = tpu.matmul %385, %374, %cst_235 {dimension_numbers = #tpu.dot_dimension_numbers<[1], [0], [0], [1], [0, 0, 1, 1], [], []>} : vector<16x16xbf16>, vector<16x16xbf16>, vector<16x16xf32> -> vector<16x16xf32>
    %387 = tpu.reciprocal %384 {approx = true} : vector<16x1xf32> -> vector<16x1xf32>
    %388 = vector.broadcast %387 : vector<16x1xf32> to vector<16x16xf32>
    %389 = arith.mulf %386, %388 : vector<16x16xf32>
    %c32_236 = arith.constant 32 : index
    %c32_237 = arith.constant 32 : index
    %390 = vector.load %arg15[%c32_236, %c32_237] : memref<64x128xf32, #tpu.memory_space<vmem>>, vector<16x16xf32>
    tpu.vector_store %arg15[%c32_236, %c32_237], %389 {strides = array<i32>} : memref<64x128xf32, #tpu.memory_space<vmem>>, vector<16x16xf32>,
    %c32_238 = arith.constant 32 : index
    %c48_239 = arith.constant 48 : index
    %391 = vector.load %arg14[%c32_238, %c48_239] : memref<64x384xbf16, #tpu.memory_space<vmem>>, vector<16x16xbf16>
    %c32_240 = arith.constant 32 : index
    %c176_241 = arith.constant 176 : index
    %392 = vector.load %arg14[%c32_240, %c176_241] : memref<64x384xbf16, #tpu.memory_space<vmem>>, vector<16x16xbf16>
    %c32_242 = arith.constant 32 : index
    %c304_243 = arith.constant 304 : index
    %393 = vector.load %arg14[%c32_242, %c304_243] : memref<64x384xbf16, #tpu.memory_space<vmem>>, vector<16x16xbf16>
    %cst_244 = arith.constant dense<0.000000e+00> : vector<16x16xf32>
    %394 = tpu.matmul %391, %392, %cst_244 {dimension_numbers = #tpu.dot_dimension_numbers<[1], [1], [0], [0], [0, 0, 1, 0], [], []>} : vector<16x16xbf16>, vector<16x16xbf16>, vector<16x16xf32> -> vector<16x16xf32>
    %cst_245 = arith.constant 2.500000e-01 : f32
    %395 = vector.broadcast %cst_245 : f32 to vector<16x16xf32>
    %396 = arith.mulf %394, %395 : vector<16x16xf32>
    %cst_246 = arith.constant dense<0xFF800000> : vector<16xf32>
    %397 = vector.multi_reduction <maximumf>, %396, %cst_246 [1] : vector<16x16xf32> to vector<16xf32>
    %398 = vector.shape_cast %397 : vector<16xf32> to vector<16x1xf32>
    %399 = vector.broadcast %398 : vector<16x1xf32> to vector<16x16xf32>
    %400 = arith.subf %396, %399 : vector<16x16xf32>
    %401 = math.exp %400 : vector<16x16xf32>
    %cst_247 = arith.constant dense<0.000000e+00> : vector<16xf32>
    %402 = vector.multi_reduction <add>, %401, %cst_247 [1] : vector<16x16xf32> to vector<16xf32>
    %403 = vector.shape_cast %402 : vector<16xf32> to vector<16x1xf32>
    %404 = arith.truncf %401 : vector<16x16xf32> to vector<16x16xbf16>
    %cst_248 = arith.constant dense<0.000000e+00> : vector<16x16xf32>
    %405 = tpu.matmul %404, %393, %cst_248 {dimension_numbers = #tpu.dot_dimension_numbers<[1], [0], [0], [1], [0, 0, 1, 1], [], []>} : vector<16x16xbf16>, vector<16x16xbf16>, vector<16x16xf32> -> vector<16x16xf32>
    %406 = tpu.reciprocal %403 {approx = true} : vector<16x1xf32> -> vector<16x1xf32>
    %407 = vector.broadcast %406 : vector<16x1xf32> to vector<16x16xf32>
    %408 = arith.mulf %405, %407 : vector<16x16xf32>
    %c32_249 = arith.constant 32 : index
    %c48_250 = arith.constant 48 : index
    %409 = vector.load %arg15[%c32_249, %c48_250] : memref<64x128xf32, #tpu.memory_space<vmem>>, vector<16x16xf32>
    tpu.vector_store %arg15[%c32_249, %c48_250], %408 {strides = array<i32>} : memref<64x128xf32, #tpu.memory_space<vmem>>, vector<16x16xf32>,
    %c32_251 = arith.constant 32 : index
    %c64_252 = arith.constant 64 : index
    %410 = vector.load %arg14[%c32_251, %c64_252] : memref<64x384xbf16, #tpu.memory_space<vmem>>, vector<16x16xbf16>
    %c32_253 = arith.constant 32 : index
    %c192_254 = arith.constant 192 : index
    %411 = vector.load %arg14[%c32_253, %c192_254] : memref<64x384xbf16, #tpu.memory_space<vmem>>, vector<16x16xbf16>
    %c32_255 = arith.constant 32 : index
    %c320_256 = arith.constant 320 : index
    %412 = vector.load %arg14[%c32_255, %c320_256] : memref<64x384xbf16, #tpu.memory_space<vmem>>, vector<16x16xbf16>
    %cst_257 = arith.constant dense<0.000000e+00> : vector<16x16xf32>
    %413 = tpu.matmul %410, %411, %cst_257 {dimension_numbers = #tpu.dot_dimension_numbers<[1], [1], [0], [0], [0, 0, 1, 0], [], []>} : vector<16x16xbf16>, vector<16x16xbf16>, vector<16x16xf32> -> vector<16x16xf32>
    %cst_258 = arith.constant 2.500000e-01 : f32
    %414 = vector.broadcast %cst_258 : f32 to vector<16x16xf32>
    %415 = arith.mulf %413, %414 : vector<16x16xf32>
    %cst_259 = arith.constant dense<0xFF800000> : vector<16xf32>
    %416 = vector.multi_reduction <maximumf>, %415, %cst_259 [1] : vector<16x16xf32> to vector<16xf32>
    %417 = vector.shape_cast %416 : vector<16xf32> to vector<16x1xf32>
    %418 = vector.broadcast %417 : vector<16x1xf32> to vector<16x16xf32>
    %419 = arith.subf %415, %418 : vector<16x16xf32>
    %420 = math.exp %419 : vector<16x16xf32>
    %cst_260 = arith.constant dense<0.000000e+00> : vector<16xf32>
    %421 = vector.multi_reduction <add>, %420, %cst_260 [1] : vector<16x16xf32> to vector<16xf32>
    %422 = vector.shape_cast %421 : vector<16xf32> to vector<16x1xf32>
    %423 = arith.truncf %420 : vector<16x16xf32> to vector<16x16xbf16>
    %cst_261 = arith.constant dense<0.000000e+00> : vector<16x16xf32>
    %424 = tpu.matmul %423, %412, %cst_261 {dimension_numbers = #tpu.dot_dimension_numbers<[1], [0], [0], [1], [0, 0, 1, 1], [], []>} : vector<16x16xbf16>, vector<16x16xbf16>, vector<16x16xf32> -> vector<16x16xf32>
    %425 = tpu.reciprocal %422 {approx = true} : vector<16x1xf32> -> vector<16x1xf32>
    %426 = vector.broadcast %425 : vector<16x1xf32> to vector<16x16xf32>
    %427 = arith.mulf %424, %426 : vector<16x16xf32>
    %c32_262 = arith.constant 32 : index
    %c64_263 = arith.constant 64 : index
    %428 = vector.load %arg15[%c32_262, %c64_263] : memref<64x128xf32, #tpu.memory_space<vmem>>, vector<16x16xf32>
    tpu.vector_store %arg15[%c32_262, %c64_263], %427 {strides = array<i32>} : memref<64x128xf32, #tpu.memory_space<vmem>>, vector<16x16xf32>,
    %c32_264 = arith.constant 32 : index
    %c80_265 = arith.constant 80 : index
    %429 = vector.load %arg14[%c32_264, %c80_265] : memref<64x384xbf16, #tpu.memory_space<vmem>>, vector<16x16xbf16>
    %c32_266 = arith.constant 32 : index
    %c208_267 = arith.constant 208 : index
    %430 = vector.load %arg14[%c32_266, %c208_267] : memref<64x384xbf16, #tpu.memory_space<vmem>>, vector<16x16xbf16>
    %c32_268 = arith.constant 32 : index
    %c336_269 = arith.constant 336 : index
    %431 = vector.load %arg14[%c32_268, %c336_269] : memref<64x384xbf16, #tpu.memory_space<vmem>>, vector<16x16xbf16>
    %cst_270 = arith.constant dense<0.000000e+00> : vector<16x16xf32>
    %432 = tpu.matmul %429, %430, %cst_270 {dimension_numbers = #tpu.dot_dimension_numbers<[1], [1], [0], [0], [0, 0, 1, 0], [], []>} : vector<16x16xbf16>, vector<16x16xbf16>, vector<16x16xf32> -> vector<16x16xf32>
    %cst_271 = arith.constant 2.500000e-01 : f32
    %433 = vector.broadcast %cst_271 : f32 to vector<16x16xf32>
    %434 = arith.mulf %432, %433 : vector<16x16xf32>
    %cst_272 = arith.constant dense<0xFF800000> : vector<16xf32>
    %435 = vector.multi_reduction <maximumf>, %434, %cst_272 [1] : vector<16x16xf32> to vector<16xf32>
    %436 = vector.shape_cast %435 : vector<16xf32> to vector<16x1xf32>
    %437 = vector.broadcast %436 : vector<16x1xf32> to vector<16x16xf32>
    %438 = arith.subf %434, %437 : vector<16x16xf32>
    %439 = math.exp %438 : vector<16x16xf32>
    %cst_273 = arith.constant dense<0.000000e+00> : vector<16xf32>
    %440 = vector.multi_reduction <add>, %439, %cst_273 [1] : vector<16x16xf32> to vector<16xf32>
    %441 = vector.shape_cast %440 : vector<16xf32> to vector<16x1xf32>
    %442 = arith.truncf %439 : vector<16x16xf32> to vector<16x16xbf16>
    %cst_274 = arith.constant dense<0.000000e+00> : vector<16x16xf32>
    %443 = tpu.matmul %442, %431, %cst_274 {dimension_numbers = #tpu.dot_dimension_numbers<[1], [0], [0], [1], [0, 0, 1, 1], [], []>} : vector<16x16xbf16>, vector<16x16xbf16>, vector<16x16xf32> -> vector<16x16xf32>
    %444 = tpu.reciprocal %441 {approx = true} : vector<16x1xf32> -> vector<16x1xf32>
    %445 = vector.broadcast %444 : vector<16x1xf32> to vector<16x16xf32>
    %446 = arith.mulf %443, %445 : vector<16x16xf32>
    %c32_275 = arith.constant 32 : index
    %c80_276 = arith.constant 80 : index
    %447 = vector.load %arg15[%c32_275, %c80_276] : memref<64x128xf32, #tpu.memory_space<vmem>>, vector<16x16xf32>
    tpu.vector_store %arg15[%c32_275, %c80_276], %446 {strides = array<i32>} : memref<64x128xf32, #tpu.memory_space<vmem>>, vector<16x16xf32>,
    %c32_277 = arith.constant 32 : index
    %c96_278 = arith.constant 96 : index
    %448 = vector.load %arg14[%c32_277, %c96_278] : memref<64x384xbf16, #tpu.memory_space<vmem>>, vector<16x16xbf16>
    %c32_279 = arith.constant 32 : index
    %c224_280 = arith.constant 224 : index
    %449 = vector.load %arg14[%c32_279, %c224_280] : memref<64x384xbf16, #tpu.memory_space<vmem>>, vector<16x16xbf16>
    %c32_281 = arith.constant 32 : index
    %c352_282 = arith.constant 352 : index
    %450 = vector.load %arg14[%c32_281, %c352_282] : memref<64x384xbf16, #tpu.memory_space<vmem>>, vector<16x16xbf16>
    %cst_283 = arith.constant dense<0.000000e+00> : vector<16x16xf32>
    %451 = tpu.matmul %448, %449, %cst_283 {dimension_numbers = #tpu.dot_dimension_numbers<[1], [1], [0], [0], [0, 0, 1, 0], [], []>} : vector<16x16xbf16>, vector<16x16xbf16>, vector<16x16xf32> -> vector<16x16xf32>
    %cst_284 = arith.constant 2.500000e-01 : f32
    %452 = vector.broadcast %cst_284 : f32 to vector<16x16xf32>
    %453 = arith.mulf %451, %452 : vector<16x16xf32>
    %cst_285 = arith.constant dense<0xFF800000> : vector<16xf32>
    %454 = vector.multi_reduction <maximumf>, %453, %cst_285 [1] : vector<16x16xf32> to vector<16xf32>
    %455 = vector.shape_cast %454 : vector<16xf32> to vector<16x1xf32>
    %456 = vector.broadcast %455 : vector<16x1xf32> to vector<16x16xf32>
    %457 = arith.subf %453, %456 : vector<16x16xf32>
    %458 = math.exp %457 : vector<16x16xf32>
    %cst_286 = arith.constant dense<0.000000e+00> : vector<16xf32>
    %459 = vector.multi_reduction <add>, %458, %cst_286 [1] : vector<16x16xf32> to vector<16xf32>
    %460 = vector.shape_cast %459 : vector<16xf32> to vector<16x1xf32>
    %461 = arith.truncf %458 : vector<16x16xf32> to vector<16x16xbf16>
    %cst_287 = arith.constant dense<0.000000e+00> : vector<16x16xf32>
    %462 = tpu.matmul %461, %450, %cst_287 {dimension_numbers = #tpu.dot_dimension_numbers<[1], [0], [0], [1], [0, 0, 1, 1], [], []>} : vector<16x16xbf16>, vector<16x16xbf16>, vector<16x16xf32> -> vector<16x16xf32>
    %463 = tpu.reciprocal %460 {approx = true} : vector<16x1xf32> -> vector<16x1xf32>
    %464 = vector.broadcast %463 : vector<16x1xf32> to vector<16x16xf32>
    %465 = arith.mulf %462, %464 : vector<16x16xf32>
    %c32_288 = arith.constant 32 : index
    %c96_289 = arith.constant 96 : index
    %466 = vector.load %arg15[%c32_288, %c96_289] : memref<64x128xf32, #tpu.memory_space<vmem>>, vector<16x16xf32>
    tpu.vector_store %arg15[%c32_288, %c96_289], %465 {strides = array<i32>} : memref<64x128xf32, #tpu.memory_space<vmem>>, vector<16x16xf32>,
    %c32_290 = arith.constant 32 : index
    %c112_291 = arith.constant 112 : index
    %467 = vector.load %arg14[%c32_290, %c112_291] : memref<64x384xbf16, #tpu.memory_space<vmem>>, vector<16x16xbf16>
    %c32_292 = arith.constant 32 : index
    %c240_293 = arith.constant 240 : index
    %468 = vector.load %arg14[%c32_292, %c240_293] : memref<64x384xbf16, #tpu.memory_space<vmem>>, vector<16x16xbf16>
    %c32_294 = arith.constant 32 : index
    %c368_295 = arith.constant 368 : index
    %469 = vector.load %arg14[%c32_294, %c368_295] : memref<64x384xbf16, #tpu.memory_space<vmem>>, vector<16x16xbf16>
    %cst_296 = arith.constant dense<0.000000e+00> : vector<16x16xf32>
    %470 = tpu.matmul %467, %468, %cst_296 {dimension_numbers = #tpu.dot_dimension_numbers<[1], [1], [0], [0], [0, 0, 1, 0], [], []>} : vector<16x16xbf16>, vector<16x16xbf16>, vector<16x16xf32> -> vector<16x16xf32>
    %cst_297 = arith.constant 2.500000e-01 : f32
    %471 = vector.broadcast %cst_297 : f32 to vector<16x16xf32>
    %472 = arith.mulf %470, %471 : vector<16x16xf32>
    %cst_298 = arith.constant dense<0xFF800000> : vector<16xf32>
    %473 = vector.multi_reduction <maximumf>, %472, %cst_298 [1] : vector<16x16xf32> to vector<16xf32>
    %474 = vector.shape_cast %473 : vector<16xf32> to vector<16x1xf32>
    %475 = vector.broadcast %474 : vector<16x1xf32> to vector<16x16xf32>
    %476 = arith.subf %472, %475 : vector<16x16xf32>
    %477 = math.exp %476 : vector<16x16xf32>
    %cst_299 = arith.constant dense<0.000000e+00> : vector<16xf32>
    %478 = vector.multi_reduction <add>, %477, %cst_299 [1] : vector<16x16xf32> to vector<16xf32>
    %479 = vector.shape_cast %478 : vector<16xf32> to vector<16x1xf32>
    %480 = arith.truncf %477 : vector<16x16xf32> to vector<16x16xbf16>
    %cst_300 = arith.constant dense<0.000000e+00> : vector<16x16xf32>
    %481 = tpu.matmul %480, %469, %cst_300 {dimension_numbers = #tpu.dot_dimension_numbers<[1], [0], [0], [1], [0, 0, 1, 1], [], []>} : vector<16x16xbf16>, vector<16x16xbf16>, vector<16x16xf32> -> vector<16x16xf32>
    %482 = tpu.reciprocal %479 {approx = true} : vector<16x1xf32> -> vector<16x1xf32>
    %483 = vector.broadcast %482 : vector<16x1xf32> to vector<16x16xf32>
    %484 = arith.mulf %481, %483 : vector<16x16xf32>
    %c32_301 = arith.constant 32 : index
    %c112_302 = arith.constant 112 : index
    %485 = vector.load %arg15[%c32_301, %c112_302] : memref<64x128xf32, #tpu.memory_space<vmem>>, vector<16x16xf32>
    tpu.vector_store %arg15[%c32_301, %c112_302], %484 {strides = array<i32>} : memref<64x128xf32, #tpu.memory_space<vmem>>, vector<16x16xf32>,
    %c48_303 = arith.constant 48 : index
    %c0_304 = arith.constant 0 : index
    %486 = vector.load %arg14[%c48_303, %c0_304] : memref<64x384xbf16, #tpu.memory_space<vmem>>, vector<16x16xbf16>
    %c48_305 = arith.constant 48 : index
    %c128_306 = arith.constant 128 : index
    %487 = vector.load %arg14[%c48_305, %c128_306] : memref<64x384xbf16, #tpu.memory_space<vmem>>, vector<16x16xbf16>
    %c48_307 = arith.constant 48 : index
    %c256_308 = arith.constant 256 : index
    %488 = vector.load %arg14[%c48_307, %c256_308] : memref<64x384xbf16, #tpu.memory_space<vmem>>, vector<16x16xbf16>
    %cst_309 = arith.constant dense<0.000000e+00> : vector<16x16xf32>
    %489 = tpu.matmul %486, %487, %cst_309 {dimension_numbers = #tpu.dot_dimension_numbers<[1], [1], [0], [0], [0, 0, 1, 0], [], []>} : vector<16x16xbf16>, vector<16x16xbf16>, vector<16x16xf32> -> vector<16x16xf32>
    %cst_310 = arith.constant 2.500000e-01 : f32
    %490 = vector.broadcast %cst_310 : f32 to vector<16x16xf32>
    %491 = arith.mulf %489, %490 : vector<16x16xf32>
    %cst_311 = arith.constant dense<0xFF800000> : vector<16xf32>
    %492 = vector.multi_reduction <maximumf>, %491, %cst_311 [1] : vector<16x16xf32> to vector<16xf32>
    %493 = vector.shape_cast %492 : vector<16xf32> to vector<16x1xf32>
    %494 = vector.broadcast %493 : vector<16x1xf32> to vector<16x16xf32>
    %495 = arith.subf %491, %494 : vector<16x16xf32>
    %496 = math.exp %495 : vector<16x16xf32>
    %cst_312 = arith.constant dense<0.000000e+00> : vector<16xf32>
    %497 = vector.multi_reduction <add>, %496, %cst_312 [1] : vector<16x16xf32> to vector<16xf32>
    %498 = vector.shape_cast %497 : vector<16xf32> to vector<16x1xf32>
    %499 = arith.truncf %496 : vector<16x16xf32> to vector<16x16xbf16>
    %cst_313 = arith.constant dense<0.000000e+00> : vector<16x16xf32>
    %500 = tpu.matmul %499, %488, %cst_313 {dimension_numbers = #tpu.dot_dimension_numbers<[1], [0], [0], [1], [0, 0, 1, 1], [], []>} : vector<16x16xbf16>, vector<16x16xbf16>, vector<16x16xf32> -> vector<16x16xf32>
    %501 = tpu.reciprocal %498 {approx = true} : vector<16x1xf32> -> vector<16x1xf32>
    %502 = vector.broadcast %501 : vector<16x1xf32> to vector<16x16xf32>
    %503 = arith.mulf %500, %502 : vector<16x16xf32>
    %c48_314 = arith.constant 48 : index
    %c0_315 = arith.constant 0 : index
    %504 = vector.load %arg15[%c48_314, %c0_315] : memref<64x128xf32, #tpu.memory_space<vmem>>, vector<16x16xf32>
    tpu.vector_store %arg15[%c48_314, %c0_315], %503 {strides = array<i32>} : memref<64x128xf32, #tpu.memory_space<vmem>>, vector<16x16xf32>,
    %c48_316 = arith.constant 48 : index
    %c16_317 = arith.constant 16 : index
    %505 = vector.load %arg14[%c48_316, %c16_317] : memref<64x384xbf16, #tpu.memory_space<vmem>>, vector<16x16xbf16>
    %c48_318 = arith.constant 48 : index
    %c144_319 = arith.constant 144 : index
    %506 = vector.load %arg14[%c48_318, %c144_319] : memref<64x384xbf16, #tpu.memory_space<vmem>>, vector<16x16xbf16>
    %c48_320 = arith.constant 48 : index
    %c272_321 = arith.constant 272 : index
    %507 = vector.load %arg14[%c48_320, %c272_321] : memref<64x384xbf16, #tpu.memory_space<vmem>>, vector<16x16xbf16>
    %cst_322 = arith.constant dense<0.000000e+00> : vector<16x16xf32>
    %508 = tpu.matmul %505, %506, %cst_322 {dimension_numbers = #tpu.dot_dimension_numbers<[1], [1], [0], [0], [0, 0, 1, 0], [], []>} : vector<16x16xbf16>, vector<16x16xbf16>, vector<16x16xf32> -> vector<16x16xf32>
    %cst_323 = arith.constant 2.500000e-01 : f32
    %509 = vector.broadcast %cst_323 : f32 to vector<16x16xf32>
    %510 = arith.mulf %508, %509 : vector<16x16xf32>
    %cst_324 = arith.constant dense<0xFF800000> : vector<16xf32>
    %511 = vector.multi_reduction <maximumf>, %510, %cst_324 [1] : vector<16x16xf32> to vector<16xf32>
    %512 = vector.shape_cast %511 : vector<16xf32> to vector<16x1xf32>
    %513 = vector.broadcast %512 : vector<16x1xf32> to vector<16x16xf32>
    %514 = arith.subf %510, %513 : vector<16x16xf32>
    %515 = math.exp %514 : vector<16x16xf32>
    %cst_325 = arith.constant dense<0.000000e+00> : vector<16xf32>
    %516 = vector.multi_reduction <add>, %515, %cst_325 [1] : vector<16x16xf32> to vector<16xf32>
    %517 = vector.shape_cast %516 : vector<16xf32> to vector<16x1xf32>
    %518 = arith.truncf %515 : vector<16x16xf32> to vector<16x16xbf16>
    %cst_326 = arith.constant dense<0.000000e+00> : vector<16x16xf32>
    %519 = tpu.matmul %518, %507, %cst_326 {dimension_numbers = #tpu.dot_dimension_numbers<[1], [0], [0], [1], [0, 0, 1, 1], [], []>} : vector<16x16xbf16>, vector<16x16xbf16>, vector<16x16xf32> -> vector<16x16xf32>
    %520 = tpu.reciprocal %517 {approx = true} : vector<16x1xf32> -> vector<16x1xf32>
    %521 = vector.broadcast %520 : vector<16x1xf32> to vector<16x16xf32>
    %522 = arith.mulf %519, %521 : vector<16x16xf32>
    %c48_327 = arith.constant 48 : index
    %c16_328 = arith.constant 16 : index
    %523 = vector.load %arg15[%c48_327, %c16_328] : memref<64x128xf32, #tpu.memory_space<vmem>>, vector<16x16xf32>
    tpu.vector_store %arg15[%c48_327, %c16_328], %522 {strides = array<i32>} : memref<64x128xf32, #tpu.memory_space<vmem>>, vector<16x16xf32>,
    %c48_329 = arith.constant 48 : index
    %c32_330 = arith.constant 32 : index
    %524 = vector.load %arg14[%c48_329, %c32_330] : memref<64x384xbf16, #tpu.memory_space<vmem>>, vector<16x16xbf16>
    %c48_331 = arith.constant 48 : index
    %c160_332 = arith.constant 160 : index
    %525 = vector.load %arg14[%c48_331, %c160_332] : memref<64x384xbf16, #tpu.memory_space<vmem>>, vector<16x16xbf16>
    %c48_333 = arith.constant 48 : index
    %c288_334 = arith.constant 288 : index
    %526 = vector.load %arg14[%c48_333, %c288_334] : memref<64x384xbf16, #tpu.memory_space<vmem>>, vector<16x16xbf16>
    %cst_335 = arith.constant dense<0.000000e+00> : vector<16x16xf32>
    %527 = tpu.matmul %524, %525, %cst_335 {dimension_numbers = #tpu.dot_dimension_numbers<[1], [1], [0], [0], [0, 0, 1, 0], [], []>} : vector<16x16xbf16>, vector<16x16xbf16>, vector<16x16xf32> -> vector<16x16xf32>
    %cst_336 = arith.constant 2.500000e-01 : f32
    %528 = vector.broadcast %cst_336 : f32 to vector<16x16xf32>
    %529 = arith.mulf %527, %528 : vector<16x16xf32>
    %cst_337 = arith.constant dense<0xFF800000> : vector<16xf32>
    %530 = vector.multi_reduction <maximumf>, %529, %cst_337 [1] : vector<16x16xf32> to vector<16xf32>
    %531 = vector.shape_cast %530 : vector<16xf32> to vector<16x1xf32>
    %532 = vector.broadcast %531 : vector<16x1xf32> to vector<16x16xf32>
    %533 = arith.subf %529, %532 : vector<16x16xf32>
    %534 = math.exp %533 : vector<16x16xf32>
    %cst_338 = arith.constant dense<0.000000e+00> : vector<16xf32>
    %535 = vector.multi_reduction <add>, %534, %cst_338 [1] : vector<16x16xf32> to vector<16xf32>
    %536 = vector.shape_cast %535 : vector<16xf32> to vector<16x1xf32>
    %537 = arith.truncf %534 : vector<16x16xf32> to vector<16x16xbf16>
    %cst_339 = arith.constant dense<0.000000e+00> : vector<16x16xf32>
    %538 = tpu.matmul %537, %526, %cst_339 {dimension_numbers = #tpu.dot_dimension_numbers<[1], [0], [0], [1], [0, 0, 1, 1], [], []>} : vector<16x16xbf16>, vector<16x16xbf16>, vector<16x16xf32> -> vector<16x16xf32>
    %539 = tpu.reciprocal %536 {approx = true} : vector<16x1xf32> -> vector<16x1xf32>
    %540 = vector.broadcast %539 : vector<16x1xf32> to vector<16x16xf32>
    %541 = arith.mulf %538, %540 : vector<16x16xf32>
    %c48_340 = arith.constant 48 : index
    %c32_341 = arith.constant 32 : index
    %542 = vector.load %arg15[%c48_340, %c32_341] : memref<64x128xf32, #tpu.memory_space<vmem>>, vector<16x16xf32>
    tpu.vector_store %arg15[%c48_340, %c32_341], %541 {strides = array<i32>} : memref<64x128xf32, #tpu.memory_space<vmem>>, vector<16x16xf32>,
    %c48_342 = arith.constant 48 : index
    %c48_343 = arith.constant 48 : index
    %543 = vector.load %arg14[%c48_342, %c48_343] : memref<64x384xbf16, #tpu.memory_space<vmem>>, vector<16x16xbf16>
    %c48_344 = arith.constant 48 : index
    %c176_345 = arith.constant 176 : index
    %544 = vector.load %arg14[%c48_344, %c176_345] : memref<64x384xbf16, #tpu.memory_space<vmem>>, vector<16x16xbf16>
    %c48_346 = arith.constant 48 : index
    %c304_347 = arith.constant 304 : index
    %545 = vector.load %arg14[%c48_346, %c304_347] : memref<64x384xbf16, #tpu.memory_space<vmem>>, vector<16x16xbf16>
    %cst_348 = arith.constant dense<0.000000e+00> : vector<16x16xf32>
    %546 = tpu.matmul %543, %544, %cst_348 {dimension_numbers = #tpu.dot_dimension_numbers<[1], [1], [0], [0], [0, 0, 1, 0], [], []>} : vector<16x16xbf16>, vector<16x16xbf16>, vector<16x16xf32> -> vector<16x16xf32>
    %cst_349 = arith.constant 2.500000e-01 : f32
    %547 = vector.broadcast %cst_349 : f32 to vector<16x16xf32>
    %548 = arith.mulf %546, %547 : vector<16x16xf32>
    %cst_350 = arith.constant dense<0xFF800000> : vector<16xf32>
    %549 = vector.multi_reduction <maximumf>, %548, %cst_350 [1] : vector<16x16xf32> to vector<16xf32>
    %550 = vector.shape_cast %549 : vector<16xf32> to vector<16x1xf32>
    %551 = vector.broadcast %550 : vector<16x1xf32> to vector<16x16xf32>
    %552 = arith.subf %548, %551 : vector<16x16xf32>
    %553 = math.exp %552 : vector<16x16xf32>
    %cst_351 = arith.constant dense<0.000000e+00> : vector<16xf32>
    %554 = vector.multi_reduction <add>, %553, %cst_351 [1] : vector<16x16xf32> to vector<16xf32>
    %555 = vector.shape_cast %554 : vector<16xf32> to vector<16x1xf32>
    %556 = arith.truncf %553 : vector<16x16xf32> to vector<16x16xbf16>
    %cst_352 = arith.constant dense<0.000000e+00> : vector<16x16xf32>
    %557 = tpu.matmul %556, %545, %cst_352 {dimension_numbers = #tpu.dot_dimension_numbers<[1], [0], [0], [1], [0, 0, 1, 1], [], []>} : vector<16x16xbf16>, vector<16x16xbf16>, vector<16x16xf32> -> vector<16x16xf32>
    %558 = tpu.reciprocal %555 {approx = true} : vector<16x1xf32> -> vector<16x1xf32>
    %559 = vector.broadcast %558 : vector<16x1xf32> to vector<16x16xf32>
    %560 = arith.mulf %557, %559 : vector<16x16xf32>
    %c48_353 = arith.constant 48 : index
    %c48_354 = arith.constant 48 : index
    %561 = vector.load %arg15[%c48_353, %c48_354] : memref<64x128xf32, #tpu.memory_space<vmem>>, vector<16x16xf32>
    tpu.vector_store %arg15[%c48_353, %c48_354], %560 {strides = array<i32>} : memref<64x128xf32, #tpu.memory_space<vmem>>, vector<16x16xf32>,
    %c48_355 = arith.constant 48 : index
    %c64_356 = arith.constant 64 : index
    %562 = vector.load %arg14[%c48_355, %c64_356] : memref<64x384xbf16, #tpu.memory_space<vmem>>, vector<16x16xbf16>
    %c48_357 = arith.constant 48 : index
    %c192_358 = arith.constant 192 : index
    %563 = vector.load %arg14[%c48_357, %c192_358] : memref<64x384xbf16, #tpu.memory_space<vmem>>, vector<16x16xbf16>
    %c48_359 = arith.constant 48 : index
    %c320_360 = arith.constant 320 : index
    %564 = vector.load %arg14[%c48_359, %c320_360] : memref<64x384xbf16, #tpu.memory_space<vmem>>, vector<16x16xbf16>
    %cst_361 = arith.constant dense<0.000000e+00> : vector<16x16xf32>
    %565 = tpu.matmul %562, %563, %cst_361 {dimension_numbers = #tpu.dot_dimension_numbers<[1], [1], [0], [0], [0, 0, 1, 0], [], []>} : vector<16x16xbf16>, vector<16x16xbf16>, vector<16x16xf32> -> vector<16x16xf32>
    %cst_362 = arith.constant 2.500000e-01 : f32
    %566 = vector.broadcast %cst_362 : f32 to vector<16x16xf32>
    %567 = arith.mulf %565, %566 : vector<16x16xf32>
    %cst_363 = arith.constant dense<0xFF800000> : vector<16xf32>
    %568 = vector.multi_reduction <maximumf>, %567, %cst_363 [1] : vector<16x16xf32> to vector<16xf32>
    %569 = vector.shape_cast %568 : vector<16xf32> to vector<16x1xf32>
    %570 = vector.broadcast %569 : vector<16x1xf32> to vector<16x16xf32>
    %571 = arith.subf %567, %570 : vector<16x16xf32>
    %572 = math.exp %571 : vector<16x16xf32>
    %cst_364 = arith.constant dense<0.000000e+00> : vector<16xf32>
    %573 = vector.multi_reduction <add>, %572, %cst_364 [1] : vector<16x16xf32> to vector<16xf32>
    %574 = vector.shape_cast %573 : vector<16xf32> to vector<16x1xf32>
    %575 = arith.truncf %572 : vector<16x16xf32> to vector<16x16xbf16>
    %cst_365 = arith.constant dense<0.000000e+00> : vector<16x16xf32>
    %576 = tpu.matmul %575, %564, %cst_365 {dimension_numbers = #tpu.dot_dimension_numbers<[1], [0], [0], [1], [0, 0, 1, 1], [], []>} : vector<16x16xbf16>, vector<16x16xbf16>, vector<16x16xf32> -> vector<16x16xf32>
    %577 = tpu.reciprocal %574 {approx = true} : vector<16x1xf32> -> vector<16x1xf32>
    %578 = vector.broadcast %577 : vector<16x1xf32> to vector<16x16xf32>
    %579 = arith.mulf %576, %578 : vector<16x16xf32>
    %c48_366 = arith.constant 48 : index
    %c64_367 = arith.constant 64 : index
    %580 = vector.load %arg15[%c48_366, %c64_367] : memref<64x128xf32, #tpu.memory_space<vmem>>, vector<16x16xf32>
    tpu.vector_store %arg15[%c48_366, %c64_367], %579 {strides = array<i32>} : memref<64x128xf32, #tpu.memory_space<vmem>>, vector<16x16xf32>,
    %c48_368 = arith.constant 48 : index
    %c80_369 = arith.constant 80 : index
    %581 = vector.load %arg14[%c48_368, %c80_369] : memref<64x384xbf16, #tpu.memory_space<vmem>>, vector<16x16xbf16>
    %c48_370 = arith.constant 48 : index
    %c208_371 = arith.constant 208 : index
    %582 = vector.load %arg14[%c48_370, %c208_371] : memref<64x384xbf16, #tpu.memory_space<vmem>>, vector<16x16xbf16>
    %c48_372 = arith.constant 48 : index
    %c336_373 = arith.constant 336 : index
    %583 = vector.load %arg14[%c48_372, %c336_373] : memref<64x384xbf16, #tpu.memory_space<vmem>>, vector<16x16xbf16>
    %cst_374 = arith.constant dense<0.000000e+00> : vector<16x16xf32>
    %584 = tpu.matmul %581, %582, %cst_374 {dimension_numbers = #tpu.dot_dimension_numbers<[1], [1], [0], [0], [0, 0, 1, 0], [], []>} : vector<16x16xbf16>, vector<16x16xbf16>, vector<16x16xf32> -> vector<16x16xf32>
    %cst_375 = arith.constant 2.500000e-01 : f32
    %585 = vector.broadcast %cst_375 : f32 to vector<16x16xf32>
    %586 = arith.mulf %584, %585 : vector<16x16xf32>
    %cst_376 = arith.constant dense<0xFF800000> : vector<16xf32>
    %587 = vector.multi_reduction <maximumf>, %586, %cst_376 [1] : vector<16x16xf32> to vector<16xf32>
    %588 = vector.shape_cast %587 : vector<16xf32> to vector<16x1xf32>
    %589 = vector.broadcast %588 : vector<16x1xf32> to vector<16x16xf32>
    %590 = arith.subf %586, %589 : vector<16x16xf32>
    %591 = math.exp %590 : vector<16x16xf32>
    %cst_377 = arith.constant dense<0.000000e+00> : vector<16xf32>
    %592 = vector.multi_reduction <add>, %591, %cst_377 [1] : vector<16x16xf32> to vector<16xf32>
    %593 = vector.shape_cast %592 : vector<16xf32> to vector<16x1xf32>
    %594 = arith.truncf %591 : vector<16x16xf32> to vector<16x16xbf16>
    %cst_378 = arith.constant dense<0.000000e+00> : vector<16x16xf32>
    %595 = tpu.matmul %594, %583, %cst_378 {dimension_numbers = #tpu.dot_dimension_numbers<[1], [0], [0], [1], [0, 0, 1, 1], [], []>} : vector<16x16xbf16>, vector<16x16xbf16>, vector<16x16xf32> -> vector<16x16xf32>
    %596 = tpu.reciprocal %593 {approx = true} : vector<16x1xf32> -> vector<16x1xf32>
    %597 = vector.broadcast %596 : vector<16x1xf32> to vector<16x16xf32>
    %598 = arith.mulf %595, %597 : vector<16x16xf32>
    %c48_379 = arith.constant 48 : index
    %c80_380 = arith.constant 80 : index
    %599 = vector.load %arg15[%c48_379, %c80_380] : memref<64x128xf32, #tpu.memory_space<vmem>>, vector<16x16xf32>
    tpu.vector_store %arg15[%c48_379, %c80_380], %598 {strides = array<i32>} : memref<64x128xf32, #tpu.memory_space<vmem>>, vector<16x16xf32>,
    %c48_381 = arith.constant 48 : index
    %c96_382 = arith.constant 96 : index
    %600 = vector.load %arg14[%c48_381, %c96_382] : memref<64x384xbf16, #tpu.memory_space<vmem>>, vector<16x16xbf16>
    %c48_383 = arith.constant 48 : index
    %c224_384 = arith.constant 224 : index
    %601 = vector.load %arg14[%c48_383, %c224_384] : memref<64x384xbf16, #tpu.memory_space<vmem>>, vector<16x16xbf16>
    %c48_385 = arith.constant 48 : index
    %c352_386 = arith.constant 352 : index
    %602 = vector.load %arg14[%c48_385, %c352_386] : memref<64x384xbf16, #tpu.memory_space<vmem>>, vector<16x16xbf16>
    %cst_387 = arith.constant dense<0.000000e+00> : vector<16x16xf32>
    %603 = tpu.matmul %600, %601, %cst_387 {dimension_numbers = #tpu.dot_dimension_numbers<[1], [1], [0], [0], [0, 0, 1, 0], [], []>} : vector<16x16xbf16>, vector<16x16xbf16>, vector<16x16xf32> -> vector<16x16xf32>
    %cst_388 = arith.constant 2.500000e-01 : f32
    %604 = vector.broadcast %cst_388 : f32 to vector<16x16xf32>
    %605 = arith.mulf %603, %604 : vector<16x16xf32>
    %cst_389 = arith.constant dense<0xFF800000> : vector<16xf32>
    %606 = vector.multi_reduction <maximumf>, %605, %cst_389 [1] : vector<16x16xf32> to vector<16xf32>
    %607 = vector.shape_cast %606 : vector<16xf32> to vector<16x1xf32>
    %608 = vector.broadcast %607 : vector<16x1xf32> to vector<16x16xf32>
    %609 = arith.subf %605, %608 : vector<16x16xf32>
    %610 = math.exp %609 : vector<16x16xf32>
    %cst_390 = arith.constant dense<0.000000e+00> : vector<16xf32>
    %611 = vector.multi_reduction <add>, %610, %cst_390 [1] : vector<16x16xf32> to vector<16xf32>
    %612 = vector.shape_cast %611 : vector<16xf32> to vector<16x1xf32>
    %613 = arith.truncf %610 : vector<16x16xf32> to vector<16x16xbf16>
    %cst_391 = arith.constant dense<0.000000e+00> : vector<16x16xf32>
    %614 = tpu.matmul %613, %602, %cst_391 {dimension_numbers = #tpu.dot_dimension_numbers<[1], [0], [0], [1], [0, 0, 1, 1], [], []>} : vector<16x16xbf16>, vector<16x16xbf16>, vector<16x16xf32> -> vector<16x16xf32>
    %615 = tpu.reciprocal %612 {approx = true} : vector<16x1xf32> -> vector<16x1xf32>
    %616 = vector.broadcast %615 : vector<16x1xf32> to vector<16x16xf32>
    %617 = arith.mulf %614, %616 : vector<16x16xf32>
    %c48_392 = arith.constant 48 : index
    %c96_393 = arith.constant 96 : index
    %618 = vector.load %arg15[%c48_392, %c96_393] : memref<64x128xf32, #tpu.memory_space<vmem>>, vector<16x16xf32>
    tpu.vector_store %arg15[%c48_392, %c96_393], %617 {strides = array<i32>} : memref<64x128xf32, #tpu.memory_space<vmem>>, vector<16x16xf32>,
    %c48_394 = arith.constant 48 : index
    %c112_395 = arith.constant 112 : index
    %619 = vector.load %arg14[%c48_394, %c112_395] : memref<64x384xbf16, #tpu.memory_space<vmem>>, vector<16x16xbf16>
    %c48_396 = arith.constant 48 : index
    %c240_397 = arith.constant 240 : index
    %620 = vector.load %arg14[%c48_396, %c240_397] : memref<64x384xbf16, #tpu.memory_space<vmem>>, vector<16x16xbf16>
    %c48_398 = arith.constant 48 : index
    %c368_399 = arith.constant 368 : index
    %621 = vector.load %arg14[%c48_398, %c368_399] : memref<64x384xbf16, #tpu.memory_space<vmem>>, vector<16x16xbf16>
    %cst_400 = arith.constant dense<0.000000e+00> : vector<16x16xf32>
    %622 = tpu.matmul %619, %620, %cst_400 {dimension_numbers = #tpu.dot_dimension_numbers<[1], [1], [0], [0], [0, 0, 1, 0], [], []>} : vector<16x16xbf16>, vector<16x16xbf16>, vector<16x16xf32> -> vector<16x16xf32>
    %cst_401 = arith.constant 2.500000e-01 : f32
    %623 = vector.broadcast %cst_401 : f32 to vector<16x16xf32>
    %624 = arith.mulf %622, %623 : vector<16x16xf32>
    %cst_402 = arith.constant dense<0xFF800000> : vector<16xf32>
    %625 = vector.multi_reduction <maximumf>, %624, %cst_402 [1] : vector<16x16xf32> to vector<16xf32>
    %626 = vector.shape_cast %625 : vector<16xf32> to vector<16x1xf32>
    %627 = vector.broadcast %626 : vector<16x1xf32> to vector<16x16xf32>
    %628 = arith.subf %624, %627 : vector<16x16xf32>
    %629 = math.exp %628 : vector<16x16xf32>
    %cst_403 = arith.constant dense<0.000000e+00> : vector<16xf32>
    %630 = vector.multi_reduction <add>, %629, %cst_403 [1] : vector<16x16xf32> to vector<16xf32>
    %631 = vector.shape_cast %630 : vector<16xf32> to vector<16x1xf32>
    %632 = arith.truncf %629 : vector<16x16xf32> to vector<16x16xbf16>
    %cst_404 = arith.constant dense<0.000000e+00> : vector<16x16xf32>
    %633 = tpu.matmul %632, %621, %cst_404 {dimension_numbers = #tpu.dot_dimension_numbers<[1], [0], [0], [1], [0, 0, 1, 1], [], []>} : vector<16x16xbf16>, vector<16x16xbf16>, vector<16x16xf32> -> vector<16x16xf32>
    %634 = tpu.reciprocal %631 {approx = true} : vector<16x1xf32> -> vector<16x1xf32>
    %635 = vector.broadcast %634 : vector<16x1xf32> to vector<16x16xf32>
    %636 = arith.mulf %633, %635 : vector<16x16xf32>
    %c48_405 = arith.constant 48 : index
    %c112_406 = arith.constant 112 : index
    %637 = vector.load %arg15[%c48_405, %c112_406] : memref<64x128xf32, #tpu.memory_space<vmem>>, vector<16x16xf32>
    tpu.vector_store %arg15[%c48_405, %c112_406], %636 {strides = array<i32>} : memref<64x128xf32, #tpu.memory_space<vmem>>, vector<16x16xf32>,
    %c0_407 = arith.constant 0 : index
    %c0_408 = arith.constant 0 : index
    %638 = vector.load %arg15[%c0_407, %c0_408] : memref<64x128xf32, #tpu.memory_space<vmem>>, vector<64x128xf32>
    %639 = arith.truncf %638 : vector<64x128xf32> to vector<64x128xbf16>
    %c0_409 = arith.constant 0 : index
    %c0_410 = arith.constant 0 : index
    %640 = vector.load %arg5[%c0_409, %c0_410] : memref<128x128xbf16, #tpu.memory_space<vmem>>, vector<128x128xbf16>
    %cst_411 = arith.constant dense<0.000000e+00> : vector<64x128xf32>
    %641 = tpu.matmul %639, %640, %cst_411 {dimension_numbers = #tpu.dot_dimension_numbers<[1], [0], [0], [1], [0, 0, 1, 1], [], []>} : vector<64x128xbf16>, vector<128x128xbf16>, vector<64x128xf32> -> vector<64x128xf32>
    %c0_412 = arith.constant 0 : index
    %c0_413 = arith.constant 0 : index
    %642 = vector.load %arg6[%c0_412, %c0_413] : memref<1x128xf32, #tpu.memory_space<vmem>>, vector<1x128xf32>
    %643 = vector.broadcast %642 : vector<1x128xf32> to vector<64x128xf32>
    %644 = arith.addf %641, %643 : vector<64x128xf32>
    %645 = arith.addf %0, %644 : vector<64x128xf32>
    %c0_414 = arith.constant 0 : index
    %c0_415 = arith.constant 0 : index
    %646 = vector.load %arg7[%c0_414, %c0_415] : memref<1x128xf32, #tpu.memory_space<vmem>>, vector<1x128xf32>
    %c0_416 = arith.constant 0 : index
    %c0_417 = arith.constant 0 : index
    %647 = vector.load %arg8[%c0_416, %c0_417] : memref<1x128xf32, #tpu.memory_space<vmem>>, vector<1x128xf32>
    %cst_418 = arith.constant dense<0.000000e+00> : vector<64xf32>
    %648 = vector.multi_reduction <add>, %645, %cst_418 [1] : vector<64x128xf32> to vector<64xf32>
    %649 = vector.shape_cast %648 : vector<64xf32> to vector<64x1xf32>
    %cst_419 = arith.constant 1.280000e+02 : f32
    %650 = vector.broadcast %cst_419 : f32 to vector<64x1xf32>
    %651 = arith.divf %649, %650 : vector<64x1xf32>
    %652 = vector.broadcast %651 : vector<64x1xf32> to vector<64x128xf32>
    %653 = arith.subf %645, %652 : vector<64x128xf32>
    %654 = arith.mulf %653, %653 : vector<64x128xf32>
    %cst_420 = arith.constant dense<0.000000e+00> : vector<64xf32>
    %655 = vector.multi_reduction <add>, %654, %cst_420 [1] : vector<64x128xf32> to vector<64xf32>
    %656 = vector.shape_cast %655 : vector<64xf32> to vector<64x1xf32>
    %cst_421 = arith.constant 1.280000e+02 : f32
    %657 = vector.broadcast %cst_421 : f32 to vector<64x1xf32>
    %658 = arith.divf %656, %657 : vector<64x1xf32>
    %659 = vector.broadcast %651 : vector<64x1xf32> to vector<64x128xf32>
    %660 = arith.subf %645, %659 : vector<64x128xf32>
    %cst_422 = arith.constant 9.99999974E-6 : f32
    %661 = vector.broadcast %cst_422 : f32 to vector<64x1xf32>
    %662 = arith.addf %658, %661 : vector<64x1xf32>
    %663 = math.rsqrt %662 : vector<64x1xf32>
    %664 = vector.broadcast %663 : vector<64x1xf32> to vector<64x128xf32>
    %665 = arith.mulf %660, %664 : vector<64x128xf32>
    %666 = vector.broadcast %646 : vector<1x128xf32> to vector<64x128xf32>
    %667 = arith.mulf %665, %666 : vector<64x128xf32>
    %668 = vector.broadcast %647 : vector<1x128xf32> to vector<64x128xf32>
    %669 = arith.addf %667, %668 : vector<64x128xf32>
    %670 = arith.truncf %669 : vector<64x128xf32> to vector<64x128xbf16>
    %c0_423 = arith.constant 0 : index
    %c0_424 = arith.constant 0 : index
    %671 = vector.load %arg9[%c0_423, %c0_424] : memref<128x256xbf16, #tpu.memory_space<vmem>>, vector<128x256xbf16>
    %cst_425 = arith.constant dense<0.000000e+00> : vector<64x256xf32>
    %672 = tpu.matmul %670, %671, %cst_425 {dimension_numbers = #tpu.dot_dimension_numbers<[1], [0], [0], [1], [0, 0, 1, 1], [], []>} : vector<64x128xbf16>, vector<128x256xbf16>, vector<64x256xf32> -> vector<64x256xf32>
    %c0_426 = arith.constant 0 : index
    %c0_427 = arith.constant 0 : index
    %673 = vector.load %arg10[%c0_426, %c0_427] : memref<1x256xf32, #tpu.memory_space<vmem>>, vector<1x256xf32>
    %674 = vector.broadcast %673 : vector<1x256xf32> to vector<64x256xf32>
    %675 = arith.addf %672, %674 : vector<64x256xf32>
    %cst_428 = arith.constant 5.000000e-01 : f32
    %676 = vector.broadcast %cst_428 : f32 to vector<64x256xf32>
    %677 = arith.mulf %676, %675 : vector<64x256xf32>
    %cst_429 = arith.constant 0.707106769 : f32
    %678 = vector.broadcast %cst_429 : f32 to vector<64x256xf32>
    %679 = arith.mulf %675, %678 : vector<64x256xf32>
    %680 = math.erf %679 : vector<64x256xf32>
    %cst_430 = arith.constant 1.000000e+00 : f32
    %681 = vector.broadcast %cst_430 : f32 to vector<64x256xf32>
    %682 = arith.addf %681, %680 : vector<64x256xf32>
    %683 = arith.mulf %677, %682 : vector<64x256xf32>
    %684 = arith.truncf %683 : vector<64x256xf32> to vector<64x256xbf16>
    %c0_431 = arith.constant 0 : index
    %c0_432 = arith.constant 0 : index
    %685 = vector.load %arg11[%c0_431, %c0_432] : memref<256x128xbf16, #tpu.memory_space<vmem>>, vector<256x128xbf16>
    %cst_433 = arith.constant dense<0.000000e+00> : vector<64x128xf32>
    %686 = tpu.matmul %684, %685, %cst_433 {dimension_numbers = #tpu.dot_dimension_numbers<[1], [0], [0], [1], [0, 0, 1, 1], [], []>} : vector<64x256xbf16>, vector<256x128xbf16>, vector<64x128xf32> -> vector<64x128xf32>
    %c0_434 = arith.constant 0 : index
    %c0_435 = arith.constant 0 : index
    %687 = vector.load %arg12[%c0_434, %c0_435] : memref<1x128xf32, #tpu.memory_space<vmem>>, vector<1x128xf32>
    %688 = vector.broadcast %687 : vector<1x128xf32> to vector<64x128xf32>
    %689 = arith.addf %686, %688 : vector<64x128xf32>
    %690 = arith.addf %645, %689 : vector<64x128xf32>
    %c0_436 = arith.constant 0 : index
    %c0_437 = arith.constant 0 : index
    %691 = vector.load %arg13[%c0_436, %c0_437] : memref<64x128xf32, #tpu.memory_space<vmem>>, vector<64x128xf32>
    tpu.vector_store %arg13[%c0_436, %c0_437], %690 {strides = array<i32>} : memref<64x128xf32, #tpu.memory_space<vmem>>, vector<64x128xf32>,
    return
  }
  func.func @transform_0(%arg0: i32) -> (i32, i32) {
    %c0_i32 = arith.constant 0 : i32
    %c0_i32_0 = arith.constant 0 : i32
    return %arg0, %c0_i32 : i32, i32
  }
  func.func @transform_1(%arg0: i32) -> (i32, i32) {
    %c0_i32 = arith.constant 0 : i32
    %c0_i32_0 = arith.constant 0 : i32
    %c0_i32_1 = arith.constant 0 : i32
    return %c0_i32, %c0_i32_0 : i32, i32
  }
  func.func @transform_2(%arg0: i32) -> (i32, i32) {
    %c0_i32 = arith.constant 0 : i32
    %c0_i32_0 = arith.constant 0 : i32
    %c0_i32_1 = arith.constant 0 : i32
    return %c0_i32, %c0_i32_0 : i32, i32
  }
  func.func @transform_3(%arg0: i32) -> (i32, i32) {
    %c0_i32 = arith.constant 0 : i32
    %c0_i32_0 = arith.constant 0 : i32
    %c0_i32_1 = arith.constant 0 : i32
    return %c0_i32, %c0_i32_0 : i32, i32
  }
  func.func @transform_4(%arg0: i32) -> (i32, i32) {
    %c0_i32 = arith.constant 0 : i32
    %c0_i32_0 = arith.constant 0 : i32
    %c0_i32_1 = arith.constant 0 : i32
    return %c0_i32, %c0_i32_0 : i32, i32
  }
  func.func @transform_5(%arg0: i32) -> (i32, i32) {
    %c0_i32 = arith.constant 0 : i32
    %c0_i32_0 = arith.constant 0 : i32
    %c0_i32_1 = arith.constant 0 : i32
    return %c0_i32, %c0_i32_0 : i32, i32
  }
  func.func @transform_6(%arg0: i32) -> (i32, i32) {
    %c0_i32 = arith.constant 0 : i32
    %c0_i32_0 = arith.constant 0 : i32
    %c0_i32_1 = arith.constant 0 : i32
    return %c0_i32, %c0_i32_0 : i32, i32
  }
  func.func @transform_7(%arg0: i32) -> (i32, i32) {
    %c0_i32 = arith.constant 0 : i32
    %c0_i32_0 = arith.constant 0 : i32
    %c0_i32_1 = arith.constant 0 : i32
    return %c0_i32, %c0_i32_0 : i32, i32
  }
  func.func @transform_8(%arg0: i32) -> (i32, i32) {
    %c0_i32 = arith.constant 0 : i32
    %c0_i32_0 = arith.constant 0 : i32
    %c0_i32_1 = arith.constant 0 : i32
    return %c0_i32, %c0_i32_0 : i32, i32
  }
  func.func @transform_9(%arg0: i32) -> (i32, i32) {
    %c0_i32 = arith.constant 0 : i32
    %c0_i32_0 = arith.constant 0 : i32
    %c0_i32_1 = arith.constant 0 : i32
    return %c0_i32, %c0_i32_0 : i32, i32
  }
  func.func @transform_10(%arg0: i32) -> (i32, i32) {
    %c0_i32 = arith.constant 0 : i32
    %c0_i32_0 = arith.constant 0 : i32
    %c0_i32_1 = arith.constant 0 : i32
    return %c0_i32, %c0_i32_0 : i32, i32
  }
  func.func @transform_11(%arg0: i32) -> (i32, i32) {
    %c0_i32 = arith.constant 0 : i32
    %c0_i32_0 = arith.constant 0 : i32
    %c0_i32_1 = arith.constant 0 : i32
    return %c0_i32, %c0_i32_0 : i32, i32
  }
  func.func @transform_12(%arg0: i32) -> (i32, i32) {
    %c0_i32 = arith.constant 0 : i32
    %c0_i32_0 = arith.constant 0 : i32
    return %arg0, %c0_i32 : i32, i32
  }
}

</mosaic_0001>

<llo_original>
// kernel: tpu_custom_call.1
$region0: #{tpu_custom_call.1}
  #allocation0 [shape = 'u32[]', space=smem, size = 0x4, offset = 0x4, fixed_abs, tag = 'smem constant byte address 0x4 - core index']
  #allocation1 [shape = 'u32[144,128]{1,0:T(1,128)}', space=vmem, size = 0x12000, scoped, tag = 'internal scratch']
  #allocation2 [shape = 'bf16[64,384]{1,0:T(16,128)(2,1)}', space=vmem, size = 0xc000, scoped, tag = 'scratch operand']
  #allocation3 [shape = 'f32[64,128]{1,0:T(8,128)}', space=vmem, size = 0x8000, scoped, tag = 'scratch operand']
  %s0 = inlined_call_operand.hbm [shape: f32[64,128], index: 0, kind: input, shape index: {}]
  %s1 = inlined_call_operand.vmem [shape: f32[1,128], index: 1, kind: input, shape index: {}]
  %s2 = inlined_call_operand.vmem [shape: f32[1,128], index: 2, kind: input, shape index: {}]
  %s3 = inlined_call_operand.hbm [shape: bf16[128,384], index: 3, kind: input, shape index: {}]
  %s4 = inlined_call_operand.hbm [shape: bf16[128,128], index: 4, kind: input, shape index: {}]
  %s5 = inlined_call_operand.vmem [shape: f32[1,128], index: 5, kind: input, shape index: {}]
  %s6 = inlined_call_operand.vmem [shape: f32[1,128], index: 6, kind: input, shape index: {}]
  %s7 = inlined_call_operand.vmem [shape: f32[1,128], index: 7, kind: input, shape index: {}]
  %s8 = inlined_call_operand.hbm [shape: bf16[128,256], index: 8, kind: input, shape index: {}]
  %s9 = inlined_call_operand.vmem [shape: f32[1,256], index: 9, kind: input, shape index: {}]
  %s10 = inlined_call_operand.hbm [shape: bf16[256,128], index: 10, kind: input, shape index: {}]
  %s11 = inlined_call_operand.vmem [shape: f32[1,128], index: 11, kind: input, shape index: {}]
  %s12 = inlined_call_operand.hbm [shape: f32[64,128], index: 12, kind: output, shape index: {}]
  %s13 = sld [smem:[#allocation0]]
  $region78: #{tpu_custom_call.1} parent=0
    _
  %s15 = ssub.s32 1, %s13
  %s16 = scalar_select 0, %s15, %s13
  $region1: #{tpu_custom_call.1} parent=0
    #allocation4 [shape = 'u8[32768]{0}', space=vmem, size = 0x8000, scoped, tag = 'input window, operand 0, single buffered']
    #allocation5 [shape = 's32[1]{0}', space=sflag, size = 0x4, scoped, tag = 'scoped memory for tpu_custom_call.1']
    #allocation6 [shape = 's32[1]{0}', space=sflag, size = 0x4, scoped, tag = 'scoped memory for tpu_custom_call.1']
    #allocation7 [shape = 'u8[98304]{0}', space=vmem, size = 0x18000, scoped, tag = 'input window, operand 3, single buffered']
    #allocation8 [shape = 's32[1]{0}', space=sflag, size = 0x4, scoped, tag = 'scoped memory for tpu_custom_call.1']
    #allocation9 [shape = 'u8[32768]{0}', space=vmem, size = 0x8000, scoped, tag = 'input window, operand 4, single buffered']
    #allocation10 [shape = 'u8[65536]{0}', space=vmem, size = 0x10000, scoped, tag = 'input window, operand 8, single buffered']
    #allocation11 [shape = 's32[1]{0}', space=sflag, size = 0x4, scoped, tag = 'scoped memory for tpu_custom_call.1']
    #allocation12 [shape = 'u8[65536]{0}', space=vmem, size = 0x10000, scoped, tag = 'input window, operand 10, single buffered']
    #allocation13 [shape = 'u8[32768]{0}', space=vmem, size = 0x8000, scoped, tag = 'output window, operand 0, single buffered']
    %17 = vsyncpa [#allocation5], 0
    %18 = vsyncpa [#allocation8], 0
    %19 = vsyncpa [#allocation11], 0
    %20 = vsyncpa [#allocation6], 0
    // Predicated region
    $region2: #{tpu_custom_call.1} parent=1 // pred_check
      _
    $region3: #{tpu_custom_call.1} parent=1 // pred_check_branch
      %22 = sbr.rel (0) target = $region5
    $region4: #{tpu_custom_call.1} parent=1 // pred_region
      %s24 = ssub.s32 1024, 1024
      %25 = vsyncadd [#allocation5], %s24
      %s26 = sshll.u32 [#allocation4], 4
      %s27 = int_to_ptr.vmem [resolvable:$true] %s26
      %32 = dma.hbm_to_vmem [thread:$0]  %s0, 1024, %s27, [#allocation5], 128, 128, 8
    $region5: #{tpu_custom_call.1} parent=1 // pred_fallthru
      _
    // Predicated region
    $region6: #{tpu_custom_call.1} parent=1 // pred_check
      _
    $region7: #{tpu_custom_call.1} parent=1 // pred_check_branch
      %34 = sbr.rel (0) target = $region9
    $region8: #{tpu_custom_call.1} parent=1 // pred_region
      _
    $region9: #{tpu_custom_call.1} parent=1 // pred_fallthru
      _
    // Predicated region
    $region10: #{tpu_custom_call.1} parent=1 // pred_check
      _
    $region11: #{tpu_custom_call.1} parent=1 // pred_check_branch
      %36 = sbr.rel (0) target = $region13
    $region12: #{tpu_custom_call.1} parent=1 // pred_region
      _
    $region13: #{tpu_custom_call.1} parent=1 // pred_fallthru
      _
    // Predicated region
    $region14: #{tpu_custom_call.1} parent=1 // pred_check
      _
    $region15: #{tpu_custom_call.1} parent=1 // pred_check_branch
      %38 = sbr.rel (0) target = $region17
    $region16: #{tpu_custom_call.1} parent=1 // pred_region
      %s40 = ssub.s32 3072, 3072
      %41 = vsyncadd [#allocation8], %s40
      %s42 = sshll.u32 [#allocation7], 4
      %s43 = int_to_ptr.vmem [resolvable:$true] %s42
      %48 = dma.hbm_to_vmem [thread:$0]  %s3, 3072, %s43, [#allocation8], 192, 192, 12
    $region17: #{tpu_custom_call.1} parent=1 // pred_fallthru
      _
    // Predicated region
    $region18: #{tpu_custom_call.1} parent=1 // pred_check
      _
    $region19: #{tpu_custom_call.1} parent=1 // pred_check_branch
      %50 = sbr.rel (0) target = $region21
    $region20: #{tpu_custom_call.1} parent=1 // pred_region
      %s52 = ssub.s32 1024, 1024
      %53 = vsyncadd [#allocation8], %s52
      %s54 = sshll.u32 [#allocation9], 4
      %s55 = int_to_ptr.vmem [resolvable:$true] %s54
      %60 = dma.hbm_to_vmem [thread:$0]  %s4, 1024, %s55, [#allocation8], 64, 64, 4
    $region21: #{tpu_custom_call.1} parent=1 // pred_fallthru
      _
    // Predicated region
    $region22: #{tpu_custom_call.1} parent=1 // pred_check
      _
    $region23: #{tpu_custom_call.1} parent=1 // pred_check_branch
      %62 = sbr.rel (0) target = $region25
    $region24: #{tpu_custom_call.1} parent=1 // pred_region
      _
    $region25: #{tpu_custom_call.1} parent=1 // pred_fallthru
      _
    // Predicated region
    $region26: #{tpu_custom_call.1} parent=1 // pred_check
      _
    $region27: #{tpu_custom_call.1} parent=1 // pred_check_branch
      %64 = sbr.rel (0) target = $region29
    $region28: #{tpu_custom_call.1} parent=1 // pred_region
      _
    $region29: #{tpu_custom_call.1} parent=1 // pred_fallthru
      _
    // Predicated region
    $region30: #{tpu_custom_call.1} parent=1 // pred_check
      _
    $region31: #{tpu_custom_call.1} parent=1 // pred_check_branch
      %66 = sbr.rel (0) target = $region33
    $region32: #{tpu_custom_call.1} parent=1 // pred_region
      _
    $region33: #{tpu_custom_call.1} parent=1 // pred_fallthru
      _
    // Predicated region
    $region34: #{tpu_custom_call.1} parent=1 // pred_check
      _
    $region35: #{tpu_custom_call.1} parent=1 // pred_check_branch
      %68 = sbr.rel (0) target = $region37
    $region36: #{tpu_custom_call.1} parent=1 // pred_region
      %s70 = ssub.s32 2048, 2048
      %71 = vsyncadd [#allocation11], %s70
      %s72 = sshll.u32 [#allocation10], 4
      %s73 = int_to_ptr.vmem [resolvable:$true] %s72
      %78 = dma.hbm_to_vmem [thread:$0]  %s8, 2048, %s73, [#allocation11], 128, 128, 8
    $region37: #{tpu_custom_call.1} parent=1 // pred_fallthru
      _
    // Predicated region
    $region38: #{tpu_custom_call.1} parent=1 // pred_check
      _
    $region39: #{tpu_custom_call.1} parent=1 // pred_check_branch
      %80 = sbr.rel (0) target = $region41
    $region40: #{tpu_custom_call.1} parent=1 // pred_region
      _
    $region41: #{tpu_custom_call.1} parent=1 // pred_fallthru
      _
    // Predicated region
    $region42: #{tpu_custom_call.1} parent=1 // pred_check
      _
    $region43: #{tpu_custom_call.1} parent=1 // pred_check_branch
      %82 = sbr.rel (0) target = $region45
    $region44: #{tpu_custom_call.1} parent=1 // pred_region
      %s84 = ssub.s32 2048, 2048
      %85 = vsyncadd [#allocation11], %s84
      %s86 = sshll.u32 [#allocation12], 4
      %s87 = int_to_ptr.vmem [resolvable:$true] %s86
      %92 = dma.hbm_to_vmem [thread:$0]  %s10, 2048, %s87, [#allocation11], 64, 64, 4
    $region45: #{tpu_custom_call.1} parent=1 // pred_fallthru
      _
    // Predicated region
    $region46: #{tpu_custom_call.1} parent=1 // pred_check
      _
    $region47: #{tpu_custom_call.1} parent=1 // pred_check_branch
      %94 = sbr.rel (0) target = $region49
    $region48: #{tpu_custom_call.1} parent=1 // pred_region
      _
    $region49: #{tpu_custom_call.1} parent=1 // pred_fallthru
      _
    // Predicated region
    $region50: #{tpu_custom_call.1} parent=1 // pred_check
      _
    $region51: #{tpu_custom_call.1} parent=1 // pred_check_branch
      %96 = sbr.rel (0) target = $region53
    $region52: #{tpu_custom_call.1} parent=1 // pred_region
      %97 = dma.done [#allocation5], 1024
    $region53: #{tpu_custom_call.1} parent=1 // pred_fallthru
      _
    // Predicated region
    $region54: #{tpu_custom_call.1} parent=1 // pred_check
      _
    $region55: #{tpu_custom_call.1} parent=1 // pred_check_branch
      %99 = sbr.rel (0) target = $region57
    $region56: #{tpu_custom_call.1} parent=1 // pred_region
      %100 = dma.done [#allocation8], 3072
    $region57: #{tpu_custom_call.1} parent=1 // pred_fallthru
      _
    // Predicated region
    $region58: #{tpu_custom_call.1} parent=1 // pred_check
      _
    $region59: #{tpu_custom_call.1} parent=1 // pred_check_branch
      %102 = sbr.rel (0) target = $region61
    $region60: #{tpu_custom_call.1} parent=1 // pred_region
      %103 = dma.done [#allocation8], 1024
    $region61: #{tpu_custom_call.1} parent=1 // pred_fallthru
      _
    // Predicated region
    $region62: #{tpu_custom_call.1} parent=1 // pred_check
      _
    $region63: #{tpu_custom_call.1} parent=1 // pred_check_branch
      %105 = sbr.rel (0) target = $region65
    $region64: #{tpu_custom_call.1} parent=1 // pred_region
      %106 = dma.done [#allocation11], 2048
    $region65: #{tpu_custom_call.1} parent=1 // pred_fallthru
      _
    // Predicated region
    $region66: #{tpu_custom_call.1} parent=1 // pred_check
      _
    $region67: #{tpu_custom_call.1} parent=1 // pred_check_branch
      %108 = sbr.rel (0) target = $region69
    $region68: #{tpu_custom_call.1} parent=1 // pred_region
      %109 = dma.done [#allocation11], 2048
    $region69: #{tpu_custom_call.1} parent=1 // pred_fallthru
      _
    %v111 = vld [vmem:[#allocation4] sm:$0xff]
    %v112 = vld [vmem:[#allocation4 + $0x8] sm:$0xff]
    %v113 = vld [vmem:[#allocation4 + $0x10] sm:$0xff]
    %v114 = vld [vmem:[#allocation4 + $0x18] sm:$0xff]
    %v115 = vld [vmem:[#allocation4 + $0x20] sm:$0xff]
    %v116 = vld [vmem:[#allocation4 + $0x28] sm:$0xff]
    %v117 = vld [vmem:[#allocation4 + $0x30] sm:$0xff]
    %v118 = vld [vmem:[#allocation4 + $0x38] sm:$0xff]
    %v119 = vld [vmem:[%s1] sm:$0x1]
    %v120 = vld [vmem:[%s2] sm:$0x1]
    %121 = vadd.xlane.f32.xlu0 %v111
    %v122 = vpop.xlane.xlu0 %121
    %123 = vadd.xlane.f32.xlu0 %v112
    %v124 = vpop.xlane.xlu0 %123
    %125 = vadd.xlane.f32.xlu0 %v113
    %v126 = vpop.xlane.xlu0 %125
    %127 = vadd.xlane.f32.xlu0 %v114
    %v128 = vpop.xlane.xlu0 %127
    %129 = vadd.xlane.f32.xlu0 %v115
    %v130 = vpop.xlane.xlu0 %129
    %131 = vadd.xlane.f32.xlu0 %v116
    %v132 = vpop.xlane.xlu0 %131
    %133 = vadd.xlane.f32.xlu0 %v117
    %v134 = vpop.xlane.xlu0 %133
    %135 = vadd.xlane.f32.xlu0 %v118
    %v136 = vpop.xlane.xlu0 %135
    %v137 = vrcp.pop 128.0
    %v138 = vmul.f32 %v122, %v137
    %v139 = vmul.f32 %v124, %v137
    %v140 = vmul.f32 %v126, %v137
    %v141 = vmul.f32 %v128, %v137
    %v142 = vmul.f32 %v130, %v137
    %v143 = vmul.f32 %v132, %v137
    %v144 = vmul.f32 %v134, %v137
    %v145 = vmul.f32 %v136, %v137
    %v146 = vsub.f32 %v111, %v138
    %v147 = vsub.f32 %v112, %v139
    %v148 = vsub.f32 %v113, %v140
    %v149 = vsub.f32 %v114, %v141
    %v150 = vsub.f32 %v115, %v142
    %v151 = vsub.f32 %v116, %v143
    %v152 = vsub.f32 %v117, %v144
    %v153 = vsub.f32 %v118, %v145
    %v154 = vmul.f32 %v146, %v146
    %v155 = vmul.f32 %v147, %v147
    %v156 = vmul.f32 %v148, %v148
    %v157 = vmul.f32 %v149, %v149
    %v158 = vmul.f32 %v150, %v150
    %v159 = vmul.f32 %v151, %v151
    %v160 = vmul.f32 %v152, %v152
    %v161 = vmul.f32 %v153, %v153
    %162 = vadd.xlane.f32.xlu0 %v154
    %v163 = vpop.xlane.xlu0 %162
    %164 = vadd.xlane.f32.xlu0 %v155
    %v165 = vpop.xlane.xlu0 %164
    %166 = vadd.xlane.f32.xlu0 %v156
    %v167 = vpop.xlane.xlu0 %166
    %168 = vadd.xlane.f32.xlu0 %v157
    %v169 = vpop.xlane.xlu0 %168
    %170 = vadd.xlane.f32.xlu0 %v158
    %v171 = vpop.xlane.xlu0 %170
    %172 = vadd.xlane.f32.xlu0 %v159
    %v173 = vpop.xlane.xlu0 %172
    %174 = vadd.xlane.f32.xlu0 %v160
    %v175 = vpop.xlane.xlu0 %174
    %176 = vadd.xlane.f32.xlu0 %v161
    %v177 = vpop.xlane.xlu0 %176
    %v178 = vmul.f32 %v163, %v137
    %v179 = vmul.f32 %v165, %v137
    %v180 = vmul.f32 %v167, %v137
    %v181 = vmul.f32 %v169, %v137
    %v182 = vmul.f32 %v171, %v137
    %v183 = vmul.f32 %v173, %v137
    %v184 = vmul.f32 %v175, %v137
    %v185 = vmul.f32 %v177, %v137
    %v186 = vadd.f32 %v178, 1e-05
    %v187 = vadd.f32 %v179, 1e-05
    %v188 = vadd.f32 %v180, 1e-05
    %v189 = vadd.f32 %v181, 1e-05
    %v190 = vadd.f32 %v182, 1e-05
    %v191 = vadd.f32 %v183, 1e-05
    %v192 = vadd.f32 %v184, 1e-05
    %v193 = vadd.f32 %v185, 1e-05
    %v194 = vrsqrt.pop %v186
    %v195 = vrsqrt.pop %v187
    %v196 = vrsqrt.pop %v188
    %v197 = vrsqrt.pop %v189
    %v198 = vrsqrt.pop %v190
    %v199 = vrsqrt.pop %v191
    %v200 = vrsqrt.pop %v192
    %v201 = vrsqrt.pop %v193
    %v202 = vmul.f32 %v146, %v194
    %v203 = vmul.f32 %v147, %v195
    %v204 = vmul.f32 %v148, %v196
    %v205 = vmul.f32 %v149, %v197
    %v206 = vmul.f32 %v150, %v198
    %v207 = vmul.f32 %v151, %v199
    %v208 = vmul.f32 %v152, %v200
    %v209 = vmul.f32 %v153, %v201
    %v211 = vlaneseq
    %v212 = vshrl.u32 %v211, 7
    %v213 = vsub.s32 0, %v212
    %v214 = vrot.slane %v119, %v213
    %v216 = vmul.f32 %v202, %v214
    %v217 = vmul.f32 %v203, %v214
    %v218 = vmul.f32 %v204, %v214
    %v219 = vmul.f32 %v205, %v214
    %v220 = vmul.f32 %v206, %v214
    %v221 = vmul.f32 %v207, %v214
    %v222 = vmul.f32 %v208, %v214
    %v223 = vmul.f32 %v209, %v214
    %v225 = vlaneseq
    %v226 = vshrl.u32 %v225, 7
    %v227 = vsub.s32 0, %v226
    %v228 = vrot.slane %v120, %v227
    %v230 = vadd.f32 %v216, %v228
    %v231 = vadd.f32 %v217, %v228
    %v232 = vadd.f32 %v218, %v228
    %v233 = vadd.f32 %v219, %v228
    %v234 = vadd.f32 %v220, %v228
    %v235 = vadd.f32 %v221, %v228
    %v236 = vadd.f32 %v222, %v228
    %v237 = vadd.f32 %v223, %v228
    %v238 = vpack.c.bf16 %v231, %v230
    %v239 = vpack.c.bf16 %v233, %v232
    %v240 = vpack.c.bf16 %v235, %v234
    %v241 = vpack.c.bf16 %v237, %v236
    %v242 = vld [vmem:[#allocation7] sm:$0xff]
    %v243 = vld [vmem:[#allocation7 + $0x8] sm:$0xf]
    %v244 = vld [vmem:[#allocation7 + $0xc] sm:$0xff]
    %v245 = vld [vmem:[#allocation7 + $0x14] sm:$0xf]
    %v246 = vld [vmem:[#allocation7 + $0x18] sm:$0xff]
    %v247 = vld [vmem:[#allocation7 + $0x20] sm:$0xf]
    %v248 = vld [vmem:[#allocation7 + $0x24] sm:$0xff]
    %v249 = vld [vmem:[#allocation7 + $0x2c] sm:$0xf]
    %v250 = vld [vmem:[#allocation7 + $0x30] sm:$0xff]
    %v251 = vld [vmem:[#allocation7 + $0x38] sm:$0xf]
    %v252 = vld [vmem:[#allocation7 + $0x3c] sm:$0xff]
    %v253 = vld [vmem:[#allocation7 + $0x44] sm:$0xf]
    %v254 = vld [vmem:[#allocation7 + $0x48] sm:$0xff]
    %v255 = vld [vmem:[#allocation7 + $0x50] sm:$0xf]
    %v256 = vld [vmem:[#allocation7 + $0x54] sm:$0xff]
    %v257 = vld [vmem:[#allocation7 + $0x5c] sm:$0xf]
    %v258 = vld [vmem:[#allocation7 + $0x60] sm:$0xff]
    %v259 = vld [vmem:[#allocation7 + $0x68] sm:$0xf]
    %v260 = vld [vmem:[#allocation7 + $0x6c] sm:$0xff]
    %v261 = vld [vmem:[#allocation7 + $0x74] sm:$0xf]
    %v262 = vld [vmem:[#allocation7 + $0x78] sm:$0xff]
    %v263 = vld [vmem:[#allocation7 + $0x80] sm:$0xf]
    %v264 = vld [vmem:[#allocation7 + $0x84] sm:$0xff]
    %v265 = vld [vmem:[#allocation7 + $0x8c] sm:$0xf]
    %v266 = vld [vmem:[#allocation7 + $0x90] sm:$0xff]
    %v267 = vld [vmem:[#allocation7 + $0x98] sm:$0xf]
    %v268 = vld [vmem:[#allocation7 + $0x9c] sm:$0xff]
    %v269 = vld [vmem:[#allocation7 + $0xa4] sm:$0xf]
    %v270 = vld [vmem:[#allocation7 + $0xa8] sm:$0xff]
    %v271 = vld [vmem:[#allocation7 + $0xb0] sm:$0xf]
    %v272 = vld [vmem:[#allocation7 + $0xb4] sm:$0xff]
    %v273 = vld [vmem:[#allocation7 + $0xbc] sm:$0xf]
    %v306 = vunpack.c.l.b16 %v242
    %v307 = vunpack.c.h.b16 %v242
    %v308 = vunpack.c.l.b16 %v243
    %v309 = vunpack.c.l.b16 %v244
    %v310 = vunpack.c.h.b16 %v244
    %v311 = vunpack.c.l.b16 %v245
    %v312 = vunpack.c.l.b16 %v246
    %v313 = vunpack.c.h.b16 %v246
    %v314 = vunpack.c.l.b16 %v247
    %v315 = vunpack.c.l.b16 %v248
    %v316 = vunpack.c.h.b16 %v248
    %v317 = vunpack.c.l.b16 %v249
    %v318 = vunpack.c.l.b16 %v250
    %v319 = vunpack.c.h.b16 %v250
    %v320 = vunpack.c.l.b16 %v251
    %v321 = vunpack.c.l.b16 %v252
    %v322 = vunpack.c.h.b16 %v252
    %v323 = vunpack.c.l.b16 %v253
    %v324 = vunpack.c.l.b16 %v254
    %v325 = vunpack.c.h.b16 %v254
    %v326 = vunpack.c.l.b16 %v255
    %v327 = vunpack.c.l.b16 %v256
    %v328 = vunpack.c.h.b16 %v256
    %v329 = vunpack.c.l.b16 %v257
    %v330 = vunpack.c.l.b16 %v258
    %v331 = vunpack.c.h.b16 %v258
    %v332 = vunpack.c.l.b16 %v259
    %v333 = vunpack.c.l.b16 %v260
    %v334 = vunpack.c.h.b16 %v260
    %v335 = vunpack.c.l.b16 %v261
    %v336 = vunpack.c.l.b16 %v262
    %v337 = vunpack.c.h.b16 %v262
    %v338 = vunpack.c.l.b16 %v263
    %v339 = vunpack.c.l.b16 %v264
    %v340 = vunpack.c.h.b16 %v264
    %v341 = vunpack.c.l.b16 %v265
    %v342 = vunpack.c.l.b16 %v266
    %v343 = vunpack.c.h.b16 %v266
    %v344 = vunpack.c.l.b16 %v267
    %v345 = vunpack.c.l.b16 %v268
    %v346 = vunpack.c.h.b16 %v268
    %v347 = vunpack.c.l.b16 %v269
    %v348 = vunpack.c.l.b16 %v270
    %v349 = vunpack.c.h.b16 %v270
    %v350 = vunpack.c.l.b16 %v271
    %v351 = vunpack.c.l.b16 %v272
    %v352 = vunpack.c.h.b16 %v272
    %v353 = vunpack.c.l.b16 %v273
    %v354 = vpack.c.b16 %v309, %v306
    %v355 = vpack.c.b16 %v310, %v307
    %v356 = vpack.c.b16 %v311, %v308
    %v357 = vpack.c.b16 %v315, %v312
    %v358 = vpack.c.b16 %v316, %v313
    %v359 = vpack.c.b16 %v317, %v314
    %v360 = vpack.c.b16 %v321, %v318
    %v361 = vpack.c.b16 %v322, %v319
    %v362 = vpack.c.b16 %v323, %v320
    %v363 = vpack.c.b16 %v327, %v324
    %v364 = vpack.c.b16 %v328, %v325
    %v365 = vpack.c.b16 %v329, %v326
    %v366 = vpack.c.b16 %v333, %v330
    %v367 = vpack.c.b16 %v334, %v331
    %v368 = vpack.c.b16 %v335, %v332
    %v369 = vpack.c.b16 %v339, %v336
    %v370 = vpack.c.b16 %v340, %v337
    %v371 = vpack.c.b16 %v341, %v338
    %v372 = vpack.c.b16 %v345, %v342
    %v373 = vpack.c.b16 %v346, %v343
    %v374 = vpack.c.b16 %v347, %v344
    %v375 = vpack.c.b16 %v351, %v348
    %v376 = vpack.c.b16 %v352, %v349
    %v377 = vpack.c.b16 %v353, %v350
    %402 = vmatprep.subr.bf16.mxu0 %v355
    %403 = vmatpush1.bf16.msra.mxu0 %v354
    %404 = vmatprep.subr.bf16.mxu0 %v358
    %405 = vmatpush1.bf16.msra.mxu0 %v357
    %406 = vmatprep.subr.bf16.mxu0 %v361
    %407 = vmatpush1.bf16.msra.mxu0 %v360
    %408 = vmatprep.subr.bf16.mxu0 %v364
    %409 = vmatpush1.bf16.msra.mxu0 %v363
    %410 = vmatprep.subr.bf16.mxu0 %v367
    %411 = vmatpush1.bf16.msra.mxu0 %v366
    %412 = vmatprep.subr.bf16.mxu0 %v370
    %413 = vmatpush1.bf16.msra.mxu0 %v369
    %414 = vmatprep.subr.bf16.mxu0 %v373
    %415 = vmatpush1.bf16.msra.mxu0 %v372
    %416 = vmatprep.subr.bf16.mxu0 %v376
    %417 = vmatpush1.bf16.msra.mxu0 %v375
    %418 = vmatprep.subr.bf16.mxu0 0
    %419 = vmatpush1.bf16.msra.mxu0 0
    %420 = vmatprep.subr.bf16.mxu0 0
    %421 = vmatpush1.bf16.msra.mxu0 0
    %422 = vmatprep.subr.bf16.mxu0 0
    %423 = vmatpush1.bf16.msra.mxu0 0
    %424 = vmatprep.subr.bf16.mxu0 0
    %425 = vmatpush1.bf16.msra.mxu0 0
    %426 = vmatprep.subr.bf16.mxu0 0
    %427 = vmatpush1.bf16.msra.mxu0 0
    %428 = vmatprep.subr.bf16.mxu0 0
    %429 = vmatpush1.bf16.msra.mxu0 0
    %430 = vmatprep.subr.bf16.mxu0 0
    %431 = vmatpush1.bf16.msra.mxu0 0
    %432 = vmatprep.subr.bf16.mxu0 0
    %433 = vmatpush1.bf16.msra.mxu0 0
    %434 = vmatprep.mubr.bf16.mxu0 0
    %435 = vmatmul.mubr.bf16.gmra.mrb[0].mxu0 %v238
    %v436 = vpop.f32.mrb[0].mxu0
    %v437 = vadd.f32 0.0, %v436
    %v438 = vpop.f32.mrb[0].mxu0
    %v439 = vadd.f32 0.0, %v438
    %v440 = vpop.f32.mrb[0].mxu0
    %v441 = vadd.f32 0.0, %v440
    %v442 = vpop.f32.mrb[0].mxu0
    %v443 = vadd.f32 0.0, %v442
    %444 = vmatprep.mubr.bf16.mxu0 0
    %445 = vmatmul.mubr.bf16.gmra.mrb[0].mxu0 %v239
    %v446 = vpop.f32.mrb[0].mxu0
    %v447 = vadd.f32 0.0, %v446
    %v448 = vpop.f32.mrb[0].mxu0
    %v449 = vadd.f32 0.0, %v448
    %v450 = vpop.f32.mrb[0].mxu0
    %v451 = vadd.f32 0.0, %v450
    %v452 = vpop.f32.mrb[0].mxu0
    %v453 = vadd.f32 0.0, %v452
    %454 = vmatprep.mubr.bf16.mxu0 0
    %455 = vmatmul.mubr.bf16.gmra.mrb[0].mxu0 %v240
    %v456 = vpop.f32.mrb[0].mxu0
    %v457 = vadd.f32 0.0, %v456
    %v458 = vpop.f32.mrb[0].mxu0
    %v459 = vadd.f32 0.0, %v458
    %v460 = vpop.f32.mrb[0].mxu0
    %v461 = vadd.f32 0.0, %v460
    %v462 = vpop.f32.mrb[0].mxu0
    %v463 = vadd.f32 0.0, %v462
    %464 = vmatprep.mubr.bf16.mxu0 0
    %465 = vmatmul.mubr.bf16.gmra.mrb[0].mxu0 %v241
    %v466 = vpop.f32.mrb[0].mxu0
    %v467 = vadd.f32 0.0, %v466
    %v468 = vpop.f32.mrb[0].mxu0
    %v469 = vadd.f32 0.0, %v468
    %v470 = vpop.f32.mrb[0].mxu0
    %v471 = vadd.f32 0.0, %v470
    %v472 = vpop.f32.mrb[0].mxu0
    %v473 = vadd.f32 0.0, %v472
    %474 = vdwg.mxu0
    %475 = vmatprep.subr.bf16.mxu0 0
    %476 = vmatpush1.bf16.msra.mxu0 %v356
    %477 = vmatprep.subr.bf16.mxu0 0
    %478 = vmatpush1.bf16.msra.mxu0 %v359
    %479 = vmatprep.subr.bf16.mxu0 0
    %480 = vmatpush1.bf16.msra.mxu0 %v362
    %481 = vmatprep.subr.bf16.mxu0 0
    %482 = vmatpush1.bf16.msra.mxu0 %v365
    %483 = vmatprep.subr.bf16.mxu0 0
    %484 = vmatpush1.bf16.msra.mxu0 %v368
    %485 = vmatprep.subr.bf16.mxu0 0
    %486 = vmatpush1.bf16.msra.mxu0 %v371
    %487 = vmatprep.subr.bf16.mxu0 0
    %488 = vmatpush1.bf16.msra.mxu0 %v374
    %489 = vmatprep.subr.bf16.mxu0 0
    %490 = vmatpush1.bf16.msra.mxu0 %v377
    %491 = vmatprep.subr.bf16.mxu0 0
    %492 = vmatpush1.bf16.msra.mxu0 0
    %493 = vmatprep.subr.bf16.mxu0 0
    %494 = vmatpush1.bf16.msra.mxu0 0
    %495 = vmatprep.subr.bf16.mxu0 0
    %496 = vmatpush1.bf16.msra.mxu0 0
    %497 = vmatprep.subr.bf16.mxu0 0
    %498 = vmatpush1.bf16.msra.mxu0 0
    %499 = vmatprep.subr.bf16.mxu0 0
    %500 = vmatpush1.bf16.msra.mxu0 0
    %501 = vmatprep.subr.bf16.mxu0 0
    %502 = vmatpush1.bf16.msra.mxu0 0
    %503 = vmatprep.subr.bf16.mxu0 0
    %504 = vmatpush1.bf16.msra.mxu0 0
    %505 = vmatprep.subr.bf16.mxu0 0
    %506 = vmatpush1.bf16.msra.mxu0 0
    %507 = vmatprep.mubr.bf16.mxu0 0
    %508 = vmatmul.mubr.bf16.gmra.mrb[0].mxu0 %v238
    %v509 = vpop.f32.mrb[0].mxu0
    %v510 = vadd.f32 0.0, %v509
    %v511 = vpop.f32.mrb[0].mxu0
    %v512 = vpop.f32.mrb[0].mxu0
    %v513 = vadd.f32 0.0, %v512
    %v514 = vpop.f32.mrb[0].mxu0
    %515 = vmatprep.mubr.bf16.mxu0 0
    %516 = vmatmul.mubr.bf16.gmra.mrb[0].mxu0 %v239
    %v517 = vpop.f32.mrb[0].mxu0
    %v518 = vadd.f32 0.0, %v517
    %v519 = vpop.f32.mrb[0].mxu0
    %v520 = vpop.f32.mrb[0].mxu0
    %v521 = vadd.f32 0.0, %v520
    %v522 = vpop.f32.mrb[0].mxu0
    %523 = vmatprep.mubr.bf16.mxu0 0
    %524 = vmatmul.mubr.bf16.gmra.mrb[0].mxu0 %v240
    %v525 = vpop.f32.mrb[0].mxu0
    %v526 = vadd.f32 0.0, %v525
    %v527 = vpop.f32.mrb[0].mxu0
    %v528 = vpop.f32.mrb[0].mxu0
    %v529 = vadd.f32 0.0, %v528
    %v530 = vpop.f32.mrb[0].mxu0
    %531 = vmatprep.mubr.bf16.mxu0 0
    %532 = vmatmul.mubr.bf16.gmra.mrb[0].mxu0 %v241
    %v533 = vpop.f32.mrb[0].mxu0
    %v534 = vadd.f32 0.0, %v533
    %v535 = vpop.f32.mrb[0].mxu0
    %v536 = vpop.f32.mrb[0].mxu0
    %v537 = vadd.f32 0.0, %v536
    %v538 = vpop.f32.mrb[0].mxu0
    %539 = vdwg.mxu0
    %v540 = vpack.c.bf16 %v441, %v437
    %v541 = vpack.c.bf16 %v443, %v439
    %v542 = vpack.c.bf16 %v513, %v510
    %v543 = vpack.c.bf16 %v451, %v447
    %v544 = vpack.c.bf16 %v453, %v449
    %v545 = vpack.c.bf16 %v521, %v518
    %v546 = vpack.c.bf16 %v461, %v457
    %v547 = vpack.c.bf16 %v463, %v459
    %v548 = vpack.c.bf16 %v529, %v526
    %v549 = vpack.c.bf16 %v471, %v467
    %v550 = vpack.c.bf16 %v473, %v469
    %v551 = vpack.c.bf16 %v537, %v534
    %552 = vst [vmem:[#allocation2] sm:$0xff] %v540
    %553 = vst [vmem:[#allocation2 + $0x8] sm:$0xff] %v541
    %554 = vst [vmem:[#allocation2 + $0x10] sm:$0xff] %v542
    %555 = vst [vmem:[#allocation2 + $0x18] sm:$0xff] %v543
    %556 = vst [vmem:[#allocation2 + $0x20] sm:$0xff] %v544
    %557 = vst [vmem:[#allocation2 + $0x28] sm:$0xff] %v545
    %558 = vst [vmem:[#allocation2 + $0x30] sm:$0xff] %v546
    %559 = vst [vmem:[#allocation2 + $0x38] sm:$0xff] %v547
    %560 = vst [vmem:[#allocation2 + $0x40] sm:$0xff] %v548
    %561 = vst [vmem:[#allocation2 + $0x48] sm:$0xff] %v549
    %562 = vst [vmem:[#allocation2 + $0x50] sm:$0xff] %v550
    %563 = vst [vmem:[#allocation2 + $0x58] sm:$0xff] %v551
    %v564 = vld [vmem:[#allocation2] sm:$0xff]
    %v565 = vld [vmem:[#allocation2 + $0x8] sm:$0xff]
    %v566 = vld [vmem:[#allocation2 + $0x10] sm:$0xff]
    %vm567 = vcmask 130048
    %v569 = vsel %vm567, %v564, 0
    %v572 = vsel %vm567, %v565, 0
    %574 = vmatprep.subr.bf16.mxu0 0
    %575 = vmatpush1.bf16.xpose.msra.mxu0 %v572
    %576 = vmatprep.subr.bf16.mxu0 0
    %577 = vmatpush1.bf16.xpose.msra.mxu0 0
    %578 = vmatprep.subr.bf16.mxu0 0
    %579 = vmatpush1.bf16.xpose.msra.mxu0 0
    %580 = vmatprep.subr.bf16.mxu0 0
    %581 = vmatpush1.bf16.xpose.msra.mxu0 0
    %582 = vmatprep.subr.bf16.mxu0 0
    %583 = vmatpush1.bf16.xpose.msra.mxu0 0
    %584 = vmatprep.subr.bf16.mxu0 0
    %585 = vmatpush1.bf16.xpose.msra.mxu0 0
    %586 = vmatprep.subr.bf16.mxu0 0
    %587 = vmatpush1.bf16.xpose.msra.mxu0 0
    %588 = vmatprep.subr.bf16.mxu0 0
    %589 = vmatpush1.bf16.xpose.msra.mxu0 0
    %590 = vmatprep.subr.bf16.mxu0 0
    %591 = vmatpush1.bf16.xpose.msra.mxu0 0
    %592 = vmatprep.subr.bf16.mxu0 0
    %593 = vmatpush1.bf16.xpose.msra.mxu0 0
    %594 = vmatprep.subr.bf16.mxu0 0
    %595 = vmatpush1.bf16.xpose.msra.mxu0 0
    %596 = vmatprep.subr.bf16.mxu0 0
    %597 = vmatpush1.bf16.xpose.msra.mxu0 0
    %598 = vmatprep.subr.bf16.mxu0 0
    %599 = vmatpush1.bf16.xpose.msra.mxu0 0
    %600 = vmatprep.subr.bf16.mxu0 0
    %601 = vmatpush1.bf16.xpose.msra.mxu0 0
    %602 = vmatprep.subr.bf16.mxu0 0
    %603 = vmatpush1.bf16.xpose.msra.mxu0 0
    %604 = vmatprep.subr.bf16.mxu0 0
    %605 = vmatpush1.bf16.xpose.msra.mxu0 0
    %606 = vmatprep.mubr.bf16.mxu0 0
    %607 = vmatmul.mubr.bf16.gmra.mrb[0].mxu0 %v569
    %v608 = vpop.f32.mrb[0].mxu0
    %v609 = vadd.f32 0.0, %v608
    %v610 = vpop.f32.mrb[0].mxu0
    %v611 = vpop.f32.mrb[0].mxu0
    %v612 = vadd.f32 0.0, %v611
    %v613 = vpop.f32.mrb[0].mxu0
    %614 = vdwg.mxu0
    %v615 = vmul.f32 %v609, 0.25
    %v616 = vmul.f32 %v612, 0.25
    %v617 = vsel %vm567, %v615, -inf
    %618 = vmax.xlane.f32.xlu0 %v617
    %v619 = vpop.xlane.xlu0 %618
    %v620 = vsel %vm567, %v616, -inf
    %621 = vmax.xlane.f32.xlu0 %v620
    %v622 = vpop.xlane.xlu0 %621
    %v623 = vsub.f32 %v615, %v619
    %v624 = vsub.f32 %v616, %v622
    %v625 = vmul.f32 %v623, 1.442695
    %v626 = vpow.pop %v625
    %v627 = vmul.f32 %v624, 1.442695
    %v628 = vpow.pop %v627
    %v629 = vsel %vm567, %v626, 0.0
    %630 = vadd.xlane.f32.xlu0 %v629
    %v631 = vpop.xlane.xlu0 %630
    %v632 = vsel %vm567, %v628, 0.0
    %633 = vadd.xlane.f32.xlu0 %v632
    %v634 = vpop.xlane.xlu0 %633
    %v635 = vpack.c.bf16 %v628, %v626
    %v637 = vsel %vm567, %v635, 0
    %639 = vmatprep.subr.bf16.mxu0 0
    %640 = vmatpush1.bf16.msra.mxu0 %v566
    %641 = vmatprep.subr.bf16.mxu0 0
    %642 = vmatpush1.bf16.msra.mxu0 0
    %643 = vmatprep.subr.bf16.mxu0 0
    %644 = vmatpush1.bf16.msra.mxu0 0
    %645 = vmatprep.subr.bf16.mxu0 0
    %646 = vmatpush1.bf16.msra.mxu0 0
    %647 = vmatprep.subr.bf16.mxu0 0
    %648 = vmatpush1.bf16.msra.mxu0 0
    %649 = vmatprep.subr.bf16.mxu0 0
    %650 = vmatpush1.bf16.msra.mxu0 0
    %651 = vmatprep.subr.bf16.mxu0 0
    %652 = vmatpush1.bf16.msra.mxu0 0
    %653 = vmatprep.subr.bf16.mxu0 0
    %654 = vmatpush1.bf16.msra.mxu0 0
    %655 = vmatprep.subr.bf16.mxu0 0
    %656 = vmatpush1.bf16.msra.mxu0 0
    %657 = vmatprep.subr.bf16.mxu0 0
    %658 = vmatpush1.bf16.msra.mxu0 0
    %659 = vmatprep.subr.bf16.mxu0 0
    %660 = vmatpush1.bf16.msra.mxu0 0
    %661 = vmatprep.subr.bf16.mxu0 0
    %662 = vmatpush1.bf16.msra.mxu0 0
    %663 = vmatprep.subr.bf16.mxu0 0
    %664 = vmatpush1.bf16.msra.mxu0 0
    %665 = vmatprep.subr.bf16.mxu0 0
    %666 = vmatpush1.bf16.msra.mxu0 0
    %667 = vmatprep.subr.bf16.mxu0 0
    %668 = vmatpush1.bf16.msra.mxu0 0
    %669 = vmatprep.subr.bf16.mxu0 0
    %670 = vmatpush1.bf16.msra.mxu0 0
    %671 = vmatprep.mubr.bf16.mxu0 0
    %672 = vmatmul.mubr.bf16.gmra.mrb[0].mxu0 %v637
    %v673 = vpop.f32.mrb[0].mxu0
    %v674 = vadd.f32 0.0, %v673
    %v675 = vpop.f32.mrb[0].mxu0
    %v676 = vpop.f32.mrb[0].mxu0
    %v677 = vadd.f32 0.0, %v676
    %v678 = vpop.f32.mrb[0].mxu0
    %679 = vdwg.mxu0
    %v680 = vrcp.pop %v631
    %v681 = vrcp.pop %v634
    %v682 = vmul.f32 %v674, %v680
    %v683 = vmul.f32 %v677, %v681
    %684 = vst.msk [vmem:[#allocation3] sm:$0xff] %vm567, %v682
    %685 = vst.msk [vmem:[#allocation3 + $0x8] sm:$0xff] %vm567, %v683
    %v686 = vld [vmem:[#allocation2] sm:$0xff]
    %v687 = vld [vmem:[#allocation2 + $0x8] sm:$0xff]
    %v688 = vld [vmem:[#allocation2 + $0x10] sm:$0xff]
    %690 = vrot.lane.b32.xlu0 %v686, 112
    %v691 = vpop.permute.xlu0 %690
    %693 = vrot.lane.b32.xlu0 %v687, 112
    %v694 = vpop.permute.xlu0 %693
    %v696 = vsel %vm567, %v691, 0
    %v699 = vsel %vm567, %v694, 0
    %701 = vmatprep.subr.bf16.mxu0 0
    %702 = vmatpush1.bf16.xpose.msra.mxu0 %v699
    %703 = vmatprep.subr.bf16.mxu0 0
    %704 = vmatpush1.bf16.xpose.msra.mxu0 0
    %705 = vmatprep.subr.bf16.mxu0 0
    %706 = vmatpush1.bf16.xpose.msra.mxu0 0
    %707 = vmatprep.subr.bf16.mxu0 0
    %708 = vmatpush1.bf16.xpose.msra.mxu0 0
    %709 = vmatprep.subr.bf16.mxu0 0
    %710 = vmatpush1.bf16.xpose.msra.mxu0 0
    %711 = vmatprep.subr.bf16.mxu0 0
    %712 = vmatpush1.bf16.xpose.msra.mxu0 0
    %713 = vmatprep.subr.bf16.mxu0 0
    %714 = vmatpush1.bf16.xpose.msra.mxu0 0
    %715 = vmatprep.subr.bf16.mxu0 0
    %716 = vmatpush1.bf16.xpose.msra.mxu0 0
    %717 = vmatprep.subr.bf16.mxu0 0
    %718 = vmatpush1.bf16.xpose.msra.mxu0 0
    %719 = vmatprep.subr.bf16.mxu0 0
    %720 = vmatpush1.bf16.xpose.msra.mxu0 0
    %721 = vmatprep.subr.bf16.mxu0 0
    %722 = vmatpush1.bf16.xpose.msra.mxu0 0
    %723 = vmatprep.subr.bf16.mxu0 0
    %724 = vmatpush1.bf16.xpose.msra.mxu0 0
    %725 = vmatprep.subr.bf16.mxu0 0
    %726 = vmatpush1.bf16.xpose.msra.mxu0 0
    %727 = vmatprep.subr.bf16.mxu0 0
    %728 = vmatpush1.bf16.xpose.msra.mxu0 0
    %729 = vmatprep.subr.bf16.mxu0 0
    %730 = vmatpush1.bf16.xpose.msra.mxu0 0
    %731 = vmatprep.subr.bf16.mxu0 0
    %732 = vmatpush1.bf16.xpose.msra.mxu0 0
    %733 = vmatprep.mubr.bf16.mxu0 0
    %734 = vmatmul.mubr.bf16.gmra.mrb[0].mxu0 %v696
    %v735 = vpop.f32.mrb[0].mxu0
    %v736 = vadd.f32 0.0, %v735
    %v737 = vpop.f32.mrb[0].mxu0
    %v738 = vpop.f32.mrb[0].mxu0
    %v739 = vadd.f32 0.0, %v738
    %v740 = vpop.f32.mrb[0].mxu0
    %741 = vdwg.mxu0
    %v742 = vmul.f32 %v736, 0.25
    %v743 = vmul.f32 %v739, 0.25
    %v744 = vsel %vm567, %v742, -inf
    %745 = vmax.xlane.f32.xlu0 %v744
    %v746 = vpop.xlane.xlu0 %745
    %v747 = vsel %vm567, %v743, -inf
    %748 = vmax.xlane.f32.xlu0 %v747
    %v749 = vpop.xlane.xlu0 %748
    %v750 = vsub.f32 %v742, %v746
    %v751 = vsub.f32 %v743, %v749
    %v752 = vmul.f32 %v750, 1.442695
    %v753 = vpow.pop %v752
    %v754 = vmul.f32 %v751, 1.442695
    %v755 = vpow.pop %v754
    %v756 = vsel %vm567, %v753, 0.0
    %757 = vadd.xlane.f32.xlu0 %v756
    %v758 = vpop.xlane.xlu0 %757
    %v759 = vsel %vm567, %v755, 0.0
    %760 = vadd.xlane.f32.xlu0 %v759
    %v761 = vpop.xlane.xlu0 %760
    %v762 = vpack.c.bf16 %v755, %v753
    %764 = vrot.lane.b32.xlu0 %v688, 112
    %v765 = vpop.permute.xlu0 %764
    %v768 = vsel %vm567, %v762, 0
    %770 = vmatprep.subr.bf16.mxu0 0
    %771 = vmatpush1.bf16.msra.mxu0 %v765
    %772 = vmatprep.subr.bf16.mxu0 0
    %773 = vmatpush1.bf16.msra.mxu0 0
    %774 = vmatprep.subr.bf16.mxu0 0
    %775 = vmatpush1.bf16.msra.mxu0 0
    %776 = vmatprep.subr.bf16.mxu0 0
    %777 = vmatpush1.bf16.msra.mxu0 0
    %778 = vmatprep.subr.bf16.mxu0 0
    %779 = vmatpush1.bf16.msra.mxu0 0
    %780 = vmatprep.subr.bf16.mxu0 0
    %781 = vmatpush1.bf16.msra.mxu0 0
    %782 = vmatprep.subr.bf16.mxu0 0
    %783 = vmatpush1.bf16.msra.mxu0 0
    %784 = vmatprep.subr.bf16.mxu0 0
    %785 = vmatpush1.bf16.msra.mxu0 0
    %786 = vmatprep.subr.bf16.mxu0 0
    %787 = vmatpush1.bf16.msra.mxu0 0
    %788 = vmatprep.subr.bf16.mxu0 0
    %789 = vmatpush1.bf16.msra.mxu0 0
    %790 = vmatprep.subr.bf16.mxu0 0
    %791 = vmatpush1.bf16.msra.mxu0 0
    %792 = vmatprep.subr.bf16.mxu0 0
    %793 = vmatpush1.bf16.msra.mxu0 0
    %794 = vmatprep.subr.bf16.mxu0 0
    %795 = vmatpush1.bf16.msra.mxu0 0
    %796 = vmatprep.subr.bf16.mxu0 0
    %797 = vmatpush1.bf16.msra.mxu0 0
    %798 = vmatprep.subr.bf16.mxu0 0
    %799 = vmatpush1.bf16.msra.mxu0 0
    %800 = vmatprep.subr.bf16.mxu0 0
    %801 = vmatpush1.bf16.msra.mxu0 0
    %802 = vmatprep.mubr.bf16.mxu0 0
    %803 = vmatmul.mubr.bf16.gmra.mrb[0].mxu0 %v768
    %v804 = vpop.f32.mrb[0].mxu0
    %v805 = vadd.f32 0.0, %v804
    %v806 = vpop.f32.mrb[0].mxu0
    %v807 = vpop.f32.mrb[0].mxu0
    %v808 = vadd.f32 0.0, %v807
    %v809 = vpop.f32.mrb[0].mxu0
    %810 = vdwg.mxu0
    %v811 = vrcp.pop %v758
    %v812 = vrcp.pop %v761
    %v813 = vmul.f32 %v805, %v811
    %v814 = vmul.f32 %v808, %v812
    %817 = vrot.lane.b32.xlu0 %v813, 16
    %v818 = vpop.permute.xlu0 %817
    %819 = vrot.lane.b32.xlu0 %v814, 16
    %v820 = vpop.permute.xlu0 %819
    %vm823 = vcmask 261248
    %824 = vst.msk [vmem:[#allocation3] sm:$0xff] %vm823, %v818
    %825 = vst.msk [vmem:[#allocation3 + $0x8] sm:$0xff] %vm823, %v820
    %v826 = vld [vmem:[#allocation2] sm:$0xff]
    %v827 = vld [vmem:[#allocation2 + $0x8] sm:$0xff]
    %v828 = vld [vmem:[#allocation2 + $0x10] sm:$0xff]
    %830 = vrot.lane.b32.xlu0 %v826, 96
    %v831 = vpop.permute.xlu0 %830
    %833 = vrot.lane.b32.xlu0 %v827, 96
    %v834 = vpop.permute.xlu0 %833
    %v836 = vsel %vm567, %v831, 0
    %v839 = vsel %vm567, %v834, 0
    %841 = vmatprep.subr.bf16.mxu0 0
    %842 = vmatpush1.bf16.xpose.msra.mxu0 %v839
    %843 = vmatprep.subr.bf16.mxu0 0
    %844 = vmatpush1.bf16.xpose.msra.mxu0 0
    %845 = vmatprep.subr.bf16.mxu0 0
    %846 = vmatpush1.bf16.xpose.msra.mxu0 0
    %847 = vmatprep.subr.bf16.mxu0 0
    %848 = vmatpush1.bf16.xpose.msra.mxu0 0
    %849 = vmatprep.subr.bf16.mxu0 0
    %850 = vmatpush1.bf16.xpose.msra.mxu0 0
    %851 = vmatprep.subr.bf16.mxu0 0
    %852 = vmatpush1.bf16.xpose.msra.mxu0 0
    %853 = vmatprep.subr.bf16.mxu0 0
    %854 = vmatpush1.bf16.xpose.msra.mxu0 0
    %855 = vmatprep.subr.bf16.mxu0 0
    %856 = vmatpush1.bf16.xpose.msra.mxu0 0
    %857 = vmatprep.subr.bf16.mxu0 0
    %858 = vmatpush1.bf16.xpose.msra.mxu0 0
    %859 = vmatprep.subr.bf16.mxu0 0
    %860 = vmatpush1.bf16.xpose.msra.mxu0 0
    %861 = vmatprep.subr.bf16.mxu0 0
    %862 = vmatpush1.bf16.xpose.msra.mxu0 0
    %863 = vmatprep.subr.bf16.mxu0 0
    %864 = vmatpush1.bf16.xpose.msra.mxu0 0
    %865 = vmatprep.subr.bf16.mxu0 0
    %866 = vmatpush1.bf16.xpose.msra.mxu0 0
    %867 = vmatprep.subr.bf16.mxu0 0
    %868 = vmatpush1.bf16.xpose.msra.mxu0 0
    %869 = vmatprep.subr.bf16.mxu0 0
    %870 = vmatpush1.bf16.xpose.msra.mxu0 0
    %871 = vmatprep.subr.bf16.mxu0 0
    %872 = vmatpush1.bf16.xpose.msra.mxu0 0
    %873 = vmatprep.mubr.bf16.mxu0 0
    %874 = vmatmul.mubr.bf16.gmra.mrb[0].mxu0 %v836
    %v875 = vpop.f32.mrb[0].mxu0
    %v876 = vadd.f32 0.0, %v875
    %v877 = vpop.f32.mrb[0].mxu0
    %v878 = vpop.f32.mrb[0].mxu0
    %v879 = vadd.f32 0.0, %v878
    %v880 = vpop.f32.mrb[0].mxu0
    %881 = vdwg.mxu0
    %v882 = vmul.f32 %v876, 0.25
    %v883 = vmul.f32 %v879, 0.25
    %v884 = vsel %vm567, %v882, -inf
    %885 = vmax.xlane.f32.xlu0 %v884
    %v886 = vpop.xlane.xlu0 %885
    %v887 = vsel %vm567, %v883, -inf
    %888 = vmax.xlane.f32.xlu0 %v887
    %v889 = vpop.xlane.xlu0 %888
    %v890 = vsub.f32 %v882, %v886
    %v891 = vsub.f32 %v883, %v889
    %v892 = vmul.f32 %v890, 1.442695
    %v893 = vpow.pop %v892
    %v894 = vmul.f32 %v891, 1.442695
    %v895 = vpow.pop %v894
    %v896 = vsel %vm567, %v893, 0.0
    %897 = vadd.xlane.f32.xlu0 %v896
    %v898 = vpop.xlane.xlu0 %897
    %v899 = vsel %vm567, %v895, 0.0
    %900 = vadd.xlane.f32.xlu0 %v899
    %v901 = vpop.xlane.xlu0 %900
    %v902 = vpack.c.bf16 %v895, %v893
    %904 = vrot.lane.b32.xlu0 %v828, 96
    %v905 = vpop.permute.xlu0 %904
    %v908 = vsel %vm567, %v902, 0
    %910 = vmatprep.subr.bf16.mxu0 0
    %911 = vmatpush1.bf16.msra.mxu0 %v905
    %912 = vmatprep.subr.bf16.mxu0 0
    %913 = vmatpush1.bf16.msra.mxu0 0
    %914 = vmatprep.subr.bf16.mxu0 0
    %915 = vmatpush1.bf16.msra.mxu0 0
    %916 = vmatprep.subr.bf16.mxu0 0
    %917 = vmatpush1.bf16.msra.mxu0 0
    %918 = vmatprep.subr.bf16.mxu0 0
    %919 = vmatpush1.bf16.msra.mxu0 0
    %920 = vmatprep.subr.bf16.mxu0 0
    %921 = vmatpush1.bf16.msra.mxu0 0
    %922 = vmatprep.subr.bf16.mxu0 0
    %923 = vmatpush1.bf16.msra.mxu0 0
    %924 = vmatprep.subr.bf16.mxu0 0
    %925 = vmatpush1.bf16.msra.mxu0 0
    %926 = vmatprep.subr.bf16.mxu0 0
    %927 = vmatpush1.bf16.msra.mxu0 0
    %928 = vmatprep.subr.bf16.mxu0 0
    %929 = vmatpush1.bf16.msra.mxu0 0
    %930 = vmatprep.subr.bf16.mxu0 0
    %931 = vmatpush1.bf16.msra.mxu0 0
    %932 = vmatprep.subr.bf16.mxu0 0
    %933 = vmatpush1.bf16.msra.mxu0 0
    %934 = vmatprep.subr.bf16.mxu0 0
    %935 = vmatpush1.bf16.msra.mxu0 0
    %936 = vmatprep.subr.bf16.mxu0 0
    %937 = vmatpush1.bf16.msra.mxu0 0
    %938 = vmatprep.subr.bf16.mxu0 0
    %939 = vmatpush1.bf16.msra.mxu0 0
    %940 = vmatprep.subr.bf16.mxu0 0
    %941 = vmatpush1.bf16.msra.mxu0 0
    %942 = vmatprep.mubr.bf16.mxu0 0
    %943 = vmatmul.mubr.bf16.gmra.mrb[0].mxu0 %v908
    %v944 = vpop.f32.mrb[0].mxu0
    %v945 = vadd.f32 0.0, %v944
    %v946 = vpop.f32.mrb[0].mxu0
    %v947 = vpop.f32.mrb[0].mxu0
    %v948 = vadd.f32 0.0, %v947
    %v949 = vpop.f32.mrb[0].mxu0
    %950 = vdwg.mxu0
    %v951 = vrcp.pop %v898
    %v952 = vrcp.pop %v901
    %v953 = vmul.f32 %v945, %v951
    %v954 = vmul.f32 %v948, %v952
    %957 = vrot.lane.b32.xlu0 %v953, 32
    %v958 = vpop.permute.xlu0 %957
    %959 = vrot.lane.b32.xlu0 %v954, 32
    %v960 = vpop.permute.xlu0 %959
    %vm963 = vcmask 392448
    %964 = vst.msk [vmem:[#allocation3] sm:$0xff] %vm963, %v958
    %965 = vst.msk [vmem:[#allocation3 + $0x8] sm:$0xff] %vm963, %v960
    %v966 = vld [vmem:[#allocation2] sm:$0xff]
    %v967 = vld [vmem:[#allocation2 + $0x8] sm:$0xff]
    %v968 = vld [vmem:[#allocation2 + $0x10] sm:$0xff]
    %970 = vrot.lane.b32.xlu0 %v966, 80
    %v971 = vpop.permute.xlu0 %970
    %973 = vrot.lane.b32.xlu0 %v967, 80
    %v974 = vpop.permute.xlu0 %973
    %v976 = vsel %vm567, %v971, 0
    %v979 = vsel %vm567, %v974, 0
    %981 = vmatprep.subr.bf16.mxu0 0
    %982 = vmatpush1.bf16.xpose.msra.mxu0 %v979
    %983 = vmatprep.subr.bf16.mxu0 0
    %984 = vmatpush1.bf16.xpose.msra.mxu0 0
    %985 = vmatprep.subr.bf16.mxu0 0
    %986 = vmatpush1.bf16.xpose.msra.mxu0 0
    %987 = vmatprep.subr.bf16.mxu0 0
    %988 = vmatpush1.bf16.xpose.msra.mxu0 0
    %989 = vmatprep.subr.bf16.mxu0 0
    %990 = vmatpush1.bf16.xpose.msra.mxu0 0
    %991 = vmatprep.subr.bf16.mxu0 0
    %992 = vmatpush1.bf16.xpose.msra.mxu0 0
    %993 = vmatprep.subr.bf16.mxu0 0
    %994 = vmatpush1.bf16.xpose.msra.mxu0 0
    %995 = vmatprep.subr.bf16.mxu0 0
    %996 = vmatpush1.bf16.xpose.msra.mxu0 0
    %997 = vmatprep.subr.bf16.mxu0 0
    %998 = vmatpush1.bf16.xpose.msra.mxu0 0
    %999 = vmatprep.subr.bf16.mxu0 0
    %1000 = vmatpush1.bf16.xpose.msra.mxu0 0
    %1001 = vmatprep.subr.bf16.mxu0 0
    %1002 = vmatpush1.bf16.xpose.msra.mxu0 0
    %1003 = vmatprep.subr.bf16.mxu0 0
    %1004 = vmatpush1.bf16.xpose.msra.mxu0 0
    %1005 = vmatprep.subr.bf16.mxu0 0
    %1006 = vmatpush1.bf16.xpose.msra.mxu0 0
    %1007 = vmatprep.subr.bf16.mxu0 0
    %1008 = vmatpush1.bf16.xpose.msra.mxu0 0
    %1009 = vmatprep.subr.bf16.mxu0 0
    %1010 = vmatpush1.bf16.xpose.msra.mxu0 0
    %1011 = vmatprep.subr.bf16.mxu0 0
    %1012 = vmatpush1.bf16.xpose.msra.mxu0 0
    %1013 = vmatprep.mubr.bf16.mxu0 0
    %1014 = vmatmul.mubr.bf16.gmra.mrb[0].mxu0 %v976
    %v1015 = vpop.f32.mrb[0].mxu0
    %v1016 = vadd.f32 0.0, %v1015
    %v1017 = vpop.f32.mrb[0].mxu0
    %v1018 = vpop.f32.mrb[0].mxu0
    %v1019 = vadd.f32 0.0, %v1018
    %v1020 = vpop.f32.mrb[0].mxu0
    %1021 = vdwg.mxu0
    %v1022 = vmul.f32 %v1016, 0.25
    %v1023 = vmul.f32 %v1019, 0.25
    %v1024 = vsel %vm567, %v1022, -inf
    %1025 = vmax.xlane.f32.xlu0 %v1024
    %v1026 = vpop.xlane.xlu0 %1025
    %v1027 = vsel %vm567, %v1023, -inf
    %1028 = vmax.xlane.f32.xlu0 %v1027
    %v1029 = vpop.xlane.xlu0 %1028
    %v1030 = vsub.f32 %v1022, %v1026
    %v1031 = vsub.f32 %v1023, %v1029
    %v1032 = vmul.f32 %v1030, 1.442695
    %v1033 = vpow.pop %v1032
    %v1034 = vmul.f32 %v1031, 1.442695
    %v1035 = vpow.pop %v1034
    %v1036 = vsel %vm567, %v1033, 0.0
    %1037 = vadd.xlane.f32.xlu0 %v1036
    %v1038 = vpop.xlane.xlu0 %1037
    %v1039 = vsel %vm567, %v1035, 0.0
    %1040 = vadd.xlane.f32.xlu0 %v1039
    %v1041 = vpop.xlane.xlu0 %1040
    %v1042 = vpack.c.bf16 %v1035, %v1033
    %1044 = vrot.lane.b32.xlu0 %v968, 80
    %v1045 = vpop.permute.xlu0 %1044
    %v1048 = vsel %vm567, %v1042, 0
    %1050 = vmatprep.subr.bf16.mxu0 0
    %1051 = vmatpush1.bf16.msra.mxu0 %v1045
    %1052 = vmatprep.subr.bf16.mxu0 0
    %1053 = vmatpush1.bf16.msra.mxu0 0
    %1054 = vmatprep.subr.bf16.mxu0 0
    %1055 = vmatpush1.bf16.msra.mxu0 0
    %1056 = vmatprep.subr.bf16.mxu0 0
    %1057 = vmatpush1.bf16.msra.mxu0 0
    %1058 = vmatprep.subr.bf16.mxu0 0
    %1059 = vmatpush1.bf16.msra.mxu0 0
    %1060 = vmatprep.subr.bf16.mxu0 0
    %1061 = vmatpush1.bf16.msra.mxu0 0
    %1062 = vmatprep.subr.bf16.mxu0 0
    %1063 = vmatpush1.bf16.msra.mxu0 0
    %1064 = vmatprep.subr.bf16.mxu0 0
    %1065 = vmatpush1.bf16.msra.mxu0 0
    %1066 = vmatprep.subr.bf16.mxu0 0
    %1067 = vmatpush1.bf16.msra.mxu0 0
    %1068 = vmatprep.subr.bf16.mxu0 0
    %1069 = vmatpush1.bf16.msra.mxu0 0
    %1070 = vmatprep.subr.bf16.mxu0 0
    %1071 = vmatpush1.bf16.msra.mxu0 0
    %1072 = vmatprep.subr.bf16.mxu0 0
    %1073 = vmatpush1.bf16.msra.mxu0 0
    %1074 = vmatprep.subr.bf16.mxu0 0
    %1075 = vmatpush1.bf16.msra.mxu0 0
    %1076 = vmatprep.subr.bf16.mxu0 0
    %1077 = vmatpush1.bf16.msra.mxu0 0
    %1078 = vmatprep.subr.bf16.mxu0 0
    %1079 = vmatpush1.bf16.msra.mxu0 0
    %1080 = vmatprep.subr.bf16.mxu0 0
    %1081 = vmatpush1.bf16.msra.mxu0 0
    %1082 = vmatprep.mubr.bf16.mxu0 0
    %1083 = vmatmul.mubr.bf16.gmra.mrb[0].mxu0 %v1048
    %v1084 = vpop.f32.mrb[0].mxu0
    %v1085 = vadd.f32 0.0, %v1084
    %v1086 = vpop.f32.mrb[0].mxu0
    %v1087 = vpop.f32.mrb[0].mxu0
    %v1088 = vadd.f32 0.0, %v1087
    %v1089 = vpop.f32.mrb[0].mxu0
    %1090 = vdwg.mxu0
    %v1091 = vrcp.pop %v1038
    %v1092 = vrcp.pop %v1041
    %v1093 = vmul.f32 %v1085, %v1091
    %v1094 = vmul.f32 %v1088, %v1092
    %1097 = vrot.lane.b32.xlu0 %v1093, 48
    %v1098 = vpop.permute.xlu0 %1097
    %1099 = vrot.lane.b32.xlu0 %v1094, 48
    %v1100 = vpop.permute.xlu0 %1099
    %vm1103 = vcmask 523648
    %1104 = vst.msk [vmem:[#allocation3] sm:$0xff] %vm1103, %v1098
    %1105 = vst.msk [vmem:[#allocation3 + $0x8] sm:$0xff] %vm1103, %v1100
    %v1106 = vld [vmem:[#allocation2] sm:$0xff]
    %v1107 = vld [vmem:[#allocation2 + $0x8] sm:$0xff]
    %v1108 = vld [vmem:[#allocation2 + $0x10] sm:$0xff]
    %1110 = vrot.lane.b32.xlu0 %v1106, 64
    %v1111 = vpop.permute.xlu0 %1110
    %1113 = vrot.lane.b32.xlu0 %v1107, 64
    %v1114 = vpop.permute.xlu0 %1113
    %v1116 = vsel %vm567, %v1111, 0
    %v1119 = vsel %vm567, %v1114, 0
    %1121 = vmatprep.subr.bf16.mxu0 0
    %1122 = vmatpush1.bf16.xpose.msra.mxu0 %v1119
    %1123 = vmatprep.subr.bf16.mxu0 0
    %1124 = vmatpush1.bf16.xpose.msra.mxu0 0
    %1125 = vmatprep.subr.bf16.mxu0 0
    %1126 = vmatpush1.bf16.xpose.msra.mxu0 0
    %1127 = vmatprep.subr.bf16.mxu0 0
    %1128 = vmatpush1.bf16.xpose.msra.mxu0 0
    %1129 = vmatprep.subr.bf16.mxu0 0
    %1130 = vmatpush1.bf16.xpose.msra.mxu0 0
    %1131 = vmatprep.subr.bf16.mxu0 0
    %1132 = vmatpush1.bf16.xpose.msra.mxu0 0
    %1133 = vmatprep.subr.bf16.mxu0 0
    %1134 = vmatpush1.bf16.xpose.msra.mxu0 0
    %1135 = vmatprep.subr.bf16.mxu0 0
    %1136 = vmatpush1.bf16.xpose.msra.mxu0 0
    %1137 = vmatprep.subr.bf16.mxu0 0
    %1138 = vmatpush1.bf16.xpose.msra.mxu0 0
    %1139 = vmatprep.subr.bf16.mxu0 0
    %1140 = vmatpush1.bf16.xpose.msra.mxu0 0
    %1141 = vmatprep.subr.bf16.mxu0 0
    %1142 = vmatpush1.bf16.xpose.msra.mxu0 0
    %1143 = vmatprep.subr.bf16.mxu0 0
    %1144 = vmatpush1.bf16.xpose.msra.mxu0 0
    %1145 = vmatprep.subr.bf16.mxu0 0
    %1146 = vmatpush1.bf16.xpose.msra.mxu0 0
    %1147 = vmatprep.subr.bf16.mxu0 0
    %1148 = vmatpush1.bf16.xpose.msra.mxu0 0
    %1149 = vmatprep.subr.bf16.mxu0 0
    %1150 = vmatpush1.bf16.xpose.msra.mxu0 0
    %1151 = vmatprep.subr.bf16.mxu0 0
    %1152 = vmatpush1.bf16.xpose.msra.mxu0 0
    %1153 = vmatprep.mubr.bf16.mxu0 0
    %1154 = vmatmul.mubr.bf16.gmra.mrb[0].mxu0 %v1116
    %v1155 = vpop.f32.mrb[0].mxu0
    %v1156 = vadd.f32 0.0, %v1155
    %v1157 = vpop.f32.mrb[0].mxu0
    %v1158 = vpop.f32.mrb[0].mxu0
    %v1159 = vadd.f32 0.0, %v1158
    %v1160 = vpop.f32.mrb[0].mxu0
    %1161 = vdwg.mxu0
    %v1162 = vmul.f32 %v1156, 0.25
    %v1163 = vmul.f32 %v1159, 0.25
    %v1164 = vsel %vm567, %v1162, -inf
    %1165 = vmax.xlane.f32.xlu0 %v1164
    %v1166 = vpop.xlane.xlu0 %1165
    %v1167 = vsel %vm567, %v1163, -inf
    %1168 = vmax.xlane.f32.xlu0 %v1167
    %v1169 = vpop.xlane.xlu0 %1168
    %v1170 = vsub.f32 %v1162, %v1166
    %v1171 = vsub.f32 %v1163, %v1169
    %v1172 = vmul.f32 %v1170, 1.442695
    %v1173 = vpow.pop %v1172
    %v1174 = vmul.f32 %v1171, 1.442695
    %v1175 = vpow.pop %v1174
    %v1176 = vsel %vm567, %v1173, 0.0
    %1177 = vadd.xlane.f32.xlu0 %v1176
    %v1178 = vpop.xlane.xlu0 %1177
    %v1179 = vsel %vm567, %v1175, 0.0
    %1180 = vadd.xlane.f32.xlu0 %v1179
    %v1181 = vpop.xlane.xlu0 %1180
    %v1182 = vpack.c.bf16 %v1175, %v1173
    %1184 = vrot.lane.b32.xlu0 %v1108, 64
    %v1185 = vpop.permute.xlu0 %1184
    %v1188 = vsel %vm567, %v1182, 0
    %1190 = vmatprep.subr.bf16.mxu0 0
    %1191 = vmatpush1.bf16.msra.mxu0 %v1185
    %1192 = vmatprep.subr.bf16.mxu0 0
    %1193 = vmatpush1.bf16.msra.mxu0 0
    %1194 = vmatprep.subr.bf16.mxu0 0
    %1195 = vmatpush1.bf16.msra.mxu0 0
    %1196 = vmatprep.subr.bf16.mxu0 0
    %1197 = vmatpush1.bf16.msra.mxu0 0
    %1198 = vmatprep.subr.bf16.mxu0 0
    %1199 = vmatpush1.bf16.msra.mxu0 0
    %1200 = vmatprep.subr.bf16.mxu0 0
    %1201 = vmatpush1.bf16.msra.mxu0 0
    %1202 = vmatprep.subr.bf16.mxu0 0
    %1203 = vmatpush1.bf16.msra.mxu0 0
    %1204 = vmatprep.subr.bf16.mxu0 0
    %1205 = vmatpush1.bf16.msra.mxu0 0
    %1206 = vmatprep.subr.bf16.mxu0 0
    %1207 = vmatpush1.bf16.msra.mxu0 0
    %1208 = vmatprep.subr.bf16.mxu0 0
    %1209 = vmatpush1.bf16.msra.mxu0 0
    %1210 = vmatprep.subr.bf16.mxu0 0
    %1211 = vmatpush1.bf16.msra.mxu0 0
    %1212 = vmatprep.subr.bf16.mxu0 0
    %1213 = vmatpush1.bf16.msra.mxu0 0
    %1214 = vmatprep.subr.bf16.mxu0 0
    %1215 = vmatpush1.bf16.msra.mxu0 0
    %1216 = vmatprep.subr.bf16.mxu0 0
    %1217 = vmatpush1.bf16.msra.mxu0 0
    %1218 = vmatprep.subr.bf16.mxu0 0
    %1219 = vmatpush1.bf16.msra.mxu0 0
    %1220 = vmatprep.subr.bf16.mxu0 0
    %1221 = vmatpush1.bf16.msra.mxu0 0
    %1222 = vmatprep.mubr.bf16.mxu0 0
    %1223 = vmatmul.mubr.bf16.gmra.mrb[0].mxu0 %v1188
    %v1224 = vpop.f32.mrb[0].mxu0
    %v1225 = vadd.f32 0.0, %v1224
    %v1226 = vpop.f32.mrb[0].mxu0
    %v1227 = vpop.f32.mrb[0].mxu0
    %v1228 = vadd.f32 0.0, %v1227
    %v1229 = vpop.f32.mrb[0].mxu0
    %1230 = vdwg.mxu0
    %v1231 = vrcp.pop %v1178
    %v1232 = vrcp.pop %v1181
    %v1233 = vmul.f32 %v1225, %v1231
    %v1234 = vmul.f32 %v1228, %v1232
    %1237 = vrot.lane.b32.xlu0 %v1233, 64
    %v1238 = vpop.permute.xlu0 %1237
    %1239 = vrot.lane.b32.xlu0 %v1234, 64
    %v1240 = vpop.permute.xlu0 %1239
    %vm1243 = vcmask 654848
    %1244 = vst.msk [vmem:[#allocation3] sm:$0xff] %vm1243, %v1238
    %1245 = vst.msk [vmem:[#allocation3 + $0x8] sm:$0xff] %vm1243, %v1240
    %v1246 = vld [vmem:[#allocation2] sm:$0xff]
    %v1247 = vld [vmem:[#allocation2 + $0x8] sm:$0xff]
    %v1248 = vld [vmem:[#allocation2 + $0x10] sm:$0xff]
    %1250 = vrot.lane.b32.xlu0 %v1246, 48
    %v1251 = vpop.permute.xlu0 %1250
    %1253 = vrot.lane.b32.xlu0 %v1247, 48
    %v1254 = vpop.permute.xlu0 %1253
    %v1256 = vsel %vm567, %v1251, 0
    %v1259 = vsel %vm567, %v1254, 0
    %1261 = vmatprep.subr.bf16.mxu0 0
    %1262 = vmatpush1.bf16.xpose.msra.mxu0 %v1259
    %1263 = vmatprep.subr.bf16.mxu0 0
    %1264 = vmatpush1.bf16.xpose.msra.mxu0 0
    %1265 = vmatprep.subr.bf16.mxu0 0
    %1266 = vmatpush1.bf16.xpose.msra.mxu0 0
    %1267 = vmatprep.subr.bf16.mxu0 0
    %1268 = vmatpush1.bf16.xpose.msra.mxu0 0
    %1269 = vmatprep.subr.bf16.mxu0 0
    %1270 = vmatpush1.bf16.xpose.msra.mxu0 0
    %1271 = vmatprep.subr.bf16.mxu0 0
    %1272 = vmatpush1.bf16.xpose.msra.mxu0 0
    %1273 = vmatprep.subr.bf16.mxu0 0
    %1274 = vmatpush1.bf16.xpose.msra.mxu0 0
    %1275 = vmatprep.subr.bf16.mxu0 0
    %1276 = vmatpush1.bf16.xpose.msra.mxu0 0
    %1277 = vmatprep.subr.bf16.mxu0 0
    %1278 = vmatpush1.bf16.xpose.msra.mxu0 0
    %1279 = vmatprep.subr.bf16.mxu0 0
    %1280 = vmatpush1.bf16.xpose.msra.mxu0 0
    %1281 = vmatprep.subr.bf16.mxu0 0
    %1282 = vmatpush1.bf16.xpose.msra.mxu0 0
    %1283 = vmatprep.subr.bf16.mxu0 0
    %1284 = vmatpush1.bf16.xpose.msra.mxu0 0
    %1285 = vmatprep.subr.bf16.mxu0 0
    %1286 = vmatpush1.bf16.xpose.msra.mxu0 0
    %1287 = vmatprep.subr.bf16.mxu0 0
    %1288 = vmatpush1.bf16.xpose.msra.mxu0 0
    %1289 = vmatprep.subr.bf16.mxu0 0
    %1290 = vmatpush1.bf16.xpose.msra.mxu0 0
    %1291 = vmatprep.subr.bf16.mxu0 0
    %1292 = vmatpush1.bf16.xpose.msra.mxu0 0
    %1293 = vmatprep.mubr.bf16.mxu0 0
    %1294 = vmatmul.mubr.bf16.gmra.mrb[0].mxu0 %v1256
    %v1295 = vpop.f32.mrb[0].mxu0
    %v1296 = vadd.f32 0.0, %v1295
    %v1297 = vpop.f32.mrb[0].mxu0
    %v1298 = vpop.f32.mrb[0].mxu0
    %v1299 = vadd.f32 0.0, %v1298
    %v1300 = vpop.f32.mrb[0].mxu0
    %1301 = vdwg.mxu0
    %v1302 = vmul.f32 %v1296, 0.25
    %v1303 = vmul.f32 %v1299, 0.25
    %v1304 = vsel %vm567, %v1302, -inf
    %1305 = vmax.xlane.f32.xlu0 %v1304
    %v1306 = vpop.xlane.xlu0 %1305
    %v1307 = vsel %vm567, %v1303, -inf
    %1308 = vmax.xlane.f32.xlu0 %v1307
    %v1309 = vpop.xlane.xlu0 %1308
    %v1310 = vsub.f32 %v1302, %v1306
    %v1311 = vsub.f32 %v1303, %v1309
    %v1312 = vmul.f32 %v1310, 1.442695
    %v1313 = vpow.pop %v1312
    %v1314 = vmul.f32 %v1311, 1.442695
    %v1315 = vpow.pop %v1314
    %v1316 = vsel %vm567, %v1313, 0.0
    %1317 = vadd.xlane.f32.xlu0 %v1316
    %v1318 = vpop.xlane.xlu0 %1317
    %v1319 = vsel %vm567, %v1315, 0.0
    %1320 = vadd.xlane.f32.xlu0 %v1319
    %v1321 = vpop.xlane.xlu0 %1320
    %v1322 = vpack.c.bf16 %v1315, %v1313
    %1324 = vrot.lane.b32.xlu0 %v1248, 48
    %v1325 = vpop.permute.xlu0 %1324
    %v1328 = vsel %vm567, %v1322, 0
    %1330 = vmatprep.subr.bf16.mxu0 0
    %1331 = vmatpush1.bf16.msra.mxu0 %v1325
    %1332 = vmatprep.subr.bf16.mxu0 0
    %1333 = vmatpush1.bf16.msra.mxu0 0
    %1334 = vmatprep.subr.bf16.mxu0 0
    %1335 = vmatpush1.bf16.msra.mxu0 0
    %1336 = vmatprep.subr.bf16.mxu0 0
    %1337 = vmatpush1.bf16.msra.mxu0 0
    %1338 = vmatprep.subr.bf16.mxu0 0
    %1339 = vmatpush1.bf16.msra.mxu0 0
    %1340 = vmatprep.subr.bf16.mxu0 0
    %1341 = vmatpush1.bf16.msra.mxu0 0
    %1342 = vmatprep.subr.bf16.mxu0 0
    %1343 = vmatpush1.bf16.msra.mxu0 0
    %1344 = vmatprep.subr.bf16.mxu0 0
    %1345 = vmatpush1.bf16.msra.mxu0 0
    %1346 = vmatprep.subr.bf16.mxu0 0
    %1347 = vmatpush1.bf16.msra.mxu0 0
    %1348 = vmatprep.subr.bf16.mxu0 0
    %1349 = vmatpush1.bf16.msra.mxu0 0
    %1350 = vmatprep.subr.bf16.mxu0 0
    %1351 = vmatpush1.bf16.msra.mxu0 0
    %1352 = vmatprep.subr.bf16.mxu0 0
    %1353 = vmatpush1.bf16.msra.mxu0 0
    %1354 = vmatprep.subr.bf16.mxu0 0
    %1355 = vmatpush1.bf16.msra.mxu0 0
    %1356 = vmatprep.subr.bf16.mxu0 0
    %1357 = vmatpush1.bf16.msra.mxu0 0
    %1358 = vmatprep.subr.bf16.mxu0 0
    %1359 = vmatpush1.bf16.msra.mxu0 0
    %1360 = vmatprep.subr.bf16.mxu0 0
    %1361 = vmatpush1.bf16.msra.mxu0 0
    %1362 = vmatprep.mubr.bf16.mxu0 0
    %1363 = vmatmul.mubr.bf16.gmra.mrb[0].mxu0 %v1328
    %v1364 = vpop.f32.mrb[0].mxu0
    %v1365 = vadd.f32 0.0, %v1364
    %v1366 = vpop.f32.mrb[0].mxu0
    %v1367 = vpop.f32.mrb[0].mxu0
    %v1368 = vadd.f32 0.0, %v1367
    %v1369 = vpop.f32.mrb[0].mxu0
    %1370 = vdwg.mxu0
    %v1371 = vrcp.pop %v1318
    %v1372 = vrcp.pop %v1321
    %v1373 = vmul.f32 %v1365, %v1371
    %v1374 = vmul.f32 %v1368, %v1372
    %1377 = vrot.lane.b32.xlu0 %v1373, 80
    %v1378 = vpop.permute.xlu0 %1377
    %1379 = vrot.lane.b32.xlu0 %v1374, 80
    %v1380 = vpop.permute.xlu0 %1379
    %vm1383 = vcmask 786048
    %1384 = vst.msk [vmem:[#allocation3] sm:$0xff] %vm1383, %v1378
    %1385 = vst.msk [vmem:[#allocation3 + $0x8] sm:$0xff] %vm1383, %v1380
    %v1386 = vld [vmem:[#allocation2] sm:$0xff]
    %v1387 = vld [vmem:[#allocation2 + $0x8] sm:$0xff]
    %v1388 = vld [vmem:[#allocation2 + $0x10] sm:$0xff]
    %1390 = vrot.lane.b32.xlu0 %v1386, 32
    %v1391 = vpop.permute.xlu0 %1390
    %1393 = vrot.lane.b32.xlu0 %v1387, 32
    %v1394 = vpop.permute.xlu0 %1393
    %v1396 = vsel %vm567, %v1391, 0
    %v1399 = vsel %vm567, %v1394, 0
    %1401 = vmatprep.subr.bf16.mxu0 0
    %1402 = vmatpush1.bf16.xpose.msra.mxu0 %v1399
    %1403 = vmatprep.subr.bf16.mxu0 0
    %1404 = vmatpush1.bf16.xpose.msra.mxu0 0
    %1405 = vmatprep.subr.bf16.mxu0 0
    %1406 = vmatpush1.bf16.xpose.msra.mxu0 0
    %1407 = vmatprep.subr.bf16.mxu0 0
    %1408 = vmatpush1.bf16.xpose.msra.mxu0 0
    %1409 = vmatprep.subr.bf16.mxu0 0
    %1410 = vmatpush1.bf16.xpose.msra.mxu0 0
    %1411 = vmatprep.subr.bf16.mxu0 0
    %1412 = vmatpush1.bf16.xpose.msra.mxu0 0
    %1413 = vmatprep.subr.bf16.mxu0 0
    %1414 = vmatpush1.bf16.xpose.msra.mxu0 0
    %1415 = vmatprep.subr.bf16.mxu0 0
    %1416 = vmatpush1.bf16.xpose.msra.mxu0 0
    %1417 = vmatprep.subr.bf16.mxu0 0
    %1418 = vmatpush1.bf16.xpose.msra.mxu0 0
    %1419 = vmatprep.subr.bf16.mxu0 0
    %1420 = vmatpush1.bf16.xpose.msra.mxu0 0
    %1421 = vmatprep.subr.bf16.mxu0 0
    %1422 = vmatpush1.bf16.xpose.msra.mxu0 0
    %1423 = vmatprep.subr.bf16.mxu0 0
    %1424 = vmatpush1.bf16.xpose.msra.mxu0 0
    %1425 = vmatprep.subr.bf16.mxu0 0
    %1426 = vmatpush1.bf16.xpose.msra.mxu0 0
    %1427 = vmatprep.subr.bf16.mxu0 0
    %1428 = vmatpush1.bf16.xpose.msra.mxu0 0
    %1429 = vmatprep.subr.bf16.mxu0 0
    %1430 = vmatpush1.bf16.xpose.msra.mxu0 0
    %1431 = vmatprep.subr.bf16.mxu0 0
    %1432 = vmatpush1.bf16.xpose.msra.mxu0 0
    %1433 = vmatprep.mubr.bf16.mxu0 0
    %1434 = vmatmul.mubr.bf16.gmra.mrb[0].mxu0 %v1396
    %v1435 = vpop.f32.mrb[0].mxu0
    %v1436 = vadd.f32 0.0, %v1435
    %v1437 = vpop.f32.mrb[0].mxu0
    %v1438 = vpop.f32.mrb[0].mxu0
    %v1439 = vadd.f32 0.0, %v1438
    %v1440 = vpop.f32.mrb[0].mxu0
    %1441 = vdwg.mxu0
    %v1442 = vmul.f32 %v1436, 0.25
    %v1443 = vmul.f32 %v1439, 0.25
    %v1444 = vsel %vm567, %v1442, -inf
    %1445 = vmax.xlane.f32.xlu0 %v1444
    %v1446 = vpop.xlane.xlu0 %1445
    %v1447 = vsel %vm567, %v1443, -inf
    %1448 = vmax.xlane.f32.xlu0 %v1447
    %v1449 = vpop.xlane.xlu0 %1448
    %v1450 = vsub.f32 %v1442, %v1446
    %v1451 = vsub.f32 %v1443, %v1449
    %v1452 = vmul.f32 %v1450, 1.442695
    %v1453 = vpow.pop %v1452
    %v1454 = vmul.f32 %v1451, 1.442695
    %v1455 = vpow.pop %v1454
    %v1456 = vsel %vm567, %v1453, 0.0
    %1457 = vadd.xlane.f32.xlu0 %v1456
    %v1458 = vpop.xlane.xlu0 %1457
    %v1459 = vsel %vm567, %v1455, 0.0
    %1460 = vadd.xlane.f32.xlu0 %v1459
    %v1461 = vpop.xlane.xlu0 %1460
    %v1462 = vpack.c.bf16 %v1455, %v1453
    %1464 = vrot.lane.b32.xlu0 %v1388, 32
    %v1465 = vpop.permute.xlu0 %1464
    %v1468 = vsel %vm567, %v1462, 0
    %1470 = vmatprep.subr.bf16.mxu0 0
    %1471 = vmatpush1.bf16.msra.mxu0 %v1465
    %1472 = vmatprep.subr.bf16.mxu0 0
    %1473 = vmatpush1.bf16.msra.mxu0 0
    %1474 = vmatprep.subr.bf16.mxu0 0
    %1475 = vmatpush1.bf16.msra.mxu0 0
    %1476 = vmatprep.subr.bf16.mxu0 0
    %1477 = vmatpush1.bf16.msra.mxu0 0
    %1478 = vmatprep.subr.bf16.mxu0 0
    %1479 = vmatpush1.bf16.msra.mxu0 0
    %1480 = vmatprep.subr.bf16.mxu0 0
    %1481 = vmatpush1.bf16.msra.mxu0 0
    %1482 = vmatprep.subr.bf16.mxu0 0
    %1483 = vmatpush1.bf16.msra.mxu0 0
    %1484 = vmatprep.subr.bf16.mxu0 0
    %1485 = vmatpush1.bf16.msra.mxu0 0
    %1486 = vmatprep.subr.bf16.mxu0 0
    %1487 = vmatpush1.bf16.msra.mxu0 0
    %1488 = vmatprep.subr.bf16.mxu0 0
    %1489 = vmatpush1.bf16.msra.mxu0 0
    %1490 = vmatprep.subr.bf16.mxu0 0
    %1491 = vmatpush1.bf16.msra.mxu0 0
    %1492 = vmatprep.subr.bf16.mxu0 0
    %1493 = vmatpush1.bf16.msra.mxu0 0
    %1494 = vmatprep.subr.bf16.mxu0 0
    %1495 = vmatpush1.bf16.msra.mxu0 0
    %1496 = vmatprep.subr.bf16.mxu0 0
    %1497 = vmatpush1.bf16.msra.mxu0 0
    %1498 = vmatprep.subr.bf16.mxu0 0
    %1499 = vmatpush1.bf16.msra.mxu0 0
    %1500 = vmatprep.subr.bf16.mxu0 0
    %1501 = vmatpush1.bf16.msra.mxu0 0
    %1502 = vmatprep.mubr.bf16.mxu0 0
    %1503 = vmatmul.mubr.bf16.gmra.mrb[0].mxu0 %v1468
    %v1504 = vpop.f32.mrb[0].mxu0
    %v1505 = vadd.f32 0.0, %v1504
    %v1506 = vpop.f32.mrb[0].mxu0
    %v1507 = vpop.f32.mrb[0].mxu0
    %v1508 = vadd.f32 0.0, %v1507
    %v1509 = vpop.f32.mrb[0].mxu0
    %1510 = vdwg.mxu0
    %v1511 = vrcp.pop %v1458
    %v1512 = vrcp.pop %v1461
    %v1513 = vmul.f32 %v1505, %v1511
    %v1514 = vmul.f32 %v1508, %v1512
    %1517 = vrot.lane.b32.xlu0 %v1513, 96
    %v1518 = vpop.permute.xlu0 %1517
    %1519 = vrot.lane.b32.xlu0 %v1514, 96
    %v1520 = vpop.permute.xlu0 %1519
    %vm1523 = vcmask 917248
    %1524 = vst.msk [vmem:[#allocation3] sm:$0xff] %vm1523, %v1518
    %1525 = vst.msk [vmem:[#allocation3 + $0x8] sm:$0xff] %vm1523, %v1520
    %v1526 = vld [vmem:[#allocation2] sm:$0xff]
    %v1527 = vld [vmem:[#allocation2 + $0x8] sm:$0xff]
    %v1528 = vld [vmem:[#allocation2 + $0x10] sm:$0xff]
    %1530 = vrot.lane.b32.xlu0 %v1526, 16
    %v1531 = vpop.permute.xlu0 %1530
    %1533 = vrot.lane.b32.xlu0 %v1527, 16
    %v1534 = vpop.permute.xlu0 %1533
    %v1536 = vsel %vm567, %v1531, 0
    %v1539 = vsel %vm567, %v1534, 0
    %1541 = vmatprep.subr.bf16.mxu0 0
    %1542 = vmatpush1.bf16.xpose.msra.mxu0 %v1539
    %1543 = vmatprep.subr.bf16.mxu0 0
    %1544 = vmatpush1.bf16.xpose.msra.mxu0 0
    %1545 = vmatprep.subr.bf16.mxu0 0
    %1546 = vmatpush1.bf16.xpose.msra.mxu0 0
    %1547 = vmatprep.subr.bf16.mxu0 0
    %1548 = vmatpush1.bf16.xpose.msra.mxu0 0
    %1549 = vmatprep.subr.bf16.mxu0 0
    %1550 = vmatpush1.bf16.xpose.msra.mxu0 0
    %1551 = vmatprep.subr.bf16.mxu0 0
    %1552 = vmatpush1.bf16.xpose.msra.mxu0 0
    %1553 = vmatprep.subr.bf16.mxu0 0
    %1554 = vmatpush1.bf16.xpose.msra.mxu0 0
    %1555 = vmatprep.subr.bf16.mxu0 0
    %1556 = vmatpush1.bf16.xpose.msra.mxu0 0
    %1557 = vmatprep.subr.bf16.mxu0 0
    %1558 = vmatpush1.bf16.xpose.msra.mxu0 0
    %1559 = vmatprep.subr.bf16.mxu0 0
    %1560 = vmatpush1.bf16.xpose.msra.mxu0 0
    %1561 = vmatprep.subr.bf16.mxu0 0
    %1562 = vmatpush1.bf16.xpose.msra.mxu0 0
    %1563 = vmatprep.subr.bf16.mxu0 0
    %1564 = vmatpush1.bf16.xpose.msra.mxu0 0
    %1565 = vmatprep.subr.bf16.mxu0 0
    %1566 = vmatpush1.bf16.xpose.msra.mxu0 0
    %1567 = vmatprep.subr.bf16.mxu0 0
    %1568 = vmatpush1.bf16.xpose.msra.mxu0 0
    %1569 = vmatprep.subr.bf16.mxu0 0
    %1570 = vmatpush1.bf16.xpose.msra.mxu0 0
    %1571 = vmatprep.subr.bf16.mxu0 0
    %1572 = vmatpush1.bf16.xpose.msra.mxu0 0
    %1573 = vmatprep.mubr.bf16.mxu0 0
    %1574 = vmatmul.mubr.bf16.gmra.mrb[0].mxu0 %v1536
    %v1575 = vpop.f32.mrb[0].mxu0
    %v1576 = vadd.f32 0.0, %v1575
    %v1577 = vpop.f32.mrb[0].mxu0
    %v1578 = vpop.f32.mrb[0].mxu0
    %v1579 = vadd.f32 0.0, %v1578
    %v1580 = vpop.f32.mrb[0].mxu0
    %1581 = vdwg.mxu0
    %v1582 = vmul.f32 %v1576, 0.25
    %v1583 = vmul.f32 %v1579, 0.25
    %v1584 = vsel %vm567, %v1582, -inf
    %1585 = vmax.xlane.f32.xlu0 %v1584
    %v1586 = vpop.xlane.xlu0 %1585
    %v1587 = vsel %vm567, %v1583, -inf
    %1588 = vmax.xlane.f32.xlu0 %v1587
    %v1589 = vpop.xlane.xlu0 %1588
    %v1590 = vsub.f32 %v1582, %v1586
    %v1591 = vsub.f32 %v1583, %v1589
    %v1592 = vmul.f32 %v1590, 1.442695
    %v1593 = vpow.pop %v1592
    %v1594 = vmul.f32 %v1591, 1.442695
    %v1595 = vpow.pop %v1594
    %v1596 = vsel %vm567, %v1593, 0.0
    %1597 = vadd.xlane.f32.xlu0 %v1596
    %v1598 = vpop.xlane.xlu0 %1597
    %v1599 = vsel %vm567, %v1595, 0.0
    %1600 = vadd.xlane.f32.xlu0 %v1599
    %v1601 = vpop.xlane.xlu0 %1600
    %v1602 = vpack.c.bf16 %v1595, %v1593
    %1604 = vrot.lane.b32.xlu0 %v1528, 16
    %v1605 = vpop.permute.xlu0 %1604
    %v1608 = vsel %vm567, %v1602, 0
    %1610 = vmatprep.subr.bf16.mxu0 0
    %1611 = vmatpush1.bf16.msra.mxu0 %v1605
    %1612 = vmatprep.subr.bf16.mxu0 0
    %1613 = vmatpush1.bf16.msra.mxu0 0
    %1614 = vmatprep.subr.bf16.mxu0 0
    %1615 = vmatpush1.bf16.msra.mxu0 0
    %1616 = vmatprep.subr.bf16.mxu0 0
    %1617 = vmatpush1.bf16.msra.mxu0 0
    %1618 = vmatprep.subr.bf16.mxu0 0
    %1619 = vmatpush1.bf16.msra.mxu0 0
    %1620 = vmatprep.subr.bf16.mxu0 0
    %1621 = vmatpush1.bf16.msra.mxu0 0
    %1622 = vmatprep.subr.bf16.mxu0 0
    %1623 = vmatpush1.bf16.msra.mxu0 0
    %1624 = vmatprep.subr.bf16.mxu0 0
    %1625 = vmatpush1.bf16.msra.mxu0 0
    %1626 = vmatprep.subr.bf16.mxu0 0
    %1627 = vmatpush1.bf16.msra.mxu0 0
    %1628 = vmatprep.subr.bf16.mxu0 0
    %1629 = vmatpush1.bf16.msra.mxu0 0
    %1630 = vmatprep.subr.bf16.mxu0 0
    %1631 = vmatpush1.bf16.msra.mxu0 0
    %1632 = vmatprep.subr.bf16.mxu0 0
    %1633 = vmatpush1.bf16.msra.mxu0 0
    %1634 = vmatprep.subr.bf16.mxu0 0
    %1635 = vmatpush1.bf16.msra.mxu0 0
    %1636 = vmatprep.subr.bf16.mxu0 0
    %1637 = vmatpush1.bf16.msra.mxu0 0
    %1638 = vmatprep.subr.bf16.mxu0 0
    %1639 = vmatpush1.bf16.msra.mxu0 0
    %1640 = vmatprep.subr.bf16.mxu0 0
    %1641 = vmatpush1.bf16.msra.mxu0 0
    %1642 = vmatprep.mubr.bf16.mxu0 0
    %1643 = vmatmul.mubr.bf16.gmra.mrb[0].mxu0 %v1608
    %v1644 = vpop.f32.mrb[0].mxu0
    %v1645 = vadd.f32 0.0, %v1644
    %v1646 = vpop.f32.mrb[0].mxu0
    %v1647 = vpop.f32.mrb[0].mxu0
    %v1648 = vadd.f32 0.0, %v1647
    %v1649 = vpop.f32.mrb[0].mxu0
    %1650 = vdwg.mxu0
    %v1651 = vrcp.pop %v1598
    %v1652 = vrcp.pop %v1601
    %v1653 = vmul.f32 %v1645, %v1651
    %v1654 = vmul.f32 %v1648, %v1652
    %1657 = vrot.lane.b32.xlu0 %v1653, 112
    %v1658 = vpop.permute.xlu0 %1657
    %1659 = vrot.lane.b32.xlu0 %v1654, 112
    %v1660 = vpop.permute.xlu0 %1659
    %vm1663 = vcmask 1048448
    %1664 = vst.msk [vmem:[#allocation3] sm:$0xff] %vm1663, %v1658
    %1665 = vst.msk [vmem:[#allocation3 + $0x8] sm:$0xff] %vm1663, %v1660
    %v1666 = vld [vmem:[#allocation2 + $0x18] sm:$0xff]
    %v1667 = vld [vmem:[#allocation2 + $0x20] sm:$0xff]
    %v1668 = vld [vmem:[#allocation2 + $0x28] sm:$0xff]
    %v1670 = vsel %vm567, %v1666, 0
    %v1673 = vsel %vm567, %v1667, 0
    %1675 = vmatprep.subr.bf16.mxu0 0
    %1676 = vmatpush1.bf16.xpose.msra.mxu0 %v1673
    %1677 = vmatprep.subr.bf16.mxu0 0
    %1678 = vmatpush1.bf16.xpose.msra.mxu0 0
    %1679 = vmatprep.subr.bf16.mxu0 0
    %1680 = vmatpush1.bf16.xpose.msra.mxu0 0
    %1681 = vmatprep.subr.bf16.mxu0 0
    %1682 = vmatpush1.bf16.xpose.msra.mxu0 0
    %1683 = vmatprep.subr.bf16.mxu0 0
    %1684 = vmatpush1.bf16.xpose.msra.mxu0 0
    %1685 = vmatprep.subr.bf16.mxu0 0
    %1686 = vmatpush1.bf16.xpose.msra.mxu0 0
    %1687 = vmatprep.subr.bf16.mxu0 0
    %1688 = vmatpush1.bf16.xpose.msra.mxu0 0
    %1689 = vmatprep.subr.bf16.mxu0 0
    %1690 = vmatpush1.bf16.xpose.msra.mxu0 0
    %1691 = vmatprep.subr.bf16.mxu0 0
    %1692 = vmatpush1.bf16.xpose.msra.mxu0 0
    %1693 = vmatprep.subr.bf16.mxu0 0
    %1694 = vmatpush1.bf16.xpose.msra.mxu0 0
    %1695 = vmatprep.subr.bf16.mxu0 0
    %1696 = vmatpush1.bf16.xpose.msra.mxu0 0
    %1697 = vmatprep.subr.bf16.mxu0 0
    %1698 = vmatpush1.bf16.xpose.msra.mxu0 0
    %1699 = vmatprep.subr.bf16.mxu0 0
    %1700 = vmatpush1.bf16.xpose.msra.mxu0 0
    %1701 = vmatprep.subr.bf16.mxu0 0
    %1702 = vmatpush1.bf16.xpose.msra.mxu0 0
    %1703 = vmatprep.subr.bf16.mxu0 0
    %1704 = vmatpush1.bf16.xpose.msra.mxu0 0
    %1705 = vmatprep.subr.bf16.mxu0 0
    %1706 = vmatpush1.bf16.xpose.msra.mxu0 0
    %1707 = vmatprep.mubr.bf16.mxu0 0
    %1708 = vmatmul.mubr.bf16.gmra.mrb[0].mxu0 %v1670
    %v1709 = vpop.f32.mrb[0].mxu0
    %v1710 = vadd.f32 0.0, %v1709
    %v1711 = vpop.f32.mrb[0].mxu0
    %v1712 = vpop.f32.mrb[0].mxu0
    %v1713 = vadd.f32 0.0, %v1712
    %v1714 = vpop.f32.mrb[0].mxu0
    %1715 = vdwg.mxu0
    %v1716 = vmul.f32 %v1710, 0.25
    %v1717 = vmul.f32 %v1713, 0.25
    %v1718 = vsel %vm567, %v1716, -inf
    %1719 = vmax.xlane.f32.xlu0 %v1718
    %v1720 = vpop.xlane.xlu0 %1719
    %v1721 = vsel %vm567, %v1717, -inf
    %1722 = vmax.xlane.f32.xlu0 %v1721
    %v1723 = vpop.xlane.xlu0 %1722
    %v1724 = vsub.f32 %v1716, %v1720
    %v1725 = vsub.f32 %v1717, %v1723
    %v1726 = vmul.f32 %v1724, 1.442695
    %v1727 = vpow.pop %v1726
    %v1728 = vmul.f32 %v1725, 1.442695
    %v1729 = vpow.pop %v1728
    %v1730 = vsel %vm567, %v1727, 0.0
    %1731 = vadd.xlane.f32.xlu0 %v1730
    %v1732 = vpop.xlane.xlu0 %1731
    %v1733 = vsel %vm567, %v1729, 0.0
    %1734 = vadd.xlane.f32.xlu0 %v1733
    %v1735 = vpop.xlane.xlu0 %1734
    %v1736 = vpack.c.bf16 %v1729, %v1727
    %v1738 = vsel %vm567, %v1736, 0
    %1740 = vmatprep.subr.bf16.mxu0 0
    %1741 = vmatpush1.bf16.msra.mxu0 %v1668
    %1742 = vmatprep.subr.bf16.mxu0 0
    %1743 = vmatpush1.bf16.msra.mxu0 0
    %1744 = vmatprep.subr.bf16.mxu0 0
    %1745 = vmatpush1.bf16.msra.mxu0 0
    %1746 = vmatprep.subr.bf16.mxu0 0
    %1747 = vmatpush1.bf16.msra.mxu0 0
    %1748 = vmatprep.subr.bf16.mxu0 0
    %1749 = vmatpush1.bf16.msra.mxu0 0
    %1750 = vmatprep.subr.bf16.mxu0 0
    %1751 = vmatpush1.bf16.msra.mxu0 0
    %1752 = vmatprep.subr.bf16.mxu0 0
    %1753 = vmatpush1.bf16.msra.mxu0 0
    %1754 = vmatprep.subr.bf16.mxu0 0
    %1755 = vmatpush1.bf16.msra.mxu0 0
    %1756 = vmatprep.subr.bf16.mxu0 0
    %1757 = vmatpush1.bf16.msra.mxu0 0
    %1758 = vmatprep.subr.bf16.mxu0 0
    %1759 = vmatpush1.bf16.msra.mxu0 0
    %1760 = vmatprep.subr.bf16.mxu0 0
    %1761 = vmatpush1.bf16.msra.mxu0 0
    %1762 = vmatprep.subr.bf16.mxu0 0
    %1763 = vmatpush1.bf16.msra.mxu0 0
    %1764 = vmatprep.subr.bf16.mxu0 0
    %1765 = vmatpush1.bf16.msra.mxu0 0
    %1766 = vmatprep.subr.bf16.mxu0 0
    %1767 = vmatpush1.bf16.msra.mxu0 0
    %1768 = vmatprep.subr.bf16.mxu0 0
    %1769 = vmatpush1.bf16.msra.mxu0 0
    %1770 = vmatprep.subr.bf16.mxu0 0
    %1771 = vmatpush1.bf16.msra.mxu0 0
    %1772 = vmatprep.mubr.bf16.mxu0 0
    %1773 = vmatmul.mubr.bf16.gmra.mrb[0].mxu0 %v1738
    %v1774 = vpop.f32.mrb[0].mxu0
    %v1775 = vadd.f32 0.0, %v1774
    %v1776 = vpop.f32.mrb[0].mxu0
    %v1777 = vpop.f32.mrb[0].mxu0
    %v1778 = vadd.f32 0.0, %v1777
    %v1779 = vpop.f32.mrb[0].mxu0
    %1780 = vdwg.mxu0
    %v1781 = vrcp.pop %v1732
    %v1782 = vrcp.pop %v1735
    %v1783 = vmul.f32 %v1775, %v1781
    %v1784 = vmul.f32 %v1778, %v1782
    %1785 = vst.msk [vmem:[#allocation3 + $0x10] sm:$0xff] %vm567, %v1783
    %1786 = vst.msk [vmem:[#allocation3 + $0x18] sm:$0xff] %vm567, %v1784
    %v1787 = vld [vmem:[#allocation2 + $0x18] sm:$0xff]
    %v1788 = vld [vmem:[#allocation2 + $0x20] sm:$0xff]
    %v1789 = vld [vmem:[#allocation2 + $0x28] sm:$0xff]
    %1791 = vrot.lane.b32.xlu0 %v1787, 112
    %v1792 = vpop.permute.xlu0 %1791
    %1794 = vrot.lane.b32.xlu0 %v1788, 112
    %v1795 = vpop.permute.xlu0 %1794
    %v1797 = vsel %vm567, %v1792, 0
    %v1800 = vsel %vm567, %v1795, 0
    %1802 = vmatprep.subr.bf16.mxu0 0
    %1803 = vmatpush1.bf16.xpose.msra.mxu0 %v1800
    %1804 = vmatprep.subr.bf16.mxu0 0
    %1805 = vmatpush1.bf16.xpose.msra.mxu0 0
    %1806 = vmatprep.subr.bf16.mxu0 0
    %1807 = vmatpush1.bf16.xpose.msra.mxu0 0
    %1808 = vmatprep.subr.bf16.mxu0 0
    %1809 = vmatpush1.bf16.xpose.msra.mxu0 0
    %1810 = vmatprep.subr.bf16.mxu0 0
    %1811 = vmatpush1.bf16.xpose.msra.mxu0 0
    %1812 = vmatprep.subr.bf16.mxu0 0
    %1813 = vmatpush1.bf16.xpose.msra.mxu0 0
    %1814 = vmatprep.subr.bf16.mxu0 0
    %1815 = vmatpush1.bf16.xpose.msra.mxu0 0
    %1816 = vmatprep.subr.bf16.mxu0 0
    %1817 = vmatpush1.bf16.xpose.msra.mxu0 0
    %1818 = vmatprep.subr.bf16.mxu0 0
    %1819 = vmatpush1.bf16.xpose.msra.mxu0 0
    %1820 = vmatprep.subr.bf16.mxu0 0
    %1821 = vmatpush1.bf16.xpose.msra.mxu0 0
    %1822 = vmatprep.subr.bf16.mxu0 0
    %1823 = vmatpush1.bf16.xpose.msra.mxu0 0
    %1824 = vmatprep.subr.bf16.mxu0 0
    %1825 = vmatpush1.bf16.xpose.msra.mxu0 0
    %1826 = vmatprep.subr.bf16.mxu0 0
    %1827 = vmatpush1.bf16.xpose.msra.mxu0 0
    %1828 = vmatprep.subr.bf16.mxu0 0
    %1829 = vmatpush1.bf16.xpose.msra.mxu0 0
    %1830 = vmatprep.subr.bf16.mxu0 0
    %1831 = vmatpush1.bf16.xpose.msra.mxu0 0
    %1832 = vmatprep.subr.bf16.mxu0 0
    %1833 = vmatpush1.bf16.xpose.msra.mxu0 0
    %1834 = vmatprep.mubr.bf16.mxu0 0
    %1835 = vmatmul.mubr.bf16.gmra.mrb[0].mxu0 %v1797
    %v1836 = vpop.f32.mrb[0].mxu0
    %v1837 = vadd.f32 0.0, %v1836
    %v1838 = vpop.f32.mrb[0].mxu0
    %v1839 = vpop.f32.mrb[0].mxu0
    %v1840 = vadd.f32 0.0, %v1839
    %v1841 = vpop.f32.mrb[0].mxu0
    %1842 = vdwg.mxu0
    %v1843 = vmul.f32 %v1837, 0.25
    %v1844 = vmul.f32 %v1840, 0.25
    %v1845 = vsel %vm567, %v1843, -inf
    %1846 = vmax.xlane.f32.xlu0 %v1845
    %v1847 = vpop.xlane.xlu0 %1846
    %v1848 = vsel %vm567, %v1844, -inf
    %1849 = vmax.xlane.f32.xlu0 %v1848
    %v1850 = vpop.xlane.xlu0 %1849
    %v1851 = vsub.f32 %v1843, %v1847
    %v1852 = vsub.f32 %v1844, %v1850
    %v1853 = vmul.f32 %v1851, 1.442695
    %v1854 = vpow.pop %v1853
    %v1855 = vmul.f32 %v1852, 1.442695
    %v1856 = vpow.pop %v1855
    %v1857 = vsel %vm567, %v1854, 0.0
    %1858 = vadd.xlane.f32.xlu0 %v1857
    %v1859 = vpop.xlane.xlu0 %1858
    %v1860 = vsel %vm567, %v1856, 0.0
    %1861 = vadd.xlane.f32.xlu0 %v1860
    %v1862 = vpop.xlane.xlu0 %1861
    %v1863 = vpack.c.bf16 %v1856, %v1854
    %1865 = vrot.lane.b32.xlu0 %v1789, 112
    %v1866 = vpop.permute.xlu0 %1865
    %v1869 = vsel %vm567, %v1863, 0
    %1871 = vmatprep.subr.bf16.mxu0 0
    %1872 = vmatpush1.bf16.msra.mxu0 %v1866
    %1873 = vmatprep.subr.bf16.mxu0 0
    %1874 = vmatpush1.bf16.msra.mxu0 0
    %1875 = vmatprep.subr.bf16.mxu0 0
    %1876 = vmatpush1.bf16.msra.mxu0 0
    %1877 = vmatprep.subr.bf16.mxu0 0
    %1878 = vmatpush1.bf16.msra.mxu0 0
    %1879 = vmatprep.subr.bf16.mxu0 0
    %1880 = vmatpush1.bf16.msra.mxu0 0
    %1881 = vmatprep.subr.bf16.mxu0 0
    %1882 = vmatpush1.bf16.msra.mxu0 0
    %1883 = vmatprep.subr.bf16.mxu0 0
    %1884 = vmatpush1.bf16.msra.mxu0 0
    %1885 = vmatprep.subr.bf16.mxu0 0
    %1886 = vmatpush1.bf16.msra.mxu0 0
    %1887 = vmatprep.subr.bf16.mxu0 0
    %1888 = vmatpush1.bf16.msra.mxu0 0
    %1889 = vmatprep.subr.bf16.mxu0 0
    %1890 = vmatpush1.bf16.msra.mxu0 0
    %1891 = vmatprep.subr.bf16.mxu0 0
    %1892 = vmatpush1.bf16.msra.mxu0 0
    %1893 = vmatprep.subr.bf16.mxu0 0
    %1894 = vmatpush1.bf16.msra.mxu0 0
    %1895 = vmatprep.subr.bf16.mxu0 0
    %1896 = vmatpush1.bf16.msra.mxu0 0
    %1897 = vmatprep.subr.bf16.mxu0 0
    %1898 = vmatpush1.bf16.msra.mxu0 0
    %1899 = vmatprep.subr.bf16.mxu0 0
    %1900 = vmatpush1.bf16.msra.mxu0 0
    %1901 = vmatprep.subr.bf16.mxu0 0
    %1902 = vmatpush1.bf16.msra.mxu0 0
    %1903 = vmatprep.mubr.bf16.mxu0 0
    %1904 = vmatmul.mubr.bf16.gmra.mrb[0].mxu0 %v1869
    %v1905 = vpop.f32.mrb[0].mxu0
    %v1906 = vadd.f32 0.0, %v1905
    %v1907 = vpop.f32.mrb[0].mxu0
    %v1908 = vpop.f32.mrb[0].mxu0
    %v1909 = vadd.f32 0.0, %v1908
    %v1910 = vpop.f32.mrb[0].mxu0
    %1911 = vdwg.mxu0
    %v1912 = vrcp.pop %v1859
    %v1913 = vrcp.pop %v1862
    %v1914 = vmul.f32 %v1906, %v1912
    %v1915 = vmul.f32 %v1909, %v1913
    %1918 = vrot.lane.b32.xlu0 %v1914, 16
    %v1919 = vpop.permute.xlu0 %1918
    %1920 = vrot.lane.b32.xlu0 %v1915, 16
    %v1921 = vpop.permute.xlu0 %1920
    %1924 = vst.msk [vmem:[#allocation3 + $0x10] sm:$0xff] %vm823, %v1919
    %1925 = vst.msk [vmem:[#allocation3 + $0x18] sm:$0xff] %vm823, %v1921
    %v1926 = vld [vmem:[#allocation2 + $0x18] sm:$0xff]
    %v1927 = vld [vmem:[#allocation2 + $0x20] sm:$0xff]
    %v1928 = vld [vmem:[#allocation2 + $0x28] sm:$0xff]
    %1930 = vrot.lane.b32.xlu0 %v1926, 96
    %v1931 = vpop.permute.xlu0 %1930
    %1933 = vrot.lane.b32.xlu0 %v1927, 96
    %v1934 = vpop.permute.xlu0 %1933
    %v1936 = vsel %vm567, %v1931, 0
    %v1939 = vsel %vm567, %v1934, 0
    %1941 = vmatprep.subr.bf16.mxu0 0
    %1942 = vmatpush1.bf16.xpose.msra.mxu0 %v1939
    %1943 = vmatprep.subr.bf16.mxu0 0
    %1944 = vmatpush1.bf16.xpose.msra.mxu0 0
    %1945 = vmatprep.subr.bf16.mxu0 0
    %1946 = vmatpush1.bf16.xpose.msra.mxu0 0
    %1947 = vmatprep.subr.bf16.mxu0 0
    %1948 = vmatpush1.bf16.xpose.msra.mxu0 0
    %1949 = vmatprep.subr.bf16.mxu0 0
    %1950 = vmatpush1.bf16.xpose.msra.mxu0 0
    %1951 = vmatprep.subr.bf16.mxu0 0
    %1952 = vmatpush1.bf16.xpose.msra.mxu0 0
    %1953 = vmatprep.subr.bf16.mxu0 0
    %1954 = vmatpush1.bf16.xpose.msra.mxu0 0
    %1955 = vmatprep.subr.bf16.mxu0 0
    %1956 = vmatpush1.bf16.xpose.msra.mxu0 0
    %1957 = vmatprep.subr.bf16.mxu0 0
    %1958 = vmatpush1.bf16.xpose.msra.mxu0 0
    %1959 = vmatprep.subr.bf16.mxu0 0
    %1960 = vmatpush1.bf16.xpose.msra.mxu0 0
    %1961 = vmatprep.subr.bf16.mxu0 0
    %1962 = vmatpush1.bf16.xpose.msra.mxu0 0
    %1963 = vmatprep.subr.bf16.mxu0 0
    %1964 = vmatpush1.bf16.xpose.msra.mxu0 0
    %1965 = vmatprep.subr.bf16.mxu0 0
    %1966 = vmatpush1.bf16.xpose.msra.mxu0 0
    %1967 = vmatprep.subr.bf16.mxu0 0
    %1968 = vmatpush1.bf16.xpose.msra.mxu0 0
    %1969 = vmatprep.subr.bf16.mxu0 0
    %1970 = vmatpush1.bf16.xpose.msra.mxu0 0
    %1971 = vmatprep.subr.bf16.mxu0 0
    %1972 = vmatpush1.bf16.xpose.msra.mxu0 0
    %1973 = vmatprep.mubr.bf16.mxu0 0
    %1974 = vmatmul.mubr.bf16.gmra.mrb[0].mxu0 %v1936
    %v1975 = vpop.f32.mrb[0].mxu0
    %v1976 = vadd.f32 0.0, %v1975
    %v1977 = vpop.f32.mrb[0].mxu0
    %v1978 = vpop.f32.mrb[0].mxu0
    %v1979 = vadd.f32 0.0, %v1978
    %v1980 = vpop.f32.mrb[0].mxu0
    %1981 = vdwg.mxu0
    %v1982 = vmul.f32 %v1976, 0.25
    %v1983 = vmul.f32 %v1979, 0.25
    %v1984 = vsel %vm567, %v1982, -inf
    %1985 = vmax.xlane.f32.xlu0 %v1984
    %v1986 = vpop.xlane.xlu0 %1985
    %v1987 = vsel %vm567, %v1983, -inf
    %1988 = vmax.xlane.f32.xlu0 %v1987
    %v1989 = vpop.xlane.xlu0 %1988
    %v1990 = vsub.f32 %v1982, %v1986
    %v1991 = vsub.f32 %v1983, %v1989
    %v1992 = vmul.f32 %v1990, 1.442695
    %v1993 = vpow.pop %v1992
    %v1994 = vmul.f32 %v1991, 1.442695
    %v1995 = vpow.pop %v1994
    %v1996 = vsel %vm567, %v1993, 0.0
    %1997 = vadd.xlane.f32.xlu0 %v1996
    %v1998 = vpop.xlane.xlu0 %1997
    %v1999 = vsel %vm567, %v1995, 0.0
    %2000 = vadd.xlane.f32.xlu0 %v1999
    %v2001 = vpop.xlane.xlu0 %2000
    %v2002 = vpack.c.bf16 %v1995, %v1993
    %2004 = vrot.lane.b32.xlu0 %v1928, 96
    %v2005 = vpop.permute.xlu0 %2004
    %v2008 = vsel %vm567, %v2002, 0
    %2010 = vmatprep.subr.bf16.mxu0 0
    %2011 = vmatpush1.bf16.msra.mxu0 %v2005
    %2012 = vmatprep.subr.bf16.mxu0 0
    %2013 = vmatpush1.bf16.msra.mxu0 0
    %2014 = vmatprep.subr.bf16.mxu0 0
    %2015 = vmatpush1.bf16.msra.mxu0 0
    %2016 = vmatprep.subr.bf16.mxu0 0
    %2017 = vmatpush1.bf16.msra.mxu0 0
    %2018 = vmatprep.subr.bf16.mxu0 0
    %2019 = vmatpush1.bf16.msra.mxu0 0
    %2020 = vmatprep.subr.bf16.mxu0 0
    %2021 = vmatpush1.bf16.msra.mxu0 0
    %2022 = vmatprep.subr.bf16.mxu0 0
    %2023 = vmatpush1.bf16.msra.mxu0 0
    %2024 = vmatprep.subr.bf16.mxu0 0
    %2025 = vmatpush1.bf16.msra.mxu0 0
    %2026 = vmatprep.subr.bf16.mxu0 0
    %2027 = vmatpush1.bf16.msra.mxu0 0
    %2028 = vmatprep.subr.bf16.mxu0 0
    %2029 = vmatpush1.bf16.msra.mxu0 0
    %2030 = vmatprep.subr.bf16.mxu0 0
    %2031 = vmatpush1.bf16.msra.mxu0 0
    %2032 = vmatprep.subr.bf16.mxu0 0
    %2033 = vmatpush1.bf16.msra.mxu0 0
    %2034 = vmatprep.subr.bf16.mxu0 0
    %2035 = vmatpush1.bf16.msra.mxu0 0
    %2036 = vmatprep.subr.bf16.mxu0 0
    %2037 = vmatpush1.bf16.msra.mxu0 0
    %2038 = vmatprep.subr.bf16.mxu0 0
    %2039 = vmatpush1.bf16.msra.mxu0 0
    %2040 = vmatprep.subr.bf16.mxu0 0
    %2041 = vmatpush1.bf16.msra.mxu0 0
    %2042 = vmatprep.mubr.bf16.mxu0 0
    %2043 = vmatmul.mubr.bf16.gmra.mrb[0].mxu0 %v2008
    %v2044 = vpop.f32.mrb[0].mxu0
    %v2045 = vadd.f32 0.0, %v2044
    %v2046 = vpop.f32.mrb[0].mxu0
    %v2047 = vpop.f32.mrb[0].mxu0
    %v2048 = vadd.f32 0.0, %v2047
    %v2049 = vpop.f32.mrb[0].mxu0
    %2050 = vdwg.mxu0
    %v2051 = vrcp.pop %v1998
    %v2052 = vrcp.pop %v2001
    %v2053 = vmul.f32 %v2045, %v2051
    %v2054 = vmul.f32 %v2048, %v2052
    %2057 = vrot.lane.b32.xlu0 %v2053, 32
    %v2058 = vpop.permute.xlu0 %2057
    %2059 = vrot.lane.b32.xlu0 %v2054, 32
    %v2060 = vpop.permute.xlu0 %2059
    %2063 = vst.msk [vmem:[#allocation3 + $0x10] sm:$0xff] %vm963, %v2058
    %2064 = vst.msk [vmem:[#allocation3 + $0x18] sm:$0xff] %vm963, %v2060
    %v2065 = vld [vmem:[#allocation2 + $0x18] sm:$0xff]
    %v2066 = vld [vmem:[#allocation2 + $0x20] sm:$0xff]
    %v2067 = vld [vmem:[#allocation2 + $0x28] sm:$0xff]
    %2069 = vrot.lane.b32.xlu0 %v2065, 80
    %v2070 = vpop.permute.xlu0 %2069
    %2072 = vrot.lane.b32.xlu0 %v2066, 80
    %v2073 = vpop.permute.xlu0 %2072
    %v2075 = vsel %vm567, %v2070, 0
    %v2078 = vsel %vm567, %v2073, 0
    %2080 = vmatprep.subr.bf16.mxu0 0
    %2081 = vmatpush1.bf16.xpose.msra.mxu0 %v2078
    %2082 = vmatprep.subr.bf16.mxu0 0
    %2083 = vmatpush1.bf16.xpose.msra.mxu0 0
    %2084 = vmatprep.subr.bf16.mxu0 0
    %2085 = vmatpush1.bf16.xpose.msra.mxu0 0
    %2086 = vmatprep.subr.bf16.mxu0 0
    %2087 = vmatpush1.bf16.xpose.msra.mxu0 0
    %2088 = vmatprep.subr.bf16.mxu0 0
    %2089 = vmatpush1.bf16.xpose.msra.mxu0 0
    %2090 = vmatprep.subr.bf16.mxu0 0
    %2091 = vmatpush1.bf16.xpose.msra.mxu0 0
    %2092 = vmatprep.subr.bf16.mxu0 0
    %2093 = vmatpush1.bf16.xpose.msra.mxu0 0
    %2094 = vmatprep.subr.bf16.mxu0 0
    %2095 = vmatpush1.bf16.xpose.msra.mxu0 0
    %2096 = vmatprep.subr.bf16.mxu0 0
    %2097 = vmatpush1.bf16.xpose.msra.mxu0 0
    %2098 = vmatprep.subr.bf16.mxu0 0
    %2099 = vmatpush1.bf16.xpose.msra.mxu0 0
    %2100 = vmatprep.subr.bf16.mxu0 0
    %2101 = vmatpush1.bf16.xpose.msra.mxu0 0
    %2102 = vmatprep.subr.bf16.mxu0 0
    %2103 = vmatpush1.bf16.xpose.msra.mxu0 0
    %2104 = vmatprep.subr.bf16.mxu0 0
    %2105 = vmatpush1.bf16.xpose.msra.mxu0 0
    %2106 = vmatprep.subr.bf16.mxu0 0
    %2107 = vmatpush1.bf16.xpose.msra.mxu0 0
    %2108 = vmatprep.subr.bf16.mxu0 0
    %2109 = vmatpush1.bf16.xpose.msra.mxu0 0
    %2110 = vmatprep.subr.bf16.mxu0 0
    %2111 = vmatpush1.bf16.xpose.msra.mxu0 0
    %2112 = vmatprep.mubr.bf16.mxu0 0
    %2113 = vmatmul.mubr.bf16.gmra.mrb[0].mxu0 %v2075
    %v2114 = vpop.f32.mrb[0].mxu0
    %v2115 = vadd.f32 0.0, %v2114
    %v2116 = vpop.f32.mrb[0].mxu0
    %v2117 = vpop.f32.mrb[0].mxu0
    %v2118 = vadd.f32 0.0, %v2117
    %v2119 = vpop.f32.mrb[0].mxu0
    %2120 = vdwg.mxu0
    %v2121 = vmul.f32 %v2115, 0.25
    %v2122 = vmul.f32 %v2118, 0.25
    %v2123 = vsel %vm567, %v2121, -inf
    %2124 = vmax.xlane.f32.xlu0 %v2123
    %v2125 = vpop.xlane.xlu0 %2124
    %v2126 = vsel %vm567, %v2122, -inf
    %2127 = vmax.xlane.f32.xlu0 %v2126
    %v2128 = vpop.xlane.xlu0 %2127
    %v2129 = vsub.f32 %v2121, %v2125
    %v2130 = vsub.f32 %v2122, %v2128
    %v2131 = vmul.f32 %v2129, 1.442695
    %v2132 = vpow.pop %v2131
    %v2133 = vmul.f32 %v2130, 1.442695
    %v2134 = vpow.pop %v2133
    %v2135 = vsel %vm567, %v2132, 0.0
    %2136 = vadd.xlane.f32.xlu0 %v2135
    %v2137 = vpop.xlane.xlu0 %2136
    %v2138 = vsel %vm567, %v2134, 0.0
    %2139 = vadd.xlane.f32.xlu0 %v2138
    %v2140 = vpop.xlane.xlu0 %2139
    %v2141 = vpack.c.bf16 %v2134, %v2132
    %2143 = vrot.lane.b32.xlu0 %v2067, 80
    %v2144 = vpop.permute.xlu0 %2143
    %v2147 = vsel %vm567, %v2141, 0
    %2149 = vmatprep.subr.bf16.mxu0 0
    %2150 = vmatpush1.bf16.msra.mxu0 %v2144
    %2151 = vmatprep.subr.bf16.mxu0 0
    %2152 = vmatpush1.bf16.msra.mxu0 0
    %2153 = vmatprep.subr.bf16.mxu0 0
    %2154 = vmatpush1.bf16.msra.mxu0 0
    %2155 = vmatprep.subr.bf16.mxu0 0
    %2156 = vmatpush1.bf16.msra.mxu0 0
    %2157 = vmatprep.subr.bf16.mxu0 0
    %2158 = vmatpush1.bf16.msra.mxu0 0
    %2159 = vmatprep.subr.bf16.mxu0 0
    %2160 = vmatpush1.bf16.msra.mxu0 0
    %2161 = vmatprep.subr.bf16.mxu0 0
    %2162 = vmatpush1.bf16.msra.mxu0 0
    %2163 = vmatprep.subr.bf16.mxu0 0
    %2164 = vmatpush1.bf16.msra.mxu0 0
    %2165 = vmatprep.subr.bf16.mxu0 0
    %2166 = vmatpush1.bf16.msra.mxu0 0
    %2167 = vmatprep.subr.bf16.mxu0 0
    %2168 = vmatpush1.bf16.msra.mxu0 0
    %2169 = vmatprep.subr.bf16.mxu0 0
    %2170 = vmatpush1.bf16.msra.mxu0 0
    %2171 = vmatprep.subr.bf16.mxu0 0
    %2172 = vmatpush1.bf16.msra.mxu0 0
    %2173 = vmatprep.subr.bf16.mxu0 0
    %2174 = vmatpush1.bf16.msra.mxu0 0
    %2175 = vmatprep.subr.bf16.mxu0 0
    %2176 = vmatpush1.bf16.msra.mxu0 0
    %2177 = vmatprep.subr.bf16.mxu0 0
    %2178 = vmatpush1.bf16.msra.mxu0 0
    %2179 = vmatprep.subr.bf16.mxu0 0
    %2180 = vmatpush1.bf16.msra.mxu0 0
    %2181 = vmatprep.mubr.bf16.mxu0 0
    %2182 = vmatmul.mubr.bf16.gmra.mrb[0].mxu0 %v2147
    %v2183 = vpop.f32.mrb[0].mxu0
    %v2184 = vadd.f32 0.0, %v2183
    %v2185 = vpop.f32.mrb[0].mxu0
    %v2186 = vpop.f32.mrb[0].mxu0
    %v2187 = vadd.f32 0.0, %v2186
    %v2188 = vpop.f32.mrb[0].mxu0
    %2189 = vdwg.mxu0
    %v2190 = vrcp.pop %v2137
    %v2191 = vrcp.pop %v2140
    %v2192 = vmul.f32 %v2184, %v2190
    %v2193 = vmul.f32 %v2187, %v2191
    %2196 = vrot.lane.b32.xlu0 %v2192, 48
    %v2197 = vpop.permute.xlu0 %2196
    %2198 = vrot.lane.b32.xlu0 %v2193, 48
    %v2199 = vpop.permute.xlu0 %2198
    %2202 = vst.msk [vmem:[#allocation3 + $0x10] sm:$0xff] %vm1103, %v2197
    %2203 = vst.msk [vmem:[#allocation3 + $0x18] sm:$0xff] %vm1103, %v2199
    %v2204 = vld [vmem:[#allocation2 + $0x18] sm:$0xff]
    %v2205 = vld [vmem:[#allocation2 + $0x20] sm:$0xff]
    %v2206 = vld [vmem:[#allocation2 + $0x28] sm:$0xff]
    %2208 = vrot.lane.b32.xlu0 %v2204, 64
    %v2209 = vpop.permute.xlu0 %2208
    %2211 = vrot.lane.b32.xlu0 %v2205, 64
    %v2212 = vpop.permute.xlu0 %2211
    %v2214 = vsel %vm567, %v2209, 0
    %v2217 = vsel %vm567, %v2212, 0
    %2219 = vmatprep.subr.bf16.mxu0 0
    %2220 = vmatpush1.bf16.xpose.msra.mxu0 %v2217
    %2221 = vmatprep.subr.bf16.mxu0 0
    %2222 = vmatpush1.bf16.xpose.msra.mxu0 0
    %2223 = vmatprep.subr.bf16.mxu0 0
    %2224 = vmatpush1.bf16.xpose.msra.mxu0 0
    %2225 = vmatprep.subr.bf16.mxu0 0
    %2226 = vmatpush1.bf16.xpose.msra.mxu0 0
    %2227 = vmatprep.subr.bf16.mxu0 0
    %2228 = vmatpush1.bf16.xpose.msra.mxu0 0
    %2229 = vmatprep.subr.bf16.mxu0 0
    %2230 = vmatpush1.bf16.xpose.msra.mxu0 0
    %2231 = vmatprep.subr.bf16.mxu0 0
    %2232 = vmatpush1.bf16.xpose.msra.mxu0 0
    %2233 = vmatprep.subr.bf16.mxu0 0
    %2234 = vmatpush1.bf16.xpose.msra.mxu0 0
    %2235 = vmatprep.subr.bf16.mxu0 0
    %2236 = vmatpush1.bf16.xpose.msra.mxu0 0
    %2237 = vmatprep.subr.bf16.mxu0 0
    %2238 = vmatpush1.bf16.xpose.msra.mxu0 0
    %2239 = vmatprep.subr.bf16.mxu0 0
    %2240 = vmatpush1.bf16.xpose.msra.mxu0 0
    %2241 = vmatprep.subr.bf16.mxu0 0
    %2242 = vmatpush1.bf16.xpose.msra.mxu0 0
    %2243 = vmatprep.subr.bf16.mxu0 0
    %2244 = vmatpush1.bf16.xpose.msra.mxu0 0
    %2245 = vmatprep.subr.bf16.mxu0 0
    %2246 = vmatpush1.bf16.xpose.msra.mxu0 0
    %2247 = vmatprep.subr.bf16.mxu0 0
    %2248 = vmatpush1.bf16.xpose.msra.mxu0 0
    %2249 = vmatprep.subr.bf16.mxu0 0
    %2250 = vmatpush1.bf16.xpose.msra.mxu0 0
    %2251 = vmatprep.mubr.bf16.mxu0 0
    %2252 = vmatmul.mubr.bf16.gmra.mrb[0].mxu0 %v2214
    %v2253 = vpop.f32.mrb[0].mxu0
    %v2254 = vadd.f32 0.0, %v2253
    %v2255 = vpop.f32.mrb[0].mxu0
    %v2256 = vpop.f32.mrb[0].mxu0
    %v2257 = vadd.f32 0.0, %v2256
    %v2258 = vpop.f32.mrb[0].mxu0
    %2259 = vdwg.mxu0
    %v2260 = vmul.f32 %v2254, 0.25
    %v2261 = vmul.f32 %v2257, 0.25
    %v2262 = vsel %vm567, %v2260, -inf
    %2263 = vmax.xlane.f32.xlu0 %v2262
    %v2264 = vpop.xlane.xlu0 %2263
    %v2265 = vsel %vm567, %v2261, -inf
    %2266 = vmax.xlane.f32.xlu0 %v2265
    %v2267 = vpop.xlane.xlu0 %2266
    %v2268 = vsub.f32 %v2260, %v2264
    %v2269 = vsub.f32 %v2261, %v2267
    %v2270 = vmul.f32 %v2268, 1.442695
    %v2271 = vpow.pop %v2270
    %v2272 = vmul.f32 %v2269, 1.442695
    %v2273 = vpow.pop %v2272
    %v2274 = vsel %vm567, %v2271, 0.0
    %2275 = vadd.xlane.f32.xlu0 %v2274
    %v2276 = vpop.xlane.xlu0 %2275
    %v2277 = vsel %vm567, %v2273, 0.0
    %2278 = vadd.xlane.f32.xlu0 %v2277
    %v2279 = vpop.xlane.xlu0 %2278
    %v2280 = vpack.c.bf16 %v2273, %v2271
    %2282 = vrot.lane.b32.xlu0 %v2206, 64
    %v2283 = vpop.permute.xlu0 %2282
    %v2286 = vsel %vm567, %v2280, 0
    %2288 = vmatprep.subr.bf16.mxu0 0
    %2289 = vmatpush1.bf16.msra.mxu0 %v2283
    %2290 = vmatprep.subr.bf16.mxu0 0
    %2291 = vmatpush1.bf16.msra.mxu0 0
    %2292 = vmatprep.subr.bf16.mxu0 0
    %2293 = vmatpush1.bf16.msra.mxu0 0
    %2294 = vmatprep.subr.bf16.mxu0 0
    %2295 = vmatpush1.bf16.msra.mxu0 0
    %2296 = vmatprep.subr.bf16.mxu0 0
    %2297 = vmatpush1.bf16.msra.mxu0 0
    %2298 = vmatprep.subr.bf16.mxu0 0
    %2299 = vmatpush1.bf16.msra.mxu0 0
    %2300 = vmatprep.subr.bf16.mxu0 0
    %2301 = vmatpush1.bf16.msra.mxu0 0
    %2302 = vmatprep.subr.bf16.mxu0 0
    %2303 = vmatpush1.bf16.msra.mxu0 0
    %2304 = vmatprep.subr.bf16.mxu0 0
    %2305 = vmatpush1.bf16.msra.mxu0 0
    %2306 = vmatprep.subr.bf16.mxu0 0
    %2307 = vmatpush1.bf16.msra.mxu0 0
    %2308 = vmatprep.subr.bf16.mxu0 0
    %2309 = vmatpush1.bf16.msra.mxu0 0
    %2310 = vmatprep.subr.bf16.mxu0 0
    %2311 = vmatpush1.bf16.msra.mxu0 0
    %2312 = vmatprep.subr.bf16.mxu0 0
    %2313 = vmatpush1.bf16.msra.mxu0 0
    %2314 = vmatprep.subr.bf16.mxu0 0
    %2315 = vmatpush1.bf16.msra.mxu0 0
    %2316 = vmatprep.subr.bf16.mxu0 0
    %2317 = vmatpush1.bf16.msra.mxu0 0
    %2318 = vmatprep.subr.bf16.mxu0 0
    %2319 = vmatpush1.bf16.msra.mxu0 0
    %2320 = vmatprep.mubr.bf16.mxu0 0
    %2321 = vmatmul.mubr.bf16.gmra.mrb[0].mxu0 %v2286
    %v2322 = vpop.f32.mrb[0].mxu0
    %v2323 = vadd.f32 0.0, %v2322
    %v2324 = vpop.f32.mrb[0].mxu0
    %v2325 = vpop.f32.mrb[0].mxu0
    %v2326 = vadd.f32 0.0, %v2325
    %v2327 = vpop.f32.mrb[0].mxu0
    %2328 = vdwg.mxu0
    %v2329 = vrcp.pop %v2276
    %v2330 = vrcp.pop %v2279
    %v2331 = vmul.f32 %v2323, %v2329
    %v2332 = vmul.f32 %v2326, %v2330
    %2335 = vrot.lane.b32.xlu0 %v2331, 64
    %v2336 = vpop.permute.xlu0 %2335
    %2337 = vrot.lane.b32.xlu0 %v2332, 64
    %v2338 = vpop.permute.xlu0 %2337
    %2341 = vst.msk [vmem:[#allocation3 + $0x10] sm:$0xff] %vm1243, %v2336
    %2342 = vst.msk [vmem:[#allocation3 + $0x18] sm:$0xff] %vm1243, %v2338
    %v2343 = vld [vmem:[#allocation2 + $0x18] sm:$0xff]
    %v2344 = vld [vmem:[#allocation2 + $0x20] sm:$0xff]
    %v2345 = vld [vmem:[#allocation2 + $0x28] sm:$0xff]
    %2347 = vrot.lane.b32.xlu0 %v2343, 48
    %v2348 = vpop.permute.xlu0 %2347
    %2350 = vrot.lane.b32.xlu0 %v2344, 48
    %v2351 = vpop.permute.xlu0 %2350
    %v2353 = vsel %vm567, %v2348, 0
    %v2356 = vsel %vm567, %v2351, 0
    %2358 = vmatprep.subr.bf16.mxu0 0
    %2359 = vmatpush1.bf16.xpose.msra.mxu0 %v2356
    %2360 = vmatprep.subr.bf16.mxu0 0
    %2361 = vmatpush1.bf16.xpose.msra.mxu0 0
    %2362 = vmatprep.subr.bf16.mxu0 0
    %2363 = vmatpush1.bf16.xpose.msra.mxu0 0
    %2364 = vmatprep.subr.bf16.mxu0 0
    %2365 = vmatpush1.bf16.xpose.msra.mxu0 0
    %2366 = vmatprep.subr.bf16.mxu0 0
    %2367 = vmatpush1.bf16.xpose.msra.mxu0 0
    %2368 = vmatprep.subr.bf16.mxu0 0
    %2369 = vmatpush1.bf16.xpose.msra.mxu0 0
    %2370 = vmatprep.subr.bf16.mxu0 0
    %2371 = vmatpush1.bf16.xpose.msra.mxu0 0
    %2372 = vmatprep.subr.bf16.mxu0 0
    %2373 = vmatpush1.bf16.xpose.msra.mxu0 0
    %2374 = vmatprep.subr.bf16.mxu0 0
    %2375 = vmatpush1.bf16.xpose.msra.mxu0 0
    %2376 = vmatprep.subr.bf16.mxu0 0
    %2377 = vmatpush1.bf16.xpose.msra.mxu0 0
    %2378 = vmatprep.subr.bf16.mxu0 0
    %2379 = vmatpush1.bf16.xpose.msra.mxu0 0
    %2380 = vmatprep.subr.bf16.mxu0 0
    %2381 = vmatpush1.bf16.xpose.msra.mxu0 0
    %2382 = vmatprep.subr.bf16.mxu0 0
    %2383 = vmatpush1.bf16.xpose.msra.mxu0 0
    %2384 = vmatprep.subr.bf16.mxu0 0
    %2385 = vmatpush1.bf16.xpose.msra.mxu0 0
    %2386 = vmatprep.subr.bf16.mxu0 0
    %2387 = vmatpush1.bf16.xpose.msra.mxu0 0
    %2388 = vmatprep.subr.bf16.mxu0 0
    %2389 = vmatpush1.bf16.xpose.msra.mxu0 0
    %2390 = vmatprep.mubr.bf16.mxu0 0
    %2391 = vmatmul.mubr.bf16.gmra.mrb[0].mxu0 %v2353
    %v2392 = vpop.f32.mrb[0].mxu0
    %v2393 = vadd.f32 0.0, %v2392
    %v2394 = vpop.f32.mrb[0].mxu0
    %v2395 = vpop.f32.mrb[0].mxu0
    %v2396 = vadd.f32 0.0, %v2395
    %v2397 = vpop.f32.mrb[0].mxu0
    %2398 = vdwg.mxu0
    %v2399 = vmul.f32 %v2393, 0.25
    %v2400 = vmul.f32 %v2396, 0.25
    %v2401 = vsel %vm567, %v2399, -inf
    %2402 = vmax.xlane.f32.xlu0 %v2401
    %v2403 = vpop.xlane.xlu0 %2402
    %v2404 = vsel %vm567, %v2400, -inf
    %2405 = vmax.xlane.f32.xlu0 %v2404
    %v2406 = vpop.xlane.xlu0 %2405
    %v2407 = vsub.f32 %v2399, %v2403
    %v2408 = vsub.f32 %v2400, %v2406
    %v2409 = vmul.f32 %v2407, 1.442695
    %v2410 = vpow.pop %v2409
    %v2411 = vmul.f32 %v2408, 1.442695
    %v2412 = vpow.pop %v2411
    %v2413 = vsel %vm567, %v2410, 0.0
    %2414 = vadd.xlane.f32.xlu0 %v2413
    %v2415 = vpop.xlane.xlu0 %2414
    %v2416 = vsel %vm567, %v2412, 0.0
    %2417 = vadd.xlane.f32.xlu0 %v2416
    %v2418 = vpop.xlane.xlu0 %2417
    %v2419 = vpack.c.bf16 %v2412, %v2410
    %2421 = vrot.lane.b32.xlu0 %v2345, 48
    %v2422 = vpop.permute.xlu0 %2421
    %v2425 = vsel %vm567, %v2419, 0
    %2427 = vmatprep.subr.bf16.mxu0 0
    %2428 = vmatpush1.bf16.msra.mxu0 %v2422
    %2429 = vmatprep.subr.bf16.mxu0 0
    %2430 = vmatpush1.bf16.msra.mxu0 0
    %2431 = vmatprep.subr.bf16.mxu0 0
    %2432 = vmatpush1.bf16.msra.mxu0 0
    %2433 = vmatprep.subr.bf16.mxu0 0
    %2434 = vmatpush1.bf16.msra.mxu0 0
    %2435 = vmatprep.subr.bf16.mxu0 0
    %2436 = vmatpush1.bf16.msra.mxu0 0
    %2437 = vmatprep.subr.bf16.mxu0 0
    %2438 = vmatpush1.bf16.msra.mxu0 0
    %2439 = vmatprep.subr.bf16.mxu0 0
    %2440 = vmatpush1.bf16.msra.mxu0 0
    %2441 = vmatprep.subr.bf16.mxu0 0
    %2442 = vmatpush1.bf16.msra.mxu0 0
    %2443 = vmatprep.subr.bf16.mxu0 0
    %2444 = vmatpush1.bf16.msra.mxu0 0
    %2445 = vmatprep.subr.bf16.mxu0 0
    %2446 = vmatpush1.bf16.msra.mxu0 0
    %2447 = vmatprep.subr.bf16.mxu0 0
    %2448 = vmatpush1.bf16.msra.mxu0 0
    %2449 = vmatprep.subr.bf16.mxu0 0
    %2450 = vmatpush1.bf16.msra.mxu0 0
    %2451 = vmatprep.subr.bf16.mxu0 0
    %2452 = vmatpush1.bf16.msra.mxu0 0
    %2453 = vmatprep.subr.bf16.mxu0 0
    %2454 = vmatpush1.bf16.msra.mxu0 0
    %2455 = vmatprep.subr.bf16.mxu0 0
    %2456 = vmatpush1.bf16.msra.mxu0 0
    %2457 = vmatprep.subr.bf16.mxu0 0
    %2458 = vmatpush1.bf16.msra.mxu0 0
    %2459 = vmatprep.mubr.bf16.mxu0 0
    %2460 = vmatmul.mubr.bf16.gmra.mrb[0].mxu0 %v2425
    %v2461 = vpop.f32.mrb[0].mxu0
    %v2462 = vadd.f32 0.0, %v2461
    %v2463 = vpop.f32.mrb[0].mxu0
    %v2464 = vpop.f32.mrb[0].mxu0
    %v2465 = vadd.f32 0.0, %v2464
    %v2466 = vpop.f32.mrb[0].mxu0
    %2467 = vdwg.mxu0
    %v2468 = vrcp.pop %v2415
    %v2469 = vrcp.pop %v2418
    %v2470 = vmul.f32 %v2462, %v2468
    %v2471 = vmul.f32 %v2465, %v2469
    %2474 = vrot.lane.b32.xlu0 %v2470, 80
    %v2475 = vpop.permute.xlu0 %2474
    %2476 = vrot.lane.b32.xlu0 %v2471, 80
    %v2477 = vpop.permute.xlu0 %2476
    %2480 = vst.msk [vmem:[#allocation3 + $0x10] sm:$0xff] %vm1383, %v2475
    %2481 = vst.msk [vmem:[#allocation3 + $0x18] sm:$0xff] %vm1383, %v2477
    %v2482 = vld [vmem:[#allocation2 + $0x18] sm:$0xff]
    %v2483 = vld [vmem:[#allocation2 + $0x20] sm:$0xff]
    %v2484 = vld [vmem:[#allocation2 + $0x28] sm:$0xff]
    %2486 = vrot.lane.b32.xlu0 %v2482, 32
    %v2487 = vpop.permute.xlu0 %2486
    %2489 = vrot.lane.b32.xlu0 %v2483, 32
    %v2490 = vpop.permute.xlu0 %2489
    %v2492 = vsel %vm567, %v2487, 0
    %v2495 = vsel %vm567, %v2490, 0
    %2497 = vmatprep.subr.bf16.mxu0 0
    %2498 = vmatpush1.bf16.xpose.msra.mxu0 %v2495
    %2499 = vmatprep.subr.bf16.mxu0 0
    %2500 = vmatpush1.bf16.xpose.msra.mxu0 0
    %2501 = vmatprep.subr.bf16.mxu0 0
    %2502 = vmatpush1.bf16.xpose.msra.mxu0 0
    %2503 = vmatprep.subr.bf16.mxu0 0
    %2504 = vmatpush1.bf16.xpose.msra.mxu0 0
    %2505 = vmatprep.subr.bf16.mxu0 0
    %2506 = vmatpush1.bf16.xpose.msra.mxu0 0
    %2507 = vmatprep.subr.bf16.mxu0 0
    %2508 = vmatpush1.bf16.xpose.msra.mxu0 0
    %2509 = vmatprep.subr.bf16.mxu0 0
    %2510 = vmatpush1.bf16.xpose.msra.mxu0 0
    %2511 = vmatprep.subr.bf16.mxu0 0
    %2512 = vmatpush1.bf16.xpose.msra.mxu0 0
    %2513 = vmatprep.subr.bf16.mxu0 0
    %2514 = vmatpush1.bf16.xpose.msra.mxu0 0
    %2515 = vmatprep.subr.bf16.mxu0 0
    %2516 = vmatpush1.bf16.xpose.msra.mxu0 0
    %2517 = vmatprep.subr.bf16.mxu0 0
    %2518 = vmatpush1.bf16.xpose.msra.mxu0 0
    %2519 = vmatprep.subr.bf16.mxu0 0
    %2520 = vmatpush1.bf16.xpose.msra.mxu0 0
    %2521 = vmatprep.subr.bf16.mxu0 0
    %2522 = vmatpush1.bf16.xpose.msra.mxu0 0
    %2523 = vmatprep.subr.bf16.mxu0 0
    %2524 = vmatpush1.bf16.xpose.msra.mxu0 0
    %2525 = vmatprep.subr.bf16.mxu0 0
    %2526 = vmatpush1.bf16.xpose.msra.mxu0 0
    %2527 = vmatprep.subr.bf16.mxu0 0
    %2528 = vmatpush1.bf16.xpose.msra.mxu0 0
    %2529 = vmatprep.mubr.bf16.mxu0 0
    %2530 = vmatmul.mubr.bf16.gmra.mrb[0].mxu0 %v2492
    %v2531 = vpop.f32.mrb[0].mxu0
    %v2532 = vadd.f32 0.0, %v2531
    %v2533 = vpop.f32.mrb[0].mxu0
    %v2534 = vpop.f32.mrb[0].mxu0
    %v2535 = vadd.f32 0.0, %v2534
    %v2536 = vpop.f32.mrb[0].mxu0
    %2537 = vdwg.mxu0
    %v2538 = vmul.f32 %v2532, 0.25
    %v2539 = vmul.f32 %v2535, 0.25
    %v2540 = vsel %vm567, %v2538, -inf
    %2541 = vmax.xlane.f32.xlu0 %v2540
    %v2542 = vpop.xlane.xlu0 %2541
    %v2543 = vsel %vm567, %v2539, -inf
    %2544 = vmax.xlane.f32.xlu0 %v2543
    %v2545 = vpop.xlane.xlu0 %2544
    %v2546 = vsub.f32 %v2538, %v2542
    %v2547 = vsub.f32 %v2539, %v2545
    %v2548 = vmul.f32 %v2546, 1.442695
    %v2549 = vpow.pop %v2548
    %v2550 = vmul.f32 %v2547, 1.442695
    %v2551 = vpow.pop %v2550
    %v2552 = vsel %vm567, %v2549, 0.0
    %2553 = vadd.xlane.f32.xlu0 %v2552
    %v2554 = vpop.xlane.xlu0 %2553
    %v2555 = vsel %vm567, %v2551, 0.0
    %2556 = vadd.xlane.f32.xlu0 %v2555
    %v2557 = vpop.xlane.xlu0 %2556
    %v2558 = vpack.c.bf16 %v2551, %v2549
    %2560 = vrot.lane.b32.xlu0 %v2484, 32
    %v2561 = vpop.permute.xlu0 %2560
    %v2564 = vsel %vm567, %v2558, 0
    %2566 = vmatprep.subr.bf16.mxu0 0
    %2567 = vmatpush1.bf16.msra.mxu0 %v2561
    %2568 = vmatprep.subr.bf16.mxu0 0
    %2569 = vmatpush1.bf16.msra.mxu0 0
    %2570 = vmatprep.subr.bf16.mxu0 0
    %2571 = vmatpush1.bf16.msra.mxu0 0
    %2572 = vmatprep.subr.bf16.mxu0 0
    %2573 = vmatpush1.bf16.msra.mxu0 0
    %2574 = vmatprep.subr.bf16.mxu0 0
    %2575 = vmatpush1.bf16.msra.mxu0 0
    %2576 = vmatprep.subr.bf16.mxu0 0
    %2577 = vmatpush1.bf16.msra.mxu0 0
    %2578 = vmatprep.subr.bf16.mxu0 0
    %2579 = vmatpush1.bf16.msra.mxu0 0
    %2580 = vmatprep.subr.bf16.mxu0 0
    %2581 = vmatpush1.bf16.msra.mxu0 0
    %2582 = vmatprep.subr.bf16.mxu0 0
    %2583 = vmatpush1.bf16.msra.mxu0 0
    %2584 = vmatprep.subr.bf16.mxu0 0
    %2585 = vmatpush1.bf16.msra.mxu0 0
    %2586 = vmatprep.subr.bf16.mxu0 0
    %2587 = vmatpush1.bf16.msra.mxu0 0
    %2588 = vmatprep.subr.bf16.mxu0 0
    %2589 = vmatpush1.bf16.msra.mxu0 0
    %2590 = vmatprep.subr.bf16.mxu0 0
    %2591 = vmatpush1.bf16.msra.mxu0 0
    %2592 = vmatprep.subr.bf16.mxu0 0
    %2593 = vmatpush1.bf16.msra.mxu0 0
    %2594 = vmatprep.subr.bf16.mxu0 0
    %2595 = vmatpush1.bf16.msra.mxu0 0
    %2596 = vmatprep.subr.bf16.mxu0 0
    %2597 = vmatpush1.bf16.msra.mxu0 0
    %2598 = vmatprep.mubr.bf16.mxu0 0
    %2599 = vmatmul.mubr.bf16.gmra.mrb[0].mxu0 %v2564
    %v2600 = vpop.f32.mrb[0].mxu0
    %v2601 = vadd.f32 0.0, %v2600
    %v2602 = vpop.f32.mrb[0].mxu0
    %v2603 = vpop.f32.mrb[0].mxu0
    %v2604 = vadd.f32 0.0, %v2603
    %v2605 = vpop.f32.mrb[0].mxu0
    %2606 = vdwg.mxu0
    %v2607 = vrcp.pop %v2554
    %v2608 = vrcp.pop %v2557
    %v2609 = vmul.f32 %v2601, %v2607
    %v2610 = vmul.f32 %v2604, %v2608
    %2613 = vrot.lane.b32.xlu0 %v2609, 96
    %v2614 = vpop.permute.xlu0 %2613
    %2615 = vrot.lane.b32.xlu0 %v2610, 96
    %v2616 = vpop.permute.xlu0 %2615
    %2619 = vst.msk [vmem:[#allocation3 + $0x10] sm:$0xff] %vm1523, %v2614
    %2620 = vst.msk [vmem:[#allocation3 + $0x18] sm:$0xff] %vm1523, %v2616
    %v2621 = vld [vmem:[#allocation2 + $0x18] sm:$0xff]
    %v2622 = vld [vmem:[#allocation2 + $0x20] sm:$0xff]
    %v2623 = vld [vmem:[#allocation2 + $0x28] sm:$0xff]
    %2625 = vrot.lane.b32.xlu0 %v2621, 16
    %v2626 = vpop.permute.xlu0 %2625
    %2628 = vrot.lane.b32.xlu0 %v2622, 16
    %v2629 = vpop.permute.xlu0 %2628
    %v2631 = vsel %vm567, %v2626, 0
    %v2634 = vsel %vm567, %v2629, 0
    %2636 = vmatprep.subr.bf16.mxu0 0
    %2637 = vmatpush1.bf16.xpose.msra.mxu0 %v2634
    %2638 = vmatprep.subr.bf16.mxu0 0
    %2639 = vmatpush1.bf16.xpose.msra.mxu0 0
    %2640 = vmatprep.subr.bf16.mxu0 0
    %2641 = vmatpush1.bf16.xpose.msra.mxu0 0
    %2642 = vmatprep.subr.bf16.mxu0 0
    %2643 = vmatpush1.bf16.xpose.msra.mxu0 0
    %2644 = vmatprep.subr.bf16.mxu0 0
    %2645 = vmatpush1.bf16.xpose.msra.mxu0 0
    %2646 = vmatprep.subr.bf16.mxu0 0
    %2647 = vmatpush1.bf16.xpose.msra.mxu0 0
    %2648 = vmatprep.subr.bf16.mxu0 0
    %2649 = vmatpush1.bf16.xpose.msra.mxu0 0
    %2650 = vmatprep.subr.bf16.mxu0 0
    %2651 = vmatpush1.bf16.xpose.msra.mxu0 0
    %2652 = vmatprep.subr.bf16.mxu0 0
    %2653 = vmatpush1.bf16.xpose.msra.mxu0 0
    %2654 = vmatprep.subr.bf16.mxu0 0
    %2655 = vmatpush1.bf16.xpose.msra.mxu0 0
    %2656 = vmatprep.subr.bf16.mxu0 0
    %2657 = vmatpush1.bf16.xpose.msra.mxu0 0
    %2658 = vmatprep.subr.bf16.mxu0 0
    %2659 = vmatpush1.bf16.xpose.msra.mxu0 0
    %2660 = vmatprep.subr.bf16.mxu0 0
    %2661 = vmatpush1.bf16.xpose.msra.mxu0 0
    %2662 = vmatprep.subr.bf16.mxu0 0
    %2663 = vmatpush1.bf16.xpose.msra.mxu0 0
    %2664 = vmatprep.subr.bf16.mxu0 0
    %2665 = vmatpush1.bf16.xpose.msra.mxu0 0
    %2666 = vmatprep.subr.bf16.mxu0 0
    %2667 = vmatpush1.bf16.xpose.msra.mxu0 0
    %2668 = vmatprep.mubr.bf16.mxu0 0
    %2669 = vmatmul.mubr.bf16.gmra.mrb[0].mxu0 %v2631
    %v2670 = vpop.f32.mrb[0].mxu0
    %v2671 = vadd.f32 0.0, %v2670
    %v2672 = vpop.f32.mrb[0].mxu0
    %v2673 = vpop.f32.mrb[0].mxu0
    %v2674 = vadd.f32 0.0, %v2673
    %v2675 = vpop.f32.mrb[0].mxu0
    %2676 = vdwg.mxu0
    %v2677 = vmul.f32 %v2671, 0.25
    %v2678 = vmul.f32 %v2674, 0.25
    %v2679 = vsel %vm567, %v2677, -inf
    %2680 = vmax.xlane.f32.xlu0 %v2679
    %v2681 = vpop.xlane.xlu0 %2680
    %v2682 = vsel %vm567, %v2678, -inf
    %2683 = vmax.xlane.f32.xlu0 %v2682
    %v2684 = vpop.xlane.xlu0 %2683
    %v2685 = vsub.f32 %v2677, %v2681
    %v2686 = vsub.f32 %v2678, %v2684
    %v2687 = vmul.f32 %v2685, 1.442695
    %v2688 = vpow.pop %v2687
    %v2689 = vmul.f32 %v2686, 1.442695
    %v2690 = vpow.pop %v2689
    %v2691 = vsel %vm567, %v2688, 0.0
    %2692 = vadd.xlane.f32.xlu0 %v2691
    %v2693 = vpop.xlane.xlu0 %2692
    %v2694 = vsel %vm567, %v2690, 0.0
    %2695 = vadd.xlane.f32.xlu0 %v2694
    %v2696 = vpop.xlane.xlu0 %2695
    %v2697 = vpack.c.bf16 %v2690, %v2688
    %2699 = vrot.lane.b32.xlu0 %v2623, 16
    %v2700 = vpop.permute.xlu0 %2699
    %v2703 = vsel %vm567, %v2697, 0
    %2705 = vmatprep.subr.bf16.mxu0 0
    %2706 = vmatpush1.bf16.msra.mxu0 %v2700
    %2707 = vmatprep.subr.bf16.mxu0 0
    %2708 = vmatpush1.bf16.msra.mxu0 0
    %2709 = vmatprep.subr.bf16.mxu0 0
    %2710 = vmatpush1.bf16.msra.mxu0 0
    %2711 = vmatprep.subr.bf16.mxu0 0
    %2712 = vmatpush1.bf16.msra.mxu0 0
    %2713 = vmatprep.subr.bf16.mxu0 0
    %2714 = vmatpush1.bf16.msra.mxu0 0
    %2715 = vmatprep.subr.bf16.mxu0 0
    %2716 = vmatpush1.bf16.msra.mxu0 0
    %2717 = vmatprep.subr.bf16.mxu0 0
    %2718 = vmatpush1.bf16.msra.mxu0 0
    %2719 = vmatprep.subr.bf16.mxu0 0
    %2720 = vmatpush1.bf16.msra.mxu0 0
    %2721 = vmatprep.subr.bf16.mxu0 0
    %2722 = vmatpush1.bf16.msra.mxu0 0
    %2723 = vmatprep.subr.bf16.mxu0 0
    %2724 = vmatpush1.bf16.msra.mxu0 0
    %2725 = vmatprep.subr.bf16.mxu0 0
    %2726 = vmatpush1.bf16.msra.mxu0 0
    %2727 = vmatprep.subr.bf16.mxu0 0
    %2728 = vmatpush1.bf16.msra.mxu0 0
    %2729 = vmatprep.subr.bf16.mxu0 0
    %2730 = vmatpush1.bf16.msra.mxu0 0
    %2731 = vmatprep.subr.bf16.mxu0 0
    %2732 = vmatpush1.bf16.msra.mxu0 0
    %2733 = vmatprep.subr.bf16.mxu0 0
    %2734 = vmatpush1.bf16.msra.mxu0 0
    %2735 = vmatprep.subr.bf16.mxu0 0
    %2736 = vmatpush1.bf16.msra.mxu0 0
    %2737 = vmatprep.mubr.bf16.mxu0 0
    %2738 = vmatmul.mubr.bf16.gmra.mrb[0].mxu0 %v2703
    %v2739 = vpop.f32.mrb[0].mxu0
    %v2740 = vadd.f32 0.0, %v2739
    %v2741 = vpop.f32.mrb[0].mxu0
    %v2742 = vpop.f32.mrb[0].mxu0
    %v2743 = vadd.f32 0.0, %v2742
    %v2744 = vpop.f32.mrb[0].mxu0
    %2745 = vdwg.mxu0
    %v2746 = vrcp.pop %v2693
    %v2747 = vrcp.pop %v2696
    %v2748 = vmul.f32 %v2740, %v2746
    %v2749 = vmul.f32 %v2743, %v2747
    %2752 = vrot.lane.b32.xlu0 %v2748, 112
    %v2753 = vpop.permute.xlu0 %2752
    %2754 = vrot.lane.b32.xlu0 %v2749, 112
    %v2755 = vpop.permute.xlu0 %2754
    %2758 = vst.msk [vmem:[#allocation3 + $0x10] sm:$0xff] %vm1663, %v2753
    %2759 = vst.msk [vmem:[#allocation3 + $0x18] sm:$0xff] %vm1663, %v2755
    %v2760 = vld [vmem:[#allocation2 + $0x30] sm:$0xff]
    %v2761 = vld [vmem:[#allocation2 + $0x38] sm:$0xff]
    %v2762 = vld [vmem:[#allocation2 + $0x40] sm:$0xff]
    %v2764 = vsel %vm567, %v2760, 0
    %v2767 = vsel %vm567, %v2761, 0
    %2769 = vmatprep.subr.bf16.mxu0 0
    %2770 = vmatpush1.bf16.xpose.msra.mxu0 %v2767
    %2771 = vmatprep.subr.bf16.mxu0 0
    %2772 = vmatpush1.bf16.xpose.msra.mxu0 0
    %2773 = vmatprep.subr.bf16.mxu0 0
    %2774 = vmatpush1.bf16.xpose.msra.mxu0 0
    %2775 = vmatprep.subr.bf16.mxu0 0
    %2776 = vmatpush1.bf16.xpose.msra.mxu0 0
    %2777 = vmatprep.subr.bf16.mxu0 0
    %2778 = vmatpush1.bf16.xpose.msra.mxu0 0
    %2779 = vmatprep.subr.bf16.mxu0 0
    %2780 = vmatpush1.bf16.xpose.msra.mxu0 0
    %2781 = vmatprep.subr.bf16.mxu0 0
    %2782 = vmatpush1.bf16.xpose.msra.mxu0 0
    %2783 = vmatprep.subr.bf16.mxu0 0
    %2784 = vmatpush1.bf16.xpose.msra.mxu0 0
    %2785 = vmatprep.subr.bf16.mxu0 0
    %2786 = vmatpush1.bf16.xpose.msra.mxu0 0
    %2787 = vmatprep.subr.bf16.mxu0 0
    %2788 = vmatpush1.bf16.xpose.msra.mxu0 0
    %2789 = vmatprep.subr.bf16.mxu0 0
    %2790 = vmatpush1.bf16.xpose.msra.mxu0 0
    %2791 = vmatprep.subr.bf16.mxu0 0
    %2792 = vmatpush1.bf16.xpose.msra.mxu0 0
    %2793 = vmatprep.subr.bf16.mxu0 0
    %2794 = vmatpush1.bf16.xpose.msra.mxu0 0
    %2795 = vmatprep.subr.bf16.mxu0 0
    %2796 = vmatpush1.bf16.xpose.msra.mxu0 0
    %2797 = vmatprep.subr.bf16.mxu0 0
    %2798 = vmatpush1.bf16.xpose.msra.mxu0 0
    %2799 = vmatprep.subr.bf16.mxu0 0
    %2800 = vmatpush1.bf16.xpose.msra.mxu0 0
    %2801 = vmatprep.mubr.bf16.mxu0 0
    %2802 = vmatmul.mubr.bf16.gmra.mrb[0].mxu0 %v2764
    %v2803 = vpop.f32.mrb[0].mxu0
    %v2804 = vadd.f32 0.0, %v2803
    %v2805 = vpop.f32.mrb[0].mxu0
    %v2806 = vpop.f32.mrb[0].mxu0
    %v2807 = vadd.f32 0.0, %v2806
    %v2808 = vpop.f32.mrb[0].mxu0
    %2809 = vdwg.mxu0
    %v2810 = vmul.f32 %v2804, 0.25
    %v2811 = vmul.f32 %v2807, 0.25
    %v2812 = vsel %vm567, %v2810, -inf
    %2813 = vmax.xlane.f32.xlu0 %v2812
    %v2814 = vpop.xlane.xlu0 %2813
    %v2815 = vsel %vm567, %v2811, -inf
    %2816 = vmax.xlane.f32.xlu0 %v2815
    %v2817 = vpop.xlane.xlu0 %2816
    %v2818 = vsub.f32 %v2810, %v2814
    %v2819 = vsub.f32 %v2811, %v2817
    %v2820 = vmul.f32 %v2818, 1.442695
    %v2821 = vpow.pop %v2820
    %v2822 = vmul.f32 %v2819, 1.442695
    %v2823 = vpow.pop %v2822
    %v2824 = vsel %vm567, %v2821, 0.0
    %2825 = vadd.xlane.f32.xlu0 %v2824
    %v2826 = vpop.xlane.xlu0 %2825
    %v2827 = vsel %vm567, %v2823, 0.0
    %2828 = vadd.xlane.f32.xlu0 %v2827
    %v2829 = vpop.xlane.xlu0 %2828
    %v2830 = vpack.c.bf16 %v2823, %v2821
    %v2832 = vsel %vm567, %v2830, 0
    %2834 = vmatprep.subr.bf16.mxu0 0
    %2835 = vmatpush1.bf16.msra.mxu0 %v2762
    %2836 = vmatprep.subr.bf16.mxu0 0
    %2837 = vmatpush1.bf16.msra.mxu0 0
    %2838 = vmatprep.subr.bf16.mxu0 0
    %2839 = vmatpush1.bf16.msra.mxu0 0
    %2840 = vmatprep.subr.bf16.mxu0 0
    %2841 = vmatpush1.bf16.msra.mxu0 0
    %2842 = vmatprep.subr.bf16.mxu0 0
    %2843 = vmatpush1.bf16.msra.mxu0 0
    %2844 = vmatprep.subr.bf16.mxu0 0
    %2845 = vmatpush1.bf16.msra.mxu0 0
    %2846 = vmatprep.subr.bf16.mxu0 0
    %2847 = vmatpush1.bf16.msra.mxu0 0
    %2848 = vmatprep.subr.bf16.mxu0 0
    %2849 = vmatpush1.bf16.msra.mxu0 0
    %2850 = vmatprep.subr.bf16.mxu0 0
    %2851 = vmatpush1.bf16.msra.mxu0 0
    %2852 = vmatprep.subr.bf16.mxu0 0
    %2853 = vmatpush1.bf16.msra.mxu0 0
    %2854 = vmatprep.subr.bf16.mxu0 0
    %2855 = vmatpush1.bf16.msra.mxu0 0
    %2856 = vmatprep.subr.bf16.mxu0 0
    %2857 = vmatpush1.bf16.msra.mxu0 0
    %2858 = vmatprep.subr.bf16.mxu0 0
    %2859 = vmatpush1.bf16.msra.mxu0 0
    %2860 = vmatprep.subr.bf16.mxu0 0
    %2861 = vmatpush1.bf16.msra.mxu0 0
    %2862 = vmatprep.subr.bf16.mxu0 0
    %2863 = vmatpush1.bf16.msra.mxu0 0
    %2864 = vmatprep.subr.bf16.mxu0 0
    %2865 = vmatpush1.bf16.msra.mxu0 0
    %2866 = vmatprep.mubr.bf16.mxu0 0
    %2867 = vmatmul.mubr.bf16.gmra.mrb[0].mxu0 %v2832
    %v2868 = vpop.f32.mrb[0].mxu0
    %v2869 = vadd.f32 0.0, %v2868
    %v2870 = vpop.f32.mrb[0].mxu0
    %v2871 = vpop.f32.mrb[0].mxu0
    %v2872 = vadd.f32 0.0, %v2871
    %v2873 = vpop.f32.mrb[0].mxu0
    %2874 = vdwg.mxu0
    %v2875 = vrcp.pop %v2826
    %v2876 = vrcp.pop %v2829
    %v2877 = vmul.f32 %v2869, %v2875
    %v2878 = vmul.f32 %v2872, %v2876
    %2879 = vst.msk [vmem:[#allocation3 + $0x20] sm:$0xff] %vm567, %v2877
    %2880 = vst.msk [vmem:[#allocation3 + $0x28] sm:$0xff] %vm567, %v2878
    %v2881 = vld [vmem:[#allocation2 + $0x30] sm:$0xff]
    %v2882 = vld [vmem:[#allocation2 + $0x38] sm:$0xff]
    %v2883 = vld [vmem:[#allocation2 + $0x40] sm:$0xff]
    %2885 = vrot.lane.b32.xlu0 %v2881, 112
    %v2886 = vpop.permute.xlu0 %2885
    %2888 = vrot.lane.b32.xlu0 %v2882, 112
    %v2889 = vpop.permute.xlu0 %2888
    %v2891 = vsel %vm567, %v2886, 0
    %v2894 = vsel %vm567, %v2889, 0
    %2896 = vmatprep.subr.bf16.mxu0 0
    %2897 = vmatpush1.bf16.xpose.msra.mxu0 %v2894
    %2898 = vmatprep.subr.bf16.mxu0 0
    %2899 = vmatpush1.bf16.xpose.msra.mxu0 0
    %2900 = vmatprep.subr.bf16.mxu0 0
    %2901 = vmatpush1.bf16.xpose.msra.mxu0 0
    %2902 = vmatprep.subr.bf16.mxu0 0
    %2903 = vmatpush1.bf16.xpose.msra.mxu0 0
    %2904 = vmatprep.subr.bf16.mxu0 0
    %2905 = vmatpush1.bf16.xpose.msra.mxu0 0
    %2906 = vmatprep.subr.bf16.mxu0 0
    %2907 = vmatpush1.bf16.xpose.msra.mxu0 0
    %2908 = vmatprep.subr.bf16.mxu0 0
    %2909 = vmatpush1.bf16.xpose.msra.mxu0 0
    %2910 = vmatprep.subr.bf16.mxu0 0
    %2911 = vmatpush1.bf16.xpose.msra.mxu0 0
    %2912 = vmatprep.subr.bf16.mxu0 0
    %2913 = vmatpush1.bf16.xpose.msra.mxu0 0
    %2914 = vmatprep.subr.bf16.mxu0 0
    %2915 = vmatpush1.bf16.xpose.msra.mxu0 0
    %2916 = vmatprep.subr.bf16.mxu0 0
    %2917 = vmatpush1.bf16.xpose.msra.mxu0 0
    %2918 = vmatprep.subr.bf16.mxu0 0
    %2919 = vmatpush1.bf16.xpose.msra.mxu0 0
    %2920 = vmatprep.subr.bf16.mxu0 0
    %2921 = vmatpush1.bf16.xpose.msra.mxu0 0
    %2922 = vmatprep.subr.bf16.mxu0 0
    %2923 = vmatpush1.bf16.xpose.msra.mxu0 0
    %2924 = vmatprep.subr.bf16.mxu0 0
    %2925 = vmatpush1.bf16.xpose.msra.mxu0 0
    %2926 = vmatprep.subr.bf16.mxu0 0
    %2927 = vmatpush1.bf16.xpose.msra.mxu0 0
    %2928 = vmatprep.mubr.bf16.mxu0 0
    %2929 = vmatmul.mubr.bf16.gmra.mrb[0].mxu0 %v2891
    %v2930 = vpop.f32.mrb[0].mxu0
    %v2931 = vadd.f32 0.0, %v2930
    %v2932 = vpop.f32.mrb[0].mxu0
    %v2933 = vpop.f32.mrb[0].mxu0
    %v2934 = vadd.f32 0.0, %v2933
    %v2935 = vpop.f32.mrb[0].mxu0
    %2936 = vdwg.mxu0
    %v2937 = vmul.f32 %v2931, 0.25
    %v2938 = vmul.f32 %v2934, 0.25
    %v2939 = vsel %vm567, %v2937, -inf
    %2940 = vmax.xlane.f32.xlu0 %v2939
    %v2941 = vpop.xlane.xlu0 %2940
    %v2942 = vsel %vm567, %v2938, -inf
    %2943 = vmax.xlane.f32.xlu0 %v2942
    %v2944 = vpop.xlane.xlu0 %2943
    %v2945 = vsub.f32 %v2937, %v2941
    %v2946 = vsub.f32 %v2938, %v2944
    %v2947 = vmul.f32 %v2945, 1.442695
    %v2948 = vpow.pop %v2947
    %v2949 = vmul.f32 %v2946, 1.442695
    %v2950 = vpow.pop %v2949
    %v2951 = vsel %vm567, %v2948, 0.0
    %2952 = vadd.xlane.f32.xlu0 %v2951
    %v2953 = vpop.xlane.xlu0 %2952
    %v2954 = vsel %vm567, %v2950, 0.0
    %2955 = vadd.xlane.f32.xlu0 %v2954
    %v2956 = vpop.xlane.xlu0 %2955
    %v2957 = vpack.c.bf16 %v2950, %v2948
    %2959 = vrot.lane.b32.xlu0 %v2883, 112
    %v2960 = vpop.permute.xlu0 %2959
    %v2963 = vsel %vm567, %v2957, 0
    %2965 = vmatprep.subr.bf16.mxu0 0
    %2966 = vmatpush1.bf16.msra.mxu0 %v2960
    %2967 = vmatprep.subr.bf16.mxu0 0
    %2968 = vmatpush1.bf16.msra.mxu0 0
    %2969 = vmatprep.subr.bf16.mxu0 0
    %2970 = vmatpush1.bf16.msra.mxu0 0
    %2971 = vmatprep.subr.bf16.mxu0 0
    %2972 = vmatpush1.bf16.msra.mxu0 0
    %2973 = vmatprep.subr.bf16.mxu0 0
    %2974 = vmatpush1.bf16.msra.mxu0 0
    %2975 = vmatprep.subr.bf16.mxu0 0
    %2976 = vmatpush1.bf16.msra.mxu0 0
    %2977 = vmatprep.subr.bf16.mxu0 0
    %2978 = vmatpush1.bf16.msra.mxu0 0
    %2979 = vmatprep.subr.bf16.mxu0 0
    %2980 = vmatpush1.bf16.msra.mxu0 0
    %2981 = vmatprep.subr.bf16.mxu0 0
    %2982 = vmatpush1.bf16.msra.mxu0 0
    %2983 = vmatprep.subr.bf16.mxu0 0
    %2984 = vmatpush1.bf16.msra.mxu0 0
    %2985 = vmatprep.subr.bf16.mxu0 0
    %2986 = vmatpush1.bf16.msra.mxu0 0
    %2987 = vmatprep.subr.bf16.mxu0 0
    %2988 = vmatpush1.bf16.msra.mxu0 0
    %2989 = vmatprep.subr.bf16.mxu0 0
    %2990 = vmatpush1.bf16.msra.mxu0 0
    %2991 = vmatprep.subr.bf16.mxu0 0
    %2992 = vmatpush1.bf16.msra.mxu0 0
    %2993 = vmatprep.subr.bf16.mxu0 0
    %2994 = vmatpush1.bf16.msra.mxu0 0
    %2995 = vmatprep.subr.bf16.mxu0 0
    %2996 = vmatpush1.bf16.msra.mxu0 0
    %2997 = vmatprep.mubr.bf16.mxu0 0
    %2998 = vmatmul.mubr.bf16.gmra.mrb[0].mxu0 %v2963
    %v2999 = vpop.f32.mrb[0].mxu0
    %v3000 = vadd.f32 0.0, %v2999
    %v3001 = vpop.f32.mrb[0].mxu0
    %v3002 = vpop.f32.mrb[0].mxu0
    %v3003 = vadd.f32 0.0, %v3002
    %v3004 = vpop.f32.mrb[0].mxu0
    %3005 = vdwg.mxu0
    %v3006 = vrcp.pop %v2953
    %v3007 = vrcp.pop %v2956
    %v3008 = vmul.f32 %v3000, %v3006
    %v3009 = vmul.f32 %v3003, %v3007
    %3012 = vrot.lane.b32.xlu0 %v3008, 16
    %v3013 = vpop.permute.xlu0 %3012
    %3014 = vrot.lane.b32.xlu0 %v3009, 16
    %v3015 = vpop.permute.xlu0 %3014
    %3018 = vst.msk [vmem:[#allocation3 + $0x20] sm:$0xff] %vm823, %v3013
    %3019 = vst.msk [vmem:[#allocation3 + $0x28] sm:$0xff] %vm823, %v3015
    %v3020 = vld [vmem:[#allocation2 + $0x30] sm:$0xff]
    %v3021 = vld [vmem:[#allocation2 + $0x38] sm:$0xff]
    %v3022 = vld [vmem:[#allocation2 + $0x40] sm:$0xff]
    %3024 = vrot.lane.b32.xlu0 %v3020, 96
    %v3025 = vpop.permute.xlu0 %3024
    %3027 = vrot.lane.b32.xlu0 %v3021, 96
    %v3028 = vpop.permute.xlu0 %3027
    %v3030 = vsel %vm567, %v3025, 0
    %v3033 = vsel %vm567, %v3028, 0
    %3035 = vmatprep.subr.bf16.mxu0 0
    %3036 = vmatpush1.bf16.xpose.msra.mxu0 %v3033
    %3037 = vmatprep.subr.bf16.mxu0 0
    %3038 = vmatpush1.bf16.xpose.msra.mxu0 0
    %3039 = vmatprep.subr.bf16.mxu0 0
    %3040 = vmatpush1.bf16.xpose.msra.mxu0 0
    %3041 = vmatprep.subr.bf16.mxu0 0
    %3042 = vmatpush1.bf16.xpose.msra.mxu0 0
    %3043 = vmatprep.subr.bf16.mxu0 0
    %3044 = vmatpush1.bf16.xpose.msra.mxu0 0
    %3045 = vmatprep.subr.bf16.mxu0 0
    %3046 = vmatpush1.bf16.xpose.msra.mxu0 0
    %3047 = vmatprep.subr.bf16.mxu0 0
    %3048 = vmatpush1.bf16.xpose.msra.mxu0 0
    %3049 = vmatprep.subr.bf16.mxu0 0
    %3050 = vmatpush1.bf16.xpose.msra.mxu0 0
    %3051 = vmatprep.subr.bf16.mxu0 0
    %3052 = vmatpush1.bf16.xpose.msra.mxu0 0
    %3053 = vmatprep.subr.bf16.mxu0 0
    %3054 = vmatpush1.bf16.xpose.msra.mxu0 0
    %3055 = vmatprep.subr.bf16.mxu0 0
    %3056 = vmatpush1.bf16.xpose.msra.mxu0 0
    %3057 = vmatprep.subr.bf16.mxu0 0
    %3058 = vmatpush1.bf16.xpose.msra.mxu0 0
    %3059 = vmatprep.subr.bf16.mxu0 0
    %3060 = vmatpush1.bf16.xpose.msra.mxu0 0
    %3061 = vmatprep.subr.bf16.mxu0 0
    %3062 = vmatpush1.bf16.xpose.msra.mxu0 0
    %3063 = vmatprep.subr.bf16.mxu0 0
    %3064 = vmatpush1.bf16.xpose.msra.mxu0 0
    %3065 = vmatprep.subr.bf16.mxu0 0
    %3066 = vmatpush1.bf16.xpose.msra.mxu0 0
    %3067 = vmatprep.mubr.bf16.mxu0 0
    %3068 = vmatmul.mubr.bf16.gmra.mrb[0].mxu0 %v3030
    %v3069 = vpop.f32.mrb[0].mxu0
    %v3070 = vadd.f32 0.0, %v3069
    %v3071 = vpop.f32.mrb[0].mxu0
    %v3072 = vpop.f32.mrb[0].mxu0
    %v3073 = vadd.f32 0.0, %v3072
    %v3074 = vpop.f32.mrb[0].mxu0
    %3075 = vdwg.mxu0
    %v3076 = vmul.f32 %v3070, 0.25
    %v3077 = vmul.f32 %v3073, 0.25
    %v3078 = vsel %vm567, %v3076, -inf
    %3079 = vmax.xlane.f32.xlu0 %v3078
    %v3080 = vpop.xlane.xlu0 %3079
    %v3081 = vsel %vm567, %v3077, -inf
    %3082 = vmax.xlane.f32.xlu0 %v3081
    %v3083 = vpop.xlane.xlu0 %3082
    %v3084 = vsub.f32 %v3076, %v3080
    %v3085 = vsub.f32 %v3077, %v3083
    %v3086 = vmul.f32 %v3084, 1.442695
    %v3087 = vpow.pop %v3086
    %v3088 = vmul.f32 %v3085, 1.442695
    %v3089 = vpow.pop %v3088
    %v3090 = vsel %vm567, %v3087, 0.0
    %3091 = vadd.xlane.f32.xlu0 %v3090
    %v3092 = vpop.xlane.xlu0 %3091
    %v3093 = vsel %vm567, %v3089, 0.0
    %3094 = vadd.xlane.f32.xlu0 %v3093
    %v3095 = vpop.xlane.xlu0 %3094
    %v3096 = vpack.c.bf16 %v3089, %v3087
    %3098 = vrot.lane.b32.xlu0 %v3022, 96
    %v3099 = vpop.permute.xlu0 %3098
    %v3102 = vsel %vm567, %v3096, 0
    %3104 = vmatprep.subr.bf16.mxu0 0
    %3105 = vmatpush1.bf16.msra.mxu0 %v3099
    %3106 = vmatprep.subr.bf16.mxu0 0
    %3107 = vmatpush1.bf16.msra.mxu0 0
    %3108 = vmatprep.subr.bf16.mxu0 0
    %3109 = vmatpush1.bf16.msra.mxu0 0
    %3110 = vmatprep.subr.bf16.mxu0 0
    %3111 = vmatpush1.bf16.msra.mxu0 0
    %3112 = vmatprep.subr.bf16.mxu0 0
    %3113 = vmatpush1.bf16.msra.mxu0 0
    %3114 = vmatprep.subr.bf16.mxu0 0
    %3115 = vmatpush1.bf16.msra.mxu0 0
    %3116 = vmatprep.subr.bf16.mxu0 0
    %3117 = vmatpush1.bf16.msra.mxu0 0
    %3118 = vmatprep.subr.bf16.mxu0 0
    %3119 = vmatpush1.bf16.msra.mxu0 0
    %3120 = vmatprep.subr.bf16.mxu0 0
    %3121 = vmatpush1.bf16.msra.mxu0 0
    %3122 = vmatprep.subr.bf16.mxu0 0
    %3123 = vmatpush1.bf16.msra.mxu0 0
    %3124 = vmatprep.subr.bf16.mxu0 0
    %3125 = vmatpush1.bf16.msra.mxu0 0
    %3126 = vmatprep.subr.bf16.mxu0 0
    %3127 = vmatpush1.bf16.msra.mxu0 0
    %3128 = vmatprep.subr.bf16.mxu0 0
    %3129 = vmatpush1.bf16.msra.mxu0 0
    %3130 = vmatprep.subr.bf16.mxu0 0
    %3131 = vmatpush1.bf16.msra.mxu0 0
    %3132 = vmatprep.subr.bf16.mxu0 0
    %3133 = vmatpush1.bf16.msra.mxu0 0
    %3134 = vmatprep.subr.bf16.mxu0 0
    %3135 = vmatpush1.bf16.msra.mxu0 0
    %3136 = vmatprep.mubr.bf16.mxu0 0
    %3137 = vmatmul.mubr.bf16.gmra.mrb[0].mxu0 %v3102
    %v3138 = vpop.f32.mrb[0].mxu0
    %v3139 = vadd.f32 0.0, %v3138
    %v3140 = vpop.f32.mrb[0].mxu0
    %v3141 = vpop.f32.mrb[0].mxu0
    %v3142 = vadd.f32 0.0, %v3141
    %v3143 = vpop.f32.mrb[0].mxu0
    %3144 = vdwg.mxu0
    %v3145 = vrcp.pop %v3092
    %v3146 = vrcp.pop %v3095
    %v3147 = vmul.f32 %v3139, %v3145
    %v3148 = vmul.f32 %v3142, %v3146
    %3151 = vrot.lane.b32.xlu0 %v3147, 32
    %v3152 = vpop.permute.xlu0 %3151
    %3153 = vrot.lane.b32.xlu0 %v3148, 32
    %v3154 = vpop.permute.xlu0 %3153
    %3157 = vst.msk [vmem:[#allocation3 + $0x20] sm:$0xff] %vm963, %v3152
    %3158 = vst.msk [vmem:[#allocation3 + $0x28] sm:$0xff] %vm963, %v3154
    %v3159 = vld [vmem:[#allocation2 + $0x30] sm:$0xff]
    %v3160 = vld [vmem:[#allocation2 + $0x38] sm:$0xff]
    %v3161 = vld [vmem:[#allocation2 + $0x40] sm:$0xff]
    %3163 = vrot.lane.b32.xlu0 %v3159, 80
    %v3164 = vpop.permute.xlu0 %3163
    %3166 = vrot.lane.b32.xlu0 %v3160, 80
    %v3167 = vpop.permute.xlu0 %3166
    %v3169 = vsel %vm567, %v3164, 0
    %v3172 = vsel %vm567, %v3167, 0
    %3174 = vmatprep.subr.bf16.mxu0 0
    %3175 = vmatpush1.bf16.xpose.msra.mxu0 %v3172
    %3176 = vmatprep.subr.bf16.mxu0 0
    %3177 = vmatpush1.bf16.xpose.msra.mxu0 0
    %3178 = vmatprep.subr.bf16.mxu0 0
    %3179 = vmatpush1.bf16.xpose.msra.mxu0 0
    %3180 = vmatprep.subr.bf16.mxu0 0
    %3181 = vmatpush1.bf16.xpose.msra.mxu0 0
    %3182 = vmatprep.subr.bf16.mxu0 0
    %3183 = vmatpush1.bf16.xpose.msra.mxu0 0
    %3184 = vmatprep.subr.bf16.mxu0 0
    %3185 = vmatpush1.bf16.xpose.msra.mxu0 0
    %3186 = vmatprep.subr.bf16.mxu0 0
    %3187 = vmatpush1.bf16.xpose.msra.mxu0 0
    %3188 = vmatprep.subr.bf16.mxu0 0
    %3189 = vmatpush1.bf16.xpose.msra.mxu0 0
    %3190 = vmatprep.subr.bf16.mxu0 0
    %3191 = vmatpush1.bf16.xpose.msra.mxu0 0
    %3192 = vmatprep.subr.bf16.mxu0 0
    %3193 = vmatpush1.bf16.xpose.msra.mxu0 0
    %3194 = vmatprep.subr.bf16.mxu0 0
    %3195 = vmatpush1.bf16.xpose.msra.mxu0 0
    %3196 = vmatprep.subr.bf16.mxu0 0
    %3197 = vmatpush1.bf16.xpose.msra.mxu0 0
    %3198 = vmatprep.subr.bf16.mxu0 0
    %3199 = vmatpush1.bf16.xpose.msra.mxu0 0
    %3200 = vmatprep.subr.bf16.mxu0 0
    %3201 = vmatpush1.bf16.xpose.msra.mxu0 0
    %3202 = vmatprep.subr.bf16.mxu0 0
    %3203 = vmatpush1.bf16.xpose.msra.mxu0 0
    %3204 = vmatprep.subr.bf16.mxu0 0
    %3205 = vmatpush1.bf16.xpose.msra.mxu0 0
    %3206 = vmatprep.mubr.bf16.mxu0 0
    %3207 = vmatmul.mubr.bf16.gmra.mrb[0].mxu0 %v3169
    %v3208 = vpop.f32.mrb[0].mxu0
    %v3209 = vadd.f32 0.0, %v3208
    %v3210 = vpop.f32.mrb[0].mxu0
    %v3211 = vpop.f32.mrb[0].mxu0
    %v3212 = vadd.f32 0.0, %v3211
    %v3213 = vpop.f32.mrb[0].mxu0
    %3214 = vdwg.mxu0
    %v3215 = vmul.f32 %v3209, 0.25
    %v3216 = vmul.f32 %v3212, 0.25
    %v3217 = vsel %vm567, %v3215, -inf
    %3218 = vmax.xlane.f32.xlu0 %v3217
    %v3219 = vpop.xlane.xlu0 %3218
    %v3220 = vsel %vm567, %v3216, -inf
    %3221 = vmax.xlane.f32.xlu0 %v3220
    %v3222 = vpop.xlane.xlu0 %3221
    %v3223 = vsub.f32 %v3215, %v3219
    %v3224 = vsub.f32 %v3216, %v3222
    %v3225 = vmul.f32 %v3223, 1.442695
    %v3226 = vpow.pop %v3225
    %v3227 = vmul.f32 %v3224, 1.442695
    %v3228 = vpow.pop %v3227
    %v3229 = vsel %vm567, %v3226, 0.0
    %3230 = vadd.xlane.f32.xlu0 %v3229
    %v3231 = vpop.xlane.xlu0 %3230
    %v3232 = vsel %vm567, %v3228, 0.0
    %3233 = vadd.xlane.f32.xlu0 %v3232
    %v3234 = vpop.xlane.xlu0 %3233
    %v3235 = vpack.c.bf16 %v3228, %v3226
    %3237 = vrot.lane.b32.xlu0 %v3161, 80
    %v3238 = vpop.permute.xlu0 %3237
    %v3241 = vsel %vm567, %v3235, 0
    %3243 = vmatprep.subr.bf16.mxu0 0
    %3244 = vmatpush1.bf16.msra.mxu0 %v3238
    %3245 = vmatprep.subr.bf16.mxu0 0
    %3246 = vmatpush1.bf16.msra.mxu0 0
    %3247 = vmatprep.subr.bf16.mxu0 0
    %3248 = vmatpush1.bf16.msra.mxu0 0
    %3249 = vmatprep.subr.bf16.mxu0 0
    %3250 = vmatpush1.bf16.msra.mxu0 0
    %3251 = vmatprep.subr.bf16.mxu0 0
    %3252 = vmatpush1.bf16.msra.mxu0 0
    %3253 = vmatprep.subr.bf16.mxu0 0
    %3254 = vmatpush1.bf16.msra.mxu0 0
    %3255 = vmatprep.subr.bf16.mxu0 0
    %3256 = vmatpush1.bf16.msra.mxu0 0
    %3257 = vmatprep.subr.bf16.mxu0 0
    %3258 = vmatpush1.bf16.msra.mxu0 0
    %3259 = vmatprep.subr.bf16.mxu0 0
    %3260 = vmatpush1.bf16.msra.mxu0 0
    %3261 = vmatprep.subr.bf16.mxu0 0
    %3262 = vmatpush1.bf16.msra.mxu0 0
    %3263 = vmatprep.subr.bf16.mxu0 0
    %3264 = vmatpush1.bf16.msra.mxu0 0
    %3265 = vmatprep.subr.bf16.mxu0 0
    %3266 = vmatpush1.bf16.msra.mxu0 0
    %3267 = vmatprep.subr.bf16.mxu0 0
    %3268 = vmatpush1.bf16.msra.mxu0 0
    %3269 = vmatprep.subr.bf16.mxu0 0
    %3270 = vmatpush1.bf16.msra.mxu0 0
    %3271 = vmatprep.subr.bf16.mxu0 0
    %3272 = vmatpush1.bf16.msra.mxu0 0
    %3273 = vmatprep.subr.bf16.mxu0 0
    %3274 = vmatpush1.bf16.msra.mxu0 0
    %3275 = vmatprep.mubr.bf16.mxu0 0
    %3276 = vmatmul.mubr.bf16.gmra.mrb[0].mxu0 %v3241
    %v3277 = vpop.f32.mrb[0].mxu0
    %v3278 = vadd.f32 0.0, %v3277
    %v3279 = vpop.f32.mrb[0].mxu0
    %v3280 = vpop.f32.mrb[0].mxu0
    %v3281 = vadd.f32 0.0, %v3280
    %v3282 = vpop.f32.mrb[0].mxu0
    %3283 = vdwg.mxu0
    %v3284 = vrcp.pop %v3231
    %v3285 = vrcp.pop %v3234
    %v3286 = vmul.f32 %v3278, %v3284
    %v3287 = vmul.f32 %v3281, %v3285
    %3290 = vrot.lane.b32.xlu0 %v3286, 48
    %v3291 = vpop.permute.xlu0 %3290
    %3292 = vrot.lane.b32.xlu0 %v3287, 48
    %v3293 = vpop.permute.xlu0 %3292
    %3296 = vst.msk [vmem:[#allocation3 + $0x20] sm:$0xff] %vm1103, %v3291
    %3297 = vst.msk [vmem:[#allocation3 + $0x28] sm:$0xff] %vm1103, %v3293
    %v3298 = vld [vmem:[#allocation2 + $0x30] sm:$0xff]
    %v3299 = vld [vmem:[#allocation2 + $0x38] sm:$0xff]
    %v3300 = vld [vmem:[#allocation2 + $0x40] sm:$0xff]
    %3302 = vrot.lane.b32.xlu0 %v3298, 64
    %v3303 = vpop.permute.xlu0 %3302
    %3305 = vrot.lane.b32.xlu0 %v3299, 64
    %v3306 = vpop.permute.xlu0 %3305
    %v3308 = vsel %vm567, %v3303, 0
    %v3311 = vsel %vm567, %v3306, 0
    %3313 = vmatprep.subr.bf16.mxu0 0
    %3314 = vmatpush1.bf16.xpose.msra.mxu0 %v3311
    %3315 = vmatprep.subr.bf16.mxu0 0
    %3316 = vmatpush1.bf16.xpose.msra.mxu0 0
    %3317 = vmatprep.subr.bf16.mxu0 0
    %3318 = vmatpush1.bf16.xpose.msra.mxu0 0
    %3319 = vmatprep.subr.bf16.mxu0 0
    %3320 = vmatpush1.bf16.xpose.msra.mxu0 0
    %3321 = vmatprep.subr.bf16.mxu0 0
    %3322 = vmatpush1.bf16.xpose.msra.mxu0 0
    %3323 = vmatprep.subr.bf16.mxu0 0
    %3324 = vmatpush1.bf16.xpose.msra.mxu0 0
    %3325 = vmatprep.subr.bf16.mxu0 0
    %3326 = vmatpush1.bf16.xpose.msra.mxu0 0
    %3327 = vmatprep.subr.bf16.mxu0 0
    %3328 = vmatpush1.bf16.xpose.msra.mxu0 0
    %3329 = vmatprep.subr.bf16.mxu0 0
    %3330 = vmatpush1.bf16.xpose.msra.mxu0 0
    %3331 = vmatprep.subr.bf16.mxu0 0
    %3332 = vmatpush1.bf16.xpose.msra.mxu0 0
    %3333 = vmatprep.subr.bf16.mxu0 0
    %3334 = vmatpush1.bf16.xpose.msra.mxu0 0
    %3335 = vmatprep.subr.bf16.mxu0 0
    %3336 = vmatpush1.bf16.xpose.msra.mxu0 0
    %3337 = vmatprep.subr.bf16.mxu0 0
    %3338 = vmatpush1.bf16.xpose.msra.mxu0 0
    %3339 = vmatprep.subr.bf16.mxu0 0
    %3340 = vmatpush1.bf16.xpose.msra.mxu0 0
    %3341 = vmatprep.subr.bf16.mxu0 0
    %3342 = vmatpush1.bf16.xpose.msra.mxu0 0
    %3343 = vmatprep.subr.bf16.mxu0 0
    %3344 = vmatpush1.bf16.xpose.msra.mxu0 0
    %3345 = vmatprep.mubr.bf16.mxu0 0
    %3346 = vmatmul.mubr.bf16.gmra.mrb[0].mxu0 %v3308
    %v3347 = vpop.f32.mrb[0].mxu0
    %v3348 = vadd.f32 0.0, %v3347
    %v3349 = vpop.f32.mrb[0].mxu0
    %v3350 = vpop.f32.mrb[0].mxu0
    %v3351 = vadd.f32 0.0, %v3350
    %v3352 = vpop.f32.mrb[0].mxu0
    %3353 = vdwg.mxu0
    %v3354 = vmul.f32 %v3348, 0.25
    %v3355 = vmul.f32 %v3351, 0.25
    %v3356 = vsel %vm567, %v3354, -inf
    %3357 = vmax.xlane.f32.xlu0 %v3356
    %v3358 = vpop.xlane.xlu0 %3357
    %v3359 = vsel %vm567, %v3355, -inf
    %3360 = vmax.xlane.f32.xlu0 %v3359
    %v3361 = vpop.xlane.xlu0 %3360
    %v3362 = vsub.f32 %v3354, %v3358
    %v3363 = vsub.f32 %v3355, %v3361
    %v3364 = vmul.f32 %v3362, 1.442695
    %v3365 = vpow.pop %v3364
    %v3366 = vmul.f32 %v3363, 1.442695
    %v3367 = vpow.pop %v3366
    %v3368 = vsel %vm567, %v3365, 0.0
    %3369 = vadd.xlane.f32.xlu0 %v3368
    %v3370 = vpop.xlane.xlu0 %3369
    %v3371 = vsel %vm567, %v3367, 0.0
    %3372 = vadd.xlane.f32.xlu0 %v3371
    %v3373 = vpop.xlane.xlu0 %3372
    %v3374 = vpack.c.bf16 %v3367, %v3365
    %3376 = vrot.lane.b32.xlu0 %v3300, 64
    %v3377 = vpop.permute.xlu0 %3376
    %v3380 = vsel %vm567, %v3374, 0
    %3382 = vmatprep.subr.bf16.mxu0 0
    %3383 = vmatpush1.bf16.msra.mxu0 %v3377
    %3384 = vmatprep.subr.bf16.mxu0 0
    %3385 = vmatpush1.bf16.msra.mxu0 0
    %3386 = vmatprep.subr.bf16.mxu0 0
    %3387 = vmatpush1.bf16.msra.mxu0 0
    %3388 = vmatprep.subr.bf16.mxu0 0
    %3389 = vmatpush1.bf16.msra.mxu0 0
    %3390 = vmatprep.subr.bf16.mxu0 0
    %3391 = vmatpush1.bf16.msra.mxu0 0
    %3392 = vmatprep.subr.bf16.mxu0 0
    %3393 = vmatpush1.bf16.msra.mxu0 0
    %3394 = vmatprep.subr.bf16.mxu0 0
    %3395 = vmatpush1.bf16.msra.mxu0 0
    %3396 = vmatprep.subr.bf16.mxu0 0
    %3397 = vmatpush1.bf16.msra.mxu0 0
    %3398 = vmatprep.subr.bf16.mxu0 0
    %3399 = vmatpush1.bf16.msra.mxu0 0
    %3400 = vmatprep.subr.bf16.mxu0 0
    %3401 = vmatpush1.bf16.msra.mxu0 0
    %3402 = vmatprep.subr.bf16.mxu0 0
    %3403 = vmatpush1.bf16.msra.mxu0 0
    %3404 = vmatprep.subr.bf16.mxu0 0
    %3405 = vmatpush1.bf16.msra.mxu0 0
    %3406 = vmatprep.subr.bf16.mxu0 0
    %3407 = vmatpush1.bf16.msra.mxu0 0
    %3408 = vmatprep.subr.bf16.mxu0 0
    %3409 = vmatpush1.bf16.msra.mxu0 0
    %3410 = vmatprep.subr.bf16.mxu0 0
    %3411 = vmatpush1.bf16.msra.mxu0 0
    %3412 = vmatprep.subr.bf16.mxu0 0
    %3413 = vmatpush1.bf16.msra.mxu0 0
    %3414 = vmatprep.mubr.bf16.mxu0 0
    %3415 = vmatmul.mubr.bf16.gmra.mrb[0].mxu0 %v3380
    %v3416 = vpop.f32.mrb[0].mxu0
    %v3417 = vadd.f32 0.0, %v3416
    %v3418 = vpop.f32.mrb[0].mxu0
    %v3419 = vpop.f32.mrb[0].mxu0
    %v3420 = vadd.f32 0.0, %v3419
    %v3421 = vpop.f32.mrb[0].mxu0
    %3422 = vdwg.mxu0
    %v3423 = vrcp.pop %v3370
    %v3424 = vrcp.pop %v3373
    %v3425 = vmul.f32 %v3417, %v3423
    %v3426 = vmul.f32 %v3420, %v3424
    %3429 = vrot.lane.b32.xlu0 %v3425, 64
    %v3430 = vpop.permute.xlu0 %3429
    %3431 = vrot.lane.b32.xlu0 %v3426, 64
    %v3432 = vpop.permute.xlu0 %3431
    %3435 = vst.msk [vmem:[#allocation3 + $0x20] sm:$0xff] %vm1243, %v3430
    %3436 = vst.msk [vmem:[#allocation3 + $0x28] sm:$0xff] %vm1243, %v3432
    %v3437 = vld [vmem:[#allocation2 + $0x30] sm:$0xff]
    %v3438 = vld [vmem:[#allocation2 + $0x38] sm:$0xff]
    %v3439 = vld [vmem:[#allocation2 + $0x40] sm:$0xff]
    %3441 = vrot.lane.b32.xlu0 %v3437, 48
    %v3442 = vpop.permute.xlu0 %3441
    %3444 = vrot.lane.b32.xlu0 %v3438, 48
    %v3445 = vpop.permute.xlu0 %3444
    %v3447 = vsel %vm567, %v3442, 0
    %v3450 = vsel %vm567, %v3445, 0
    %3452 = vmatprep.subr.bf16.mxu0 0
    %3453 = vmatpush1.bf16.xpose.msra.mxu0 %v3450
    %3454 = vmatprep.subr.bf16.mxu0 0
    %3455 = vmatpush1.bf16.xpose.msra.mxu0 0
    %3456 = vmatprep.subr.bf16.mxu0 0
    %3457 = vmatpush1.bf16.xpose.msra.mxu0 0
    %3458 = vmatprep.subr.bf16.mxu0 0
    %3459 = vmatpush1.bf16.xpose.msra.mxu0 0
    %3460 = vmatprep.subr.bf16.mxu0 0
    %3461 = vmatpush1.bf16.xpose.msra.mxu0 0
    %3462 = vmatprep.subr.bf16.mxu0 0
    %3463 = vmatpush1.bf16.xpose.msra.mxu0 0
    %3464 = vmatprep.subr.bf16.mxu0 0
    %3465 = vmatpush1.bf16.xpose.msra.mxu0 0
    %3466 = vmatprep.subr.bf16.mxu0 0
    %3467 = vmatpush1.bf16.xpose.msra.mxu0 0
    %3468 = vmatprep.subr.bf16.mxu0 0
    %3469 = vmatpush1.bf16.xpose.msra.mxu0 0
    %3470 = vmatprep.subr.bf16.mxu0 0
    %3471 = vmatpush1.bf16.xpose.msra.mxu0 0
    %3472 = vmatprep.subr.bf16.mxu0 0
    %3473 = vmatpush1.bf16.xpose.msra.mxu0 0
    %3474 = vmatprep.subr.bf16.mxu0 0
    %3475 = vmatpush1.bf16.xpose.msra.mxu0 0
    %3476 = vmatprep.subr.bf16.mxu0 0
    %3477 = vmatpush1.bf16.xpose.msra.mxu0 0
    %3478 = vmatprep.subr.bf16.mxu0 0
    %3479 = vmatpush1.bf16.xpose.msra.mxu0 0
    %3480 = vmatprep.subr.bf16.mxu0 0
    %3481 = vmatpush1.bf16.xpose.msra.mxu0 0
    %3482 = vmatprep.subr.bf16.mxu0 0
    %3483 = vmatpush1.bf16.xpose.msra.mxu0 0
    %3484 = vmatprep.mubr.bf16.mxu0 0
    %3485 = vmatmul.mubr.bf16.gmra.mrb[0].mxu0 %v3447
    %v3486 = vpop.f32.mrb[0].mxu0
    %v3487 = vadd.f32 0.0, %v3486
    %v3488 = vpop.f32.mrb[0].mxu0
    %v3489 = vpop.f32.mrb[0].mxu0
    %v3490 = vadd.f32 0.0, %v3489
    %v3491 = vpop.f32.mrb[0].mxu0
    %3492 = vdwg.mxu0
    %v3493 = vmul.f32 %v3487, 0.25
    %v3494 = vmul.f32 %v3490, 0.25
    %v3495 = vsel %vm567, %v3493, -inf
    %3496 = vmax.xlane.f32.xlu0 %v3495
    %v3497 = vpop.xlane.xlu0 %3496
    %v3498 = vsel %vm567, %v3494, -inf
    %3499 = vmax.xlane.f32.xlu0 %v3498
    %v3500 = vpop.xlane.xlu0 %3499
    %v3501 = vsub.f32 %v3493, %v3497
    %v3502 = vsub.f32 %v3494, %v3500
    %v3503 = vmul.f32 %v3501, 1.442695
    %v3504 = vpow.pop %v3503
    %v3505 = vmul.f32 %v3502, 1.442695
    %v3506 = vpow.pop %v3505
    %v3507 = vsel %vm567, %v3504, 0.0
    %3508 = vadd.xlane.f32.xlu0 %v3507
    %v3509 = vpop.xlane.xlu0 %3508
    %v3510 = vsel %vm567, %v3506, 0.0
    %3511 = vadd.xlane.f32.xlu0 %v3510
    %v3512 = vpop.xlane.xlu0 %3511
    %v3513 = vpack.c.bf16 %v3506, %v3504
    %3515 = vrot.lane.b32.xlu0 %v3439, 48
    %v3516 = vpop.permute.xlu0 %3515
    %v3519 = vsel %vm567, %v3513, 0
    %3521 = vmatprep.subr.bf16.mxu0 0
    %3522 = vmatpush1.bf16.msra.mxu0 %v3516
    %3523 = vmatprep.subr.bf16.mxu0 0
    %3524 = vmatpush1.bf16.msra.mxu0 0
    %3525 = vmatprep.subr.bf16.mxu0 0
    %3526 = vmatpush1.bf16.msra.mxu0 0
    %3527 = vmatprep.subr.bf16.mxu0 0
    %3528 = vmatpush1.bf16.msra.mxu0 0
    %3529 = vmatprep.subr.bf16.mxu0 0
    %3530 = vmatpush1.bf16.msra.mxu0 0
    %3531 = vmatprep.subr.bf16.mxu0 0
    %3532 = vmatpush1.bf16.msra.mxu0 0
    %3533 = vmatprep.subr.bf16.mxu0 0
    %3534 = vmatpush1.bf16.msra.mxu0 0
    %3535 = vmatprep.subr.bf16.mxu0 0
    %3536 = vmatpush1.bf16.msra.mxu0 0
    %3537 = vmatprep.subr.bf16.mxu0 0
    %3538 = vmatpush1.bf16.msra.mxu0 0
    %3539 = vmatprep.subr.bf16.mxu0 0
    %3540 = vmatpush1.bf16.msra.mxu0 0
    %3541 = vmatprep.subr.bf16.mxu0 0
    %3542 = vmatpush1.bf16.msra.mxu0 0
    %3543 = vmatprep.subr.bf16.mxu0 0
    %3544 = vmatpush1.bf16.msra.mxu0 0
    %3545 = vmatprep.subr.bf16.mxu0 0
    %3546 = vmatpush1.bf16.msra.mxu0 0
    %3547 = vmatprep.subr.bf16.mxu0 0
    %3548 = vmatpush1.bf16.msra.mxu0 0
    %3549 = vmatprep.subr.bf16.mxu0 0
    %3550 = vmatpush1.bf16.msra.mxu0 0
    %3551 = vmatprep.subr.bf16.mxu0 0
    %3552 = vmatpush1.bf16.msra.mxu0 0
    %3553 = vmatprep.mubr.bf16.mxu0 0
    %3554 = vmatmul.mubr.bf16.gmra.mrb[0].mxu0 %v3519
    %v3555 = vpop.f32.mrb[0].mxu0
    %v3556 = vadd.f32 0.0, %v3555
    %v3557 = vpop.f32.mrb[0].mxu0
    %v3558 = vpop.f32.mrb[0].mxu0
    %v3559 = vadd.f32 0.0, %v3558
    %v3560 = vpop.f32.mrb[0].mxu0
    %3561 = vdwg.mxu0
    %v3562 = vrcp.pop %v3509
    %v3563 = vrcp.pop %v3512
    %v3564 = vmul.f32 %v3556, %v3562
    %v3565 = vmul.f32 %v3559, %v3563
    %3568 = vrot.lane.b32.xlu0 %v3564, 80
    %v3569 = vpop.permute.xlu0 %3568
    %3570 = vrot.lane.b32.xlu0 %v3565, 80
    %v3571 = vpop.permute.xlu0 %3570
    %3574 = vst.msk [vmem:[#allocation3 + $0x20] sm:$0xff] %vm1383, %v3569
    %3575 = vst.msk [vmem:[#allocation3 + $0x28] sm:$0xff] %vm1383, %v3571
    %v3576 = vld [vmem:[#allocation2 + $0x30] sm:$0xff]
    %v3577 = vld [vmem:[#allocation2 + $0x38] sm:$0xff]
    %v3578 = vld [vmem:[#allocation2 + $0x40] sm:$0xff]
    %3580 = vrot.lane.b32.xlu0 %v3576, 32
    %v3581 = vpop.permute.xlu0 %3580
    %3583 = vrot.lane.b32.xlu0 %v3577, 32
    %v3584 = vpop.permute.xlu0 %3583
    %v3586 = vsel %vm567, %v3581, 0
    %v3589 = vsel %vm567, %v3584, 0
    %3591 = vmatprep.subr.bf16.mxu0 0
    %3592 = vmatpush1.bf16.xpose.msra.mxu0 %v3589
    %3593 = vmatprep.subr.bf16.mxu0 0
    %3594 = vmatpush1.bf16.xpose.msra.mxu0 0
    %3595 = vmatprep.subr.bf16.mxu0 0
    %3596 = vmatpush1.bf16.xpose.msra.mxu0 0
    %3597 = vmatprep.subr.bf16.mxu0 0
    %3598 = vmatpush1.bf16.xpose.msra.mxu0 0
    %3599 = vmatprep.subr.bf16.mxu0 0
    %3600 = vmatpush1.bf16.xpose.msra.mxu0 0
    %3601 = vmatprep.subr.bf16.mxu0 0
    %3602 = vmatpush1.bf16.xpose.msra.mxu0 0
    %3603 = vmatprep.subr.bf16.mxu0 0
    %3604 = vmatpush1.bf16.xpose.msra.mxu0 0
    %3605 = vmatprep.subr.bf16.mxu0 0
    %3606 = vmatpush1.bf16.xpose.msra.mxu0 0
    %3607 = vmatprep.subr.bf16.mxu0 0
    %3608 = vmatpush1.bf16.xpose.msra.mxu0 0
    %3609 = vmatprep.subr.bf16.mxu0 0
    %3610 = vmatpush1.bf16.xpose.msra.mxu0 0
    %3611 = vmatprep.subr.bf16.mxu0 0
    %3612 = vmatpush1.bf16.xpose.msra.mxu0 0
    %3613 = vmatprep.subr.bf16.mxu0 0
    %3614 = vmatpush1.bf16.xpose.msra.mxu0 0
    %3615 = vmatprep.subr.bf16.mxu0 0
    %3616 = vmatpush1.bf16.xpose.msra.mxu0 0
    %3617 = vmatprep.subr.bf16.mxu0 0
    %3618 = vmatpush1.bf16.xpose.msra.mxu0 0
    %3619 = vmatprep.subr.bf16.mxu0 0
    %3620 = vmatpush1.bf16.xpose.msra.mxu0 0
    %3621 = vmatprep.subr.bf16.mxu0 0
    %3622 = vmatpush1.bf16.xpose.msra.mxu0 0
    %3623 = vmatprep.mubr.bf16.mxu0 0
    %3624 = vmatmul.mubr.bf16.gmra.mrb[0].mxu0 %v3586
    %v3625 = vpop.f32.mrb[0].mxu0
    %v3626 = vadd.f32 0.0, %v3625
    %v3627 = vpop.f32.mrb[0].mxu0
    %v3628 = vpop.f32.mrb[0].mxu0
    %v3629 = vadd.f32 0.0, %v3628
    %v3630 = vpop.f32.mrb[0].mxu0
    %3631 = vdwg.mxu0
    %v3632 = vmul.f32 %v3626, 0.25
    %v3633 = vmul.f32 %v3629, 0.25
    %v3634 = vsel %vm567, %v3632, -inf
    %3635 = vmax.xlane.f32.xlu0 %v3634
    %v3636 = vpop.xlane.xlu0 %3635
    %v3637 = vsel %vm567, %v3633, -inf
    %3638 = vmax.xlane.f32.xlu0 %v3637
    %v3639 = vpop.xlane.xlu0 %3638
    %v3640 = vsub.f32 %v3632, %v3636
    %v3641 = vsub.f32 %v3633, %v3639
    %v3642 = vmul.f32 %v3640, 1.442695
    %v3643 = vpow.pop %v3642
    %v3644 = vmul.f32 %v3641, 1.442695
    %v3645 = vpow.pop %v3644
    %v3646 = vsel %vm567, %v3643, 0.0
    %3647 = vadd.xlane.f32.xlu0 %v3646
    %v3648 = vpop.xlane.xlu0 %3647
    %v3649 = vsel %vm567, %v3645, 0.0
    %3650 = vadd.xlane.f32.xlu0 %v3649
    %v3651 = vpop.xlane.xlu0 %3650
    %v3652 = vpack.c.bf16 %v3645, %v3643
    %3654 = vrot.lane.b32.xlu0 %v3578, 32
    %v3655 = vpop.permute.xlu0 %3654
    %v3658 = vsel %vm567, %v3652, 0
    %3660 = vmatprep.subr.bf16.mxu0 0
    %3661 = vmatpush1.bf16.msra.mxu0 %v3655
    %3662 = vmatprep.subr.bf16.mxu0 0
    %3663 = vmatpush1.bf16.msra.mxu0 0
    %3664 = vmatprep.subr.bf16.mxu0 0
    %3665 = vmatpush1.bf16.msra.mxu0 0
    %3666 = vmatprep.subr.bf16.mxu0 0
    %3667 = vmatpush1.bf16.msra.mxu0 0
    %3668 = vmatprep.subr.bf16.mxu0 0
    %3669 = vmatpush1.bf16.msra.mxu0 0
    %3670 = vmatprep.subr.bf16.mxu0 0
    %3671 = vmatpush1.bf16.msra.mxu0 0
    %3672 = vmatprep.subr.bf16.mxu0 0
    %3673 = vmatpush1.bf16.msra.mxu0 0
    %3674 = vmatprep.subr.bf16.mxu0 0
    %3675 = vmatpush1.bf16.msra.mxu0 0
    %3676 = vmatprep.subr.bf16.mxu0 0
    %3677 = vmatpush1.bf16.msra.mxu0 0
    %3678 = vmatprep.subr.bf16.mxu0 0
    %3679 = vmatpush1.bf16.msra.mxu0 0
    %3680 = vmatprep.subr.bf16.mxu0 0
    %3681 = vmatpush1.bf16.msra.mxu0 0
    %3682 = vmatprep.subr.bf16.mxu0 0
    %3683 = vmatpush1.bf16.msra.mxu0 0
    %3684 = vmatprep.subr.bf16.mxu0 0
    %3685 = vmatpush1.bf16.msra.mxu0 0
    %3686 = vmatprep.subr.bf16.mxu0 0
    %3687 = vmatpush1.bf16.msra.mxu0 0
    %3688 = vmatprep.subr.bf16.mxu0 0
    %3689 = vmatpush1.bf16.msra.mxu0 0
    %3690 = vmatprep.subr.bf16.mxu0 0
    %3691 = vmatpush1.bf16.msra.mxu0 0
    %3692 = vmatprep.mubr.bf16.mxu0 0
    %3693 = vmatmul.mubr.bf16.gmra.mrb[0].mxu0 %v3658
    %v3694 = vpop.f32.mrb[0].mxu0
    %v3695 = vadd.f32 0.0, %v3694
    %v3696 = vpop.f32.mrb[0].mxu0
    %v3697 = vpop.f32.mrb[0].mxu0
    %v3698 = vadd.f32 0.0, %v3697
    %v3699 = vpop.f32.mrb[0].mxu0
    %3700 = vdwg.mxu0
    %v3701 = vrcp.pop %v3648
    %v3702 = vrcp.pop %v3651
    %v3703 = vmul.f32 %v3695, %v3701
    %v3704 = vmul.f32 %v3698, %v3702
    %3707 = vrot.lane.b32.xlu0 %v3703, 96
    %v3708 = vpop.permute.xlu0 %3707
    %3709 = vrot.lane.b32.xlu0 %v3704, 96
    %v3710 = vpop.permute.xlu0 %3709
    %3713 = vst.msk [vmem:[#allocation3 + $0x20] sm:$0xff] %vm1523, %v3708
    %3714 = vst.msk [vmem:[#allocation3 + $0x28] sm:$0xff] %vm1523, %v3710
    %v3715 = vld [vmem:[#allocation2 + $0x30] sm:$0xff]
    %v3716 = vld [vmem:[#allocation2 + $0x38] sm:$0xff]
    %v3717 = vld [vmem:[#allocation2 + $0x40] sm:$0xff]
    %3719 = vrot.lane.b32.xlu0 %v3715, 16
    %v3720 = vpop.permute.xlu0 %3719
    %3722 = vrot.lane.b32.xlu0 %v3716, 16
    %v3723 = vpop.permute.xlu0 %3722
    %v3725 = vsel %vm567, %v3720, 0
    %v3728 = vsel %vm567, %v3723, 0
    %3730 = vmatprep.subr.bf16.mxu0 0
    %3731 = vmatpush1.bf16.xpose.msra.mxu0 %v3728
    %3732 = vmatprep.subr.bf16.mxu0 0
    %3733 = vmatpush1.bf16.xpose.msra.mxu0 0
    %3734 = vmatprep.subr.bf16.mxu0 0
    %3735 = vmatpush1.bf16.xpose.msra.mxu0 0
    %3736 = vmatprep.subr.bf16.mxu0 0
    %3737 = vmatpush1.bf16.xpose.msra.mxu0 0
    %3738 = vmatprep.subr.bf16.mxu0 0
    %3739 = vmatpush1.bf16.xpose.msra.mxu0 0
    %3740 = vmatprep.subr.bf16.mxu0 0
    %3741 = vmatpush1.bf16.xpose.msra.mxu0 0
    %3742 = vmatprep.subr.bf16.mxu0 0
    %3743 = vmatpush1.bf16.xpose.msra.mxu0 0
    %3744 = vmatprep.subr.bf16.mxu0 0
    %3745 = vmatpush1.bf16.xpose.msra.mxu0 0
    %3746 = vmatprep.subr.bf16.mxu0 0
    %3747 = vmatpush1.bf16.xpose.msra.mxu0 0
    %3748 = vmatprep.subr.bf16.mxu0 0
    %3749 = vmatpush1.bf16.xpose.msra.mxu0 0
    %3750 = vmatprep.subr.bf16.mxu0 0
    %3751 = vmatpush1.bf16.xpose.msra.mxu0 0
    %3752 = vmatprep.subr.bf16.mxu0 0
    %3753 = vmatpush1.bf16.xpose.msra.mxu0 0
    %3754 = vmatprep.subr.bf16.mxu0 0
    %3755 = vmatpush1.bf16.xpose.msra.mxu0 0
    %3756 = vmatprep.subr.bf16.mxu0 0
    %3757 = vmatpush1.bf16.xpose.msra.mxu0 0
    %3758 = vmatprep.subr.bf16.mxu0 0
    %3759 = vmatpush1.bf16.xpose.msra.mxu0 0
    %3760 = vmatprep.subr.bf16.mxu0 0
    %3761 = vmatpush1.bf16.xpose.msra.mxu0 0
    %3762 = vmatprep.mubr.bf16.mxu0 0
    %3763 = vmatmul.mubr.bf16.gmra.mrb[0].mxu0 %v3725
    %v3764 = vpop.f32.mrb[0].mxu0
    %v3765 = vadd.f32 0.0, %v3764
    %v3766 = vpop.f32.mrb[0].mxu0
    %v3767 = vpop.f32.mrb[0].mxu0
    %v3768 = vadd.f32 0.0, %v3767
    %v3769 = vpop.f32.mrb[0].mxu0
    %3770 = vdwg.mxu0
    %v3771 = vmul.f32 %v3765, 0.25
    %v3772 = vmul.f32 %v3768, 0.25
    %v3773 = vsel %vm567, %v3771, -inf
    %3774 = vmax.xlane.f32.xlu0 %v3773
    %v3775 = vpop.xlane.xlu0 %3774
    %v3776 = vsel %vm567, %v3772, -inf
    %3777 = vmax.xlane.f32.xlu0 %v3776
    %v3778 = vpop.xlane.xlu0 %3777
    %v3779 = vsub.f32 %v3771, %v3775
    %v3780 = vsub.f32 %v3772, %v3778
    %v3781 = vmul.f32 %v3779, 1.442695
    %v3782 = vpow.pop %v3781
    %v3783 = vmul.f32 %v3780, 1.442695
    %v3784 = vpow.pop %v3783
    %v3785 = vsel %vm567, %v3782, 0.0
    %3786 = vadd.xlane.f32.xlu0 %v3785
    %v3787 = vpop.xlane.xlu0 %3786
    %v3788 = vsel %vm567, %v3784, 0.0
    %3789 = vadd.xlane.f32.xlu0 %v3788
    %v3790 = vpop.xlane.xlu0 %3789
    %v3791 = vpack.c.bf16 %v3784, %v3782
    %3793 = vrot.lane.b32.xlu0 %v3717, 16
    %v3794 = vpop.permute.xlu0 %3793
    %v3797 = vsel %vm567, %v3791, 0
    %3799 = vmatprep.subr.bf16.mxu0 0
    %3800 = vmatpush1.bf16.msra.mxu0 %v3794
    %3801 = vmatprep.subr.bf16.mxu0 0
    %3802 = vmatpush1.bf16.msra.mxu0 0
    %3803 = vmatprep.subr.bf16.mxu0 0
    %3804 = vmatpush1.bf16.msra.mxu0 0
    %3805 = vmatprep.subr.bf16.mxu0 0
    %3806 = vmatpush1.bf16.msra.mxu0 0
    %3807 = vmatprep.subr.bf16.mxu0 0
    %3808 = vmatpush1.bf16.msra.mxu0 0
    %3809 = vmatprep.subr.bf16.mxu0 0
    %3810 = vmatpush1.bf16.msra.mxu0 0
    %3811 = vmatprep.subr.bf16.mxu0 0
    %3812 = vmatpush1.bf16.msra.mxu0 0
    %3813 = vmatprep.subr.bf16.mxu0 0
    %3814 = vmatpush1.bf16.msra.mxu0 0
    %3815 = vmatprep.subr.bf16.mxu0 0
    %3816 = vmatpush1.bf16.msra.mxu0 0
    %3817 = vmatprep.subr.bf16.mxu0 0
    %3818 = vmatpush1.bf16.msra.mxu0 0
    %3819 = vmatprep.subr.bf16.mxu0 0
    %3820 = vmatpush1.bf16.msra.mxu0 0
    %3821 = vmatprep.subr.bf16.mxu0 0
    %3822 = vmatpush1.bf16.msra.mxu0 0
    %3823 = vmatprep.subr.bf16.mxu0 0
    %3824 = vmatpush1.bf16.msra.mxu0 0
    %3825 = vmatprep.subr.bf16.mxu0 0
    %3826 = vmatpush1.bf16.msra.mxu0 0
    %3827 = vmatprep.subr.bf16.mxu0 0
    %3828 = vmatpush1.bf16.msra.mxu0 0
    %3829 = vmatprep.subr.bf16.mxu0 0
    %3830 = vmatpush1.bf16.msra.mxu0 0
    %3831 = vmatprep.mubr.bf16.mxu0 0
    %3832 = vmatmul.mubr.bf16.gmra.mrb[0].mxu0 %v3797
    %v3833 = vpop.f32.mrb[0].mxu0
    %v3834 = vadd.f32 0.0, %v3833
    %v3835 = vpop.f32.mrb[0].mxu0
    %v3836 = vpop.f32.mrb[0].mxu0
    %v3837 = vadd.f32 0.0, %v3836
    %v3838 = vpop.f32.mrb[0].mxu0
    %3839 = vdwg.mxu0
    %v3840 = vrcp.pop %v3787
    %v3841 = vrcp.pop %v3790
    %v3842 = vmul.f32 %v3834, %v3840
    %v3843 = vmul.f32 %v3837, %v3841
    %3846 = vrot.lane.b32.xlu0 %v3842, 112
    %v3847 = vpop.permute.xlu0 %3846
    %3848 = vrot.lane.b32.xlu0 %v3843, 112
    %v3849 = vpop.permute.xlu0 %3848
    %3852 = vst.msk [vmem:[#allocation3 + $0x20] sm:$0xff] %vm1663, %v3847
    %3853 = vst.msk [vmem:[#allocation3 + $0x28] sm:$0xff] %vm1663, %v3849
    %v3854 = vld [vmem:[#allocation2 + $0x48] sm:$0xff]
    %v3855 = vld [vmem:[#allocation2 + $0x50] sm:$0xff]
    %v3856 = vld [vmem:[#allocation2 + $0x58] sm:$0xff]
    %v3858 = vsel %vm567, %v3854, 0
    %v3861 = vsel %vm567, %v3855, 0
    %3863 = vmatprep.subr.bf16.mxu0 0
    %3864 = vmatpush1.bf16.xpose.msra.mxu0 %v3861
    %3865 = vmatprep.subr.bf16.mxu0 0
    %3866 = vmatpush1.bf16.xpose.msra.mxu0 0
    %3867 = vmatprep.subr.bf16.mxu0 0
    %3868 = vmatpush1.bf16.xpose.msra.mxu0 0
    %3869 = vmatprep.subr.bf16.mxu0 0
    %3870 = vmatpush1.bf16.xpose.msra.mxu0 0
    %3871 = vmatprep.subr.bf16.mxu0 0
    %3872 = vmatpush1.bf16.xpose.msra.mxu0 0
    %3873 = vmatprep.subr.bf16.mxu0 0
    %3874 = vmatpush1.bf16.xpose.msra.mxu0 0
    %3875 = vmatprep.subr.bf16.mxu0 0
    %3876 = vmatpush1.bf16.xpose.msra.mxu0 0
    %3877 = vmatprep.subr.bf16.mxu0 0
    %3878 = vmatpush1.bf16.xpose.msra.mxu0 0
    %3879 = vmatprep.subr.bf16.mxu0 0
    %3880 = vmatpush1.bf16.xpose.msra.mxu0 0
    %3881 = vmatprep.subr.bf16.mxu0 0
    %3882 = vmatpush1.bf16.xpose.msra.mxu0 0
    %3883 = vmatprep.subr.bf16.mxu0 0
    %3884 = vmatpush1.bf16.xpose.msra.mxu0 0
    %3885 = vmatprep.subr.bf16.mxu0 0
    %3886 = vmatpush1.bf16.xpose.msra.mxu0 0
    %3887 = vmatprep.subr.bf16.mxu0 0
    %3888 = vmatpush1.bf16.xpose.msra.mxu0 0
    %3889 = vmatprep.subr.bf16.mxu0 0
    %3890 = vmatpush1.bf16.xpose.msra.mxu0 0
    %3891 = vmatprep.subr.bf16.mxu0 0
    %3892 = vmatpush1.bf16.xpose.msra.mxu0 0
    %3893 = vmatprep.subr.bf16.mxu0 0
    %3894 = vmatpush1.bf16.xpose.msra.mxu0 0
    %3895 = vmatprep.mubr.bf16.mxu0 0
    %3896 = vmatmul.mubr.bf16.gmra.mrb[0].mxu0 %v3858
    %v3897 = vpop.f32.mrb[0].mxu0
    %v3898 = vadd.f32 0.0, %v3897
    %v3899 = vpop.f32.mrb[0].mxu0
    %v3900 = vpop.f32.mrb[0].mxu0
    %v3901 = vadd.f32 0.0, %v3900
    %v3902 = vpop.f32.mrb[0].mxu0
    %3903 = vdwg.mxu0
    %v3904 = vmul.f32 %v3898, 0.25
    %v3905 = vmul.f32 %v3901, 0.25
    %v3906 = vsel %vm567, %v3904, -inf
    %3907 = vmax.xlane.f32.xlu0 %v3906
    %v3908 = vpop.xlane.xlu0 %3907
    %v3909 = vsel %vm567, %v3905, -inf
    %3910 = vmax.xlane.f32.xlu0 %v3909
    %v3911 = vpop.xlane.xlu0 %3910
    %v3912 = vsub.f32 %v3904, %v3908
    %v3913 = vsub.f32 %v3905, %v3911
    %v3914 = vmul.f32 %v3912, 1.442695
    %v3915 = vpow.pop %v3914
    %v3916 = vmul.f32 %v3913, 1.442695
    %v3917 = vpow.pop %v3916
    %v3918 = vsel %vm567, %v3915, 0.0
    %3919 = vadd.xlane.f32.xlu0 %v3918
    %v3920 = vpop.xlane.xlu0 %3919
    %v3921 = vsel %vm567, %v3917, 0.0
    %3922 = vadd.xlane.f32.xlu0 %v3921
    %v3923 = vpop.xlane.xlu0 %3922
    %v3924 = vpack.c.bf16 %v3917, %v3915
    %v3926 = vsel %vm567, %v3924, 0
    %3928 = vmatprep.subr.bf16.mxu0 0
    %3929 = vmatpush1.bf16.msra.mxu0 %v3856
    %3930 = vmatprep.subr.bf16.mxu0 0
    %3931 = vmatpush1.bf16.msra.mxu0 0
    %3932 = vmatprep.subr.bf16.mxu0 0
    %3933 = vmatpush1.bf16.msra.mxu0 0
    %3934 = vmatprep.subr.bf16.mxu0 0
    %3935 = vmatpush1.bf16.msra.mxu0 0
    %3936 = vmatprep.subr.bf16.mxu0 0
    %3937 = vmatpush1.bf16.msra.mxu0 0
    %3938 = vmatprep.subr.bf16.mxu0 0
    %3939 = vmatpush1.bf16.msra.mxu0 0
    %3940 = vmatprep.subr.bf16.mxu0 0
    %3941 = vmatpush1.bf16.msra.mxu0 0
    %3942 = vmatprep.subr.bf16.mxu0 0
    %3943 = vmatpush1.bf16.msra.mxu0 0
    %3944 = vmatprep.subr.bf16.mxu0 0
    %3945 = vmatpush1.bf16.msra.mxu0 0
    %3946 = vmatprep.subr.bf16.mxu0 0
    %3947 = vmatpush1.bf16.msra.mxu0 0
    %3948 = vmatprep.subr.bf16.mxu0 0
    %3949 = vmatpush1.bf16.msra.mxu0 0
    %3950 = vmatprep.subr.bf16.mxu0 0
    %3951 = vmatpush1.bf16.msra.mxu0 0
    %3952 = vmatprep.subr.bf16.mxu0 0
    %3953 = vmatpush1.bf16.msra.mxu0 0
    %3954 = vmatprep.subr.bf16.mxu0 0
    %3955 = vmatpush1.bf16.msra.mxu0 0
    %3956 = vmatprep.subr.bf16.mxu0 0
    %3957 = vmatpush1.bf16.msra.mxu0 0
    %3958 = vmatprep.subr.bf16.mxu0 0
    %3959 = vmatpush1.bf16.msra.mxu0 0
    %3960 = vmatprep.mubr.bf16.mxu0 0
    %3961 = vmatmul.mubr.bf16.gmra.mrb[0].mxu0 %v3926
    %v3962 = vpop.f32.mrb[0].mxu0
    %v3963 = vadd.f32 0.0, %v3962
    %v3964 = vpop.f32.mrb[0].mxu0
    %v3965 = vpop.f32.mrb[0].mxu0
    %v3966 = vadd.f32 0.0, %v3965
    %v3967 = vpop.f32.mrb[0].mxu0
    %3968 = vdwg.mxu0
    %v3969 = vrcp.pop %v3920
    %v3970 = vrcp.pop %v3923
    %v3971 = vmul.f32 %v3963, %v3969
    %v3972 = vmul.f32 %v3966, %v3970
    %3973 = vst.msk [vmem:[#allocation3 + $0x30] sm:$0xff] %vm567, %v3971
    %3974 = vst.msk [vmem:[#allocation3 + $0x38] sm:$0xff] %vm567, %v3972
    %v3975 = vld [vmem:[#allocation2 + $0x48] sm:$0xff]
    %v3976 = vld [vmem:[#allocation2 + $0x50] sm:$0xff]
    %v3977 = vld [vmem:[#allocation2 + $0x58] sm:$0xff]
    %3979 = vrot.lane.b32.xlu0 %v3975, 112
    %v3980 = vpop.permute.xlu0 %3979
    %3982 = vrot.lane.b32.xlu0 %v3976, 112
    %v3983 = vpop.permute.xlu0 %3982
    %v3985 = vsel %vm567, %v3980, 0
    %v3988 = vsel %vm567, %v3983, 0
    %3990 = vmatprep.subr.bf16.mxu0 0
    %3991 = vmatpush1.bf16.xpose.msra.mxu0 %v3988
    %3992 = vmatprep.subr.bf16.mxu0 0
    %3993 = vmatpush1.bf16.xpose.msra.mxu0 0
    %3994 = vmatprep.subr.bf16.mxu0 0
    %3995 = vmatpush1.bf16.xpose.msra.mxu0 0
    %3996 = vmatprep.subr.bf16.mxu0 0
    %3997 = vmatpush1.bf16.xpose.msra.mxu0 0
    %3998 = vmatprep.subr.bf16.mxu0 0
    %3999 = vmatpush1.bf16.xpose.msra.mxu0 0
    %4000 = vmatprep.subr.bf16.mxu0 0
    %4001 = vmatpush1.bf16.xpose.msra.mxu0 0
    %4002 = vmatprep.subr.bf16.mxu0 0
    %4003 = vmatpush1.bf16.xpose.msra.mxu0 0
    %4004 = vmatprep.subr.bf16.mxu0 0
    %4005 = vmatpush1.bf16.xpose.msra.mxu0 0
    %4006 = vmatprep.subr.bf16.mxu0 0
    %4007 = vmatpush1.bf16.xpose.msra.mxu0 0
    %4008 = vmatprep.subr.bf16.mxu0 0
    %4009 = vmatpush1.bf16.xpose.msra.mxu0 0
    %4010 = vmatprep.subr.bf16.mxu0 0
    %4011 = vmatpush1.bf16.xpose.msra.mxu0 0
    %4012 = vmatprep.subr.bf16.mxu0 0
    %4013 = vmatpush1.bf16.xpose.msra.mxu0 0
    %4014 = vmatprep.subr.bf16.mxu0 0
    %4015 = vmatpush1.bf16.xpose.msra.mxu0 0
    %4016 = vmatprep.subr.bf16.mxu0 0
    %4017 = vmatpush1.bf16.xpose.msra.mxu0 0
    %4018 = vmatprep.subr.bf16.mxu0 0
    %4019 = vmatpush1.bf16.xpose.msra.mxu0 0
    %4020 = vmatprep.subr.bf16.mxu0 0
    %4021 = vmatpush1.bf16.xpose.msra.mxu0 0
    %4022 = vmatprep.mubr.bf16.mxu0 0
    %4023 = vmatmul.mubr.bf16.gmra.mrb[0].mxu0 %v3985
    %v4024 = vpop.f32.mrb[0].mxu0
    %v4025 = vadd.f32 0.0, %v4024
    %v4026 = vpop.f32.mrb[0].mxu0
    %v4027 = vpop.f32.mrb[0].mxu0
    %v4028 = vadd.f32 0.0, %v4027
    %v4029 = vpop.f32.mrb[0].mxu0
    %4030 = vdwg.mxu0
    %v4031 = vmul.f32 %v4025, 0.25
    %v4032 = vmul.f32 %v4028, 0.25
    %v4033 = vsel %vm567, %v4031, -inf
    %4034 = vmax.xlane.f32.xlu0 %v4033
    %v4035 = vpop.xlane.xlu0 %4034
    %v4036 = vsel %vm567, %v4032, -inf
    %4037 = vmax.xlane.f32.xlu0 %v4036
    %v4038 = vpop.xlane.xlu0 %4037
    %v4039 = vsub.f32 %v4031, %v4035
    %v4040 = vsub.f32 %v4032, %v4038
    %v4041 = vmul.f32 %v4039, 1.442695
    %v4042 = vpow.pop %v4041
    %v4043 = vmul.f32 %v4040, 1.442695
    %v4044 = vpow.pop %v4043
    %v4045 = vsel %vm567, %v4042, 0.0
    %4046 = vadd.xlane.f32.xlu0 %v4045
    %v4047 = vpop.xlane.xlu0 %4046
    %v4048 = vsel %vm567, %v4044, 0.0
    %4049 = vadd.xlane.f32.xlu0 %v4048
    %v4050 = vpop.xlane.xlu0 %4049
    %v4051 = vpack.c.bf16 %v4044, %v4042
    %4053 = vrot.lane.b32.xlu0 %v3977, 112
    %v4054 = vpop.permute.xlu0 %4053
    %v4057 = vsel %vm567, %v4051, 0
    %4059 = vmatprep.subr.bf16.mxu0 0
    %4060 = vmatpush1.bf16.msra.mxu0 %v4054
    %4061 = vmatprep.subr.bf16.mxu0 0
    %4062 = vmatpush1.bf16.msra.mxu0 0
    %4063 = vmatprep.subr.bf16.mxu0 0
    %4064 = vmatpush1.bf16.msra.mxu0 0
    %4065 = vmatprep.subr.bf16.mxu0 0
    %4066 = vmatpush1.bf16.msra.mxu0 0
    %4067 = vmatprep.subr.bf16.mxu0 0
    %4068 = vmatpush1.bf16.msra.mxu0 0
    %4069 = vmatprep.subr.bf16.mxu0 0
    %4070 = vmatpush1.bf16.msra.mxu0 0
    %4071 = vmatprep.subr.bf16.mxu0 0
    %4072 = vmatpush1.bf16.msra.mxu0 0
    %4073 = vmatprep.subr.bf16.mxu0 0
    %4074 = vmatpush1.bf16.msra.mxu0 0
    %4075 = vmatprep.subr.bf16.mxu0 0
    %4076 = vmatpush1.bf16.msra.mxu0 0
    %4077 = vmatprep.subr.bf16.mxu0 0
    %4078 = vmatpush1.bf16.msra.mxu0 0
    %4079 = vmatprep.subr.bf16.mxu0 0
    %4080 = vmatpush1.bf16.msra.mxu0 0
    %4081 = vmatprep.subr.bf16.mxu0 0
    %4082 = vmatpush1.bf16.msra.mxu0 0
    %4083 = vmatprep.subr.bf16.mxu0 0
    %4084 = vmatpush1.bf16.msra.mxu0 0
    %4085 = vmatprep.subr.bf16.mxu0 0
    %4086 = vmatpush1.bf16.msra.mxu0 0
    %4087 = vmatprep.subr.bf16.mxu0 0
    %4088 = vmatpush1.bf16.msra.mxu0 0
    %4089 = vmatprep.subr.bf16.mxu0 0
    %4090 = vmatpush1.bf16.msra.mxu0 0
    %4091 = vmatprep.mubr.bf16.mxu0 0
    %4092 = vmatmul.mubr.bf16.gmra.mrb[0].mxu0 %v4057
    %v4093 = vpop.f32.mrb[0].mxu0
    %v4094 = vadd.f32 0.0, %v4093
    %v4095 = vpop.f32.mrb[0].mxu0
    %v4096 = vpop.f32.mrb[0].mxu0
    %v4097 = vadd.f32 0.0, %v4096
    %v4098 = vpop.f32.mrb[0].mxu0
    %4099 = vdwg.mxu0
    %v4100 = vrcp.pop %v4047
    %v4101 = vrcp.pop %v4050
    %v4102 = vmul.f32 %v4094, %v4100
    %v4103 = vmul.f32 %v4097, %v4101
    %4106 = vrot.lane.b32.xlu0 %v4102, 16
    %v4107 = vpop.permute.xlu0 %4106
    %4108 = vrot.lane.b32.xlu0 %v4103, 16
    %v4109 = vpop.permute.xlu0 %4108
    %4112 = vst.msk [vmem:[#allocation3 + $0x30] sm:$0xff] %vm823, %v4107
    %4113 = vst.msk [vmem:[#allocation3 + $0x38] sm:$0xff] %vm823, %v4109
    %v4114 = vld [vmem:[#allocation2 + $0x48] sm:$0xff]
    %v4115 = vld [vmem:[#allocation2 + $0x50] sm:$0xff]
    %v4116 = vld [vmem:[#allocation2 + $0x58] sm:$0xff]
    %4118 = vrot.lane.b32.xlu0 %v4114, 96
    %v4119 = vpop.permute.xlu0 %4118
    %4121 = vrot.lane.b32.xlu0 %v4115, 96
    %v4122 = vpop.permute.xlu0 %4121
    %v4124 = vsel %vm567, %v4119, 0
    %v4127 = vsel %vm567, %v4122, 0
    %4129 = vmatprep.subr.bf16.mxu0 0
    %4130 = vmatpush1.bf16.xpose.msra.mxu0 %v4127
    %4131 = vmatprep.subr.bf16.mxu0 0
    %4132 = vmatpush1.bf16.xpose.msra.mxu0 0
    %4133 = vmatprep.subr.bf16.mxu0 0
    %4134 = vmatpush1.bf16.xpose.msra.mxu0 0
    %4135 = vmatprep.subr.bf16.mxu0 0
    %4136 = vmatpush1.bf16.xpose.msra.mxu0 0
    %4137 = vmatprep.subr.bf16.mxu0 0
    %4138 = vmatpush1.bf16.xpose.msra.mxu0 0
    %4139 = vmatprep.subr.bf16.mxu0 0
    %4140 = vmatpush1.bf16.xpose.msra.mxu0 0
    %4141 = vmatprep.subr.bf16.mxu0 0
    %4142 = vmatpush1.bf16.xpose.msra.mxu0 0
    %4143 = vmatprep.subr.bf16.mxu0 0
    %4144 = vmatpush1.bf16.xpose.msra.mxu0 0
    %4145 = vmatprep.subr.bf16.mxu0 0
    %4146 = vmatpush1.bf16.xpose.msra.mxu0 0
    %4147 = vmatprep.subr.bf16.mxu0 0
    %4148 = vmatpush1.bf16.xpose.msra.mxu0 0
    %4149 = vmatprep.subr.bf16.mxu0 0
    %4150 = vmatpush1.bf16.xpose.msra.mxu0 0
    %4151 = vmatprep.subr.bf16.mxu0 0
    %4152 = vmatpush1.bf16.xpose.msra.mxu0 0
    %4153 = vmatprep.subr.bf16.mxu0 0
    %4154 = vmatpush1.bf16.xpose.msra.mxu0 0
    %4155 = vmatprep.subr.bf16.mxu0 0
    %4156 = vmatpush1.bf16.xpose.msra.mxu0 0
    %4157 = vmatprep.subr.bf16.mxu0 0
    %4158 = vmatpush1.bf16.xpose.msra.mxu0 0
    %4159 = vmatprep.subr.bf16.mxu0 0
    %4160 = vmatpush1.bf16.xpose.msra.mxu0 0
    %4161 = vmatprep.mubr.bf16.mxu0 0
    %4162 = vmatmul.mubr.bf16.gmra.mrb[0].mxu0 %v4124
    %v4163 = vpop.f32.mrb[0].mxu0
    %v4164 = vadd.f32 0.0, %v4163
    %v4165 = vpop.f32.mrb[0].mxu0
    %v4166 = vpop.f32.mrb[0].mxu0
    %v4167 = vadd.f32 0.0, %v4166
    %v4168 = vpop.f32.mrb[0].mxu0
    %4169 = vdwg.mxu0
    %v4170 = vmul.f32 %v4164, 0.25
    %v4171 = vmul.f32 %v4167, 0.25
    %v4172 = vsel %vm567, %v4170, -inf
    %4173 = vmax.xlane.f32.xlu0 %v4172
    %v4174 = vpop.xlane.xlu0 %4173
    %v4175 = vsel %vm567, %v4171, -inf
    %4176 = vmax.xlane.f32.xlu0 %v4175
    %v4177 = vpop.xlane.xlu0 %4176
    %v4178 = vsub.f32 %v4170, %v4174
    %v4179 = vsub.f32 %v4171, %v4177
    %v4180 = vmul.f32 %v4178, 1.442695
    %v4181 = vpow.pop %v4180
    %v4182 = vmul.f32 %v4179, 1.442695
    %v4183 = vpow.pop %v4182
    %v4184 = vsel %vm567, %v4181, 0.0
    %4185 = vadd.xlane.f32.xlu0 %v4184
    %v4186 = vpop.xlane.xlu0 %4185
    %v4187 = vsel %vm567, %v4183, 0.0
    %4188 = vadd.xlane.f32.xlu0 %v4187
    %v4189 = vpop.xlane.xlu0 %4188
    %v4190 = vpack.c.bf16 %v4183, %v4181
    %4192 = vrot.lane.b32.xlu0 %v4116, 96
    %v4193 = vpop.permute.xlu0 %4192
    %v4196 = vsel %vm567, %v4190, 0
    %4198 = vmatprep.subr.bf16.mxu0 0
    %4199 = vmatpush1.bf16.msra.mxu0 %v4193
    %4200 = vmatprep.subr.bf16.mxu0 0
    %4201 = vmatpush1.bf16.msra.mxu0 0
    %4202 = vmatprep.subr.bf16.mxu0 0
    %4203 = vmatpush1.bf16.msra.mxu0 0
    %4204 = vmatprep.subr.bf16.mxu0 0
    %4205 = vmatpush1.bf16.msra.mxu0 0
    %4206 = vmatprep.subr.bf16.mxu0 0
    %4207 = vmatpush1.bf16.msra.mxu0 0
    %4208 = vmatprep.subr.bf16.mxu0 0
    %4209 = vmatpush1.bf16.msra.mxu0 0
    %4210 = vmatprep.subr.bf16.mxu0 0
    %4211 = vmatpush1.bf16.msra.mxu0 0
    %4212 = vmatprep.subr.bf16.mxu0 0
    %4213 = vmatpush1.bf16.msra.mxu0 0
    %4214 = vmatprep.subr.bf16.mxu0 0
    %4215 = vmatpush1.bf16.msra.mxu0 0
    %4216 = vmatprep.subr.bf16.mxu0 0
    %4217 = vmatpush1.bf16.msra.mxu0 0
    %4218 = vmatprep.subr.bf16.mxu0 0
    %4219 = vmatpush1.bf16.msra.mxu0 0
    %4220 = vmatprep.subr.bf16.mxu0 0
    %4221 = vmatpush1.bf16.msra.mxu0 0
    %4222 = vmatprep.subr.bf16.mxu0 0
    %4223 = vmatpush1.bf16.msra.mxu0 0
    %4224 = vmatprep.subr.bf16.mxu0 0
    %4225 = vmatpush1.bf16.msra.mxu0 0
    %4226 = vmatprep.subr.bf16.mxu0 0
    %4227 = vmatpush1.bf16.msra.mxu0 0
    %4228 = vmatprep.subr.bf16.mxu0 0
    %4229 = vmatpush1.bf16.msra.mxu0 0
    %4230 = vmatprep.mubr.bf16.mxu0 0
    %4231 = vmatmul.mubr.bf16.gmra.mrb[0].mxu0 %v4196
    %v4232 = vpop.f32.mrb[0].mxu0
    %v4233 = vadd.f32 0.0, %v4232
    %v4234 = vpop.f32.mrb[0].mxu0
    %v4235 = vpop.f32.mrb[0].mxu0
    %v4236 = vadd.f32 0.0, %v4235
    %v4237 = vpop.f32.mrb[0].mxu0
    %4238 = vdwg.mxu0
    %v4239 = vrcp.pop %v4186
    %v4240 = vrcp.pop %v4189
    %v4241 = vmul.f32 %v4233, %v4239
    %v4242 = vmul.f32 %v4236, %v4240
    %4245 = vrot.lane.b32.xlu0 %v4241, 32
    %v4246 = vpop.permute.xlu0 %4245
    %4247 = vrot.lane.b32.xlu0 %v4242, 32
    %v4248 = vpop.permute.xlu0 %4247
    %4251 = vst.msk [vmem:[#allocation3 + $0x30] sm:$0xff] %vm963, %v4246
    %4252 = vst.msk [vmem:[#allocation3 + $0x38] sm:$0xff] %vm963, %v4248
    %v4253 = vld [vmem:[#allocation2 + $0x48] sm:$0xff]
    %v4254 = vld [vmem:[#allocation2 + $0x50] sm:$0xff]
    %v4255 = vld [vmem:[#allocation2 + $0x58] sm:$0xff]
    %4257 = vrot.lane.b32.xlu0 %v4253, 80
    %v4258 = vpop.permute.xlu0 %4257
    %4260 = vrot.lane.b32.xlu0 %v4254, 80
    %v4261 = vpop.permute.xlu0 %4260
    %v4263 = vsel %vm567, %v4258, 0
    %v4266 = vsel %vm567, %v4261, 0
    %4268 = vmatprep.subr.bf16.mxu0 0
    %4269 = vmatpush1.bf16.xpose.msra.mxu0 %v4266
    %4270 = vmatprep.subr.bf16.mxu0 0
    %4271 = vmatpush1.bf16.xpose.msra.mxu0 0
    %4272 = vmatprep.subr.bf16.mxu0 0
    %4273 = vmatpush1.bf16.xpose.msra.mxu0 0
    %4274 = vmatprep.subr.bf16.mxu0 0
    %4275 = vmatpush1.bf16.xpose.msra.mxu0 0
    %4276 = vmatprep.subr.bf16.mxu0 0
    %4277 = vmatpush1.bf16.xpose.msra.mxu0 0
    %4278 = vmatprep.subr.bf16.mxu0 0
    %4279 = vmatpush1.bf16.xpose.msra.mxu0 0
    %4280 = vmatprep.subr.bf16.mxu0 0
    %4281 = vmatpush1.bf16.xpose.msra.mxu0 0
    %4282 = vmatprep.subr.bf16.mxu0 0
    %4283 = vmatpush1.bf16.xpose.msra.mxu0 0
    %4284 = vmatprep.subr.bf16.mxu0 0
    %4285 = vmatpush1.bf16.xpose.msra.mxu0 0
    %4286 = vmatprep.subr.bf16.mxu0 0
    %4287 = vmatpush1.bf16.xpose.msra.mxu0 0
    %4288 = vmatprep.subr.bf16.mxu0 0
    %4289 = vmatpush1.bf16.xpose.msra.mxu0 0
    %4290 = vmatprep.subr.bf16.mxu0 0
    %4291 = vmatpush1.bf16.xpose.msra.mxu0 0
    %4292 = vmatprep.subr.bf16.mxu0 0
    %4293 = vmatpush1.bf16.xpose.msra.mxu0 0
    %4294 = vmatprep.subr.bf16.mxu0 0
    %4295 = vmatpush1.bf16.xpose.msra.mxu0 0
    %4296 = vmatprep.subr.bf16.mxu0 0
    %4297 = vmatpush1.bf16.xpose.msra.mxu0 0
    %4298 = vmatprep.subr.bf16.mxu0 0
    %4299 = vmatpush1.bf16.xpose.msra.mxu0 0
    %4300 = vmatprep.mubr.bf16.mxu0 0
    %4301 = vmatmul.mubr.bf16.gmra.mrb[0].mxu0 %v4263
    %v4302 = vpop.f32.mrb[0].mxu0
    %v4303 = vadd.f32 0.0, %v4302
    %v4304 = vpop.f32.mrb[0].mxu0
    %v4305 = vpop.f32.mrb[0].mxu0
    %v4306 = vadd.f32 0.0, %v4305
    %v4307 = vpop.f32.mrb[0].mxu0
    %4308 = vdwg.mxu0
    %v4309 = vmul.f32 %v4303, 0.25
    %v4310 = vmul.f32 %v4306, 0.25
    %v4311 = vsel %vm567, %v4309, -inf
    %4312 = vmax.xlane.f32.xlu0 %v4311
    %v4313 = vpop.xlane.xlu0 %4312
    %v4314 = vsel %vm567, %v4310, -inf
    %4315 = vmax.xlane.f32.xlu0 %v4314
    %v4316 = vpop.xlane.xlu0 %4315
    %v4317 = vsub.f32 %v4309, %v4313
    %v4318 = vsub.f32 %v4310, %v4316
    %v4319 = vmul.f32 %v4317, 1.442695
    %v4320 = vpow.pop %v4319
    %v4321 = vmul.f32 %v4318, 1.442695
    %v4322 = vpow.pop %v4321
    %v4323 = vsel %vm567, %v4320, 0.0
    %4324 = vadd.xlane.f32.xlu0 %v4323
    %v4325 = vpop.xlane.xlu0 %4324
    %v4326 = vsel %vm567, %v4322, 0.0
    %4327 = vadd.xlane.f32.xlu0 %v4326
    %v4328 = vpop.xlane.xlu0 %4327
    %v4329 = vpack.c.bf16 %v4322, %v4320
    %4331 = vrot.lane.b32.xlu0 %v4255, 80
    %v4332 = vpop.permute.xlu0 %4331
    %v4335 = vsel %vm567, %v4329, 0
    %4337 = vmatprep.subr.bf16.mxu0 0
    %4338 = vmatpush1.bf16.msra.mxu0 %v4332
    %4339 = vmatprep.subr.bf16.mxu0 0
    %4340 = vmatpush1.bf16.msra.mxu0 0
    %4341 = vmatprep.subr.bf16.mxu0 0
    %4342 = vmatpush1.bf16.msra.mxu0 0
    %4343 = vmatprep.subr.bf16.mxu0 0
    %4344 = vmatpush1.bf16.msra.mxu0 0
    %4345 = vmatprep.subr.bf16.mxu0 0
    %4346 = vmatpush1.bf16.msra.mxu0 0
    %4347 = vmatprep.subr.bf16.mxu0 0
    %4348 = vmatpush1.bf16.msra.mxu0 0
    %4349 = vmatprep.subr.bf16.mxu0 0
    %4350 = vmatpush1.bf16.msra.mxu0 0
    %4351 = vmatprep.subr.bf16.mxu0 0
    %4352 = vmatpush1.bf16.msra.mxu0 0
    %4353 = vmatprep.subr.bf16.mxu0 0
    %4354 = vmatpush1.bf16.msra.mxu0 0
    %4355 = vmatprep.subr.bf16.mxu0 0
    %4356 = vmatpush1.bf16.msra.mxu0 0
    %4357 = vmatprep.subr.bf16.mxu0 0
    %4358 = vmatpush1.bf16.msra.mxu0 0
    %4359 = vmatprep.subr.bf16.mxu0 0
    %4360 = vmatpush1.bf16.msra.mxu0 0
    %4361 = vmatprep.subr.bf16.mxu0 0
    %4362 = vmatpush1.bf16.msra.mxu0 0
    %4363 = vmatprep.subr.bf16.mxu0 0
    %4364 = vmatpush1.bf16.msra.mxu0 0
    %4365 = vmatprep.subr.bf16.mxu0 0
    %4366 = vmatpush1.bf16.msra.mxu0 0
    %4367 = vmatprep.subr.bf16.mxu0 0
    %4368 = vmatpush1.bf16.msra.mxu0 0
    %4369 = vmatprep.mubr.bf16.mxu0 0
    %4370 = vmatmul.mubr.bf16.gmra.mrb[0].mxu0 %v4335
    %v4371 = vpop.f32.mrb[0].mxu0
    %v4372 = vadd.f32 0.0, %v4371
    %v4373 = vpop.f32.mrb[0].mxu0
    %v4374 = vpop.f32.mrb[0].mxu0
    %v4375 = vadd.f32 0.0, %v4374
    %v4376 = vpop.f32.mrb[0].mxu0
    %4377 = vdwg.mxu0
    %v4378 = vrcp.pop %v4325
    %v4379 = vrcp.pop %v4328
    %v4380 = vmul.f32 %v4372, %v4378
    %v4381 = vmul.f32 %v4375, %v4379
    %4384 = vrot.lane.b32.xlu0 %v4380, 48
    %v4385 = vpop.permute.xlu0 %4384
    %4386 = vrot.lane.b32.xlu0 %v4381, 48
    %v4387 = vpop.permute.xlu0 %4386
    %4390 = vst.msk [vmem:[#allocation3 + $0x30] sm:$0xff] %vm1103, %v4385
    %4391 = vst.msk [vmem:[#allocation3 + $0x38] sm:$0xff] %vm1103, %v4387
    %v4392 = vld [vmem:[#allocation2 + $0x48] sm:$0xff]
    %v4393 = vld [vmem:[#allocation2 + $0x50] sm:$0xff]
    %v4394 = vld [vmem:[#allocation2 + $0x58] sm:$0xff]
    %4396 = vrot.lane.b32.xlu0 %v4392, 64
    %v4397 = vpop.permute.xlu0 %4396
    %4399 = vrot.lane.b32.xlu0 %v4393, 64
    %v4400 = vpop.permute.xlu0 %4399
    %v4402 = vsel %vm567, %v4397, 0
    %v4405 = vsel %vm567, %v4400, 0
    %4407 = vmatprep.subr.bf16.mxu0 0
    %4408 = vmatpush1.bf16.xpose.msra.mxu0 %v4405
    %4409 = vmatprep.subr.bf16.mxu0 0
    %4410 = vmatpush1.bf16.xpose.msra.mxu0 0
    %4411 = vmatprep.subr.bf16.mxu0 0
    %4412 = vmatpush1.bf16.xpose.msra.mxu0 0
    %4413 = vmatprep.subr.bf16.mxu0 0
    %4414 = vmatpush1.bf16.xpose.msra.mxu0 0
    %4415 = vmatprep.subr.bf16.mxu0 0
    %4416 = vmatpush1.bf16.xpose.msra.mxu0 0
    %4417 = vmatprep.subr.bf16.mxu0 0
    %4418 = vmatpush1.bf16.xpose.msra.mxu0 0
    %4419 = vmatprep.subr.bf16.mxu0 0
    %4420 = vmatpush1.bf16.xpose.msra.mxu0 0
    %4421 = vmatprep.subr.bf16.mxu0 0
    %4422 = vmatpush1.bf16.xpose.msra.mxu0 0
    %4423 = vmatprep.subr.bf16.mxu0 0
    %4424 = vmatpush1.bf16.xpose.msra.mxu0 0
    %4425 = vmatprep.subr.bf16.mxu0 0
    %4426 = vmatpush1.bf16.xpose.msra.mxu0 0
    %4427 = vmatprep.subr.bf16.mxu0 0
    %4428 = vmatpush1.bf16.xpose.msra.mxu0 0
    %4429 = vmatprep.subr.bf16.mxu0 0
    %4430 = vmatpush1.bf16.xpose.msra.mxu0 0
    %4431 = vmatprep.subr.bf16.mxu0 0
    %4432 = vmatpush1.bf16.xpose.msra.mxu0 0
    %4433 = vmatprep.subr.bf16.mxu0 0
    %4434 = vmatpush1.bf16.xpose.msra.mxu0 0
    %4435 = vmatprep.subr.bf16.mxu0 0
    %4436 = vmatpush1.bf16.xpose.msra.mxu0 0
    %4437 = vmatprep.subr.bf16.mxu0 0
    %4438 = vmatpush1.bf16.xpose.msra.mxu0 0
    %4439 = vmatprep.mubr.bf16.mxu0 0
    %4440 = vmatmul.mubr.bf16.gmra.mrb[0].mxu0 %v4402
    %v4441 = vpop.f32.mrb[0].mxu0
    %v4442 = vadd.f32 0.0, %v4441
    %v4443 = vpop.f32.mrb[0].mxu0
    %v4444 = vpop.f32.mrb[0].mxu0
    %v4445 = vadd.f32 0.0, %v4444
    %v4446 = vpop.f32.mrb[0].mxu0
    %4447 = vdwg.mxu0
    %v4448 = vmul.f32 %v4442, 0.25
    %v4449 = vmul.f32 %v4445, 0.25
    %v4450 = vsel %vm567, %v4448, -inf
    %4451 = vmax.xlane.f32.xlu0 %v4450
    %v4452 = vpop.xlane.xlu0 %4451
    %v4453 = vsel %vm567, %v4449, -inf
    %4454 = vmax.xlane.f32.xlu0 %v4453
    %v4455 = vpop.xlane.xlu0 %4454
    %v4456 = vsub.f32 %v4448, %v4452
    %v4457 = vsub.f32 %v4449, %v4455
    %v4458 = vmul.f32 %v4456, 1.442695
    %v4459 = vpow.pop %v4458
    %v4460 = vmul.f32 %v4457, 1.442695
    %v4461 = vpow.pop %v4460
    %v4462 = vsel %vm567, %v4459, 0.0
    %4463 = vadd.xlane.f32.xlu0 %v4462
    %v4464 = vpop.xlane.xlu0 %4463
    %v4465 = vsel %vm567, %v4461, 0.0
    %4466 = vadd.xlane.f32.xlu0 %v4465
    %v4467 = vpop.xlane.xlu0 %4466
    %v4468 = vpack.c.bf16 %v4461, %v4459
    %4470 = vrot.lane.b32.xlu0 %v4394, 64
    %v4471 = vpop.permute.xlu0 %4470
    %v4474 = vsel %vm567, %v4468, 0
    %4476 = vmatprep.subr.bf16.mxu0 0
    %4477 = vmatpush1.bf16.msra.mxu0 %v4471
    %4478 = vmatprep.subr.bf16.mxu0 0
    %4479 = vmatpush1.bf16.msra.mxu0 0
    %4480 = vmatprep.subr.bf16.mxu0 0
    %4481 = vmatpush1.bf16.msra.mxu0 0
    %4482 = vmatprep.subr.bf16.mxu0 0
    %4483 = vmatpush1.bf16.msra.mxu0 0
    %4484 = vmatprep.subr.bf16.mxu0 0
    %4485 = vmatpush1.bf16.msra.mxu0 0
    %4486 = vmatprep.subr.bf16.mxu0 0
    %4487 = vmatpush1.bf16.msra.mxu0 0
    %4488 = vmatprep.subr.bf16.mxu0 0
    %4489 = vmatpush1.bf16.msra.mxu0 0
    %4490 = vmatprep.subr.bf16.mxu0 0
    %4491 = vmatpush1.bf16.msra.mxu0 0
    %4492 = vmatprep.subr.bf16.mxu0 0
    %4493 = vmatpush1.bf16.msra.mxu0 0
    %4494 = vmatprep.subr.bf16.mxu0 0
    %4495 = vmatpush1.bf16.msra.mxu0 0
    %4496 = vmatprep.subr.bf16.mxu0 0
    %4497 = vmatpush1.bf16.msra.mxu0 0
    %4498 = vmatprep.subr.bf16.mxu0 0
    %4499 = vmatpush1.bf16.msra.mxu0 0
    %4500 = vmatprep.subr.bf16.mxu0 0
    %4501 = vmatpush1.bf16.msra.mxu0 0
    %4502 = vmatprep.subr.bf16.mxu0 0
    %4503 = vmatpush1.bf16.msra.mxu0 0
    %4504 = vmatprep.subr.bf16.mxu0 0
    %4505 = vmatpush1.bf16.msra.mxu0 0
    %4506 = vmatprep.subr.bf16.mxu0 0
    %4507 = vmatpush1.bf16.msra.mxu0 0
    %4508 = vmatprep.mubr.bf16.mxu0 0
    %4509 = vmatmul.mubr.bf16.gmra.mrb[0].mxu0 %v4474
    %v4510 = vpop.f32.mrb[0].mxu0
    %v4511 = vadd.f32 0.0, %v4510
    %v4512 = vpop.f32.mrb[0].mxu0
    %v4513 = vpop.f32.mrb[0].mxu0
    %v4514 = vadd.f32 0.0, %v4513
    %v4515 = vpop.f32.mrb[0].mxu0
    %4516 = vdwg.mxu0
    %v4517 = vrcp.pop %v4464
    %v4518 = vrcp.pop %v4467
    %v4519 = vmul.f32 %v4511, %v4517
    %v4520 = vmul.f32 %v4514, %v4518
    %4523 = vrot.lane.b32.xlu0 %v4519, 64
    %v4524 = vpop.permute.xlu0 %4523
    %4525 = vrot.lane.b32.xlu0 %v4520, 64
    %v4526 = vpop.permute.xlu0 %4525
    %4529 = vst.msk [vmem:[#allocation3 + $0x30] sm:$0xff] %vm1243, %v4524
    %4530 = vst.msk [vmem:[#allocation3 + $0x38] sm:$0xff] %vm1243, %v4526
    %v4531 = vld [vmem:[#allocation2 + $0x48] sm:$0xff]
    %v4532 = vld [vmem:[#allocation2 + $0x50] sm:$0xff]
    %v4533 = vld [vmem:[#allocation2 + $0x58] sm:$0xff]
    %4535 = vrot.lane.b32.xlu0 %v4531, 48
    %v4536 = vpop.permute.xlu0 %4535
    %4538 = vrot.lane.b32.xlu0 %v4532, 48
    %v4539 = vpop.permute.xlu0 %4538
    %v4541 = vsel %vm567, %v4536, 0
    %v4544 = vsel %vm567, %v4539, 0
    %4546 = vmatprep.subr.bf16.mxu0 0
    %4547 = vmatpush1.bf16.xpose.msra.mxu0 %v4544
    %4548 = vmatprep.subr.bf16.mxu0 0
    %4549 = vmatpush1.bf16.xpose.msra.mxu0 0
    %4550 = vmatprep.subr.bf16.mxu0 0
    %4551 = vmatpush1.bf16.xpose.msra.mxu0 0
    %4552 = vmatprep.subr.bf16.mxu0 0
    %4553 = vmatpush1.bf16.xpose.msra.mxu0 0
    %4554 = vmatprep.subr.bf16.mxu0 0
    %4555 = vmatpush1.bf16.xpose.msra.mxu0 0
    %4556 = vmatprep.subr.bf16.mxu0 0
    %4557 = vmatpush1.bf16.xpose.msra.mxu0 0
    %4558 = vmatprep.subr.bf16.mxu0 0
    %4559 = vmatpush1.bf16.xpose.msra.mxu0 0
    %4560 = vmatprep.subr.bf16.mxu0 0
    %4561 = vmatpush1.bf16.xpose.msra.mxu0 0
    %4562 = vmatprep.subr.bf16.mxu0 0
    %4563 = vmatpush1.bf16.xpose.msra.mxu0 0
    %4564 = vmatprep.subr.bf16.mxu0 0
    %4565 = vmatpush1.bf16.xpose.msra.mxu0 0
    %4566 = vmatprep.subr.bf16.mxu0 0
    %4567 = vmatpush1.bf16.xpose.msra.mxu0 0
    %4568 = vmatprep.subr.bf16.mxu0 0
    %4569 = vmatpush1.bf16.xpose.msra.mxu0 0
    %4570 = vmatprep.subr.bf16.mxu0 0
    %4571 = vmatpush1.bf16.xpose.msra.mxu0 0
    %4572 = vmatprep.subr.bf16.mxu0 0
    %4573 = vmatpush1.bf16.xpose.msra.mxu0 0
    %4574 = vmatprep.subr.bf16.mxu0 0
    %4575 = vmatpush1.bf16.xpose.msra.mxu0 0
    %4576 = vmatprep.subr.bf16.mxu0 0
    %4577 = vmatpush1.bf16.xpose.msra.mxu0 0
    %4578 = vmatprep.mubr.bf16.mxu0 0
    %4579 = vmatmul.mubr.bf16.gmra.mrb[0].mxu0 %v4541
    %v4580 = vpop.f32.mrb[0].mxu0
    %v4581 = vadd.f32 0.0, %v4580
    %v4582 = vpop.f32.mrb[0].mxu0
    %v4583 = vpop.f32.mrb[0].mxu0
    %v4584 = vadd.f32 0.0, %v4583
    %v4585 = vpop.f32.mrb[0].mxu0
    %4586 = vdwg.mxu0
    %v4587 = vmul.f32 %v4581, 0.25
    %v4588 = vmul.f32 %v4584, 0.25
    %v4589 = vsel %vm567, %v4587, -inf
    %4590 = vmax.xlane.f32.xlu0 %v4589
    %v4591 = vpop.xlane.xlu0 %4590
    %v4592 = vsel %vm567, %v4588, -inf
    %4593 = vmax.xlane.f32.xlu0 %v4592
    %v4594 = vpop.xlane.xlu0 %4593
    %v4595 = vsub.f32 %v4587, %v4591
    %v4596 = vsub.f32 %v4588, %v4594
    %v4597 = vmul.f32 %v4595, 1.442695
    %v4598 = vpow.pop %v4597
    %v4599 = vmul.f32 %v4596, 1.442695
    %v4600 = vpow.pop %v4599
    %v4601 = vsel %vm567, %v4598, 0.0
    %4602 = vadd.xlane.f32.xlu0 %v4601
    %v4603 = vpop.xlane.xlu0 %4602
    %v4604 = vsel %vm567, %v4600, 0.0
    %4605 = vadd.xlane.f32.xlu0 %v4604
    %v4606 = vpop.xlane.xlu0 %4605
    %v4607 = vpack.c.bf16 %v4600, %v4598
    %4609 = vrot.lane.b32.xlu0 %v4533, 48
    %v4610 = vpop.permute.xlu0 %4609
    %v4613 = vsel %vm567, %v4607, 0
    %4615 = vmatprep.subr.bf16.mxu0 0
    %4616 = vmatpush1.bf16.msra.mxu0 %v4610
    %4617 = vmatprep.subr.bf16.mxu0 0
    %4618 = vmatpush1.bf16.msra.mxu0 0
    %4619 = vmatprep.subr.bf16.mxu0 0
    %4620 = vmatpush1.bf16.msra.mxu0 0
    %4621 = vmatprep.subr.bf16.mxu0 0
    %4622 = vmatpush1.bf16.msra.mxu0 0
    %4623 = vmatprep.subr.bf16.mxu0 0
    %4624 = vmatpush1.bf16.msra.mxu0 0
    %4625 = vmatprep.subr.bf16.mxu0 0
    %4626 = vmatpush1.bf16.msra.mxu0 0
    %4627 = vmatprep.subr.bf16.mxu0 0
    %4628 = vmatpush1.bf16.msra.mxu0 0
    %4629 = vmatprep.subr.bf16.mxu0 0
    %4630 = vmatpush1.bf16.msra.mxu0 0
    %4631 = vmatprep.subr.bf16.mxu0 0
    %4632 = vmatpush1.bf16.msra.mxu0 0
    %4633 = vmatprep.subr.bf16.mxu0 0
    %4634 = vmatpush1.bf16.msra.mxu0 0
    %4635 = vmatprep.subr.bf16.mxu0 0
    %4636 = vmatpush1.bf16.msra.mxu0 0
    %4637 = vmatprep.subr.bf16.mxu0 0
    %4638 = vmatpush1.bf16.msra.mxu0 0
    %4639 = vmatprep.subr.bf16.mxu0 0
    %4640 = vmatpush1.bf16.msra.mxu0 0
    %4641 = vmatprep.subr.bf16.mxu0 0
    %4642 = vmatpush1.bf16.msra.mxu0 0
    %4643 = vmatprep.subr.bf16.mxu0 0
    %4644 = vmatpush1.bf16.msra.mxu0 0
    %4645 = vmatprep.subr.bf16.mxu0 0
    %4646 = vmatpush1.bf16.msra.mxu0 0
    %4647 = vmatprep.mubr.bf16.mxu0 0
    %4648 = vmatmul.mubr.bf16.gmra.mrb[0].mxu0 %v4613
    %v4649 = vpop.f32.mrb[0].mxu0
    %v4650 = vadd.f32 0.0, %v4649
    %v4651 = vpop.f32.mrb[0].mxu0
    %v4652 = vpop.f32.mrb[0].mxu0
    %v4653 = vadd.f32 0.0, %v4652
    %v4654 = vpop.f32.mrb[0].mxu0
    %4655 = vdwg.mxu0
    %v4656 = vrcp.pop %v4603
    %v4657 = vrcp.pop %v4606
    %v4658 = vmul.f32 %v4650, %v4656
    %v4659 = vmul.f32 %v4653, %v4657
    %4662 = vrot.lane.b32.xlu0 %v4658, 80
    %v4663 = vpop.permute.xlu0 %4662
    %4664 = vrot.lane.b32.xlu0 %v4659, 80
    %v4665 = vpop.permute.xlu0 %4664
    %4668 = vst.msk [vmem:[#allocation3 + $0x30] sm:$0xff] %vm1383, %v4663
    %4669 = vst.msk [vmem:[#allocation3 + $0x38] sm:$0xff] %vm1383, %v4665
    %v4670 = vld [vmem:[#allocation2 + $0x48] sm:$0xff]
    %v4671 = vld [vmem:[#allocation2 + $0x50] sm:$0xff]
    %v4672 = vld [vmem:[#allocation2 + $0x58] sm:$0xff]
    %4674 = vrot.lane.b32.xlu0 %v4670, 32
    %v4675 = vpop.permute.xlu0 %4674
    %4677 = vrot.lane.b32.xlu0 %v4671, 32
    %v4678 = vpop.permute.xlu0 %4677
    %v4680 = vsel %vm567, %v4675, 0
    %v4683 = vsel %vm567, %v4678, 0
    %4685 = vmatprep.subr.bf16.mxu0 0
    %4686 = vmatpush1.bf16.xpose.msra.mxu0 %v4683
    %4687 = vmatprep.subr.bf16.mxu0 0
    %4688 = vmatpush1.bf16.xpose.msra.mxu0 0
    %4689 = vmatprep.subr.bf16.mxu0 0
    %4690 = vmatpush1.bf16.xpose.msra.mxu0 0
    %4691 = vmatprep.subr.bf16.mxu0 0
    %4692 = vmatpush1.bf16.xpose.msra.mxu0 0
    %4693 = vmatprep.subr.bf16.mxu0 0
    %4694 = vmatpush1.bf16.xpose.msra.mxu0 0
    %4695 = vmatprep.subr.bf16.mxu0 0
    %4696 = vmatpush1.bf16.xpose.msra.mxu0 0
    %4697 = vmatprep.subr.bf16.mxu0 0
    %4698 = vmatpush1.bf16.xpose.msra.mxu0 0
    %4699 = vmatprep.subr.bf16.mxu0 0
    %4700 = vmatpush1.bf16.xpose.msra.mxu0 0
    %4701 = vmatprep.subr.bf16.mxu0 0
    %4702 = vmatpush1.bf16.xpose.msra.mxu0 0
    %4703 = vmatprep.subr.bf16.mxu0 0
    %4704 = vmatpush1.bf16.xpose.msra.mxu0 0
    %4705 = vmatprep.subr.bf16.mxu0 0
    %4706 = vmatpush1.bf16.xpose.msra.mxu0 0
    %4707 = vmatprep.subr.bf16.mxu0 0
    %4708 = vmatpush1.bf16.xpose.msra.mxu0 0
    %4709 = vmatprep.subr.bf16.mxu0 0
    %4710 = vmatpush1.bf16.xpose.msra.mxu0 0
    %4711 = vmatprep.subr.bf16.mxu0 0
    %4712 = vmatpush1.bf16.xpose.msra.mxu0 0
    %4713 = vmatprep.subr.bf16.mxu0 0
    %4714 = vmatpush1.bf16.xpose.msra.mxu0 0
    %4715 = vmatprep.subr.bf16.mxu0 0
    %4716 = vmatpush1.bf16.xpose.msra.mxu0 0
    %4717 = vmatprep.mubr.bf16.mxu0 0
    %4718 = vmatmul.mubr.bf16.gmra.mrb[0].mxu0 %v4680
    %v4719 = vpop.f32.mrb[0].mxu0
    %v4720 = vadd.f32 0.0, %v4719
    %v4721 = vpop.f32.mrb[0].mxu0
    %v4722 = vpop.f32.mrb[0].mxu0
    %v4723 = vadd.f32 0.0, %v4722
    %v4724 = vpop.f32.mrb[0].mxu0
    %4725 = vdwg.mxu0
    %v4726 = vmul.f32 %v4720, 0.25
    %v4727 = vmul.f32 %v4723, 0.25
    %v4728 = vsel %vm567, %v4726, -inf
    %4729 = vmax.xlane.f32.xlu0 %v4728
    %v4730 = vpop.xlane.xlu0 %4729
    %v4731 = vsel %vm567, %v4727, -inf
    %4732 = vmax.xlane.f32.xlu0 %v4731
    %v4733 = vpop.xlane.xlu0 %4732
    %v4734 = vsub.f32 %v4726, %v4730
    %v4735 = vsub.f32 %v4727, %v4733
    %v4736 = vmul.f32 %v4734, 1.442695
    %v4737 = vpow.pop %v4736
    %v4738 = vmul.f32 %v4735, 1.442695
    %v4739 = vpow.pop %v4738
    %v4740 = vsel %vm567, %v4737, 0.0
    %4741 = vadd.xlane.f32.xlu0 %v4740
    %v4742 = vpop.xlane.xlu0 %4741
    %v4743 = vsel %vm567, %v4739, 0.0
    %4744 = vadd.xlane.f32.xlu0 %v4743
    %v4745 = vpop.xlane.xlu0 %4744
    %v4746 = vpack.c.bf16 %v4739, %v4737
    %4748 = vrot.lane.b32.xlu0 %v4672, 32
    %v4749 = vpop.permute.xlu0 %4748
    %v4752 = vsel %vm567, %v4746, 0
    %4754 = vmatprep.subr.bf16.mxu0 0
    %4755 = vmatpush1.bf16.msra.mxu0 %v4749
    %4756 = vmatprep.subr.bf16.mxu0 0
    %4757 = vmatpush1.bf16.msra.mxu0 0
    %4758 = vmatprep.subr.bf16.mxu0 0
    %4759 = vmatpush1.bf16.msra.mxu0 0
    %4760 = vmatprep.subr.bf16.mxu0 0
    %4761 = vmatpush1.bf16.msra.mxu0 0
    %4762 = vmatprep.subr.bf16.mxu0 0
    %4763 = vmatpush1.bf16.msra.mxu0 0
    %4764 = vmatprep.subr.bf16.mxu0 0
    %4765 = vmatpush1.bf16.msra.mxu0 0
    %4766 = vmatprep.subr.bf16.mxu0 0
    %4767 = vmatpush1.bf16.msra.mxu0 0
    %4768 = vmatprep.subr.bf16.mxu0 0
    %4769 = vmatpush1.bf16.msra.mxu0 0
    %4770 = vmatprep.subr.bf16.mxu0 0
    %4771 = vmatpush1.bf16.msra.mxu0 0
    %4772 = vmatprep.subr.bf16.mxu0 0
    %4773 = vmatpush1.bf16.msra.mxu0 0
    %4774 = vmatprep.subr.bf16.mxu0 0
    %4775 = vmatpush1.bf16.msra.mxu0 0
    %4776 = vmatprep.subr.bf16.mxu0 0
    %4777 = vmatpush1.bf16.msra.mxu0 0
    %4778 = vmatprep.subr.bf16.mxu0 0
    %4779 = vmatpush1.bf16.msra.mxu0 0
    %4780 = vmatprep.subr.bf16.mxu0 0
    %4781 = vmatpush1.bf16.msra.mxu0 0
    %4782 = vmatprep.subr.bf16.mxu0 0
    %4783 = vmatpush1.bf16.msra.mxu0 0
    %4784 = vmatprep.subr.bf16.mxu0 0
    %4785 = vmatpush1.bf16.msra.mxu0 0
    %4786 = vmatprep.mubr.bf16.mxu0 0
    %4787 = vmatmul.mubr.bf16.gmra.mrb[0].mxu0 %v4752
    %v4788 = vpop.f32.mrb[0].mxu0
    %v4789 = vadd.f32 0.0, %v4788
    %v4790 = vpop.f32.mrb[0].mxu0
    %v4791 = vpop.f32.mrb[0].mxu0
    %v4792 = vadd.f32 0.0, %v4791
    %v4793 = vpop.f32.mrb[0].mxu0
    %4794 = vdwg.mxu0
    %v4795 = vrcp.pop %v4742
    %v4796 = vrcp.pop %v4745
    %v4797 = vmul.f32 %v4789, %v4795
    %v4798 = vmul.f32 %v4792, %v4796
    %4801 = vrot.lane.b32.xlu0 %v4797, 96
    %v4802 = vpop.permute.xlu0 %4801
    %4803 = vrot.lane.b32.xlu0 %v4798, 96
    %v4804 = vpop.permute.xlu0 %4803
    %4807 = vst.msk [vmem:[#allocation3 + $0x30] sm:$0xff] %vm1523, %v4802
    %4808 = vst.msk [vmem:[#allocation3 + $0x38] sm:$0xff] %vm1523, %v4804
    %v4809 = vld [vmem:[#allocation2 + $0x48] sm:$0xff]
    %v4810 = vld [vmem:[#allocation2 + $0x50] sm:$0xff]
    %v4811 = vld [vmem:[#allocation2 + $0x58] sm:$0xff]
    %4813 = vrot.lane.b32.xlu0 %v4809, 16
    %v4814 = vpop.permute.xlu0 %4813
    %4816 = vrot.lane.b32.xlu0 %v4810, 16
    %v4817 = vpop.permute.xlu0 %4816
    %v4819 = vsel %vm567, %v4814, 0
    %v4822 = vsel %vm567, %v4817, 0
    %4824 = vmatprep.subr.bf16.mxu0 0
    %4825 = vmatpush1.bf16.xpose.msra.mxu0 %v4822
    %4826 = vmatprep.subr.bf16.mxu0 0
    %4827 = vmatpush1.bf16.xpose.msra.mxu0 0
    %4828 = vmatprep.subr.bf16.mxu0 0
    %4829 = vmatpush1.bf16.xpose.msra.mxu0 0
    %4830 = vmatprep.subr.bf16.mxu0 0
    %4831 = vmatpush1.bf16.xpose.msra.mxu0 0
    %4832 = vmatprep.subr.bf16.mxu0 0
    %4833 = vmatpush1.bf16.xpose.msra.mxu0 0
    %4834 = vmatprep.subr.bf16.mxu0 0
    %4835 = vmatpush1.bf16.xpose.msra.mxu0 0
    %4836 = vmatprep.subr.bf16.mxu0 0
    %4837 = vmatpush1.bf16.xpose.msra.mxu0 0
    %4838 = vmatprep.subr.bf16.mxu0 0
    %4839 = vmatpush1.bf16.xpose.msra.mxu0 0
    %4840 = vmatprep.subr.bf16.mxu0 0
    %4841 = vmatpush1.bf16.xpose.msra.mxu0 0
    %4842 = vmatprep.subr.bf16.mxu0 0
    %4843 = vmatpush1.bf16.xpose.msra.mxu0 0
    %4844 = vmatprep.subr.bf16.mxu0 0
    %4845 = vmatpush1.bf16.xpose.msra.mxu0 0
    %4846 = vmatprep.subr.bf16.mxu0 0
    %4847 = vmatpush1.bf16.xpose.msra.mxu0 0
    %4848 = vmatprep.subr.bf16.mxu0 0
    %4849 = vmatpush1.bf16.xpose.msra.mxu0 0
    %4850 = vmatprep.subr.bf16.mxu0 0
    %4851 = vmatpush1.bf16.xpose.msra.mxu0 0
    %4852 = vmatprep.subr.bf16.mxu0 0
    %4853 = vmatpush1.bf16.xpose.msra.mxu0 0
    %4854 = vmatprep.subr.bf16.mxu0 0
    %4855 = vmatpush1.bf16.xpose.msra.mxu0 0
    %4856 = vmatprep.mubr.bf16.mxu0 0
    %4857 = vmatmul.mubr.bf16.gmra.mrb[0].mxu0 %v4819
    %v4858 = vpop.f32.mrb[0].mxu0
    %v4859 = vadd.f32 0.0, %v4858
    %v4860 = vpop.f32.mrb[0].mxu0
    %v4861 = vpop.f32.mrb[0].mxu0
    %v4862 = vadd.f32 0.0, %v4861
    %v4863 = vpop.f32.mrb[0].mxu0
    %4864 = vdwg.mxu0
    %v4865 = vmul.f32 %v4859, 0.25
    %v4866 = vmul.f32 %v4862, 0.25
    %v4867 = vsel %vm567, %v4865, -inf
    %4868 = vmax.xlane.f32.xlu0 %v4867
    %v4869 = vpop.xlane.xlu0 %4868
    %v4870 = vsel %vm567, %v4866, -inf
    %4871 = vmax.xlane.f32.xlu0 %v4870
    %v4872 = vpop.xlane.xlu0 %4871
    %v4873 = vsub.f32 %v4865, %v4869
    %v4874 = vsub.f32 %v4866, %v4872
    %v4875 = vmul.f32 %v4873, 1.442695
    %v4876 = vpow.pop %v4875
    %v4877 = vmul.f32 %v4874, 1.442695
    %v4878 = vpow.pop %v4877
    %v4879 = vsel %vm567, %v4876, 0.0
    %4880 = vadd.xlane.f32.xlu0 %v4879
    %v4881 = vpop.xlane.xlu0 %4880
    %v4882 = vsel %vm567, %v4878, 0.0
    %4883 = vadd.xlane.f32.xlu0 %v4882
    %v4884 = vpop.xlane.xlu0 %4883
    %v4885 = vpack.c.bf16 %v4878, %v4876
    %4887 = vrot.lane.b32.xlu0 %v4811, 16
    %v4888 = vpop.permute.xlu0 %4887
    %v4891 = vsel %vm567, %v4885, 0
    %4893 = vmatprep.subr.bf16.mxu0 0
    %4894 = vmatpush1.bf16.msra.mxu0 %v4888
    %4895 = vmatprep.subr.bf16.mxu0 0
    %4896 = vmatpush1.bf16.msra.mxu0 0
    %4897 = vmatprep.subr.bf16.mxu0 0
    %4898 = vmatpush1.bf16.msra.mxu0 0
    %4899 = vmatprep.subr.bf16.mxu0 0
    %4900 = vmatpush1.bf16.msra.mxu0 0
    %4901 = vmatprep.subr.bf16.mxu0 0
    %4902 = vmatpush1.bf16.msra.mxu0 0
    %4903 = vmatprep.subr.bf16.mxu0 0
    %4904 = vmatpush1.bf16.msra.mxu0 0
    %4905 = vmatprep.subr.bf16.mxu0 0
    %4906 = vmatpush1.bf16.msra.mxu0 0
    %4907 = vmatprep.subr.bf16.mxu0 0
    %4908 = vmatpush1.bf16.msra.mxu0 0
    %4909 = vmatprep.subr.bf16.mxu0 0
    %4910 = vmatpush1.bf16.msra.mxu0 0
    %4911 = vmatprep.subr.bf16.mxu0 0
    %4912 = vmatpush1.bf16.msra.mxu0 0
    %4913 = vmatprep.subr.bf16.mxu0 0
    %4914 = vmatpush1.bf16.msra.mxu0 0
    %4915 = vmatprep.subr.bf16.mxu0 0
    %4916 = vmatpush1.bf16.msra.mxu0 0
    %4917 = vmatprep.subr.bf16.mxu0 0
    %4918 = vmatpush1.bf16.msra.mxu0 0
    %4919 = vmatprep.subr.bf16.mxu0 0
    %4920 = vmatpush1.bf16.msra.mxu0 0
    %4921 = vmatprep.subr.bf16.mxu0 0
    %4922 = vmatpush1.bf16.msra.mxu0 0
    %4923 = vmatprep.subr.bf16.mxu0 0
    %4924 = vmatpush1.bf16.msra.mxu0 0
    %4925 = vmatprep.mubr.bf16.mxu0 0
    %4926 = vmatmul.mubr.bf16.gmra.mrb[0].mxu0 %v4891
    %v4927 = vpop.f32.mrb[0].mxu0
    %v4928 = vadd.f32 0.0, %v4927
    %v4929 = vpop.f32.mrb[0].mxu0
    %v4930 = vpop.f32.mrb[0].mxu0
    %v4931 = vadd.f32 0.0, %v4930
    %v4932 = vpop.f32.mrb[0].mxu0
    %4933 = vdwg.mxu0
    %v4934 = vrcp.pop %v4881
    %v4935 = vrcp.pop %v4884
    %v4936 = vmul.f32 %v4928, %v4934
    %v4937 = vmul.f32 %v4931, %v4935
    %4940 = vrot.lane.b32.xlu0 %v4936, 112
    %v4941 = vpop.permute.xlu0 %4940
    %4942 = vrot.lane.b32.xlu0 %v4937, 112
    %v4943 = vpop.permute.xlu0 %4942
    %4946 = vst.msk [vmem:[#allocation3 + $0x30] sm:$0xff] %vm1663, %v4941
    %4947 = vst.msk [vmem:[#allocation3 + $0x38] sm:$0xff] %vm1663, %v4943
    %v4948 = vld [vmem:[#allocation3] sm:$0xff]
    %v4949 = vld [vmem:[#allocation3 + $0x8] sm:$0xff]
    %v4950 = vld [vmem:[#allocation3 + $0x10] sm:$0xff]
    %v4951 = vld [vmem:[#allocation3 + $0x18] sm:$0xff]
    %v4952 = vld [vmem:[#allocation3 + $0x20] sm:$0xff]
    %v4953 = vld [vmem:[#allocation3 + $0x28] sm:$0xff]
    %v4954 = vld [vmem:[#allocation3 + $0x30] sm:$0xff]
    %v4955 = vld [vmem:[#allocation3 + $0x38] sm:$0xff]
    %v4956 = vpack.c.bf16 %v4949, %v4948
    %v4957 = vpack.c.bf16 %v4951, %v4950
    %v4958 = vpack.c.bf16 %v4953, %v4952
    %v4959 = vpack.c.bf16 %v4955, %v4954
    %v4960 = vld [vmem:[#allocation9] sm:$0xf]
    %v4961 = vld [vmem:[#allocation9 + $0x4] sm:$0xf]
    %v4962 = vld [vmem:[#allocation9 + $0x8] sm:$0xf]
    %v4963 = vld [vmem:[#allocation9 + $0xc] sm:$0xf]
    %v4964 = vld [vmem:[#allocation9 + $0x10] sm:$0xf]
    %v4965 = vld [vmem:[#allocation9 + $0x14] sm:$0xf]
    %v4966 = vld [vmem:[#allocation9 + $0x18] sm:$0xf]
    %v4967 = vld [vmem:[#allocation9 + $0x1c] sm:$0xf]
    %v4968 = vld [vmem:[#allocation9 + $0x20] sm:$0xf]
    %v4969 = vld [vmem:[#allocation9 + $0x24] sm:$0xf]
    %v4970 = vld [vmem:[#allocation9 + $0x28] sm:$0xf]
    %v4971 = vld [vmem:[#allocation9 + $0x2c] sm:$0xf]
    %v4972 = vld [vmem:[#allocation9 + $0x30] sm:$0xf]
    %v4973 = vld [vmem:[#allocation9 + $0x34] sm:$0xf]
    %v4974 = vld [vmem:[#allocation9 + $0x38] sm:$0xf]
    %v4975 = vld [vmem:[#allocation9 + $0x3c] sm:$0xf]
    %v4976 = vld [vmem:[%s5] sm:$0x1]
    %v4978 = vlaneseq
    %v4979 = vshrl.u32 %v4978, 7
    %v4980 = vsub.s32 0, %v4979
    %v4981 = vrot.slane %v4976, %v4980
    %v4999 = vunpack.c.l.b16 %v4960
    %v5000 = vunpack.c.l.b16 %v4961
    %v5001 = vunpack.c.l.b16 %v4962
    %v5002 = vunpack.c.l.b16 %v4963
    %v5003 = vunpack.c.l.b16 %v4964
    %v5004 = vunpack.c.l.b16 %v4965
    %v5005 = vunpack.c.l.b16 %v4966
    %v5006 = vunpack.c.l.b16 %v4967
    %v5007 = vunpack.c.l.b16 %v4968
    %v5008 = vunpack.c.l.b16 %v4969
    %v5009 = vunpack.c.l.b16 %v4970
    %v5010 = vunpack.c.l.b16 %v4971
    %v5011 = vunpack.c.l.b16 %v4972
    %v5012 = vunpack.c.l.b16 %v4973
    %v5013 = vunpack.c.l.b16 %v4974
    %v5014 = vunpack.c.l.b16 %v4975
    %v5015 = vpack.c.b16 %v5000, %v4999
    %v5016 = vpack.c.b16 %v5002, %v5001
    %v5017 = vpack.c.b16 %v5004, %v5003
    %v5018 = vpack.c.b16 %v5006, %v5005
    %v5019 = vpack.c.b16 %v5008, %v5007
    %v5020 = vpack.c.b16 %v5010, %v5009
    %v5021 = vpack.c.b16 %v5012, %v5011
    %v5022 = vpack.c.b16 %v5014, %v5013
    %5031 = vmatprep.subr.bf16.mxu0 0
    %5032 = vmatpush1.bf16.msra.mxu0 %v5015
    %5033 = vmatprep.subr.bf16.mxu0 0
    %5034 = vmatpush1.bf16.msra.mxu0 %v5016
    %5035 = vmatprep.subr.bf16.mxu0 0
    %5036 = vmatpush1.bf16.msra.mxu0 %v5017
    %5037 = vmatprep.subr.bf16.mxu0 0
    %5038 = vmatpush1.bf16.msra.mxu0 %v5018
    %5039 = vmatprep.subr.bf16.mxu0 0
    %5040 = vmatpush1.bf16.msra.mxu0 %v5019
    %5041 = vmatprep.subr.bf16.mxu0 0
    %5042 = vmatpush1.bf16.msra.mxu0 %v5020
    %5043 = vmatprep.subr.bf16.mxu0 0
    %5044 = vmatpush1.bf16.msra.mxu0 %v5021
    %5045 = vmatprep.subr.bf16.mxu0 0
    %5046 = vmatpush1.bf16.msra.mxu0 %v5022
    %5047 = vmatprep.subr.bf16.mxu0 0
    %5048 = vmatpush1.bf16.msra.mxu0 0
    %5049 = vmatprep.subr.bf16.mxu0 0
    %5050 = vmatpush1.bf16.msra.mxu0 0
    %5051 = vmatprep.subr.bf16.mxu0 0
    %5052 = vmatpush1.bf16.msra.mxu0 0
    %5053 = vmatprep.subr.bf16.mxu0 0
    %5054 = vmatpush1.bf16.msra.mxu0 0
    %5055 = vmatprep.subr.bf16.mxu0 0
    %5056 = vmatpush1.bf16.msra.mxu0 0
    %5057 = vmatprep.subr.bf16.mxu0 0
    %5058 = vmatpush1.bf16.msra.mxu0 0
    %5059 = vmatprep.subr.bf16.mxu0 0
    %5060 = vmatpush1.bf16.msra.mxu0 0
    %5061 = vmatprep.subr.bf16.mxu0 0
    %5062 = vmatpush1.bf16.msra.mxu0 0
    %5063 = vmatprep.mubr.bf16.mxu0 0
    %5064 = vmatmul.mubr.bf16.gmra.mrb[0].mxu0 %v4956
    %v5065 = vpop.f32.mrb[0].mxu0
    %v5066 = vadd.f32 %v4981, %v5065
    %v5067 = vpop.f32.mrb[0].mxu0
    %v5068 = vpop.f32.mrb[0].mxu0
    %v5069 = vadd.f32 %v4981, %v5068
    %v5070 = vpop.f32.mrb[0].mxu0
    %5071 = vmatprep.mubr.bf16.mxu0 0
    %5072 = vmatmul.mubr.bf16.gmra.mrb[0].mxu0 %v4957
    %v5073 = vpop.f32.mrb[0].mxu0
    %v5074 = vadd.f32 %v4981, %v5073
    %v5075 = vpop.f32.mrb[0].mxu0
    %v5076 = vpop.f32.mrb[0].mxu0
    %v5077 = vadd.f32 %v4981, %v5076
    %v5078 = vpop.f32.mrb[0].mxu0
    %5079 = vmatprep.mubr.bf16.mxu0 0
    %5080 = vmatmul.mubr.bf16.gmra.mrb[0].mxu0 %v4958
    %v5081 = vpop.f32.mrb[0].mxu0
    %v5082 = vadd.f32 %v4981, %v5081
    %v5083 = vpop.f32.mrb[0].mxu0
    %v5084 = vpop.f32.mrb[0].mxu0
    %v5085 = vadd.f32 %v4981, %v5084
    %v5086 = vpop.f32.mrb[0].mxu0
    %5087 = vmatprep.mubr.bf16.mxu0 0
    %5088 = vmatmul.mubr.bf16.gmra.mrb[0].mxu0 %v4959
    %v5089 = vpop.f32.mrb[0].mxu0
    %v5090 = vadd.f32 %v4981, %v5089
    %v5091 = vpop.f32.mrb[0].mxu0
    %v5092 = vpop.f32.mrb[0].mxu0
    %v5093 = vadd.f32 %v4981, %v5092
    %v5094 = vpop.f32.mrb[0].mxu0
    %5095 = vdwg.mxu0
    %v5096 = vadd.f32 %v111, %v5066
    %v5097 = vadd.f32 %v112, %v5069
    %v5098 = vadd.f32 %v113, %v5074
    %v5099 = vadd.f32 %v114, %v5077
    %v5100 = vadd.f32 %v115, %v5082
    %v5101 = vadd.f32 %v116, %v5085
    %v5102 = vadd.f32 %v117, %v5090
    %v5103 = vadd.f32 %v118, %v5093
    %v5104 = vld [vmem:[%s6] sm:$0x1]
    %v5105 = vld [vmem:[%s7] sm:$0x1]
    %5106 = vadd.xlane.f32.xlu0 %v5096
    %v5107 = vpop.xlane.xlu0 %5106
    %5108 = vadd.xlane.f32.xlu0 %v5097
    %v5109 = vpop.xlane.xlu0 %5108
    %5110 = vadd.xlane.f32.xlu0 %v5098
    %v5111 = vpop.xlane.xlu0 %5110
    %5112 = vadd.xlane.f32.xlu0 %v5099
    %v5113 = vpop.xlane.xlu0 %5112
    %5114 = vadd.xlane.f32.xlu0 %v5100
    %v5115 = vpop.xlane.xlu0 %5114
    %5116 = vadd.xlane.f32.xlu0 %v5101
    %v5117 = vpop.xlane.xlu0 %5116
    %5118 = vadd.xlane.f32.xlu0 %v5102
    %v5119 = vpop.xlane.xlu0 %5118
    %5120 = vadd.xlane.f32.xlu0 %v5103
    %v5121 = vpop.xlane.xlu0 %5120
    %v5122 = vmul.f32 %v5107, %v137
    %v5123 = vmul.f32 %v5109, %v137
    %v5124 = vmul.f32 %v5111, %v137
    %v5125 = vmul.f32 %v5113, %v137
    %v5126 = vmul.f32 %v5115, %v137
    %v5127 = vmul.f32 %v5117, %v137
    %v5128 = vmul.f32 %v5119, %v137
    %v5129 = vmul.f32 %v5121, %v137
    %v5130 = vsub.f32 %v5096, %v5122
    %v5131 = vsub.f32 %v5097, %v5123
    %v5132 = vsub.f32 %v5098, %v5124
    %v5133 = vsub.f32 %v5099, %v5125
    %v5134 = vsub.f32 %v5100, %v5126
    %v5135 = vsub.f32 %v5101, %v5127
    %v5136 = vsub.f32 %v5102, %v5128
    %v5137 = vsub.f32 %v5103, %v5129
    %v5138 = vmul.f32 %v5130, %v5130
    %v5139 = vmul.f32 %v5131, %v5131
    %v5140 = vmul.f32 %v5132, %v5132
    %v5141 = vmul.f32 %v5133, %v5133
    %v5142 = vmul.f32 %v5134, %v5134
    %v5143 = vmul.f32 %v5135, %v5135
    %v5144 = vmul.f32 %v5136, %v5136
    %v5145 = vmul.f32 %v5137, %v5137
    %5146 = vadd.xlane.f32.xlu0 %v5138
    %v5147 = vpop.xlane.xlu0 %5146
    %5148 = vadd.xlane.f32.xlu0 %v5139
    %v5149 = vpop.xlane.xlu0 %5148
    %5150 = vadd.xlane.f32.xlu0 %v5140
    %v5151 = vpop.xlane.xlu0 %5150
    %5152 = vadd.xlane.f32.xlu0 %v5141
    %v5153 = vpop.xlane.xlu0 %5152
    %5154 = vadd.xlane.f32.xlu0 %v5142
    %v5155 = vpop.xlane.xlu0 %5154
    %5156 = vadd.xlane.f32.xlu0 %v5143
    %v5157 = vpop.xlane.xlu0 %5156
    %5158 = vadd.xlane.f32.xlu0 %v5144
    %v5159 = vpop.xlane.xlu0 %5158
    %5160 = vadd.xlane.f32.xlu0 %v5145
    %v5161 = vpop.xlane.xlu0 %5160
    %v5162 = vmul.f32 %v5147, %v137
    %v5163 = vmul.f32 %v5149, %v137
    %v5164 = vmul.f32 %v5151, %v137
    %v5165 = vmul.f32 %v5153, %v137
    %v5166 = vmul.f32 %v5155, %v137
    %v5167 = vmul.f32 %v5157, %v137
    %v5168 = vmul.f32 %v5159, %v137
    %v5169 = vmul.f32 %v5161, %v137
    %v5170 = vadd.f32 %v5162, 1e-05
    %v5171 = vadd.f32 %v5163, 1e-05
    %v5172 = vadd.f32 %v5164, 1e-05
    %v5173 = vadd.f32 %v5165, 1e-05
    %v5174 = vadd.f32 %v5166, 1e-05
    %v5175 = vadd.f32 %v5167, 1e-05
    %v5176 = vadd.f32 %v5168, 1e-05
    %v5177 = vadd.f32 %v5169, 1e-05
    %v5178 = vrsqrt.pop %v5170
    %v5179 = vrsqrt.pop %v5171
    %v5180 = vrsqrt.pop %v5172
    %v5181 = vrsqrt.pop %v5173
    %v5182 = vrsqrt.pop %v5174
    %v5183 = vrsqrt.pop %v5175
    %v5184 = vrsqrt.pop %v5176
    %v5185 = vrsqrt.pop %v5177
    %v5186 = vmul.f32 %v5130, %v5178
    %v5187 = vmul.f32 %v5131, %v5179
    %v5188 = vmul.f32 %v5132, %v5180
    %v5189 = vmul.f32 %v5133, %v5181
    %v5190 = vmul.f32 %v5134, %v5182
    %v5191 = vmul.f32 %v5135, %v5183
    %v5192 = vmul.f32 %v5136, %v5184
    %v5193 = vmul.f32 %v5137, %v5185
    %v5195 = vlaneseq
    %v5196 = vshrl.u32 %v5195, 7
    %v5197 = vsub.s32 0, %v5196
    %v5198 = vrot.slane %v5104, %v5197
    %v5200 = vmul.f32 %v5186, %v5198
    %v5201 = vmul.f32 %v5187, %v5198
    %v5202 = vmul.f32 %v5188, %v5198
    %v5203 = vmul.f32 %v5189, %v5198
    %v5204 = vmul.f32 %v5190, %v5198
    %v5205 = vmul.f32 %v5191, %v5198
    %v5206 = vmul.f32 %v5192, %v5198
    %v5207 = vmul.f32 %v5193, %v5198
    %v5209 = vlaneseq
    %v5210 = vshrl.u32 %v5209, 7
    %v5211 = vsub.s32 0, %v5210
    %v5212 = vrot.slane %v5105, %v5211
    %v5214 = vadd.f32 %v5200, %v5212
    %v5215 = vadd.f32 %v5201, %v5212
    %v5216 = vadd.f32 %v5202, %v5212
    %v5217 = vadd.f32 %v5203, %v5212
    %v5218 = vadd.f32 %v5204, %v5212
    %v5219 = vadd.f32 %v5205, %v5212
    %v5220 = vadd.f32 %v5206, %v5212
    %v5221 = vadd.f32 %v5207, %v5212
    %v5222 = vpack.c.bf16 %v5215, %v5214
    %v5223 = vpack.c.bf16 %v5217, %v5216
    %v5224 = vpack.c.bf16 %v5219, %v5218
    %v5225 = vpack.c.bf16 %v5221, %v5220
    %v5226 = vld [vmem:[#allocation10] sm:$0xff]
    %v5227 = vld [vmem:[#allocation10 + $0x8] sm:$0xff]
    %v5228 = vld [vmem:[#allocation10 + $0x10] sm:$0xff]
    %v5229 = vld [vmem:[#allocation10 + $0x18] sm:$0xff]
    %v5230 = vld [vmem:[#allocation10 + $0x20] sm:$0xff]
    %v5231 = vld [vmem:[#allocation10 + $0x28] sm:$0xff]
    %v5232 = vld [vmem:[#allocation10 + $0x30] sm:$0xff]
    %v5233 = vld [vmem:[#allocation10 + $0x38] sm:$0xff]
    %v5234 = vld [vmem:[#allocation10 + $0x40] sm:$0xff]
    %v5235 = vld [vmem:[#allocation10 + $0x48] sm:$0xff]
    %v5236 = vld [vmem:[#allocation10 + $0x50] sm:$0xff]
    %v5237 = vld [vmem:[#allocation10 + $0x58] sm:$0xff]
    %v5238 = vld [vmem:[#allocation10 + $0x60] sm:$0xff]
    %v5239 = vld [vmem:[#allocation10 + $0x68] sm:$0xff]
    %v5240 = vld [vmem:[#allocation10 + $0x70] sm:$0xff]
    %v5241 = vld [vmem:[#allocation10 + $0x78] sm:$0xff]
    %v5242 = vld [vmem:[%s9] sm:$0x3]
    %v5244 = vlaneseq
    %v5245 = vshrl.u32 %v5244, 7
    %v5246 = vsub.s32 0, %v5245
    %v5247 = vrot.slane %v5242, %v5246
    %v5248 = vlaneseq
    %v5249 = vshrl.u32 %v5248, 7
    %v5250 = vsub.s32 1, %v5249
    %v5251 = vrot.slane %v5242, %v5250
    %v5270 = vunpack.c.l.b16 %v5226
    %v5271 = vunpack.c.h.b16 %v5226
    %v5272 = vunpack.c.l.b16 %v5227
    %v5273 = vunpack.c.h.b16 %v5227
    %v5274 = vunpack.c.l.b16 %v5228
    %v5275 = vunpack.c.h.b16 %v5228
    %v5276 = vunpack.c.l.b16 %v5229
    %v5277 = vunpack.c.h.b16 %v5229
    %v5278 = vunpack.c.l.b16 %v5230
    %v5279 = vunpack.c.h.b16 %v5230
    %v5280 = vunpack.c.l.b16 %v5231
    %v5281 = vunpack.c.h.b16 %v5231
    %v5282 = vunpack.c.l.b16 %v5232
    %v5283 = vunpack.c.h.b16 %v5232
    %v5284 = vunpack.c.l.b16 %v5233
    %v5285 = vunpack.c.h.b16 %v5233
    %v5286 = vunpack.c.l.b16 %v5234
    %v5287 = vunpack.c.h.b16 %v5234
    %v5288 = vunpack.c.l.b16 %v5235
    %v5289 = vunpack.c.h.b16 %v5235
    %v5290 = vunpack.c.l.b16 %v5236
    %v5291 = vunpack.c.h.b16 %v5236
    %v5292 = vunpack.c.l.b16 %v5237
    %v5293 = vunpack.c.h.b16 %v5237
    %v5294 = vunpack.c.l.b16 %v5238
    %v5295 = vunpack.c.h.b16 %v5238
    %v5296 = vunpack.c.l.b16 %v5239
    %v5297 = vunpack.c.h.b16 %v5239
    %v5298 = vunpack.c.l.b16 %v5240
    %v5299 = vunpack.c.h.b16 %v5240
    %v5300 = vunpack.c.l.b16 %v5241
    %v5301 = vunpack.c.h.b16 %v5241
    %v5302 = vpack.c.b16 %v5272, %v5270
    %v5303 = vpack.c.b16 %v5273, %v5271
    %v5304 = vpack.c.b16 %v5276, %v5274
    %v5305 = vpack.c.b16 %v5277, %v5275
    %v5306 = vpack.c.b16 %v5280, %v5278
    %v5307 = vpack.c.b16 %v5281, %v5279
    %v5308 = vpack.c.b16 %v5284, %v5282
    %v5309 = vpack.c.b16 %v5285, %v5283
    %v5310 = vpack.c.b16 %v5288, %v5286
    %v5311 = vpack.c.b16 %v5289, %v5287
    %v5312 = vpack.c.b16 %v5292, %v5290
    %v5313 = vpack.c.b16 %v5293, %v5291
    %v5314 = vpack.c.b16 %v5296, %v5294
    %v5315 = vpack.c.b16 %v5297, %v5295
    %v5316 = vpack.c.b16 %v5300, %v5298
    %v5317 = vpack.c.b16 %v5301, %v5299
    %5334 = vmatprep.subr.bf16.mxu0 %v5303
    %5335 = vmatpush1.bf16.msra.mxu0 %v5302
    %5336 = vmatprep.subr.bf16.mxu0 %v5305
    %5337 = vmatpush1.bf16.msra.mxu0 %v5304
    %5338 = vmatprep.subr.bf16.mxu0 %v5307
    %5339 = vmatpush1.bf16.msra.mxu0 %v5306
    %5340 = vmatprep.subr.bf16.mxu0 %v5309
    %5341 = vmatpush1.bf16.msra.mxu0 %v5308
    %5342 = vmatprep.subr.bf16.mxu0 %v5311
    %5343 = vmatpush1.bf16.msra.mxu0 %v5310
    %5344 = vmatprep.subr.bf16.mxu0 %v5313
    %5345 = vmatpush1.bf16.msra.mxu0 %v5312
    %5346 = vmatprep.subr.bf16.mxu0 %v5315
    %5347 = vmatpush1.bf16.msra.mxu0 %v5314
    %5348 = vmatprep.subr.bf16.mxu0 %v5317
    %5349 = vmatpush1.bf16.msra.mxu0 %v5316
    %5350 = vmatprep.subr.bf16.mxu0 0
    %5351 = vmatpush1.bf16.msra.mxu0 0
    %5352 = vmatprep.subr.bf16.mxu0 0
    %5353 = vmatpush1.bf16.msra.mxu0 0
    %5354 = vmatprep.subr.bf16.mxu0 0
    %5355 = vmatpush1.bf16.msra.mxu0 0
    %5356 = vmatprep.subr.bf16.mxu0 0
    %5357 = vmatpush1.bf16.msra.mxu0 0
    %5358 = vmatprep.subr.bf16.mxu0 0
    %5359 = vmatpush1.bf16.msra.mxu0 0
    %5360 = vmatprep.subr.bf16.mxu0 0
    %5361 = vmatpush1.bf16.msra.mxu0 0
    %5362 = vmatprep.subr.bf16.mxu0 0
    %5363 = vmatpush1.bf16.msra.mxu0 0
    %5364 = vmatprep.subr.bf16.mxu0 0
    %5365 = vmatpush1.bf16.msra.mxu0 0
    %5366 = vmatprep.mubr.bf16.mxu0 0
    %5367 = vmatmul.mubr.bf16.gmra.mrb[0].mxu0 %v5222
    %v5368 = vpop.f32.mrb[0].mxu0
    %v5369 = vadd.f32 %v5247, %v5368
    %v5370 = vpop.f32.mrb[0].mxu0
    %v5371 = vadd.f32 %v5251, %v5370
    %v5372 = vpop.f32.mrb[0].mxu0
    %v5373 = vadd.f32 %v5247, %v5372
    %v5374 = vpop.f32.mrb[0].mxu0
    %v5375 = vadd.f32 %v5251, %v5374
    %5376 = vmatprep.mubr.bf16.mxu0 0
    %5377 = vmatmul.mubr.bf16.gmra.mrb[0].mxu0 %v5223
    %v5378 = vpop.f32.mrb[0].mxu0
    %v5379 = vadd.f32 %v5247, %v5378
    %v5380 = vpop.f32.mrb[0].mxu0
    %v5381 = vadd.f32 %v5251, %v5380
    %v5382 = vpop.f32.mrb[0].mxu0
    %v5383 = vadd.f32 %v5247, %v5382
    %v5384 = vpop.f32.mrb[0].mxu0
    %v5385 = vadd.f32 %v5251, %v5384
    %5386 = vmatprep.mubr.bf16.mxu0 0
    %5387 = vmatmul.mubr.bf16.gmra.mrb[0].mxu0 %v5224
    %v5388 = vpop.f32.mrb[0].mxu0
    %v5389 = vadd.f32 %v5247, %v5388
    %v5390 = vpop.f32.mrb[0].mxu0
    %v5391 = vadd.f32 %v5251, %v5390
    %v5392 = vpop.f32.mrb[0].mxu0
    %v5393 = vadd.f32 %v5247, %v5392
    %v5394 = vpop.f32.mrb[0].mxu0
    %v5395 = vadd.f32 %v5251, %v5394
    %5396 = vmatprep.mubr.bf16.mxu0 0
    %5397 = vmatmul.mubr.bf16.gmra.mrb[0].mxu0 %v5225
    %v5398 = vpop.f32.mrb[0].mxu0
    %v5399 = vadd.f32 %v5247, %v5398
    %v5400 = vpop.f32.mrb[0].mxu0
    %v5401 = vadd.f32 %v5251, %v5400
    %v5402 = vpop.f32.mrb[0].mxu0
    %v5403 = vadd.f32 %v5247, %v5402
    %v5404 = vpop.f32.mrb[0].mxu0
    %v5405 = vadd.f32 %v5251, %v5404
    %5406 = vdwg.mxu0
    %v5407 = vmul.f32 %v5369, 0.5
    %v5408 = vmul.f32 %v5371, 0.5
    %v5409 = vmul.f32 %v5373, 0.5
    %v5410 = vmul.f32 %v5375, 0.5
    %v5411 = vmul.f32 %v5379, 0.5
    %v5412 = vmul.f32 %v5381, 0.5
    %v5413 = vmul.f32 %v5383, 0.5
    %v5414 = vmul.f32 %v5385, 0.5
    %v5415 = vmul.f32 %v5389, 0.5
    %v5416 = vmul.f32 %v5391, 0.5
    %v5417 = vmul.f32 %v5393, 0.5
    %v5418 = vmul.f32 %v5395, 0.5
    %v5419 = vmul.f32 %v5399, 0.5
    %v5420 = vmul.f32 %v5401, 0.5
    %v5421 = vmul.f32 %v5403, 0.5
    %v5422 = vmul.f32 %v5405, 0.5
    %v5423 = vmul.f32 %v5369, 0.70710677
    %v5424 = vmul.f32 %v5371, 0.70710677
    %v5425 = vmul.f32 %v5373, 0.70710677
    %v5426 = vmul.f32 %v5375, 0.70710677
    %v5427 = vmul.f32 %v5379, 0.70710677
    %v5428 = vmul.f32 %v5381, 0.70710677
    %v5429 = vmul.f32 %v5383, 0.70710677
    %v5430 = vmul.f32 %v5385, 0.70710677
    %v5431 = vmul.f32 %v5389, 0.70710677
    %v5432 = vmul.f32 %v5391, 0.70710677
    %v5433 = vmul.f32 %v5393, 0.70710677
    %v5434 = vmul.f32 %v5395, 0.70710677
    %v5435 = vmul.f32 %v5399, 0.70710677
    %v5436 = vmul.f32 %v5401, 0.70710677
    %v5437 = vmul.f32 %v5403, 0.70710677
    %v5438 = vmul.f32 %v5405, 0.70710677
    %v5439 = verf.f32.pop %v5423
    %v5440 = verf.f32.pop %v5424
    %v5441 = verf.f32.pop %v5425
    %v5442 = verf.f32.pop %v5426
    %v5443 = verf.f32.pop %v5427
    %v5444 = verf.f32.pop %v5428
    %v5445 = verf.f32.pop %v5429
    %v5446 = verf.f32.pop %v5430
    %v5447 = verf.f32.pop %v5431
    %v5448 = verf.f32.pop %v5432
    %v5449 = verf.f32.pop %v5433
    %v5450 = verf.f32.pop %v5434
    %v5451 = verf.f32.pop %v5435
    %v5452 = verf.f32.pop %v5436
    %v5453 = verf.f32.pop %v5437
    %v5454 = verf.f32.pop %v5438
    %v5455 = vadd.f32 %v5439, 1.0
    %v5456 = vadd.f32 %v5440, 1.0
    %v5457 = vadd.f32 %v5441, 1.0
    %v5458 = vadd.f32 %v5442, 1.0
    %v5459 = vadd.f32 %v5443, 1.0
    %v5460 = vadd.f32 %v5444, 1.0
    %v5461 = vadd.f32 %v5445, 1.0
    %v5462 = vadd.f32 %v5446, 1.0
    %v5463 = vadd.f32 %v5447, 1.0
    %v5464 = vadd.f32 %v5448, 1.0
    %v5465 = vadd.f32 %v5449, 1.0
    %v5466 = vadd.f32 %v5450, 1.0
    %v5467 = vadd.f32 %v5451, 1.0
    %v5468 = vadd.f32 %v5452, 1.0
    %v5469 = vadd.f32 %v5453, 1.0
    %v5470 = vadd.f32 %v5454, 1.0
    %v5471 = vmul.f32 %v5407, %v5455
    %v5472 = vmul.f32 %v5408, %v5456
    %v5473 = vmul.f32 %v5409, %v5457
    %v5474 = vmul.f32 %v5410, %v5458
    %v5475 = vmul.f32 %v5411, %v5459
    %v5476 = vmul.f32 %v5412, %v5460
    %v5477 = vmul.f32 %v5413, %v5461
    %v5478 = vmul.f32 %v5414, %v5462
    %v5479 = vmul.f32 %v5415, %v5463
    %v5480 = vmul.f32 %v5416, %v5464
    %v5481 = vmul.f32 %v5417, %v5465
    %v5482 = vmul.f32 %v5418, %v5466
    %v5483 = vmul.f32 %v5419, %v5467
    %v5484 = vmul.f32 %v5420, %v5468
    %v5485 = vmul.f32 %v5421, %v5469
    %v5486 = vmul.f32 %v5422, %v5470
    %v5487 = vpack.c.bf16 %v5473, %v5471
    %v5488 = vpack.c.bf16 %v5474, %v5472
    %v5489 = vpack.c.bf16 %v5477, %v5475
    %v5490 = vpack.c.bf16 %v5478, %v5476
    %v5491 = vpack.c.bf16 %v5481, %v5479
    %v5492 = vpack.c.bf16 %v5482, %v5480
    %v5493 = vpack.c.bf16 %v5485, %v5483
    %v5494 = vpack.c.bf16 %v5486, %v5484
    %v5495 = vld [vmem:[#allocation12] sm:$0xf]
    %v5496 = vld [vmem:[#allocation12 + $0x4] sm:$0xf]
    %v5497 = vld [vmem:[#allocation12 + $0x8] sm:$0xf]
    %v5498 = vld [vmem:[#allocation12 + $0xc] sm:$0xf]
    %v5499 = vld [vmem:[#allocation12 + $0x10] sm:$0xf]
    %v5500 = vld [vmem:[#allocation12 + $0x14] sm:$0xf]
    %v5501 = vld [vmem:[#allocation12 + $0x18] sm:$0xf]
    %v5502 = vld [vmem:[#allocation12 + $0x1c] sm:$0xf]
    %v5503 = vld [vmem:[#allocation12 + $0x20] sm:$0xf]
    %v5504 = vld [vmem:[#allocation12 + $0x24] sm:$0xf]
    %v5505 = vld [vmem:[#allocation12 + $0x28] sm:$0xf]
    %v5506 = vld [vmem:[#allocation12 + $0x2c] sm:$0xf]
    %v5507 = vld [vmem:[#allocation12 + $0x30] sm:$0xf]
    %v5508 = vld [vmem:[#allocation12 + $0x34] sm:$0xf]
    %v5509 = vld [vmem:[#allocation12 + $0x38] sm:$0xf]
    %v5510 = vld [vmem:[#allocation12 + $0x3c] sm:$0xf]
    %v5511 = vld [vmem:[#allocation12 + $0x40] sm:$0xf]
    %v5512 = vld [vmem:[#allocation12 + $0x44] sm:$0xf]
    %v5513 = vld [vmem:[#allocation12 + $0x48] sm:$0xf]
    %v5514 = vld [vmem:[#allocation12 + $0x4c] sm:$0xf]
    %v5515 = vld [vmem:[#allocation12 + $0x50] sm:$0xf]
    %v5516 = vld [vmem:[#allocation12 + $0x54] sm:$0xf]
    %v5517 = vld [vmem:[#allocation12 + $0x58] sm:$0xf]
    %v5518 = vld [vmem:[#allocation12 + $0x5c] sm:$0xf]
    %v5519 = vld [vmem:[#allocation12 + $0x60] sm:$0xf]
    %v5520 = vld [vmem:[#allocation12 + $0x64] sm:$0xf]
    %v5521 = vld [vmem:[#allocation12 + $0x68] sm:$0xf]
    %v5522 = vld [vmem:[#allocation12 + $0x6c] sm:$0xf]
    %v5523 = vld [vmem:[#allocation12 + $0x70] sm:$0xf]
    %v5524 = vld [vmem:[#allocation12 + $0x74] sm:$0xf]
    %v5525 = vld [vmem:[#allocation12 + $0x78] sm:$0xf]
    %v5526 = vld [vmem:[#allocation12 + $0x7c] sm:$0xf]
    %v5527 = vld [vmem:[%s11] sm:$0x1]
    %v5529 = vlaneseq
    %v5530 = vshrl.u32 %v5529, 7
    %v5531 = vsub.s32 0, %v5530
    %v5532 = vrot.slane %v5527, %v5531
    %v5566 = vunpack.c.l.b16 %v5495
    %v5567 = vunpack.c.l.b16 %v5496
    %v5568 = vunpack.c.l.b16 %v5497
    %v5569 = vunpack.c.l.b16 %v5498
    %v5570 = vunpack.c.l.b16 %v5499
    %v5571 = vunpack.c.l.b16 %v5500
    %v5572 = vunpack.c.l.b16 %v5501
    %v5573 = vunpack.c.l.b16 %v5502
    %v5574 = vunpack.c.l.b16 %v5503
    %v5575 = vunpack.c.l.b16 %v5504
    %v5576 = vunpack.c.l.b16 %v5505
    %v5577 = vunpack.c.l.b16 %v5506
    %v5578 = vunpack.c.l.b16 %v5507
    %v5579 = vunpack.c.l.b16 %v5508
    %v5580 = vunpack.c.l.b16 %v5509
    %v5581 = vunpack.c.l.b16 %v5510
    %v5582 = vunpack.c.l.b16 %v5511
    %v5583 = vunpack.c.l.b16 %v5512
    %v5584 = vunpack.c.l.b16 %v5513
    %v5585 = vunpack.c.l.b16 %v5514
    %v5586 = vunpack.c.l.b16 %v5515
    %v5587 = vunpack.c.l.b16 %v5516
    %v5588 = vunpack.c.l.b16 %v5517
    %v5589 = vunpack.c.l.b16 %v5518
    %v5590 = vunpack.c.l.b16 %v5519
    %v5591 = vunpack.c.l.b16 %v5520
    %v5592 = vunpack.c.l.b16 %v5521
    %v5593 = vunpack.c.l.b16 %v5522
    %v5594 = vunpack.c.l.b16 %v5523
    %v5595 = vunpack.c.l.b16 %v5524
    %v5596 = vunpack.c.l.b16 %v5525
    %v5597 = vunpack.c.l.b16 %v5526
    %v5598 = vpack.c.b16 %v5567, %v5566
    %v5599 = vpack.c.b16 %v5569, %v5568
    %v5600 = vpack.c.b16 %v5571, %v5570
    %v5601 = vpack.c.b16 %v5573, %v5572
    %v5602 = vpack.c.b16 %v5575, %v5574
    %v5603 = vpack.c.b16 %v5577, %v5576
    %v5604 = vpack.c.b16 %v5579, %v5578
    %v5605 = vpack.c.b16 %v5581, %v5580
    %v5606 = vpack.c.b16 %v5583, %v5582
    %v5607 = vpack.c.b16 %v5585, %v5584
    %v5608 = vpack.c.b16 %v5587, %v5586
    %v5609 = vpack.c.b16 %v5589, %v5588
    %v5610 = vpack.c.b16 %v5591, %v5590
    %v5611 = vpack.c.b16 %v5593, %v5592
    %v5612 = vpack.c.b16 %v5595, %v5594
    %v5613 = vpack.c.b16 %v5597, %v5596
    %5630 = vmatprep.subr.bf16.mxu0 0
    %5631 = vmatpush1.bf16.msra.mxu0 %v5598
    %5632 = vmatprep.subr.bf16.mxu0 0
    %5633 = vmatpush1.bf16.msra.mxu0 %v5599
    %5634 = vmatprep.subr.bf16.mxu0 0
    %5635 = vmatpush1.bf16.msra.mxu0 %v5600
    %5636 = vmatprep.subr.bf16.mxu0 0
    %5637 = vmatpush1.bf16.msra.mxu0 %v5601
    %5638 = vmatprep.subr.bf16.mxu0 0
    %5639 = vmatpush1.bf16.msra.mxu0 %v5602
    %5640 = vmatprep.subr.bf16.mxu0 0
    %5641 = vmatpush1.bf16.msra.mxu0 %v5603
    %5642 = vmatprep.subr.bf16.mxu0 0
    %5643 = vmatpush1.bf16.msra.mxu0 %v5604
    %5644 = vmatprep.subr.bf16.mxu0 0
    %5645 = vmatpush1.bf16.msra.mxu0 %v5605
    %5646 = vmatprep.subr.bf16.mxu0 0
    %5647 = vmatpush1.bf16.msra.mxu0 %v5606
    %5648 = vmatprep.subr.bf16.mxu0 0
    %5649 = vmatpush1.bf16.msra.mxu0 %v5607
    %5650 = vmatprep.subr.bf16.mxu0 0
    %5651 = vmatpush1.bf16.msra.mxu0 %v5608
    %5652 = vmatprep.subr.bf16.mxu0 0
    %5653 = vmatpush1.bf16.msra.mxu0 %v5609
    %5654 = vmatprep.subr.bf16.mxu0 0
    %5655 = vmatpush1.bf16.msra.mxu0 %v5610
    %5656 = vmatprep.subr.bf16.mxu0 0
    %5657 = vmatpush1.bf16.msra.mxu0 %v5611
    %5658 = vmatprep.subr.bf16.mxu0 0
    %5659 = vmatpush1.bf16.msra.mxu0 %v5612
    %5660 = vmatprep.subr.bf16.mxu0 0
    %5661 = vmatpush1.bf16.msra.mxu0 %v5613
    %5662 = vmatprep.mubr.bf16.mxu0 %v5488
    %5663 = vmatmul.mubr.bf16.gmra.mrb[0].mxu0 %v5487
    %v5664 = vpop.f32.mrb[0].mxu0
    %v5665 = vadd.f32 %v5532, %v5664
    %v5666 = vpop.f32.mrb[0].mxu0
    %v5667 = vpop.f32.mrb[0].mxu0
    %v5668 = vadd.f32 %v5532, %v5667
    %v5669 = vpop.f32.mrb[0].mxu0
    %5670 = vmatprep.mubr.bf16.mxu0 %v5490
    %5671 = vmatmul.mubr.bf16.gmra.mrb[0].mxu0 %v5489
    %v5672 = vpop.f32.mrb[0].mxu0
    %v5673 = vadd.f32 %v5532, %v5672
    %v5674 = vpop.f32.mrb[0].mxu0
    %v5675 = vpop.f32.mrb[0].mxu0
    %v5676 = vadd.f32 %v5532, %v5675
    %v5677 = vpop.f32.mrb[0].mxu0
    %5678 = vmatprep.mubr.bf16.mxu0 %v5492
    %5679 = vmatmul.mubr.bf16.gmra.mrb[0].mxu0 %v5491
    %v5680 = vpop.f32.mrb[0].mxu0
    %v5681 = vadd.f32 %v5532, %v5680
    %v5682 = vpop.f32.mrb[0].mxu0
    %v5683 = vpop.f32.mrb[0].mxu0
    %v5684 = vadd.f32 %v5532, %v5683
    %v5685 = vpop.f32.mrb[0].mxu0
    %5686 = vmatprep.mubr.bf16.mxu0 %v5494
    %5687 = vmatmul.mubr.bf16.gmra.mrb[0].mxu0 %v5493
    %v5688 = vpop.f32.mrb[0].mxu0
    %v5689 = vadd.f32 %v5532, %v5688
    %v5690 = vpop.f32.mrb[0].mxu0
    %v5691 = vpop.f32.mrb[0].mxu0
    %v5692 = vadd.f32 %v5532, %v5691
    %v5693 = vpop.f32.mrb[0].mxu0
    %5694 = vdwg.mxu0
    %v5695 = vadd.f32 %v5096, %v5665
    %v5696 = vadd.f32 %v5097, %v5668
    %v5697 = vadd.f32 %v5098, %v5673
    %v5698 = vadd.f32 %v5099, %v5676
    %v5699 = vadd.f32 %v5100, %v5681
    %v5700 = vadd.f32 %v5101, %v5684
    %v5701 = vadd.f32 %v5102, %v5689
    %v5702 = vadd.f32 %v5103, %v5692
    %5703 = vst [vmem:[#allocation13] sm:$0xff] %v5695
    %5704 = vst [vmem:[#allocation13 + $0x8] sm:$0xff] %v5696
    %5705 = vst [vmem:[#allocation13 + $0x10] sm:$0xff] %v5697
    %5706 = vst [vmem:[#allocation13 + $0x18] sm:$0xff] %v5698
    %5707 = vst [vmem:[#allocation13 + $0x20] sm:$0xff] %v5699
    %5708 = vst [vmem:[#allocation13 + $0x28] sm:$0xff] %v5700
    %5709 = vst [vmem:[#allocation13 + $0x30] sm:$0xff] %v5701
    %5710 = vst [vmem:[#allocation13 + $0x38] sm:$0xff] %v5702
    // Predicated region
    $region70: #{tpu_custom_call.1} parent=1 // pred_check
      _
    $region71: #{tpu_custom_call.1} parent=1 // pred_check_branch
      %5712 = sbr.rel (0) target = $region73
    $region72: #{tpu_custom_call.1} parent=1 // pred_region
      %s5714 = ssub.s32 1024, 1024
      %5715 = vsyncadd [#allocation6], %s5714
      %s5716 = sshll.u32 [#allocation13], 4
      %s5717 = int_to_ptr.vmem [resolvable:$true] %s5716
      %5722 = dma.vmem_to_hbm [thread:$0]  %s5717, 1024, %s12, [#allocation6], 128, 128, 8
    $region73: #{tpu_custom_call.1} parent=1 // pred_fallthru
      _
    // Predicated region
    $region74: #{tpu_custom_call.1} parent=1 // pred_check
      _
    $region75: #{tpu_custom_call.1} parent=1 // pred_check_branch
      %5724 = sbr.rel (0) target = $region77
    $region76: #{tpu_custom_call.1} parent=1 // pred_region
      %5725 = dma.done [#allocation6], 1024
    $region77: #{tpu_custom_call.1} parent=1 // pred_fallthru
      _
    %5726 = vsyncpa [#allocation5], 1
    %5727 = vsyncpa [#allocation8], 1
    %5728 = vsyncpa [#allocation11], 1
    %5729 = vsyncpa [#allocation6], 1

</llo_original>
